<compile_context>
chip_gen: v7x
topology: tpu7x:2x2x1
jax: 0.10.0
libtpu: 0.0.40
codegen_flags: <defaults>
</compile_context>

<pallas_src>
import functools

import jax
import jax.numpy as jnp
import numpy as np
from jax.experimental import pallas as pl
from jax.experimental.pallas import tpu as pltpu

# ---------------------------------------------------------------------------
# Architecture constants (fixed by classifier_cnn2: 24x24 -> 12 -> 6 -> 3)
# ---------------------------------------------------------------------------
H1 = W1 = 24                  # conv1 spatial size (input)
H2 = W2 = 12                  # after pool1
H3 = W3 = 6                   # after pool2
HF = WF = 3                   # after pool3 (fc expects 64*3*3)
C1, C2, C3 = 32, 64, 64       # channel counts
K1, K2, K3 = 7, 5, 3          # conv kernel sizes
PAD1, P2, P3 = 3, 2, 1        # "same" paddings
HP2 = H2 + 2 * P2             # 16: padded conv2-input grid side
HP3 = H3 + 2 * P3             # 8:  padded conv3-input grid side
G2 = HP2 * HP2                # 256 rows of padded conv2 input grid
G3 = HP3 * HP3                # 64 rows of padded conv3 input grid
M2 = 40                       # margin >= P2*HP2 + P2 = 34, multiple of 8
M3 = 16                       # margin >= P3*HP3 + P3 = 9,  multiple of 8
NH1 = H2 * W1                 # 288 rows after conv1 h-pool
FDIM = C3 * HF * WF           # 576
HID = 128                     # fc hidden


# ---------------------------------------------------------------------------
# Fused per-sample kernel
# ---------------------------------------------------------------------------
def _kernel(p1_ref, w1_ref, b1_ref, s1_ref, w2_ref, b2_ref, s2_ref,
            w3_ref, b3_ref, s3_ref, wf1_ref, bf1_ref, wf2_ref, bf2_ref,
            out_ref, xp2_ref, xp3_ref, pat2_ref, pat3_ref):
    f32 = jnp.float32

    # Zero only the overreach margins of the padded activation grids; the
    # interiors (including the conv "same" padding rows/cols) are fully
    # overwritten by the pooled selection-matmul results below.
    xp2_ref[0:M2, :] = jnp.zeros((M2, C1), f32)
    xp2_ref[M2 + G2:2 * M2 + G2, :] = jnp.zeros((M2, C1), f32)
    xp3_ref[0:M3, :] = jnp.zeros((M3, C2), f32)
    xp3_ref[M3 + G3:2 * M3 + G3, :] = jnp.zeros((M3, C2), f32)

    # ---------------- conv1: single MXU matmul over im2col patches ----------
    acc1 = jnp.dot(p1_ref[0], w1_ref[...], preferred_element_type=f32)  # (576,32)

    # h-pool = max of the two contiguous halves (rows pre-ordered by h parity
    # in the wrapper); bias + ReLU commute with the pooling maxes.
    hb1 = jnp.maximum(
        jnp.maximum(acc1[:NH1, :], acc1[NH1:, :]) + b1_ref[...], 0.0)    # (288,32)

    # w-pool + re-pad onto the 16x16 conv2 input grid: two selection matmuls.
    g2 = jnp.maximum(jnp.dot(s1_ref[0], hb1, preferred_element_type=f32),
                     jnp.dot(s1_ref[1], hb1, preferred_element_type=f32))
    xp2_ref[M2:M2 + G2, :] = g2                                          # one store

    # ---------------- conv2: im2col patch build + ONE big-K matmul ----------
    for ki in range(K2):
        for kj in range(K2):
            t = ki * K2 + kj
            s = (ki - P2) * HP2 + (kj - P2)          # constant row shift per tap
            pat2_ref[:, t * C1:(t + 1) * C1] = xp2_ref[M2 + s:M2 + s + G2, :]
    acc2 = jnp.dot(pat2_ref[...], w2_ref[...], preferred_element_type=f32)  # (256,64)
    hb2 = jnp.maximum(acc2 + b2_ref[...], 0.0)

    # 2x2 max-pool + re-pad onto the 8x8 conv3 grid: four selection matmuls.
    g3 = jnp.maximum(
        jnp.maximum(jnp.dot(s2_ref[0], hb2, preferred_element_type=f32),
                    jnp.dot(s2_ref[1], hb2, preferred_element_type=f32)),
        jnp.maximum(jnp.dot(s2_ref[2], hb2, preferred_element_type=f32),
                    jnp.dot(s2_ref[3], hb2, preferred_element_type=f32)))
    xp3_ref[M3:M3 + G3, :] = g3

    # ---------------- conv3: same im2col big-K scheme ------------------------
    for ki in range(K3):
        for kj in range(K3):
            t = ki * K3 + kj
            s = (ki - P3) * HP3 + (kj - P3)
            pat3_ref[:, t * C2:(t + 1) * C2] = xp3_ref[M3 + s:M3 + s + G3, :]
    acc3 = jnp.dot(pat3_ref[...], w3_ref[...], preferred_element_type=f32)  # (64,64)
    hb3 = jnp.maximum(acc3 + b3_ref[...], 0.0)

    # 2x2 max-pool to the 3x3 feature pixels: rows = (i,j), lanes = channels.
    feats = jnp.maximum(
        jnp.maximum(jnp.dot(s3_ref[0], hb3, preferred_element_type=f32),
                    jnp.dot(s3_ref[1], hb3, preferred_element_type=f32)),
        jnp.maximum(jnp.dot(s3_ref[2], hb3, preferred_element_type=f32),
                    jnp.dot(s3_ref[3], hb3, preferred_element_type=f32)))    # (9,64)

    # ---------------- FC head ------------------------------------------------
    # FC1 as a K-accumulation over the 9 pooled pixels (torch.flatten's
    # (C,H,W) order is folded into wf1's row permutation in the wrapper).
    h = bf1_ref[...]
    for p in range(HF * WF):
        h = h + jnp.dot(feats[p:p + 1, :], wf1_ref[p * C3:(p + 1) * C3, :],
                        preferred_element_type=f32)
    h = jnp.maximum(h, 0.0)
    out_ref[0] = jnp.dot(h, wf2_ref[...], preferred_element_type=f32) + bf2_ref[...]


# ---------------------------------------------------------------------------
# Precomputed 0/1 pooling + re-pad selection matrices (compile-time constants)
# ---------------------------------------------------------------------------
@functools.lru_cache(maxsize=1)
def _pool_select_matrices():
    # S1: w-pool (candidate d) + re-pad of conv1 h-maxed rows (i, w) -> 16x16.
    s1 = np.zeros((2, G2, NH1), np.float32)
    for d in range(2):
        for i in range(H2):
            for j in range(W2):
                s1[d, (P2 + i) * HP2 + (P2 + j), i * W1 + 2 * j + d] = 1.0
    # S2: full 2x2 pool (candidates hd,wd) of the 16x16 conv2 grid -> 8x8 grid.
    s2 = np.zeros((4, G3, G2), np.float32)
    for hd in range(2):
        for wd in range(2):
            for i in range(H3):
                for j in range(W3):
                    s2[hd * 2 + wd, (P3 + i) * HP3 + (P3 + j),
                       (P2 + 2 * i + hd) * HP2 + (P2 + 2 * j + wd)] = 1.0
    # S3: full 2x2 pool of the 8x8 conv3 grid -> 3x3 feature pixels.
    s3 = np.zeros((4, HF * WF, G3), np.float32)
    for hd in range(2):
        for wd in range(2):
            for i in range(HF):
                for j in range(WF):
                    s3[hd * 2 + wd, i * WF + j,
                       (P3 + 2 * i + hd) * HP3 + (P3 + 2 * j + wd)] = 1.0
    return jnp.asarray(s1), jnp.asarray(s2), jnp.asarray(s3)


# ---------------------------------------------------------------------------
# Wrapper: boundary layout plumbing in XLA, all compute in the Pallas kernel
# ---------------------------------------------------------------------------
def classifier_cnn2_forward(x_nchw, params):
    nb = x_nchw.shape[0]
    ncls = params["wf2"].shape[1]
    npad = ((ncls + 127) // 128) * 128
    f32 = jnp.float32

    # conv1 im2col (tiny: (nb, 576, 49)); rows ordered (h parity, h//2, w) so
    # the in-kernel h-pool is a max of two contiguous halves.
    x = x_nchw[:, 0, :, :].astype(f32)
    xpad = jnp.pad(x, ((0, 0), (PAD1, PAD1), (PAD1, PAD1)))
    taps = [xpad[:, i:i + H1, j:j + W1] for i in range(K1) for j in range(K1)]
    p1 = jnp.stack(taps, axis=-1)                            # (nb, 24, 24, 49)
    p1 = (p1.reshape(nb, H2, 2, W1, K1 * K1)
            .transpose(0, 2, 1, 3, 4)
            .reshape(nb, H1 * W1, K1 * K1))

    s1, s2, s3 = _pool_select_matrices()

    # Parameter prep (pure layout; no runtime transposes inside the kernel).
    w1r = params["w1"].reshape(K1 * K1, C1).astype(f32)
    w2r = params["w2"].reshape(K2 * K2 * C1, C2).astype(f32)
    w3r = params["w3"].reshape(K3 * K3 * C2, C3).astype(f32)
    b1 = params["b1"].reshape(1, C1).astype(f32)
    b2 = params["b2"].reshape(1, C2).astype(f32)
    b3 = params["b3"].reshape(1, C3).astype(f32)
    # Fold torch.flatten's (C,H,W) order into wf1's rows -> rows = (pixel, C).
    wf1p = (params["wf1"].reshape(C3, HF * WF, HID)
            .transpose(1, 0, 2).reshape(FDIM, HID).astype(f32))
    bf1 = params["bf1"].reshape(1, HID).astype(f32)
    # Pad the classifier to a lane-dense output width.
    wf2p = jnp.zeros((HID, npad), f32).at[:, :ncls].set(params["wf2"].astype(f32))
    bf2p = jnp.zeros((1, npad), f32).at[:, :ncls].set(
        params["bf2"].reshape(1, ncls).astype(f32))

    def _const(arr):
        nd = arr.ndim
        return pl.BlockSpec(arr.shape, lambda n, nd=nd: (0,) * nd)

    out = pl.pallas_call(
        _kernel,
        out_shape=jax.ShapeDtypeStruct((nb, 1, npad), f32),
        grid=(nb,),
        in_specs=[
            pl.BlockSpec((1, H1 * W1, K1 * K1), lambda n: (n, 0, 0)),
            _const(w1r), _const(b1), _const(s1),
            _const(w2r), _const(b2), _const(s2),
            _const(w3r), _const(b3), _const(s3),
            _const(wf1p), _const(bf1), _const(wf2p), _const(bf2p),
        ],
        out_specs=pl.BlockSpec((1, 1, npad), lambda n: (n, 0, 0)),
        scratch_shapes=[
            pltpu.VMEM((2 * M2 + G2, C1), f32),      # padded conv2 input grid
            pltpu.VMEM((2 * M3 + G3, C2), f32),      # padded conv3 input grid
            pltpu.VMEM((G2, K2 * K2 * C1), f32),     # conv2 im2col patches (256,800)
            pltpu.VMEM((G3, K3 * K3 * C2), f32),     # conv3 im2col patches (64,576)
        ],
        compiler_params=pltpu.CompilerParams(
            dimension_semantics=("parallel",)),
        cost_estimate=pl.CostEstimate(flops=105_000_000, transcendentals=0,
                                      bytes_accessed=2_500_000),
    )(p1, w1r, b1, s1, w2r, b2, s2, w3r, b3, s3, wf1p, bf1, wf2p, bf2p)
    return out[:, 0, :ncls]


# ---------------------------------------------------------------------------
# Deterministic parameter init (shapes from the module's __init__)
# ---------------------------------------------------------------------------
def init_params(key, num_classes):
    ks = jax.random.split(key, 10)

    def conv_w(k, kh, kw, cin, cout):
        return jax.random.normal(k, (kh, kw, cin, cout), jnp.float32) / jnp.sqrt(kh * kw * cin)

    def lin_w(k, fin, fout):
        return jax.random.normal(k, (fin, fout), jnp.float32) / jnp.sqrt(fin)

    return {
        "w1": conv_w(ks[0], 7, 7, 1, 32),   "b1": 0.01 * jax.random.normal(ks[1], (32,), jnp.float32),
        "w2": conv_w(ks[2], 5, 5, 32, 64),  "b2": 0.01 * jax.random.normal(ks[3], (64,), jnp.float32),
        "w3": conv_w(ks[4], 3, 3, 64, 64),  "b3": 0.01 * jax.random.normal(ks[5], (64,), jnp.float32),
        "wf1": lin_w(ks[6], 64 * 3 * 3, 128), "bf1": 0.01 * jax.random.normal(ks[7], (128,), jnp.float32),
        "wf2": lin_w(ks[8], 128, num_classes), "bf2": 0.01 * jax.random.normal(ks[9], (num_classes,), jnp.float32),
    }


# ---------------------------------------------------------------------------
# Pure-JAX (XLA) reference for correctness checking
# ---------------------------------------------------------------------------
def reference_forward(x_nchw, p):
    x = jnp.transpose(x_nchw, (0, 2, 3, 1))

    def conv(x, w, b):
        pad = (w.shape[0] - 1) // 2
        y = jax.lax.conv_general_dilated(
            x, w, window_strides=(1, 1), padding=[(pad, pad), (pad, pad)],
            dimension_numbers=("NHWC", "HWIO", "NHWC"))
        return jnp.maximum(y + b, 0.0)

    def pool(x):
        return jax.lax.reduce_window(x, -jnp.inf, jax.lax.max,
                                     (1, 2, 2, 1), (1, 2, 2, 1), "VALID")

    x = pool(conv(x, p["w1"], p["b1"]))
    x = pool(conv(x, p["w2"], p["b2"]))
    x = pool(conv(x, p["w3"], p["b3"]))
    n, h, w, c = x.shape
    xf = jnp.transpose(x, (0, 3, 1, 2)).reshape(n, c * h * w)   # torch.flatten order
    hdn = jnp.maximum(xf @ p["wf1"] + p["bf1"], 0.0)
    return hdn @ p["wf2"] + p["bf2"]


if __name__ == "__main__":
    num_classes = 10
    key = jax.random.PRNGKey(0)
    k_x, k_p = jax.random.split(key)

    # Input spatial size must reduce to 3x3 after three 2x2 pools (fc expects 64*3*3).
    x = jax.random.normal(k_x, (2, 1, 24, 24), jnp.float32)   # NCHW like PyTorch
    params = init_params(k_p, num_classes)

    fwd = jax.jit(classifier_cnn2_forward)
    out = jax.block_until_ready(fwd(x, params))
    ref = jax.block_until_ready(reference_forward(x, params))

    assert out.shape == (2, num_classes), out.shape
    max_diff = float(jnp.max(jnp.abs(out - ref)))
    assert jnp.allclose(out, ref, atol=1e-3, rtol=1e-3), f"max abs diff {max_diff}"

    print("KERNEL_OK")
</pallas_src>

<mosaic_0001>
module attributes {stable_mosaic.version = 11 : i64} {
  func.func @_kernel(%arg0: i32, %arg1: memref<1x576x49xf32, #tpu.memory_space<vmem>>, %arg2: memref<49x32xf32, #tpu.memory_space<vmem>>, %arg3: memref<1x32xf32, #tpu.memory_space<vmem>>, %arg4: memref<2x256x288xf32, #tpu.memory_space<vmem>>, %arg5: memref<800x64xf32, #tpu.memory_space<vmem>>, %arg6: memref<1x64xf32, #tpu.memory_space<vmem>>, %arg7: memref<4x64x256xf32, #tpu.memory_space<vmem>>, %arg8: memref<576x64xf32, #tpu.memory_space<vmem>>, %arg9: memref<1x64xf32, #tpu.memory_space<vmem>>, %arg10: memref<4x9x64xf32, #tpu.memory_space<vmem>>, %arg11: memref<576x128xf32, #tpu.memory_space<vmem>>, %arg12: memref<1x128xf32, #tpu.memory_space<vmem>>, %arg13: memref<128x128xf32, #tpu.memory_space<vmem>>, %arg14: memref<1x128xf32, #tpu.memory_space<vmem>>, %arg15: memref<1x1x128xf32, #tpu.memory_space<vmem>>, %arg16: memref<336x32xf32, #tpu.memory_space<vmem>>, %arg17: memref<96x64xf32, #tpu.memory_space<vmem>>, %arg18: memref<256x800xf32, #tpu.memory_space<vmem>>, %arg19: memref<64x576xf32, #tpu.memory_space<vmem>>) attributes {dimension_semantics = [#tpu.dimension_semantics<parallel>], iteration_bounds = array<i64: 2>, scalar_prefetch = 0 : i64, scratch_operands = 4 : i64, tpu.core_type = #tpu.core_type<tc>, window_params = [{transform_indices = @transform_0, window_bounds = array<i64: 1, 576, 49>}, {pipeline_mode = #tpu.pipeline_mode<synchronous>, transform_indices = @transform_1, window_bounds = array<i64: 49, 32>}, {pipeline_mode = #tpu.pipeline_mode<synchronous>, transform_indices = @transform_2, window_bounds = array<i64: 1, 32>}, {pipeline_mode = #tpu.pipeline_mode<synchronous>, transform_indices = @transform_3, window_bounds = array<i64: 2, 256, 288>}, {pipeline_mode = #tpu.pipeline_mode<synchronous>, transform_indices = @transform_4, window_bounds = array<i64: 800, 64>}, {pipeline_mode = #tpu.pipeline_mode<synchronous>, transform_indices = @transform_5, window_bounds = array<i64: 1, 64>}, {pipeline_mode = #tpu.pipeline_mode<synchronous>, transform_indices = @transform_6, window_bounds = array<i64: 4, 64, 256>}, {pipeline_mode = #tpu.pipeline_mode<synchronous>, transform_indices = @transform_7, window_bounds = array<i64: 576, 64>}, {pipeline_mode = #tpu.pipeline_mode<synchronous>, transform_indices = @transform_8, window_bounds = array<i64: 1, 64>}, {pipeline_mode = #tpu.pipeline_mode<synchronous>, transform_indices = @transform_9, window_bounds = array<i64: 4, 9, 64>}, {pipeline_mode = #tpu.pipeline_mode<synchronous>, transform_indices = @transform_10, window_bounds = array<i64: 576, 128>}, {pipeline_mode = #tpu.pipeline_mode<synchronous>, transform_indices = @transform_11, window_bounds = array<i64: 1, 128>}, {pipeline_mode = #tpu.pipeline_mode<synchronous>, transform_indices = @transform_12, window_bounds = array<i64: 128, 128>}, {pipeline_mode = #tpu.pipeline_mode<synchronous>, transform_indices = @transform_13, window_bounds = array<i64: 1, 128>}, {transform_indices = @transform_14, window_bounds = array<i64: 1, 1, 128>}]} {
    %cst = arith.constant 0.000000e+00 : f32
    %0 = vector.broadcast %cst : f32 to vector<40x32xf32>
    %c0 = arith.constant 0 : index
    %c0_0 = arith.constant 0 : index
    %1 = vector.load %arg16[%c0, %c0_0] : memref<336x32xf32, #tpu.memory_space<vmem>>, vector<40x32xf32>
    tpu.vector_store %arg16[%c0, %c0_0], %0 {strides = array<i32>} : memref<336x32xf32, #tpu.memory_space<vmem>>, vector<40x32xf32>,
    %cst_1 = arith.constant 0.000000e+00 : f32
    %2 = vector.broadcast %cst_1 : f32 to vector<40x32xf32>
    %c296 = arith.constant 296 : index
    %c0_2 = arith.constant 0 : index
    %3 = vector.load %arg16[%c296, %c0_2] : memref<336x32xf32, #tpu.memory_space<vmem>>, vector<40x32xf32>
    tpu.vector_store %arg16[%c296, %c0_2], %2 {strides = array<i32>} : memref<336x32xf32, #tpu.memory_space<vmem>>, vector<40x32xf32>,
    %cst_3 = arith.constant 0.000000e+00 : f32
    %4 = vector.broadcast %cst_3 : f32 to vector<16x64xf32>
    %c0_4 = arith.constant 0 : index
    %c0_5 = arith.constant 0 : index
    %5 = vector.load %arg17[%c0_4, %c0_5] : memref<96x64xf32, #tpu.memory_space<vmem>>, vector<16x64xf32>
    tpu.vector_store %arg17[%c0_4, %c0_5], %4 {strides = array<i32>} : memref<96x64xf32, #tpu.memory_space<vmem>>, vector<16x64xf32>,
    %cst_6 = arith.constant 0.000000e+00 : f32
    %6 = vector.broadcast %cst_6 : f32 to vector<16x64xf32>
    %c80 = arith.constant 80 : index
    %c0_7 = arith.constant 0 : index
    %7 = vector.load %arg17[%c80, %c0_7] : memref<96x64xf32, #tpu.memory_space<vmem>>, vector<16x64xf32>
    tpu.vector_store %arg17[%c80, %c0_7], %6 {strides = array<i32>} : memref<96x64xf32, #tpu.memory_space<vmem>>, vector<16x64xf32>,
    %c0_8 = arith.constant 0 : index
    %c0_9 = arith.constant 0 : index
    %c0_10 = arith.constant 0 : index
    %8 = vector.load %arg1[%c0_8, %c0_9, %c0_10] : memref<1x576x49xf32, #tpu.memory_space<vmem>>, vector<1x576x49xf32>
    %9 = vector.shape_cast %8 : vector<1x576x49xf32> to vector<576x49xf32>
    %c0_11 = arith.constant 0 : index
    %c0_12 = arith.constant 0 : index
    %10 = vector.load %arg2[%c0_11, %c0_12] : memref<49x32xf32, #tpu.memory_space<vmem>>, vector<49x32xf32>
    %cst_13 = arith.constant dense<0.000000e+00> : vector<576x32xf32>
    %11 = tpu.matmul %9, %10, %cst_13 {dimension_numbers = #tpu.dot_dimension_numbers<[1], [0], [0], [1], [0, 0, 1, 1], [], []>} : vector<576x49xf32>, vector<49x32xf32>, vector<576x32xf32> -> vector<576x32xf32>
    %12 = vector.extract_strided_slice %11 {offsets = [0, 0], sizes = [288, 32], strides = [1, 1]} : vector<576x32xf32> to vector<288x32xf32>
    %13 = vector.extract_strided_slice %11 {offsets = [288, 0], sizes = [288, 32], strides = [1, 1]} : vector<576x32xf32> to vector<288x32xf32>
    %14 = arith.maximumf %12, %13 : vector<288x32xf32>
    %c0_14 = arith.constant 0 : index
    %c0_15 = arith.constant 0 : index
    %15 = vector.load %arg3[%c0_14, %c0_15] : memref<1x32xf32, #tpu.memory_space<vmem>>, vector<1x32xf32>
    %16 = vector.broadcast %15 : vector<1x32xf32> to vector<288x32xf32>
    %17 = arith.addf %14, %16 : vector<288x32xf32>
    %cst_16 = arith.constant 0.000000e+00 : f32
    %18 = vector.broadcast %cst_16 : f32 to vector<288x32xf32>
    %19 = arith.maximumf %17, %18 : vector<288x32xf32>
    %c0_17 = arith.constant 0 : index
    %c0_18 = arith.constant 0 : index
    %c0_19 = arith.constant 0 : index
    %20 = vector.load %arg4[%c0_17, %c0_18, %c0_19] : memref<2x256x288xf32, #tpu.memory_space<vmem>>, vector<1x256x288xf32>
    %21 = vector.shape_cast %20 : vector<1x256x288xf32> to vector<256x288xf32>
    %cst_20 = arith.constant dense<0.000000e+00> : vector<256x32xf32>
    %22 = tpu.matmul %21, %19, %cst_20 {dimension_numbers = #tpu.dot_dimension_numbers<[1], [0], [0], [1], [0, 0, 1, 1], [], []>} : vector<256x288xf32>, vector<288x32xf32>, vector<256x32xf32> -> vector<256x32xf32>
    %c1 = arith.constant 1 : index
    %c0_21 = arith.constant 0 : index
    %c0_22 = arith.constant 0 : index
    %23 = vector.load %arg4[%c1, %c0_21, %c0_22] : memref<2x256x288xf32, #tpu.memory_space<vmem>>, vector<1x256x288xf32>
    %24 = vector.shape_cast %23 : vector<1x256x288xf32> to vector<256x288xf32>
    %cst_23 = arith.constant dense<0.000000e+00> : vector<256x32xf32>
    %25 = tpu.matmul %24, %19, %cst_23 {dimension_numbers = #tpu.dot_dimension_numbers<[1], [0], [0], [1], [0, 0, 1, 1], [], []>} : vector<256x288xf32>, vector<288x32xf32>, vector<256x32xf32> -> vector<256x32xf32>
    %26 = arith.maximumf %22, %25 : vector<256x32xf32>
    %c40 = arith.constant 40 : index
    %c0_24 = arith.constant 0 : index
    %27 = vector.load %arg16[%c40, %c0_24] : memref<336x32xf32, #tpu.memory_space<vmem>>, vector<256x32xf32>
    tpu.vector_store %arg16[%c40, %c0_24], %26 {strides = array<i32>} : memref<336x32xf32, #tpu.memory_space<vmem>>, vector<256x32xf32>,
    %c6 = arith.constant 6 : index
    %c0_25 = arith.constant 0 : index
    %28 = vector.load %arg16[%c6, %c0_25] : memref<336x32xf32, #tpu.memory_space<vmem>>, vector<256x32xf32>
    %c0_26 = arith.constant 0 : index
    %c0_27 = arith.constant 0 : index
    %29 = vector.load %arg18[%c0_26, %c0_27] : memref<256x800xf32, #tpu.memory_space<vmem>>, vector<256x32xf32>
    tpu.vector_store %arg18[%c0_26, %c0_27], %28 {strides = array<i32>} : memref<256x800xf32, #tpu.memory_space<vmem>>, vector<256x32xf32>,
    %c7 = arith.constant 7 : index
    %c0_28 = arith.constant 0 : index
    %30 = vector.load %arg16[%c7, %c0_28] : memref<336x32xf32, #tpu.memory_space<vmem>>, vector<256x32xf32>
    %c0_29 = arith.constant 0 : index
    %c32 = arith.constant 32 : index
    %31 = vector.load %arg18[%c0_29, %c32] : memref<256x800xf32, #tpu.memory_space<vmem>>, vector<256x32xf32>
    tpu.vector_store %arg18[%c0_29, %c32], %30 {strides = array<i32>} : memref<256x800xf32, #tpu.memory_space<vmem>>, vector<256x32xf32>,
    %c8 = arith.constant 8 : index
    %c0_30 = arith.constant 0 : index
    %32 = vector.load %arg16[%c8, %c0_30] : memref<336x32xf32, #tpu.memory_space<vmem>>, vector<256x32xf32>
    %c0_31 = arith.constant 0 : index
    %c64 = arith.constant 64 : index
    %33 = vector.load %arg18[%c0_31, %c64] : memref<256x800xf32, #tpu.memory_space<vmem>>, vector<256x32xf32>
    tpu.vector_store %arg18[%c0_31, %c64], %32 {strides = array<i32>} : memref<256x800xf32, #tpu.memory_space<vmem>>, vector<256x32xf32>,
    %c9 = arith.constant 9 : index
    %c0_32 = arith.constant 0 : index
    %34 = vector.load %arg16[%c9, %c0_32] : memref<336x32xf32, #tpu.memory_space<vmem>>, vector<256x32xf32>
    %c0_33 = arith.constant 0 : index
    %c96 = arith.constant 96 : index
    %35 = vector.load %arg18[%c0_33, %c96] : memref<256x800xf32, #tpu.memory_space<vmem>>, vector<256x32xf32>
    tpu.vector_store %arg18[%c0_33, %c96], %34 {strides = array<i32>} : memref<256x800xf32, #tpu.memory_space<vmem>>, vector<256x32xf32>,
    %c10 = arith.constant 10 : index
    %c0_34 = arith.constant 0 : index
    %36 = vector.load %arg16[%c10, %c0_34] : memref<336x32xf32, #tpu.memory_space<vmem>>, vector<256x32xf32>
    %c0_35 = arith.constant 0 : index
    %c128 = arith.constant 128 : index
    %37 = vector.load %arg18[%c0_35, %c128] : memref<256x800xf32, #tpu.memory_space<vmem>>, vector<256x32xf32>
    tpu.vector_store %arg18[%c0_35, %c128], %36 {strides = array<i32>} : memref<256x800xf32, #tpu.memory_space<vmem>>, vector<256x32xf32>,
    %c22 = arith.constant 22 : index
    %c0_36 = arith.constant 0 : index
    %38 = vector.load %arg16[%c22, %c0_36] : memref<336x32xf32, #tpu.memory_space<vmem>>, vector<256x32xf32>
    %c0_37 = arith.constant 0 : index
    %c160 = arith.constant 160 : index
    %39 = vector.load %arg18[%c0_37, %c160] : memref<256x800xf32, #tpu.memory_space<vmem>>, vector<256x32xf32>
    tpu.vector_store %arg18[%c0_37, %c160], %38 {strides = array<i32>} : memref<256x800xf32, #tpu.memory_space<vmem>>, vector<256x32xf32>,
    %c23 = arith.constant 23 : index
    %c0_38 = arith.constant 0 : index
    %40 = vector.load %arg16[%c23, %c0_38] : memref<336x32xf32, #tpu.memory_space<vmem>>, vector<256x32xf32>
    %c0_39 = arith.constant 0 : index
    %c192 = arith.constant 192 : index
    %41 = vector.load %arg18[%c0_39, %c192] : memref<256x800xf32, #tpu.memory_space<vmem>>, vector<256x32xf32>
    tpu.vector_store %arg18[%c0_39, %c192], %40 {strides = array<i32>} : memref<256x800xf32, #tpu.memory_space<vmem>>, vector<256x32xf32>,
    %c24 = arith.constant 24 : index
    %c0_40 = arith.constant 0 : index
    %42 = vector.load %arg16[%c24, %c0_40] : memref<336x32xf32, #tpu.memory_space<vmem>>, vector<256x32xf32>
    %c0_41 = arith.constant 0 : index
    %c224 = arith.constant 224 : index
    %43 = vector.load %arg18[%c0_41, %c224] : memref<256x800xf32, #tpu.memory_space<vmem>>, vector<256x32xf32>
    tpu.vector_store %arg18[%c0_41, %c224], %42 {strides = array<i32>} : memref<256x800xf32, #tpu.memory_space<vmem>>, vector<256x32xf32>,
    %c25 = arith.constant 25 : index
    %c0_42 = arith.constant 0 : index
    %44 = vector.load %arg16[%c25, %c0_42] : memref<336x32xf32, #tpu.memory_space<vmem>>, vector<256x32xf32>
    %c0_43 = arith.constant 0 : index
    %c256 = arith.constant 256 : index
    %45 = vector.load %arg18[%c0_43, %c256] : memref<256x800xf32, #tpu.memory_space<vmem>>, vector<256x32xf32>
    tpu.vector_store %arg18[%c0_43, %c256], %44 {strides = array<i32>} : memref<256x800xf32, #tpu.memory_space<vmem>>, vector<256x32xf32>,
    %c26 = arith.constant 26 : index
    %c0_44 = arith.constant 0 : index
    %46 = vector.load %arg16[%c26, %c0_44] : memref<336x32xf32, #tpu.memory_space<vmem>>, vector<256x32xf32>
    %c0_45 = arith.constant 0 : index
    %c288 = arith.constant 288 : index
    %47 = vector.load %arg18[%c0_45, %c288] : memref<256x800xf32, #tpu.memory_space<vmem>>, vector<256x32xf32>
    tpu.vector_store %arg18[%c0_45, %c288], %46 {strides = array<i32>} : memref<256x800xf32, #tpu.memory_space<vmem>>, vector<256x32xf32>,
    %c38 = arith.constant 38 : index
    %c0_46 = arith.constant 0 : index
    %48 = vector.load %arg16[%c38, %c0_46] : memref<336x32xf32, #tpu.memory_space<vmem>>, vector<256x32xf32>
    %c0_47 = arith.constant 0 : index
    %c320 = arith.constant 320 : index
    %49 = vector.load %arg18[%c0_47, %c320] : memref<256x800xf32, #tpu.memory_space<vmem>>, vector<256x32xf32>
    tpu.vector_store %arg18[%c0_47, %c320], %48 {strides = array<i32>} : memref<256x800xf32, #tpu.memory_space<vmem>>, vector<256x32xf32>,
    %c39 = arith.constant 39 : index
    %c0_48 = arith.constant 0 : index
    %50 = vector.load %arg16[%c39, %c0_48] : memref<336x32xf32, #tpu.memory_space<vmem>>, vector<256x32xf32>
    %c0_49 = arith.constant 0 : index
    %c352 = arith.constant 352 : index
    %51 = vector.load %arg18[%c0_49, %c352] : memref<256x800xf32, #tpu.memory_space<vmem>>, vector<256x32xf32>
    tpu.vector_store %arg18[%c0_49, %c352], %50 {strides = array<i32>} : memref<256x800xf32, #tpu.memory_space<vmem>>, vector<256x32xf32>,
    %c40_50 = arith.constant 40 : index
    %c0_51 = arith.constant 0 : index
    %52 = vector.load %arg16[%c40_50, %c0_51] : memref<336x32xf32, #tpu.memory_space<vmem>>, vector<256x32xf32>
    %c0_52 = arith.constant 0 : index
    %c384 = arith.constant 384 : index
    %53 = vector.load %arg18[%c0_52, %c384] : memref<256x800xf32, #tpu.memory_space<vmem>>, vector<256x32xf32>
    tpu.vector_store %arg18[%c0_52, %c384], %52 {strides = array<i32>} : memref<256x800xf32, #tpu.memory_space<vmem>>, vector<256x32xf32>,
    %c41 = arith.constant 41 : index
    %c0_53 = arith.constant 0 : index
    %54 = vector.load %arg16[%c41, %c0_53] : memref<336x32xf32, #tpu.memory_space<vmem>>, vector<256x32xf32>
    %c0_54 = arith.constant 0 : index
    %c416 = arith.constant 416 : index
    %55 = vector.load %arg18[%c0_54, %c416] : memref<256x800xf32, #tpu.memory_space<vmem>>, vector<256x32xf32>
    tpu.vector_store %arg18[%c0_54, %c416], %54 {strides = array<i32>} : memref<256x800xf32, #tpu.memory_space<vmem>>, vector<256x32xf32>,
    %c42 = arith.constant 42 : index
    %c0_55 = arith.constant 0 : index
    %56 = vector.load %arg16[%c42, %c0_55] : memref<336x32xf32, #tpu.memory_space<vmem>>, vector<256x32xf32>
    %c0_56 = arith.constant 0 : index
    %c448 = arith.constant 448 : index
    %57 = vector.load %arg18[%c0_56, %c448] : memref<256x800xf32, #tpu.memory_space<vmem>>, vector<256x32xf32>
    tpu.vector_store %arg18[%c0_56, %c448], %56 {strides = array<i32>} : memref<256x800xf32, #tpu.memory_space<vmem>>, vector<256x32xf32>,
    %c54 = arith.constant 54 : index
    %c0_57 = arith.constant 0 : index
    %58 = vector.load %arg16[%c54, %c0_57] : memref<336x32xf32, #tpu.memory_space<vmem>>, vector<256x32xf32>
    %c0_58 = arith.constant 0 : index
    %c480 = arith.constant 480 : index
    %59 = vector.load %arg18[%c0_58, %c480] : memref<256x800xf32, #tpu.memory_space<vmem>>, vector<256x32xf32>
    tpu.vector_store %arg18[%c0_58, %c480], %58 {strides = array<i32>} : memref<256x800xf32, #tpu.memory_space<vmem>>, vector<256x32xf32>,
    %c55 = arith.constant 55 : index
    %c0_59 = arith.constant 0 : index
    %60 = vector.load %arg16[%c55, %c0_59] : memref<336x32xf32, #tpu.memory_space<vmem>>, vector<256x32xf32>
    %c0_60 = arith.constant 0 : index
    %c512 = arith.constant 512 : index
    %61 = vector.load %arg18[%c0_60, %c512] : memref<256x800xf32, #tpu.memory_space<vmem>>, vector<256x32xf32>
    tpu.vector_store %arg18[%c0_60, %c512], %60 {strides = array<i32>} : memref<256x800xf32, #tpu.memory_space<vmem>>, vector<256x32xf32>,
    %c56 = arith.constant 56 : index
    %c0_61 = arith.constant 0 : index
    %62 = vector.load %arg16[%c56, %c0_61] : memref<336x32xf32, #tpu.memory_space<vmem>>, vector<256x32xf32>
    %c0_62 = arith.constant 0 : index
    %c544 = arith.constant 544 : index
    %63 = vector.load %arg18[%c0_62, %c544] : memref<256x800xf32, #tpu.memory_space<vmem>>, vector<256x32xf32>
    tpu.vector_store %arg18[%c0_62, %c544], %62 {strides = array<i32>} : memref<256x800xf32, #tpu.memory_space<vmem>>, vector<256x32xf32>,
    %c57 = arith.constant 57 : index
    %c0_63 = arith.constant 0 : index
    %64 = vector.load %arg16[%c57, %c0_63] : memref<336x32xf32, #tpu.memory_space<vmem>>, vector<256x32xf32>
    %c0_64 = arith.constant 0 : index
    %c576 = arith.constant 576 : index
    %65 = vector.load %arg18[%c0_64, %c576] : memref<256x800xf32, #tpu.memory_space<vmem>>, vector<256x32xf32>
    tpu.vector_store %arg18[%c0_64, %c576], %64 {strides = array<i32>} : memref<256x800xf32, #tpu.memory_space<vmem>>, vector<256x32xf32>,
    %c58 = arith.constant 58 : index
    %c0_65 = arith.constant 0 : index
    %66 = vector.load %arg16[%c58, %c0_65] : memref<336x32xf32, #tpu.memory_space<vmem>>, vector<256x32xf32>
    %c0_66 = arith.constant 0 : index
    %c608 = arith.constant 608 : index
    %67 = vector.load %arg18[%c0_66, %c608] : memref<256x800xf32, #tpu.memory_space<vmem>>, vector<256x32xf32>
    tpu.vector_store %arg18[%c0_66, %c608], %66 {strides = array<i32>} : memref<256x800xf32, #tpu.memory_space<vmem>>, vector<256x32xf32>,
    %c70 = arith.constant 70 : index
    %c0_67 = arith.constant 0 : index
    %68 = vector.load %arg16[%c70, %c0_67] : memref<336x32xf32, #tpu.memory_space<vmem>>, vector<256x32xf32>
    %c0_68 = arith.constant 0 : index
    %c640 = arith.constant 640 : index
    %69 = vector.load %arg18[%c0_68, %c640] : memref<256x800xf32, #tpu.memory_space<vmem>>, vector<256x32xf32>
    tpu.vector_store %arg18[%c0_68, %c640], %68 {strides = array<i32>} : memref<256x800xf32, #tpu.memory_space<vmem>>, vector<256x32xf32>,
    %c71 = arith.constant 71 : index
    %c0_69 = arith.constant 0 : index
    %70 = vector.load %arg16[%c71, %c0_69] : memref<336x32xf32, #tpu.memory_space<vmem>>, vector<256x32xf32>
    %c0_70 = arith.constant 0 : index
    %c672 = arith.constant 672 : index
    %71 = vector.load %arg18[%c0_70, %c672] : memref<256x800xf32, #tpu.memory_space<vmem>>, vector<256x32xf32>
    tpu.vector_store %arg18[%c0_70, %c672], %70 {strides = array<i32>} : memref<256x800xf32, #tpu.memory_space<vmem>>, vector<256x32xf32>,
    %c72 = arith.constant 72 : index
    %c0_71 = arith.constant 0 : index
    %72 = vector.load %arg16[%c72, %c0_71] : memref<336x32xf32, #tpu.memory_space<vmem>>, vector<256x32xf32>
    %c0_72 = arith.constant 0 : index
    %c704 = arith.constant 704 : index
    %73 = vector.load %arg18[%c0_72, %c704] : memref<256x800xf32, #tpu.memory_space<vmem>>, vector<256x32xf32>
    tpu.vector_store %arg18[%c0_72, %c704], %72 {strides = array<i32>} : memref<256x800xf32, #tpu.memory_space<vmem>>, vector<256x32xf32>,
    %c73 = arith.constant 73 : index
    %c0_73 = arith.constant 0 : index
    %74 = vector.load %arg16[%c73, %c0_73] : memref<336x32xf32, #tpu.memory_space<vmem>>, vector<256x32xf32>
    %c0_74 = arith.constant 0 : index
    %c736 = arith.constant 736 : index
    %75 = vector.load %arg18[%c0_74, %c736] : memref<256x800xf32, #tpu.memory_space<vmem>>, vector<256x32xf32>
    tpu.vector_store %arg18[%c0_74, %c736], %74 {strides = array<i32>} : memref<256x800xf32, #tpu.memory_space<vmem>>, vector<256x32xf32>,
    %c74 = arith.constant 74 : index
    %c0_75 = arith.constant 0 : index
    %76 = vector.load %arg16[%c74, %c0_75] : memref<336x32xf32, #tpu.memory_space<vmem>>, vector<256x32xf32>
    %c0_76 = arith.constant 0 : index
    %c768 = arith.constant 768 : index
    %77 = vector.load %arg18[%c0_76, %c768] : memref<256x800xf32, #tpu.memory_space<vmem>>, vector<256x32xf32>
    tpu.vector_store %arg18[%c0_76, %c768], %76 {strides = array<i32>} : memref<256x800xf32, #tpu.memory_space<vmem>>, vector<256x32xf32>,
    %c0_77 = arith.constant 0 : index
    %c0_78 = arith.constant 0 : index
    %78 = vector.load %arg18[%c0_77, %c0_78] : memref<256x800xf32, #tpu.memory_space<vmem>>, vector<256x800xf32>
    %c0_79 = arith.constant 0 : index
    %c0_80 = arith.constant 0 : index
    %79 = vector.load %arg5[%c0_79, %c0_80] : memref<800x64xf32, #tpu.memory_space<vmem>>, vector<800x64xf32>
    %cst_81 = arith.constant dense<0.000000e+00> : vector<256x64xf32>
    %80 = tpu.matmul %78, %79, %cst_81 {dimension_numbers = #tpu.dot_dimension_numbers<[1], [0], [0], [1], [0, 0, 1, 1], [], []>} : vector<256x800xf32>, vector<800x64xf32>, vector<256x64xf32> -> vector<256x64xf32>
    %c0_82 = arith.constant 0 : index
    %c0_83 = arith.constant 0 : index
    %81 = vector.load %arg6[%c0_82, %c0_83] : memref<1x64xf32, #tpu.memory_space<vmem>>, vector<1x64xf32>
    %82 = vector.broadcast %81 : vector<1x64xf32> to vector<256x64xf32>
    %83 = arith.addf %80, %82 : vector<256x64xf32>
    %cst_84 = arith.constant 0.000000e+00 : f32
    %84 = vector.broadcast %cst_84 : f32 to vector<256x64xf32>
    %85 = arith.maximumf %83, %84 : vector<256x64xf32>
    %c0_85 = arith.constant 0 : index
    %c0_86 = arith.constant 0 : index
    %c0_87 = arith.constant 0 : index
    %86 = vector.load %arg7[%c0_85, %c0_86, %c0_87] : memref<4x64x256xf32, #tpu.memory_space<vmem>>, vector<1x64x256xf32>
    %87 = vector.shape_cast %86 : vector<1x64x256xf32> to vector<64x256xf32>
    %cst_88 = arith.constant dense<0.000000e+00> : vector<64x64xf32>
    %88 = tpu.matmul %87, %85, %cst_88 {dimension_numbers = #tpu.dot_dimension_numbers<[1], [0], [0], [1], [0, 0, 1, 1], [], []>} : vector<64x256xf32>, vector<256x64xf32>, vector<64x64xf32> -> vector<64x64xf32>
    %c1_89 = arith.constant 1 : index
    %c0_90 = arith.constant 0 : index
    %c0_91 = arith.constant 0 : index
    %89 = vector.load %arg7[%c1_89, %c0_90, %c0_91] : memref<4x64x256xf32, #tpu.memory_space<vmem>>, vector<1x64x256xf32>
    %90 = vector.shape_cast %89 : vector<1x64x256xf32> to vector<64x256xf32>
    %cst_92 = arith.constant dense<0.000000e+00> : vector<64x64xf32>
    %91 = tpu.matmul %90, %85, %cst_92 {dimension_numbers = #tpu.dot_dimension_numbers<[1], [0], [0], [1], [0, 0, 1, 1], [], []>} : vector<64x256xf32>, vector<256x64xf32>, vector<64x64xf32> -> vector<64x64xf32>
    %92 = arith.maximumf %88, %91 : vector<64x64xf32>
    %c2 = arith.constant 2 : index
    %c0_93 = arith.constant 0 : index
    %c0_94 = arith.constant 0 : index
    %93 = vector.load %arg7[%c2, %c0_93, %c0_94] : memref<4x64x256xf32, #tpu.memory_space<vmem>>, vector<1x64x256xf32>
    %94 = vector.shape_cast %93 : vector<1x64x256xf32> to vector<64x256xf32>
    %cst_95 = arith.constant dense<0.000000e+00> : vector<64x64xf32>
    %95 = tpu.matmul %94, %85, %cst_95 {dimension_numbers = #tpu.dot_dimension_numbers<[1], [0], [0], [1], [0, 0, 1, 1], [], []>} : vector<64x256xf32>, vector<256x64xf32>, vector<64x64xf32> -> vector<64x64xf32>
    %c3 = arith.constant 3 : index
    %c0_96 = arith.constant 0 : index
    %c0_97 = arith.constant 0 : index
    %96 = vector.load %arg7[%c3, %c0_96, %c0_97] : memref<4x64x256xf32, #tpu.memory_space<vmem>>, vector<1x64x256xf32>
    %97 = vector.shape_cast %96 : vector<1x64x256xf32> to vector<64x256xf32>
    %cst_98 = arith.constant dense<0.000000e+00> : vector<64x64xf32>
    %98 = tpu.matmul %97, %85, %cst_98 {dimension_numbers = #tpu.dot_dimension_numbers<[1], [0], [0], [1], [0, 0, 1, 1], [], []>} : vector<64x256xf32>, vector<256x64xf32>, vector<64x64xf32> -> vector<64x64xf32>
    %99 = arith.maximumf %95, %98 : vector<64x64xf32>
    %100 = arith.maximumf %92, %99 : vector<64x64xf32>
    %c16 = arith.constant 16 : index
    %c0_99 = arith.constant 0 : index
    %101 = vector.load %arg17[%c16, %c0_99] : memref<96x64xf32, #tpu.memory_space<vmem>>, vector<64x64xf32>
    tpu.vector_store %arg17[%c16, %c0_99], %100 {strides = array<i32>} : memref<96x64xf32, #tpu.memory_space<vmem>>, vector<64x64xf32>,
    %c7_100 = arith.constant 7 : index
    %c0_101 = arith.constant 0 : index
    %102 = vector.load %arg17[%c7_100, %c0_101] : memref<96x64xf32, #tpu.memory_space<vmem>>, vector<64x64xf32>
    %c0_102 = arith.constant 0 : index
    %c0_103 = arith.constant 0 : index
    %103 = vector.load %arg19[%c0_102, %c0_103] : memref<64x576xf32, #tpu.memory_space<vmem>>, vector<64x64xf32>
    tpu.vector_store %arg19[%c0_102, %c0_103], %102 {strides = array<i32>} : memref<64x576xf32, #tpu.memory_space<vmem>>, vector<64x64xf32>,
    %c8_104 = arith.constant 8 : index
    %c0_105 = arith.constant 0 : index
    %104 = vector.load %arg17[%c8_104, %c0_105] : memref<96x64xf32, #tpu.memory_space<vmem>>, vector<64x64xf32>
    %c0_106 = arith.constant 0 : index
    %c64_107 = arith.constant 64 : index
    %105 = vector.load %arg19[%c0_106, %c64_107] : memref<64x576xf32, #tpu.memory_space<vmem>>, vector<64x64xf32>
    tpu.vector_store %arg19[%c0_106, %c64_107], %104 {strides = array<i32>} : memref<64x576xf32, #tpu.memory_space<vmem>>, vector<64x64xf32>,
    %c9_108 = arith.constant 9 : index
    %c0_109 = arith.constant 0 : index
    %106 = vector.load %arg17[%c9_108, %c0_109] : memref<96x64xf32, #tpu.memory_space<vmem>>, vector<64x64xf32>
    %c0_110 = arith.constant 0 : index
    %c128_111 = arith.constant 128 : index
    %107 = vector.load %arg19[%c0_110, %c128_111] : memref<64x576xf32, #tpu.memory_space<vmem>>, vector<64x64xf32>
    tpu.vector_store %arg19[%c0_110, %c128_111], %106 {strides = array<i32>} : memref<64x576xf32, #tpu.memory_space<vmem>>, vector<64x64xf32>,
    %c15 = arith.constant 15 : index
    %c0_112 = arith.constant 0 : index
    %108 = vector.load %arg17[%c15, %c0_112] : memref<96x64xf32, #tpu.memory_space<vmem>>, vector<64x64xf32>
    %c0_113 = arith.constant 0 : index
    %c192_114 = arith.constant 192 : index
    %109 = vector.load %arg19[%c0_113, %c192_114] : memref<64x576xf32, #tpu.memory_space<vmem>>, vector<64x64xf32>
    tpu.vector_store %arg19[%c0_113, %c192_114], %108 {strides = array<i32>} : memref<64x576xf32, #tpu.memory_space<vmem>>, vector<64x64xf32>,
    %c16_115 = arith.constant 16 : index
    %c0_116 = arith.constant 0 : index
    %110 = vector.load %arg17[%c16_115, %c0_116] : memref<96x64xf32, #tpu.memory_space<vmem>>, vector<64x64xf32>
    %c0_117 = arith.constant 0 : index
    %c256_118 = arith.constant 256 : index
    %111 = vector.load %arg19[%c0_117, %c256_118] : memref<64x576xf32, #tpu.memory_space<vmem>>, vector<64x64xf32>
    tpu.vector_store %arg19[%c0_117, %c256_118], %110 {strides = array<i32>} : memref<64x576xf32, #tpu.memory_space<vmem>>, vector<64x64xf32>,
    %c17 = arith.constant 17 : index
    %c0_119 = arith.constant 0 : index
    %112 = vector.load %arg17[%c17, %c0_119] : memref<96x64xf32, #tpu.memory_space<vmem>>, vector<64x64xf32>
    %c0_120 = arith.constant 0 : index
    %c320_121 = arith.constant 320 : index
    %113 = vector.load %arg19[%c0_120, %c320_121] : memref<64x576xf32, #tpu.memory_space<vmem>>, vector<64x64xf32>
    tpu.vector_store %arg19[%c0_120, %c320_121], %112 {strides = array<i32>} : memref<64x576xf32, #tpu.memory_space<vmem>>, vector<64x64xf32>,
    %c23_122 = arith.constant 23 : index
    %c0_123 = arith.constant 0 : index
    %114 = vector.load %arg17[%c23_122, %c0_123] : memref<96x64xf32, #tpu.memory_space<vmem>>, vector<64x64xf32>
    %c0_124 = arith.constant 0 : index
    %c384_125 = arith.constant 384 : index
    %115 = vector.load %arg19[%c0_124, %c384_125] : memref<64x576xf32, #tpu.memory_space<vmem>>, vector<64x64xf32>
    tpu.vector_store %arg19[%c0_124, %c384_125], %114 {strides = array<i32>} : memref<64x576xf32, #tpu.memory_space<vmem>>, vector<64x64xf32>,
    %c24_126 = arith.constant 24 : index
    %c0_127 = arith.constant 0 : index
    %116 = vector.load %arg17[%c24_126, %c0_127] : memref<96x64xf32, #tpu.memory_space<vmem>>, vector<64x64xf32>
    %c0_128 = arith.constant 0 : index
    %c448_129 = arith.constant 448 : index
    %117 = vector.load %arg19[%c0_128, %c448_129] : memref<64x576xf32, #tpu.memory_space<vmem>>, vector<64x64xf32>
    tpu.vector_store %arg19[%c0_128, %c448_129], %116 {strides = array<i32>} : memref<64x576xf32, #tpu.memory_space<vmem>>, vector<64x64xf32>,
    %c25_130 = arith.constant 25 : index
    %c0_131 = arith.constant 0 : index
    %118 = vector.load %arg17[%c25_130, %c0_131] : memref<96x64xf32, #tpu.memory_space<vmem>>, vector<64x64xf32>
    %c0_132 = arith.constant 0 : index
    %c512_133 = arith.constant 512 : index
    %119 = vector.load %arg19[%c0_132, %c512_133] : memref<64x576xf32, #tpu.memory_space<vmem>>, vector<64x64xf32>
    tpu.vector_store %arg19[%c0_132, %c512_133], %118 {strides = array<i32>} : memref<64x576xf32, #tpu.memory_space<vmem>>, vector<64x64xf32>,
    %c0_134 = arith.constant 0 : index
    %c0_135 = arith.constant 0 : index
    %120 = vector.load %arg19[%c0_134, %c0_135] : memref<64x576xf32, #tpu.memory_space<vmem>>, vector<64x576xf32>
    %c0_136 = arith.constant 0 : index
    %c0_137 = arith.constant 0 : index
    %121 = vector.load %arg8[%c0_136, %c0_137] : memref<576x64xf32, #tpu.memory_space<vmem>>, vector<576x64xf32>
    %cst_138 = arith.constant dense<0.000000e+00> : vector<64x64xf32>
    %122 = tpu.matmul %120, %121, %cst_138 {dimension_numbers = #tpu.dot_dimension_numbers<[1], [0], [0], [1], [0, 0, 1, 1], [], []>} : vector<64x576xf32>, vector<576x64xf32>, vector<64x64xf32> -> vector<64x64xf32>
    %c0_139 = arith.constant 0 : index
    %c0_140 = arith.constant 0 : index
    %123 = vector.load %arg9[%c0_139, %c0_140] : memref<1x64xf32, #tpu.memory_space<vmem>>, vector<1x64xf32>
    %124 = vector.broadcast %123 : vector<1x64xf32> to vector<64x64xf32>
    %125 = arith.addf %122, %124 : vector<64x64xf32>
    %cst_141 = arith.constant 0.000000e+00 : f32
    %126 = vector.broadcast %cst_141 : f32 to vector<64x64xf32>
    %127 = arith.maximumf %125, %126 : vector<64x64xf32>
    %c0_142 = arith.constant 0 : index
    %c0_143 = arith.constant 0 : index
    %c0_144 = arith.constant 0 : index
    %128 = vector.load %arg10[%c0_142, %c0_143, %c0_144] : memref<4x9x64xf32, #tpu.memory_space<vmem>>, vector<1x9x64xf32>
    %129 = vector.shape_cast %128 : vector<1x9x64xf32> to vector<9x64xf32>
    %cst_145 = arith.constant dense<0.000000e+00> : vector<9x64xf32>
    %130 = tpu.matmul %129, %127, %cst_145 {dimension_numbers = #tpu.dot_dimension_numbers<[1], [0], [0], [1], [0, 0, 1, 1], [], []>} : vector<9x64xf32>, vector<64x64xf32>, vector<9x64xf32> -> vector<9x64xf32>
    %c1_146 = arith.constant 1 : index
    %c0_147 = arith.constant 0 : index
    %c0_148 = arith.constant 0 : index
    %131 = vector.load %arg10[%c1_146, %c0_147, %c0_148] : memref<4x9x64xf32, #tpu.memory_space<vmem>>, vector<1x9x64xf32>
    %132 = vector.shape_cast %131 : vector<1x9x64xf32> to vector<9x64xf32>
    %cst_149 = arith.constant dense<0.000000e+00> : vector<9x64xf32>
    %133 = tpu.matmul %132, %127, %cst_149 {dimension_numbers = #tpu.dot_dimension_numbers<[1], [0], [0], [1], [0, 0, 1, 1], [], []>} : vector<9x64xf32>, vector<64x64xf32>, vector<9x64xf32> -> vector<9x64xf32>
    %134 = arith.maximumf %130, %133 : vector<9x64xf32>
    %c2_150 = arith.constant 2 : index
    %c0_151 = arith.constant 0 : index
    %c0_152 = arith.constant 0 : index
    %135 = vector.load %arg10[%c2_150, %c0_151, %c0_152] : memref<4x9x64xf32, #tpu.memory_space<vmem>>, vector<1x9x64xf32>
    %136 = vector.shape_cast %135 : vector<1x9x64xf32> to vector<9x64xf32>
    %cst_153 = arith.constant dense<0.000000e+00> : vector<9x64xf32>
    %137 = tpu.matmul %136, %127, %cst_153 {dimension_numbers = #tpu.dot_dimension_numbers<[1], [0], [0], [1], [0, 0, 1, 1], [], []>} : vector<9x64xf32>, vector<64x64xf32>, vector<9x64xf32> -> vector<9x64xf32>
    %c3_154 = arith.constant 3 : index
    %c0_155 = arith.constant 0 : index
    %c0_156 = arith.constant 0 : index
    %138 = vector.load %arg10[%c3_154, %c0_155, %c0_156] : memref<4x9x64xf32, #tpu.memory_space<vmem>>, vector<1x9x64xf32>
    %139 = vector.shape_cast %138 : vector<1x9x64xf32> to vector<9x64xf32>
    %cst_157 = arith.constant dense<0.000000e+00> : vector<9x64xf32>
    %140 = tpu.matmul %139, %127, %cst_157 {dimension_numbers = #tpu.dot_dimension_numbers<[1], [0], [0], [1], [0, 0, 1, 1], [], []>} : vector<9x64xf32>, vector<64x64xf32>, vector<9x64xf32> -> vector<9x64xf32>
    %141 = arith.maximumf %137, %140 : vector<9x64xf32>
    %142 = arith.maximumf %134, %141 : vector<9x64xf32>
    %c0_158 = arith.constant 0 : index
    %c0_159 = arith.constant 0 : index
    %143 = vector.load %arg12[%c0_158, %c0_159] : memref<1x128xf32, #tpu.memory_space<vmem>>, vector<1x128xf32>
    %144 = vector.extract_strided_slice %142 {offsets = [0, 0], sizes = [1, 64], strides = [1, 1]} : vector<9x64xf32> to vector<1x64xf32>
    %c0_160 = arith.constant 0 : index
    %c0_161 = arith.constant 0 : index
    %145 = vector.load %arg11[%c0_160, %c0_161] : memref<576x128xf32, #tpu.memory_space<vmem>>, vector<64x128xf32>
    %cst_162 = arith.constant dense<0.000000e+00> : vector<1x128xf32>
    %146 = tpu.matmul %144, %145, %cst_162 {dimension_numbers = #tpu.dot_dimension_numbers<[1], [0], [0], [1], [0, 0, 1, 1], [], []>} : vector<1x64xf32>, vector<64x128xf32>, vector<1x128xf32> -> vector<1x128xf32>
    %147 = arith.addf %143, %146 : vector<1x128xf32>
    %148 = vector.extract_strided_slice %142 {offsets = [1, 0], sizes = [1, 64], strides = [1, 1]} : vector<9x64xf32> to vector<1x64xf32>
    %c64_163 = arith.constant 64 : index
    %c0_164 = arith.constant 0 : index
    %149 = vector.load %arg11[%c64_163, %c0_164] : memref<576x128xf32, #tpu.memory_space<vmem>>, vector<64x128xf32>
    %cst_165 = arith.constant dense<0.000000e+00> : vector<1x128xf32>
    %150 = tpu.matmul %148, %149, %cst_165 {dimension_numbers = #tpu.dot_dimension_numbers<[1], [0], [0], [1], [0, 0, 1, 1], [], []>} : vector<1x64xf32>, vector<64x128xf32>, vector<1x128xf32> -> vector<1x128xf32>
    %151 = arith.addf %147, %150 : vector<1x128xf32>
    %152 = vector.extract_strided_slice %142 {offsets = [2, 0], sizes = [1, 64], strides = [1, 1]} : vector<9x64xf32> to vector<1x64xf32>
    %c128_166 = arith.constant 128 : index
    %c0_167 = arith.constant 0 : index
    %153 = vector.load %arg11[%c128_166, %c0_167] : memref<576x128xf32, #tpu.memory_space<vmem>>, vector<64x128xf32>
    %cst_168 = arith.constant dense<0.000000e+00> : vector<1x128xf32>
    %154 = tpu.matmul %152, %153, %cst_168 {dimension_numbers = #tpu.dot_dimension_numbers<[1], [0], [0], [1], [0, 0, 1, 1], [], []>} : vector<1x64xf32>, vector<64x128xf32>, vector<1x128xf32> -> vector<1x128xf32>
    %155 = arith.addf %151, %154 : vector<1x128xf32>
    %156 = vector.extract_strided_slice %142 {offsets = [3, 0], sizes = [1, 64], strides = [1, 1]} : vector<9x64xf32> to vector<1x64xf32>
    %c192_169 = arith.constant 192 : index
    %c0_170 = arith.constant 0 : index
    %157 = vector.load %arg11[%c192_169, %c0_170] : memref<576x128xf32, #tpu.memory_space<vmem>>, vector<64x128xf32>
    %cst_171 = arith.constant dense<0.000000e+00> : vector<1x128xf32>
    %158 = tpu.matmul %156, %157, %cst_171 {dimension_numbers = #tpu.dot_dimension_numbers<[1], [0], [0], [1], [0, 0, 1, 1], [], []>} : vector<1x64xf32>, vector<64x128xf32>, vector<1x128xf32> -> vector<1x128xf32>
    %159 = arith.addf %155, %158 : vector<1x128xf32>
    %160 = vector.extract_strided_slice %142 {offsets = [4, 0], sizes = [1, 64], strides = [1, 1]} : vector<9x64xf32> to vector<1x64xf32>
    %c256_172 = arith.constant 256 : index
    %c0_173 = arith.constant 0 : index
    %161 = vector.load %arg11[%c256_172, %c0_173] : memref<576x128xf32, #tpu.memory_space<vmem>>, vector<64x128xf32>
    %cst_174 = arith.constant dense<0.000000e+00> : vector<1x128xf32>
    %162 = tpu.matmul %160, %161, %cst_174 {dimension_numbers = #tpu.dot_dimension_numbers<[1], [0], [0], [1], [0, 0, 1, 1], [], []>} : vector<1x64xf32>, vector<64x128xf32>, vector<1x128xf32> -> vector<1x128xf32>
    %163 = arith.addf %159, %162 : vector<1x128xf32>
    %164 = vector.extract_strided_slice %142 {offsets = [5, 0], sizes = [1, 64], strides = [1, 1]} : vector<9x64xf32> to vector<1x64xf32>
    %c320_175 = arith.constant 320 : index
    %c0_176 = arith.constant 0 : index
    %165 = vector.load %arg11[%c320_175, %c0_176] : memref<576x128xf32, #tpu.memory_space<vmem>>, vector<64x128xf32>
    %cst_177 = arith.constant dense<0.000000e+00> : vector<1x128xf32>
    %166 = tpu.matmul %164, %165, %cst_177 {dimension_numbers = #tpu.dot_dimension_numbers<[1], [0], [0], [1], [0, 0, 1, 1], [], []>} : vector<1x64xf32>, vector<64x128xf32>, vector<1x128xf32> -> vector<1x128xf32>
    %167 = arith.addf %163, %166 : vector<1x128xf32>
    %168 = vector.extract_strided_slice %142 {offsets = [6, 0], sizes = [1, 64], strides = [1, 1]} : vector<9x64xf32> to vector<1x64xf32>
    %c384_178 = arith.constant 384 : index
    %c0_179 = arith.constant 0 : index
    %169 = vector.load %arg11[%c384_178, %c0_179] : memref<576x128xf32, #tpu.memory_space<vmem>>, vector<64x128xf32>
    %cst_180 = arith.constant dense<0.000000e+00> : vector<1x128xf32>
    %170 = tpu.matmul %168, %169, %cst_180 {dimension_numbers = #tpu.dot_dimension_numbers<[1], [0], [0], [1], [0, 0, 1, 1], [], []>} : vector<1x64xf32>, vector<64x128xf32>, vector<1x128xf32> -> vector<1x128xf32>
    %171 = arith.addf %167, %170 : vector<1x128xf32>
    %172 = vector.extract_strided_slice %142 {offsets = [7, 0], sizes = [1, 64], strides = [1, 1]} : vector<9x64xf32> to vector<1x64xf32>
    %c448_181 = arith.constant 448 : index
    %c0_182 = arith.constant 0 : index
    %173 = vector.load %arg11[%c448_181, %c0_182] : memref<576x128xf32, #tpu.memory_space<vmem>>, vector<64x128xf32>
    %cst_183 = arith.constant dense<0.000000e+00> : vector<1x128xf32>
    %174 = tpu.matmul %172, %173, %cst_183 {dimension_numbers = #tpu.dot_dimension_numbers<[1], [0], [0], [1], [0, 0, 1, 1], [], []>} : vector<1x64xf32>, vector<64x128xf32>, vector<1x128xf32> -> vector<1x128xf32>
    %175 = arith.addf %171, %174 : vector<1x128xf32>
    %176 = vector.extract_strided_slice %142 {offsets = [8, 0], sizes = [1, 64], strides = [1, 1]} : vector<9x64xf32> to vector<1x64xf32>
    %c512_184 = arith.constant 512 : index
    %c0_185 = arith.constant 0 : index
    %177 = vector.load %arg11[%c512_184, %c0_185] : memref<576x128xf32, #tpu.memory_space<vmem>>, vector<64x128xf32>
    %cst_186 = arith.constant dense<0.000000e+00> : vector<1x128xf32>
    %178 = tpu.matmul %176, %177, %cst_186 {dimension_numbers = #tpu.dot_dimension_numbers<[1], [0], [0], [1], [0, 0, 1, 1], [], []>} : vector<1x64xf32>, vector<64x128xf32>, vector<1x128xf32> -> vector<1x128xf32>
    %179 = arith.addf %175, %178 : vector<1x128xf32>
    %cst_187 = arith.constant 0.000000e+00 : f32
    %180 = vector.broadcast %cst_187 : f32 to vector<1x128xf32>
    %181 = arith.maximumf %179, %180 : vector<1x128xf32>
    %c0_188 = arith.constant 0 : index
    %c0_189 = arith.constant 0 : index
    %182 = vector.load %arg13[%c0_188, %c0_189] : memref<128x128xf32, #tpu.memory_space<vmem>>, vector<128x128xf32>
    %cst_190 = arith.constant dense<0.000000e+00> : vector<1x128xf32>
    %183 = tpu.matmul %181, %182, %cst_190 {dimension_numbers = #tpu.dot_dimension_numbers<[1], [0], [0], [1], [0, 0, 1, 1], [], []>} : vector<1x128xf32>, vector<128x128xf32>, vector<1x128xf32> -> vector<1x128xf32>
    %c0_191 = arith.constant 0 : index
    %c0_192 = arith.constant 0 : index
    %184 = vector.load %arg14[%c0_191, %c0_192] : memref<1x128xf32, #tpu.memory_space<vmem>>, vector<1x128xf32>
    %185 = arith.addf %183, %184 : vector<1x128xf32>
    %c0_193 = arith.constant 0 : index
    %c0_194 = arith.constant 0 : index
    %c0_195 = arith.constant 0 : index
    %186 = vector.load %arg15[%c0_193, %c0_194, %c0_195] : memref<1x1x128xf32, #tpu.memory_space<vmem>>, vector<1x1x128xf32>
    %187 = vector.shape_cast %186 : vector<1x1x128xf32> to vector<1x128xf32>
    %188 = vector.shape_cast %185 : vector<1x128xf32> to vector<1x1x128xf32>
    tpu.vector_store %arg15[%c0_193, %c0_194, %c0_195], %188 {strides = array<i32>} : memref<1x1x128xf32, #tpu.memory_space<vmem>>, vector<1x1x128xf32>,
    return
  }
  func.func @transform_0(%arg0: i32) -> (i32, i32, i32) {
    %c0_i32 = arith.constant 0 : i32
    %c0_i32_0 = arith.constant 0 : i32
    %c0_i32_1 = arith.constant 0 : i32
    return %arg0, %c0_i32, %c0_i32_0 : i32, i32, i32
  }
  func.func @transform_1(%arg0: i32) -> (i32, i32) {
    %c0_i32 = arith.constant 0 : i32
    %c0_i32_0 = arith.constant 0 : i32
    %c0_i32_1 = arith.constant 0 : i32
    return %c0_i32, %c0_i32_0 : i32, i32
  }
  func.func @transform_2(%arg0: i32) -> (i32, i32) {
    %c0_i32 = arith.constant 0 : i32
    %c0_i32_0 = arith.constant 0 : i32
    %c0_i32_1 = arith.constant 0 : i32
    return %c0_i32, %c0_i32_0 : i32, i32
  }
  func.func @transform_3(%arg0: i32) -> (i32, i32, i32) {
    %c0_i32 = arith.constant 0 : i32
    %c0_i32_0 = arith.constant 0 : i32
    %c0_i32_1 = arith.constant 0 : i32
    %c0_i32_2 = arith.constant 0 : i32
    return %c0_i32, %c0_i32_0, %c0_i32_1 : i32, i32, i32
  }
  func.func @transform_4(%arg0: i32) -> (i32, i32) {
    %c0_i32 = arith.constant 0 : i32
    %c0_i32_0 = arith.constant 0 : i32
    %c0_i32_1 = arith.constant 0 : i32
    return %c0_i32, %c0_i32_0 : i32, i32
  }
  func.func @transform_5(%arg0: i32) -> (i32, i32) {
    %c0_i32 = arith.constant 0 : i32
    %c0_i32_0 = arith.constant 0 : i32
    %c0_i32_1 = arith.constant 0 : i32
    return %c0_i32, %c0_i32_0 : i32, i32
  }
  func.func @transform_6(%arg0: i32) -> (i32, i32, i32) {
    %c0_i32 = arith.constant 0 : i32
    %c0_i32_0 = arith.constant 0 : i32
    %c0_i32_1 = arith.constant 0 : i32
    %c0_i32_2 = arith.constant 0 : i32
    return %c0_i32, %c0_i32_0, %c0_i32_1 : i32, i32, i32
  }
  func.func @transform_7(%arg0: i32) -> (i32, i32) {
    %c0_i32 = arith.constant 0 : i32
    %c0_i32_0 = arith.constant 0 : i32
    %c0_i32_1 = arith.constant 0 : i32
    return %c0_i32, %c0_i32_0 : i32, i32
  }
  func.func @transform_8(%arg0: i32) -> (i32, i32) {
    %c0_i32 = arith.constant 0 : i32
    %c0_i32_0 = arith.constant 0 : i32
    %c0_i32_1 = arith.constant 0 : i32
    return %c0_i32, %c0_i32_0 : i32, i32
  }
  func.func @transform_9(%arg0: i32) -> (i32, i32, i32) {
    %c0_i32 = arith.constant 0 : i32
    %c0_i32_0 = arith.constant 0 : i32
    %c0_i32_1 = arith.constant 0 : i32
    %c0_i32_2 = arith.constant 0 : i32
    return %c0_i32, %c0_i32_0, %c0_i32_1 : i32, i32, i32
  }
  func.func @transform_10(%arg0: i32) -> (i32, i32) {
    %c0_i32 = arith.constant 0 : i32
    %c0_i32_0 = arith.constant 0 : i32
    %c0_i32_1 = arith.constant 0 : i32
    return %c0_i32, %c0_i32_0 : i32, i32
  }
  func.func @transform_11(%arg0: i32) -> (i32, i32) {
    %c0_i32 = arith.constant 0 : i32
    %c0_i32_0 = arith.constant 0 : i32
    %c0_i32_1 = arith.constant 0 : i32
    return %c0_i32, %c0_i32_0 : i32, i32
  }
  func.func @transform_12(%arg0: i32) -> (i32, i32) {
    %c0_i32 = arith.constant 0 : i32
    %c0_i32_0 = arith.constant 0 : i32
    %c0_i32_1 = arith.constant 0 : i32
    return %c0_i32, %c0_i32_0 : i32, i32
  }
  func.func @transform_13(%arg0: i32) -> (i32, i32) {
    %c0_i32 = arith.constant 0 : i32
    %c0_i32_0 = arith.constant 0 : i32
    %c0_i32_1 = arith.constant 0 : i32
    return %c0_i32, %c0_i32_0 : i32, i32
  }
  func.func @transform_14(%arg0: i32) -> (i32, i32, i32) {
    %c0_i32 = arith.constant 0 : i32
    %c0_i32_0 = arith.constant 0 : i32
    %c0_i32_1 = arith.constant 0 : i32
    return %arg0, %c0_i32, %c0_i32_0 : i32, i32, i32
  }
}

</mosaic_0001>

<llo_original>
// kernel: classifier_cnn2_forward.1
$region0: #{classifier_cnn2_forward.1}
  #allocation0 [shape = 'u32[]', space=smem, size = 0x4, offset = 0x4, fixed_abs, tag = 'smem constant byte address 0x4 - core index']
  #allocation1 [shape = 'u32[144,128]{1,0:T(1,128)}', space=vmem, size = 0x12000, scoped, tag = 'internal scratch']
  #allocation2 [shape = 'f32[336,32]{1,0:T(8,128)}', space=vmem, size = 0x2a000, scoped, tag = 'scratch operand']
  #allocation3 [shape = 'f32[96,64]{1,0:T(8,128)}', space=vmem, size = 0xc000, scoped, tag = 'scratch operand']
  #allocation4 [shape = 'f32[256,800]{1,0:T(8,128)}', space=vmem, size = 0xe0000, scoped, tag = 'scratch operand']
  #allocation5 [shape = 'f32[64,576]{1,0:T(8,128)}', space=vmem, size = 0x28000, scoped, tag = 'scratch operand']
  %s0 = inlined_call_operand.vmem [shape: f32[2,576,49], index: 0, kind: input, shape index: {}]
  %s1 = inlined_call_operand.vmem [shape: f32[49,32], index: 1, kind: input, shape index: {}]
  %s2 = inlined_call_operand.vmem [shape: f32[1,32], index: 2, kind: input, shape index: {}]
  %s3 = inlined_call_operand.vmem [shape: f32[2,256,288], index: 3, kind: input, shape index: {}]
  %s4 = inlined_call_operand.vmem [shape: f32[800,64], index: 4, kind: input, shape index: {}]
  %s5 = inlined_call_operand.vmem [shape: f32[1,64], index: 5, kind: input, shape index: {}]
  %s6 = inlined_call_operand.vmem [shape: f32[4,64,256], index: 6, kind: input, shape index: {}]
  %s7 = inlined_call_operand.vmem [shape: f32[576,64], index: 7, kind: input, shape index: {}]
  %s8 = inlined_call_operand.vmem [shape: f32[1,64], index: 8, kind: input, shape index: {}]
  %s9 = inlined_call_operand.vmem [shape: f32[4,9,64], index: 9, kind: input, shape index: {}]
  %s10 = inlined_call_operand.vmem [shape: f32[576,128], index: 10, kind: input, shape index: {}]
  %s11 = inlined_call_operand.vmem [shape: f32[1,128], index: 11, kind: input, shape index: {}]
  %s12 = inlined_call_operand.vmem [shape: f32[128,128], index: 12, kind: input, shape index: {}]
  %s13 = inlined_call_operand.vmem [shape: f32[1,128], index: 13, kind: input, shape index: {}]
  %s14 = inlined_call_operand.hbm [shape: f32[2,1,128], index: 14, kind: output, shape index: {}]
  %s15 = sld [smem:[#allocation0]]
  $region89: #{classifier_cnn2_forward.1} parent=0
    _
  %s17 = ssub.s32 1, %s15
  %s18 = scalar_select 0, %s17, %s15
  $region1: #{classifier_cnn2_forward.1} parent=0
    #allocation6 [shape = 'u8[1024]{0}', space=vmem, size = 0x400, scoped, tag = 'output window, operand 0']
    #allocation7 [shape = 's32[2]{0}', space=sflag, size = 0x8, scoped, tag = 'scoped memory for classifier_cnn2_forward.1']
    %19 = vsyncpa [#allocation7], 0
    %s20 = scalar_lea.sflag [#allocation7], 1
    %21 = vsyncpa %s20, 0
    loop: start=0, step=1, limit=4
    $region2: #{classifier_cnn2_forward.1} parent=1 // loop_pre_header
      _
    $region3: #{classifier_cnn2_forward.1} parent=1 // loop_header
      %s23 = sphi 0, %s27
      %p24 = scmp.ge.s32.totalorder %s23, 4
      %s33 = sphi 0, %s35
      %s36 = sphi 0, %s33
      %s37 = sphi 0, %s36
      %s53 = sphi 0, %s37
      %s57 = sphi 0, %s57
      %s59 = sphi 0, %s57
      %s60 = sphi 0, %s59
      %s74 = sphi 0, %s60
      %s78 = sphi 0, %s78
      %s80 = sphi 0, %s78
      %s81 = sphi 0, %s80
      %s95 = sphi 0, %s81
      %s99 = sphi 0, %s99
      %s101 = sphi 0, %s99
      %s102 = sphi 0, %s101
      %s116 = sphi 0, %s102
      %s120 = sphi 0, %s120
      %s122 = sphi 0, %s120
      %s123 = sphi 0, %s122
      %s137 = sphi 0, %s123
      %s141 = sphi 0, %s141
      %s143 = sphi 0, %s141
      %s144 = sphi 0, %s143
      %s158 = sphi 0, %s144
      %s162 = sphi 0, %s162
      %s164 = sphi 0, %s162
      %s165 = sphi 0, %s164
      %s179 = sphi 0, %s165
      %s183 = sphi 0, %s183
      %s185 = sphi 0, %s183
      %s186 = sphi 0, %s185
      %s200 = sphi 0, %s186
      %s204 = sphi 0, %s204
      %s206 = sphi 0, %s204
      %s207 = sphi 0, %s206
      %s221 = sphi 0, %s207
      %s225 = sphi 0, %s225
      %s227 = sphi 0, %s225
      %s228 = sphi 0, %s227
      %s242 = sphi 0, %s228
      %s246 = sphi 0, %s246
      %s248 = sphi 0, %s246
      %s249 = sphi 0, %s248
      %s263 = sphi 0, %s249
      %s267 = sphi 0, %s267
      %s269 = sphi 0, %s267
      %s270 = sphi 0, %s269
      %s284 = sphi 0, %s270
      %s288 = sphi 0, %s288
      %s290 = sphi 0, %s288
      %s291 = sphi 0, %s290
      %s305 = sphi 0, %s291
      %s309 = sphi 0, %s309
      %s311 = sphi 0, %s309
      %s312 = sphi 0, %s311
      %s326 = sphi 0, %s312
      %s332 = sphi 0, %s334
      %s335 = sphi 0, %s332
      %s336 = sphi 0, %s335
      %s352 = sphi 0, %s336
    $region4: #{classifier_cnn2_forward.1} parent=1 // loop_header_branch
      %26 = sbr.rel (%p24) target = $region8
    $region5: #{classifier_cnn2_forward.1} parent=1 // loop_body
      %s28 = ssub.s32 %s23, 1
      %s29 = ssub.s32 %s23, 2
      %s30 = sadd.s32 %s23, 1
      %s31 = ssub.s32 %s23, %s30
      %p32 = scmp.eq.s32.totalorder %s31, 0
      %s34 = sadd.s32 %s33, 1
      %s35 = scalar_select %p32, %s33, %s34
      %p38 = pneg %p32
      %p39 = scmp.eq.s32.totalorder %s23, 1
      %p40 = por %p38, %p39
      %p41 = scmp.ne.s32.totalorder %s33, %s36
      %p42 = scmp.eq.s32.totalorder %s23, 0
      %p43 = por %p41, %p42
      %p44 = scmp.ne.s32.totalorder %s33, %s36
      %p45 = scmp.eq.s32.totalorder %s28, 1
      %p46 = por %p44, %p45
      %p47 = scmp.ne.s32.totalorder %s36, %s37
      %p48 = scmp.eq.s32.totalorder %s28, 0
      %p49 = por %p47, %p48
      %p50 = scmp.ne.s32.totalorder %s36, %s37
      %p51 = scmp.eq.s32.totalorder %s29, 1
      %p52 = por %p50, %p51
      %p54 = scmp.ne.s32.totalorder %s37, %s53
      %p55 = scmp.eq.s32.totalorder %s29, 0
      %p56 = por %p54, %p55
      %s58 = sadd.s32 %s57, 1
      %p61 = scmp.eq.s32.totalorder %s23, 1
      %p62 = scmp.ne.s32.totalorder %s57, %s59
      %p63 = scmp.eq.s32.totalorder %s23, 0
      %p64 = por %p62, %p63
      %p65 = scmp.ne.s32.totalorder %s57, %s59
      %p66 = scmp.eq.s32.totalorder %s28, 1
      %p67 = por %p65, %p66
      %p68 = scmp.ne.s32.totalorder %s59, %s60
      %p69 = scmp.eq.s32.totalorder %s28, 0
      %p70 = por %p68, %p69
      %p71 = scmp.ne.s32.totalorder %s59, %s60
      %p72 = scmp.eq.s32.totalorder %s29, 1
      %p73 = por %p71, %p72
      %p75 = scmp.ne.s32.totalorder %s60, %s74
      %p76 = scmp.eq.s32.totalorder %s29, 0
      %p77 = por %p75, %p76
      %s79 = sadd.s32 %s78, 1
      %p82 = scmp.eq.s32.totalorder %s23, 1
      %p83 = scmp.ne.s32.totalorder %s78, %s80
      %p84 = scmp.eq.s32.totalorder %s23, 0
      %p85 = por %p83, %p84
      %p86 = scmp.ne.s32.totalorder %s78, %s80
      %p87 = scmp.eq.s32.totalorder %s28, 1
      %p88 = por %p86, %p87
      %p89 = scmp.ne.s32.totalorder %s80, %s81
      %p90 = scmp.eq.s32.totalorder %s28, 0
      %p91 = por %p89, %p90
      %p92 = scmp.ne.s32.totalorder %s80, %s81
      %p93 = scmp.eq.s32.totalorder %s29, 1
      %p94 = por %p92, %p93
      %p96 = scmp.ne.s32.totalorder %s81, %s95
      %p97 = scmp.eq.s32.totalorder %s29, 0
      %p98 = por %p96, %p97
      %s100 = sadd.s32 %s99, 1
      %p103 = scmp.eq.s32.totalorder %s23, 1
      %p104 = scmp.ne.s32.totalorder %s99, %s101
      %p105 = scmp.eq.s32.totalorder %s23, 0
      %p106 = por %p104, %p105
      %p107 = scmp.ne.s32.totalorder %s99, %s101
      %p108 = scmp.eq.s32.totalorder %s28, 1
      %p109 = por %p107, %p108
      %p110 = scmp.ne.s32.totalorder %s101, %s102
      %p111 = scmp.eq.s32.totalorder %s28, 0
      %p112 = por %p110, %p111
      %p113 = scmp.ne.s32.totalorder %s101, %s102
      %p114 = scmp.eq.s32.totalorder %s29, 1
      %p115 = por %p113, %p114
      %p117 = scmp.ne.s32.totalorder %s102, %s116
      %p118 = scmp.eq.s32.totalorder %s29, 0
      %p119 = por %p117, %p118
      %s121 = sadd.s32 %s120, 1
      %p124 = scmp.eq.s32.totalorder %s23, 1
      %p125 = scmp.ne.s32.totalorder %s120, %s122
      %p126 = scmp.eq.s32.totalorder %s23, 0
      %p127 = por %p125, %p126
      %p128 = scmp.ne.s32.totalorder %s120, %s122
      %p129 = scmp.eq.s32.totalorder %s28, 1
      %p130 = por %p128, %p129
      %p131 = scmp.ne.s32.totalorder %s122, %s123
      %p132 = scmp.eq.s32.totalorder %s28, 0
      %p133 = por %p131, %p132
      %p134 = scmp.ne.s32.totalorder %s122, %s123
      %p135 = scmp.eq.s32.totalorder %s29, 1
      %p136 = por %p134, %p135
      %p138 = scmp.ne.s32.totalorder %s123, %s137
      %p139 = scmp.eq.s32.totalorder %s29, 0
      %p140 = por %p138, %p139
      %s142 = sadd.s32 %s141, 1
      %p145 = scmp.eq.s32.totalorder %s23, 1
      %p146 = scmp.ne.s32.totalorder %s141, %s143
      %p147 = scmp.eq.s32.totalorder %s23, 0
      %p148 = por %p146, %p147
      %p149 = scmp.ne.s32.totalorder %s141, %s143
      %p150 = scmp.eq.s32.totalorder %s28, 1
      %p151 = por %p149, %p150
      %p152 = scmp.ne.s32.totalorder %s143, %s144
      %p153 = scmp.eq.s32.totalorder %s28, 0
      %p154 = por %p152, %p153
      %p155 = scmp.ne.s32.totalorder %s143, %s144
      %p156 = scmp.eq.s32.totalorder %s29, 1
      %p157 = por %p155, %p156
      %p159 = scmp.ne.s32.totalorder %s144, %s158
      %p160 = scmp.eq.s32.totalorder %s29, 0
      %p161 = por %p159, %p160
      %s163 = sadd.s32 %s162, 1
      %p166 = scmp.eq.s32.totalorder %s23, 1
      %p167 = scmp.ne.s32.totalorder %s162, %s164
      %p168 = scmp.eq.s32.totalorder %s23, 0
      %p169 = por %p167, %p168
      %p170 = scmp.ne.s32.totalorder %s162, %s164
      %p171 = scmp.eq.s32.totalorder %s28, 1
      %p172 = por %p170, %p171
      %p173 = scmp.ne.s32.totalorder %s164, %s165
      %p174 = scmp.eq.s32.totalorder %s28, 0
      %p175 = por %p173, %p174
      %p176 = scmp.ne.s32.totalorder %s164, %s165
      %p177 = scmp.eq.s32.totalorder %s29, 1
      %p178 = por %p176, %p177
      %p180 = scmp.ne.s32.totalorder %s165, %s179
      %p181 = scmp.eq.s32.totalorder %s29, 0
      %p182 = por %p180, %p181
      %s184 = sadd.s32 %s183, 1
      %p187 = scmp.eq.s32.totalorder %s23, 1
      %p188 = scmp.ne.s32.totalorder %s183, %s185
      %p189 = scmp.eq.s32.totalorder %s23, 0
      %p190 = por %p188, %p189
      %p191 = scmp.ne.s32.totalorder %s183, %s185
      %p192 = scmp.eq.s32.totalorder %s28, 1
      %p193 = por %p191, %p192
      %p194 = scmp.ne.s32.totalorder %s185, %s186
      %p195 = scmp.eq.s32.totalorder %s28, 0
      %p196 = por %p194, %p195
      %p197 = scmp.ne.s32.totalorder %s185, %s186
      %p198 = scmp.eq.s32.totalorder %s29, 1
      %p199 = por %p197, %p198
      %p201 = scmp.ne.s32.totalorder %s186, %s200
      %p202 = scmp.eq.s32.totalorder %s29, 0
      %p203 = por %p201, %p202
      %s205 = sadd.s32 %s204, 1
      %p208 = scmp.eq.s32.totalorder %s23, 1
      %p209 = scmp.ne.s32.totalorder %s204, %s206
      %p210 = scmp.eq.s32.totalorder %s23, 0
      %p211 = por %p209, %p210
      %p212 = scmp.ne.s32.totalorder %s204, %s206
      %p213 = scmp.eq.s32.totalorder %s28, 1
      %p214 = por %p212, %p213
      %p215 = scmp.ne.s32.totalorder %s206, %s207
      %p216 = scmp.eq.s32.totalorder %s28, 0
      %p217 = por %p215, %p216
      %p218 = scmp.ne.s32.totalorder %s206, %s207
      %p219 = scmp.eq.s32.totalorder %s29, 1
      %p220 = por %p218, %p219
      %p222 = scmp.ne.s32.totalorder %s207, %s221
      %p223 = scmp.eq.s32.totalorder %s29, 0
      %p224 = por %p222, %p223
      %s226 = sadd.s32 %s225, 1
      %p229 = scmp.eq.s32.totalorder %s23, 1
      %p230 = scmp.ne.s32.totalorder %s225, %s227
      %p231 = scmp.eq.s32.totalorder %s23, 0
      %p232 = por %p230, %p231
      %p233 = scmp.ne.s32.totalorder %s225, %s227
      %p234 = scmp.eq.s32.totalorder %s28, 1
      %p235 = por %p233, %p234
      %p236 = scmp.ne.s32.totalorder %s227, %s228
      %p237 = scmp.eq.s32.totalorder %s28, 0
      %p238 = por %p236, %p237
      %p239 = scmp.ne.s32.totalorder %s227, %s228
      %p240 = scmp.eq.s32.totalorder %s29, 1
      %p241 = por %p239, %p240
      %p243 = scmp.ne.s32.totalorder %s228, %s242
      %p244 = scmp.eq.s32.totalorder %s29, 0
      %p245 = por %p243, %p244
      %s247 = sadd.s32 %s246, 1
      %p250 = scmp.eq.s32.totalorder %s23, 1
      %p251 = scmp.ne.s32.totalorder %s246, %s248
      %p252 = scmp.eq.s32.totalorder %s23, 0
      %p253 = por %p251, %p252
      %p254 = scmp.ne.s32.totalorder %s246, %s248
      %p255 = scmp.eq.s32.totalorder %s28, 1
      %p256 = por %p254, %p255
      %p257 = scmp.ne.s32.totalorder %s248, %s249
      %p258 = scmp.eq.s32.totalorder %s28, 0
      %p259 = por %p257, %p258
      %p260 = scmp.ne.s32.totalorder %s248, %s249
      %p261 = scmp.eq.s32.totalorder %s29, 1
      %p262 = por %p260, %p261
      %p264 = scmp.ne.s32.totalorder %s249, %s263
      %p265 = scmp.eq.s32.totalorder %s29, 0
      %p266 = por %p264, %p265
      %s268 = sadd.s32 %s267, 1
      %p271 = scmp.eq.s32.totalorder %s23, 1
      %p272 = scmp.ne.s32.totalorder %s267, %s269
      %p273 = scmp.eq.s32.totalorder %s23, 0
      %p274 = por %p272, %p273
      %p275 = scmp.ne.s32.totalorder %s267, %s269
      %p276 = scmp.eq.s32.totalorder %s28, 1
      %p277 = por %p275, %p276
      %p278 = scmp.ne.s32.totalorder %s269, %s270
      %p279 = scmp.eq.s32.totalorder %s28, 0
      %p280 = por %p278, %p279
      %p281 = scmp.ne.s32.totalorder %s269, %s270
      %p282 = scmp.eq.s32.totalorder %s29, 1
      %p283 = por %p281, %p282
      %p285 = scmp.ne.s32.totalorder %s270, %s284
      %p286 = scmp.eq.s32.totalorder %s29, 0
      %p287 = por %p285, %p286
      %s289 = sadd.s32 %s288, 1
      %p292 = scmp.eq.s32.totalorder %s23, 1
      %p293 = scmp.ne.s32.totalorder %s288, %s290
      %p294 = scmp.eq.s32.totalorder %s23, 0
      %p295 = por %p293, %p294
      %p296 = scmp.ne.s32.totalorder %s288, %s290
      %p297 = scmp.eq.s32.totalorder %s28, 1
      %p298 = por %p296, %p297
      %p299 = scmp.ne.s32.totalorder %s290, %s291
      %p300 = scmp.eq.s32.totalorder %s28, 0
      %p301 = por %p299, %p300
      %p302 = scmp.ne.s32.totalorder %s290, %s291
      %p303 = scmp.eq.s32.totalorder %s29, 1
      %p304 = por %p302, %p303
      %p306 = scmp.ne.s32.totalorder %s291, %s305
      %p307 = scmp.eq.s32.totalorder %s29, 0
      %p308 = por %p306, %p307
      %s310 = sadd.s32 %s309, 1
      %p313 = scmp.eq.s32.totalorder %s23, 1
      %p314 = scmp.ne.s32.totalorder %s309, %s311
      %p315 = scmp.eq.s32.totalorder %s23, 0
      %p316 = por %p314, %p315
      %p317 = scmp.ne.s32.totalorder %s309, %s311
      %p318 = scmp.eq.s32.totalorder %s28, 1
      %p319 = por %p317, %p318
      %p320 = scmp.ne.s32.totalorder %s311, %s312
      %p321 = scmp.eq.s32.totalorder %s28, 0
      %p322 = por %p320, %p321
      %p323 = scmp.ne.s32.totalorder %s311, %s312
      %p324 = scmp.eq.s32.totalorder %s29, 1
      %p325 = por %p323, %p324
      %p327 = scmp.ne.s32.totalorder %s312, %s326
      %p328 = scmp.eq.s32.totalorder %s29, 0
      %p329 = por %p327, %p328
      %s330 = ssub.s32 %s23, %s30
      %p331 = scmp.eq.s32.totalorder %s330, 0
      %s333 = sadd.s32 %s332, 1
      %s334 = scalar_select %p331, %s332, %s333
      %p337 = pneg %p331
      %p338 = scmp.eq.s32.totalorder %s23, 1
      %p339 = por %p337, %p338
      %p340 = scmp.ne.s32.totalorder %s332, %s335
      %p341 = scmp.eq.s32.totalorder %s23, 0
      %p342 = por %p340, %p341
      %p343 = scmp.ne.s32.totalorder %s332, %s335
      %p344 = scmp.eq.s32.totalorder %s28, 1
      %p345 = por %p343, %p344
      %p346 = scmp.ne.s32.totalorder %s335, %s336
      %p347 = scmp.eq.s32.totalorder %s28, 0
      %p348 = por %p346, %p347
      %p349 = scmp.ne.s32.totalorder %s335, %s336
      %p350 = scmp.eq.s32.totalorder %s29, 1
      %p351 = por %p349, %p350
      %p353 = scmp.ne.s32.totalorder %s336, %s352
      %p354 = scmp.eq.s32.totalorder %s29, 0
      %p355 = por %p353, %p354
      %p356 = scmp.le.s32.totalorder 1, %s23
      %p357 = scmp.lt.s32.totalorder %s23, 3
      %p358 = pnand %p356, %p357
      %p359 = pneg %p358
      // Predicated region
      $region9: #{classifier_cnn2_forward.1} parent=5 // pred_check
        _
      $region10: #{classifier_cnn2_forward.1} parent=5 // pred_check_branch
        %361 = sbr.rel (%p358) target = $region12
      $region11: #{classifier_cnn2_forward.1} parent=5 // pred_region
        %s362 = ssub.s32 %s23, 1
        // Predicated region
        $region13: #{classifier_cnn2_forward.1} parent=11 // pred_check
          %p363 = pneg %p70
        $region14: #{classifier_cnn2_forward.1} parent=11 // pred_check_branch
          %365 = sbr.rel (%p363) target = $region16
        $region15: #{classifier_cnn2_forward.1} parent=11 // pred_region
          _
        $region16: #{classifier_cnn2_forward.1} parent=11 // pred_fallthru
          _
        // Predicated region
        $region17: #{classifier_cnn2_forward.1} parent=11 // pred_check
          %p366 = pneg %p91
        $region18: #{classifier_cnn2_forward.1} parent=11 // pred_check_branch
          %368 = sbr.rel (%p366) target = $region20
        $region19: #{classifier_cnn2_forward.1} parent=11 // pred_region
          _
        $region20: #{classifier_cnn2_forward.1} parent=11 // pred_fallthru
          _
        // Predicated region
        $region21: #{classifier_cnn2_forward.1} parent=11 // pred_check
          %p369 = pneg %p112
        $region22: #{classifier_cnn2_forward.1} parent=11 // pred_check_branch
          %371 = sbr.rel (%p369) target = $region24
        $region23: #{classifier_cnn2_forward.1} parent=11 // pred_region
          _
        $region24: #{classifier_cnn2_forward.1} parent=11 // pred_fallthru
          _
        // Predicated region
        $region25: #{classifier_cnn2_forward.1} parent=11 // pred_check
          %p372 = pneg %p133
        $region26: #{classifier_cnn2_forward.1} parent=11 // pred_check_branch
          %374 = sbr.rel (%p372) target = $region28
        $region27: #{classifier_cnn2_forward.1} parent=11 // pred_region
          _
        $region28: #{classifier_cnn2_forward.1} parent=11 // pred_fallthru
          _
        // Predicated region
        $region29: #{classifier_cnn2_forward.1} parent=11 // pred_check
          %p375 = pneg %p154
        $region30: #{classifier_cnn2_forward.1} parent=11 // pred_check_branch
          %377 = sbr.rel (%p375) target = $region32
        $region31: #{classifier_cnn2_forward.1} parent=11 // pred_region
          _
        $region32: #{classifier_cnn2_forward.1} parent=11 // pred_fallthru
          _
        // Predicated region
        $region33: #{classifier_cnn2_forward.1} parent=11 // pred_check
          %p378 = pneg %p175
        $region34: #{classifier_cnn2_forward.1} parent=11 // pred_check_branch
          %380 = sbr.rel (%p378) target = $region36
        $region35: #{classifier_cnn2_forward.1} parent=11 // pred_region
          _
        $region36: #{classifier_cnn2_forward.1} parent=11 // pred_fallthru
          _
        // Predicated region
        $region37: #{classifier_cnn2_forward.1} parent=11 // pred_check
          %p381 = pneg %p196
        $region38: #{classifier_cnn2_forward.1} parent=11 // pred_check_branch
          %383 = sbr.rel (%p381) target = $region40
        $region39: #{classifier_cnn2_forward.1} parent=11 // pred_region
          _
        $region40: #{classifier_cnn2_forward.1} parent=11 // pred_fallthru
          _
        // Predicated region
        $region41: #{classifier_cnn2_forward.1} parent=11 // pred_check
          %p384 = pneg %p217
        $region42: #{classifier_cnn2_forward.1} parent=11 // pred_check_branch
          %386 = sbr.rel (%p384) target = $region44
        $region43: #{classifier_cnn2_forward.1} parent=11 // pred_region
          _
        $region44: #{classifier_cnn2_forward.1} parent=11 // pred_fallthru
          _
        // Predicated region
        $region45: #{classifier_cnn2_forward.1} parent=11 // pred_check
          %p387 = pneg %p238
        $region46: #{classifier_cnn2_forward.1} parent=11 // pred_check_branch
          %389 = sbr.rel (%p387) target = $region48
        $region47: #{classifier_cnn2_forward.1} parent=11 // pred_region
          _
        $region48: #{classifier_cnn2_forward.1} parent=11 // pred_fallthru
          _
        // Predicated region
        $region49: #{classifier_cnn2_forward.1} parent=11 // pred_check
          %p390 = pneg %p259
        $region50: #{classifier_cnn2_forward.1} parent=11 // pred_check_branch
          %392 = sbr.rel (%p390) target = $region52
        $region51: #{classifier_cnn2_forward.1} parent=11 // pred_region
          _
        $region52: #{classifier_cnn2_forward.1} parent=11 // pred_fallthru
          _
        // Predicated region
        $region53: #{classifier_cnn2_forward.1} parent=11 // pred_check
          %p393 = pneg %p280
        $region54: #{classifier_cnn2_forward.1} parent=11 // pred_check_branch
          %395 = sbr.rel (%p393) target = $region56
        $region55: #{classifier_cnn2_forward.1} parent=11 // pred_region
          _
        $region56: #{classifier_cnn2_forward.1} parent=11 // pred_fallthru
          _
        // Predicated region
        $region57: #{classifier_cnn2_forward.1} parent=11 // pred_check
          %p396 = pneg %p301
        $region58: #{classifier_cnn2_forward.1} parent=11 // pred_check_branch
          %398 = sbr.rel (%p396) target = $region60
        $region59: #{classifier_cnn2_forward.1} parent=11 // pred_region
          _
        $region60: #{classifier_cnn2_forward.1} parent=11 // pred_fallthru
          _
        // Predicated region
        $region61: #{classifier_cnn2_forward.1} parent=11 // pred_check
          %p399 = pneg %p322
        $region62: #{classifier_cnn2_forward.1} parent=11 // pred_check_branch
          %401 = sbr.rel (%p399) target = $region64
        $region63: #{classifier_cnn2_forward.1} parent=11 // pred_region
          _
        $region64: #{classifier_cnn2_forward.1} parent=11 // pred_fallthru
          _
      $region12: #{classifier_cnn2_forward.1} parent=5 // pred_fallthru
        _
      %p402 = scmp.lt.s32.totalorder %s23, 2
      // Predicated region
      $region65: #{classifier_cnn2_forward.1} parent=5 // pred_check
        %p403 = pneg %p402
      $region66: #{classifier_cnn2_forward.1} parent=5 // pred_check_branch
        %405 = sbr.rel (%p403) target = $region68
      $region67: #{classifier_cnn2_forward.1} parent=5 // pred_region
        // Predicated region
        $region69: #{classifier_cnn2_forward.1} parent=67 // pred_check
          %p406 = pneg %p43
        $region70: #{classifier_cnn2_forward.1} parent=67 // pred_check_branch
          %408 = sbr.rel (%p406) target = $region72
        $region71: #{classifier_cnn2_forward.1} parent=67 // pred_region
          %p409 = scmp.lt.s32.totalorder %s23, 1
          %s410 = scalar_select %p409, %s23, 1
          %s411 = smul.addr %s410, 72
          %s412 = smul.addr %s411, 8
          %s413 = scalar_lea.vmem %s0, %s412
        $region72: #{classifier_cnn2_forward.1} parent=67 // pred_fallthru
          _
      $region68: #{classifier_cnn2_forward.1} parent=5 // pred_fallthru
        _
      %p414 = scmp.le.s32.totalorder 1, %s23
      %p415 = scmp.lt.s32.totalorder %s23, 3
      %p416 = pnand %p414, %p415
      %p417 = pneg %p416
      // Predicated region
      $region73: #{classifier_cnn2_forward.1} parent=5 // pred_check
        _
      $region74: #{classifier_cnn2_forward.1} parent=5 // pred_check_branch
        %419 = sbr.rel (%p416) target = $region76
      $region75: #{classifier_cnn2_forward.1} parent=5 // pred_region
        %s420 = ssub.s32 %s23, 1
        %p421 = scmp.lt.s32.totalorder %s28, 1
        %s422 = scalar_select %p421, %s28, 1
        %s423 = smul.addr %s422, 72
        %s424 = smul.addr %s423, 8
        %s425 = scalar_lea.vmem %s0, %s424
        %p426 = pneg %p49
        %p427 = pneg %p46
        %p428 = pneg %p70
        %p429 = pneg %p67
        %p430 = pneg %p91
        %p431 = pneg %p88
        %p432 = pneg %p112
        %p433 = pneg %p109
        %p434 = pneg %p133
        %p435 = pneg %p130
        %p436 = pneg %p154
        %p437 = pneg %p151
        %p438 = pneg %p175
        %p439 = pneg %p172
        %p440 = pneg %p196
        %p441 = pneg %p193
        %p442 = pneg %p217
        %p443 = pneg %p214
        %p444 = pneg %p238
        %p445 = pneg %p235
        %p446 = pneg %p259
        %p447 = pneg %p256
        %p448 = pneg %p280
        %p449 = pneg %p277
        %p450 = pneg %p301
        %p451 = pneg %p298
        %p452 = pneg %p322
        %p453 = pneg %p319
        %p454 = pneg %p348
        %p455 = pneg %p345
        %s456 = sand.u32 %s335, 1
        %s457 = scalar_lea.sflag [#allocation7], %s456
        %s458 = sand.u32 %s335, 1
        %s459 = scalar_lea.vmem [#allocation6], %s458
        %p460 = scmp.lt.s32.totalorder %s28, 1
        %s461 = scalar_select %p460, %s28, 1
        %s462 = smul.addr %s461, 72
        %s463 = smul.addr %s462, 8
        %s464 = scalar_lea.vmem %s0, %s463
        %vm465 = vcmask 261120
        %466 = vst.msk [vmem:[#allocation2] sm:$0xff] %vm465, 0.0
        %467 = vst.msk [vmem:[#allocation2 + $0x8] sm:$0xff] %vm465, 0.0
        %468 = vst.msk [vmem:[#allocation2 + $0x10] sm:$0xff] %vm465, 0.0
        %469 = vst.msk [vmem:[#allocation2 + $0x18] sm:$0xff] %vm465, 0.0
        %470 = vst.msk [vmem:[#allocation2 + $0x20] sm:$0xff] %vm465, 0.0
        %471 = vst.msk [vmem:[#allocation2 + $0x128] sm:$0xff] %vm465, 0.0
        %472 = vst.msk [vmem:[#allocation2 + $0x130] sm:$0xff] %vm465, 0.0
        %473 = vst.msk [vmem:[#allocation2 + $0x138] sm:$0xff] %vm465, 0.0
        %474 = vst.msk [vmem:[#allocation2 + $0x140] sm:$0xff] %vm465, 0.0
        %475 = vst.msk [vmem:[#allocation2 + $0x148] sm:$0xff] %vm465, 0.0
        %vm476 = vcmask 523264
        %477 = vst.msk [vmem:[#allocation3] sm:$0xff] %vm476, 0.0
        %478 = vst.msk [vmem:[#allocation3 + $0x8] sm:$0xff] %vm476, 0.0
        %479 = vst.msk [vmem:[#allocation3 + $0x50] sm:$0xff] %vm476, 0.0
        %480 = vst.msk [vmem:[#allocation3 + $0x58] sm:$0xff] %vm476, 0.0
        %v481 = vld [vmem:[%s464] sm:$0xff]
        %v482 = vld [vmem:[%s464 + $0x8] sm:$0xff]
        %v483 = vld [vmem:[%s464 + $0x10] sm:$0xff]
        %v484 = vld [vmem:[%s464 + $0x18] sm:$0xff]
        %v485 = vld [vmem:[%s464 + $0x20] sm:$0xff]
        %v486 = vld [vmem:[%s464 + $0x28] sm:$0xff]
        %v487 = vld [vmem:[%s464 + $0x30] sm:$0xff]
        %v488 = vld [vmem:[%s464 + $0x38] sm:$0xff]
        %v489 = vld [vmem:[%s464 + $0x40] sm:$0xff]
        %v490 = vld [vmem:[%s464 + $0x48] sm:$0xff]
        %v491 = vld [vmem:[%s464 + $0x50] sm:$0xff]
        %v492 = vld [vmem:[%s464 + $0x58] sm:$0xff]
        %v493 = vld [vmem:[%s464 + $0x60] sm:$0xff]
        %v494 = vld [vmem:[%s464 + $0x68] sm:$0xff]
        %v495 = vld [vmem:[%s464 + $0x70] sm:$0xff]
        %v496 = vld [vmem:[%s464 + $0x78] sm:$0xff]
        %v497 = vld [vmem:[%s464 + $0x80] sm:$0xff]
        %v498 = vld [vmem:[%s464 + $0x88] sm:$0xff]
        %v499 = vld [vmem:[%s464 + $0x90] sm:$0xff]
        %v500 = vld [vmem:[%s464 + $0x98] sm:$0xff]
        %v501 = vld [vmem:[%s464 + $0xa0] sm:$0xff]
        %v502 = vld [vmem:[%s464 + $0xa8] sm:$0xff]
        %v503 = vld [vmem:[%s464 + $0xb0] sm:$0xff]
        %v504 = vld [vmem:[%s464 + $0xb8] sm:$0xff]
        %v505 = vld [vmem:[%s464 + $0xc0] sm:$0xff]
        %v506 = vld [vmem:[%s464 + $0xc8] sm:$0xff]
        %v507 = vld [vmem:[%s464 + $0xd0] sm:$0xff]
        %v508 = vld [vmem:[%s464 + $0xd8] sm:$0xff]
        %v509 = vld [vmem:[%s464 + $0xe0] sm:$0xff]
        %v510 = vld [vmem:[%s464 + $0xe8] sm:$0xff]
        %v511 = vld [vmem:[%s464 + $0xf0] sm:$0xff]
        %v512 = vld [vmem:[%s464 + $0xf8] sm:$0xff]
        %v513 = vld [vmem:[%s464 + $0x100] sm:$0xff]
        %v514 = vld [vmem:[%s464 + $0x108] sm:$0xff]
        %v515 = vld [vmem:[%s464 + $0x110] sm:$0xff]
        %v516 = vld [vmem:[%s464 + $0x118] sm:$0xff]
        %v517 = vld [vmem:[%s464 + $0x120] sm:$0xff]
        %v518 = vld [vmem:[%s464 + $0x128] sm:$0xff]
        %v519 = vld [vmem:[%s464 + $0x130] sm:$0xff]
        %v520 = vld [vmem:[%s464 + $0x138] sm:$0xff]
        %v521 = vld [vmem:[%s464 + $0x140] sm:$0xff]
        %v522 = vld [vmem:[%s464 + $0x148] sm:$0xff]
        %v523 = vld [vmem:[%s464 + $0x150] sm:$0xff]
        %v524 = vld [vmem:[%s464 + $0x158] sm:$0xff]
        %v525 = vld [vmem:[%s464 + $0x160] sm:$0xff]
        %v526 = vld [vmem:[%s464 + $0x168] sm:$0xff]
        %v527 = vld [vmem:[%s464 + $0x170] sm:$0xff]
        %v528 = vld [vmem:[%s464 + $0x178] sm:$0xff]
        %v529 = vld [vmem:[%s464 + $0x180] sm:$0xff]
        %v530 = vld [vmem:[%s464 + $0x188] sm:$0xff]
        %v531 = vld [vmem:[%s464 + $0x190] sm:$0xff]
        %v532 = vld [vmem:[%s464 + $0x198] sm:$0xff]
        %v533 = vld [vmem:[%s464 + $0x1a0] sm:$0xff]
        %v534 = vld [vmem:[%s464 + $0x1a8] sm:$0xff]
        %v535 = vld [vmem:[%s464 + $0x1b0] sm:$0xff]
        %v536 = vld [vmem:[%s464 + $0x1b8] sm:$0xff]
        %v537 = vld [vmem:[%s464 + $0x1c0] sm:$0xff]
        %v538 = vld [vmem:[%s464 + $0x1c8] sm:$0xff]
        %v539 = vld [vmem:[%s464 + $0x1d0] sm:$0xff]
        %v540 = vld [vmem:[%s464 + $0x1d8] sm:$0xff]
        %v541 = vld [vmem:[%s464 + $0x1e0] sm:$0xff]
        %v542 = vld [vmem:[%s464 + $0x1e8] sm:$0xff]
        %v543 = vld [vmem:[%s464 + $0x1f0] sm:$0xff]
        %v544 = vld [vmem:[%s464 + $0x1f8] sm:$0xff]
        %v545 = vld [vmem:[%s464 + $0x200] sm:$0xff]
        %v546 = vld [vmem:[%s464 + $0x208] sm:$0xff]
        %v547 = vld [vmem:[%s464 + $0x210] sm:$0xff]
        %v548 = vld [vmem:[%s464 + $0x218] sm:$0xff]
        %v549 = vld [vmem:[%s464 + $0x220] sm:$0xff]
        %v550 = vld [vmem:[%s464 + $0x228] sm:$0xff]
        %v551 = vld [vmem:[%s464 + $0x230] sm:$0xff]
        %v552 = vld [vmem:[%s464 + $0x238] sm:$0xff]
        %v553 = vld [vmem:[%s1] sm:$0xff]
        %v554 = vld [vmem:[%s1 + $0x8] sm:$0xff]
        %v555 = vld [vmem:[%s1 + $0x10] sm:$0xff]
        %v556 = vld [vmem:[%s1 + $0x18] sm:$0xff]
        %v557 = vld [vmem:[%s1 + $0x20] sm:$0xff]
        %v558 = vld [vmem:[%s1 + $0x28] sm:$0xff]
        %v559 = vld [vmem:[%s1 + $0x30] sm:$0x1]
        %vm560 = vcmask 400384
        %v562 = vsel %vm560, %v481, 0
        %v565 = vsel %vm560, %v482, 0
        %v568 = vsel %vm560, %v483, 0
        %v571 = vsel %vm560, %v484, 0
        %v574 = vsel %vm560, %v485, 0
        %v577 = vsel %vm560, %v486, 0
        %v580 = vsel %vm560, %v487, 0
        %v583 = vsel %vm560, %v488, 0
        %v586 = vsel %vm560, %v489, 0
        %v589 = vsel %vm560, %v490, 0
        %v592 = vsel %vm560, %v491, 0
        %v595 = vsel %vm560, %v492, 0
        %v598 = vsel %vm560, %v493, 0
        %v601 = vsel %vm560, %v494, 0
        %v604 = vsel %vm560, %v495, 0
        %v607 = vsel %vm560, %v496, 0
        %v610 = vsel %vm560, %v497, 0
        %v613 = vsel %vm560, %v498, 0
        %v616 = vsel %vm560, %v499, 0
        %v619 = vsel %vm560, %v500, 0
        %v622 = vsel %vm560, %v501, 0
        %v625 = vsel %vm560, %v502, 0
        %v628 = vsel %vm560, %v503, 0
        %v631 = vsel %vm560, %v504, 0
        %v634 = vsel %vm560, %v505, 0
        %v637 = vsel %vm560, %v506, 0
        %v640 = vsel %vm560, %v507, 0
        %v643 = vsel %vm560, %v508, 0
        %v646 = vsel %vm560, %v509, 0
        %v649 = vsel %vm560, %v510, 0
        %v652 = vsel %vm560, %v511, 0
        %v655 = vsel %vm560, %v512, 0
        %v658 = vsel %vm560, %v513, 0
        %v661 = vsel %vm560, %v514, 0
        %v664 = vsel %vm560, %v515, 0
        %v667 = vsel %vm560, %v516, 0
        %v670 = vsel %vm560, %v517, 0
        %v673 = vsel %vm560, %v518, 0
        %v676 = vsel %vm560, %v519, 0
        %v679 = vsel %vm560, %v520, 0
        %v682 = vsel %vm560, %v521, 0
        %v685 = vsel %vm560, %v522, 0
        %v688 = vsel %vm560, %v523, 0
        %v691 = vsel %vm560, %v524, 0
        %v694 = vsel %vm560, %v525, 0
        %v697 = vsel %vm560, %v526, 0
        %v700 = vsel %vm560, %v527, 0
        %v703 = vsel %vm560, %v528, 0
        %v706 = vsel %vm560, %v529, 0
        %v709 = vsel %vm560, %v530, 0
        %v712 = vsel %vm560, %v531, 0
        %v715 = vsel %vm560, %v532, 0
        %v718 = vsel %vm560, %v533, 0
        %v721 = vsel %vm560, %v534, 0
        %v724 = vsel %vm560, %v535, 0
        %v727 = vsel %vm560, %v536, 0
        %v730 = vsel %vm560, %v537, 0
        %v733 = vsel %vm560, %v538, 0
        %v736 = vsel %vm560, %v539, 0
        %v739 = vsel %vm560, %v540, 0
        %v742 = vsel %vm560, %v541, 0
        %v745 = vsel %vm560, %v542, 0
        %v748 = vsel %vm560, %v543, 0
        %v751 = vsel %vm560, %v544, 0
        %v754 = vsel %vm560, %v545, 0
        %v757 = vsel %vm560, %v546, 0
        %v760 = vsel %vm560, %v547, 0
        %v763 = vsel %vm560, %v548, 0
        %v766 = vsel %vm560, %v549, 0
        %v769 = vsel %vm560, %v550, 0
        %v772 = vsel %vm560, %v551, 0
        %v775 = vsel %vm560, %v552, 0
        %vm777 = vcmask 1040384
        %v779 = vsel %vm777, %v559, 0
        %781 = vmatprep.subr.mxu0 0.0
        %782 = vmatpush1.msra.mxu0 %v553
        %783 = vmatprep.subr.mxu0 0.0
        %784 = vmatpush1.msra.mxu0 %v554
        %785 = vmatprep.subr.mxu0 0.0
        %786 = vmatpush1.msra.mxu0 %v555
        %787 = vmatprep.subr.mxu0 0.0
        %788 = vmatpush1.msra.mxu0 %v556
        %789 = vmatprep.subr.mxu0 0.0
        %790 = vmatpush1.msra.mxu0 %v557
        %791 = vmatprep.subr.mxu0 0.0
        %792 = vmatpush1.msra.mxu0 %v558
        %793 = vmatprep.subr.mxu0 0.0
        %794 = vmatpush1.msra.mxu0 %v779
        %795 = vmatprep.subr.mxu0 0.0
        %796 = vmatpush1.msra.mxu0 0.0
        %797 = vmatprep.subr.mxu0 0.0
        %798 = vmatpush1.msra.mxu0 0.0
        %799 = vmatprep.subr.mxu0 0.0
        %800 = vmatpush1.msra.mxu0 0.0
        %801 = vmatprep.subr.mxu0 0.0
        %802 = vmatpush1.msra.mxu0 0.0
        %803 = vmatprep.subr.mxu0 0.0
        %804 = vmatpush1.msra.mxu0 0.0
        %805 = vmatprep.subr.mxu0 0.0
        %806 = vmatpush1.msra.mxu0 0.0
        %807 = vmatprep.subr.mxu0 0.0
        %808 = vmatpush1.msra.mxu0 0.0
        %809 = vmatprep.subr.mxu0 0.0
        %810 = vmatpush1.msra.mxu0 0.0
        %811 = vmatprep.subr.mxu0 0.0
        %812 = vmatpush1.msra.mxu0 0.0
        %813 = vmatprep.subr.mxu0 0.0
        %814 = vmatpush1.msra.mxu0 0.0
        %815 = vmatprep.subr.mxu0 0.0
        %816 = vmatpush1.msra.mxu0 0.0
        %817 = vmatprep.subr.mxu0 0.0
        %818 = vmatpush1.msra.mxu0 0.0
        %819 = vmatprep.subr.mxu0 0.0
        %820 = vmatpush1.msra.mxu0 0.0
        %821 = vmatprep.subr.mxu0 0.0
        %822 = vmatpush1.msra.mxu0 0.0
        %823 = vmatprep.subr.mxu0 0.0
        %824 = vmatpush1.msra.mxu0 0.0
        %825 = vmatprep.subr.mxu0 0.0
        %826 = vmatpush1.msra.mxu0 0.0
        %827 = vmatprep.subr.mxu0 0.0
        %828 = vmatpush1.msra.mxu0 0.0
        %829 = vmatprep.subr.mxu0 0.0
        %830 = vmatpush1.msra.mxu0 0.0
        %831 = vmatprep.subr.mxu0 0.0
        %832 = vmatpush1.msra.mxu0 0.0
        %833 = vmatprep.subr.mxu0 0.0
        %834 = vmatpush1.msra.mxu0 0.0
        %835 = vmatprep.subr.mxu0 0.0
        %836 = vmatpush1.msra.mxu0 0.0
        %837 = vmatprep.subr.mxu0 0.0
        %838 = vmatpush1.msra.mxu0 0.0
        %839 = vmatprep.subr.mxu0 0.0
        %840 = vmatpush1.msra.mxu0 0.0
        %841 = vmatprep.subr.mxu0 0.0
        %842 = vmatpush1.msra.mxu0 0.0
        %843 = vmatprep.subr.mxu0 0.0
        %844 = vmatpush1.msra.mxu0 0.0
        %845 = vmatprep.mubr.f32.mxu0 0.0
        %846 = vmatmul.mubr.f32.gmra.mrb[0].mxu0 %v562
        %v847 = vpop.f32.mrb[0].mxu0
        %v848 = vadd.f32 0.0, %v847
        %v849 = vpop.f32.mrb[0].mxu0
        %850 = vmatprep.mubr.f32.mxu0 0.0
        %851 = vmatmul.mubr.f32.gmra.mrb[0].mxu0 %v565
        %v852 = vpop.f32.mrb[0].mxu0
        %v853 = vadd.f32 0.0, %v852
        %v854 = vpop.f32.mrb[0].mxu0
        %855 = vmatprep.mubr.f32.mxu0 0.0
        %856 = vmatmul.mubr.f32.gmra.mrb[0].mxu0 %v568
        %v857 = vpop.f32.mrb[0].mxu0
        %v858 = vadd.f32 0.0, %v857
        %v859 = vpop.f32.mrb[0].mxu0
        %860 = vmatprep.mubr.f32.mxu0 0.0
        %861 = vmatmul.mubr.f32.gmra.mrb[0].mxu0 %v571
        %v862 = vpop.f32.mrb[0].mxu0
        %v863 = vadd.f32 0.0, %v862
        %v864 = vpop.f32.mrb[0].mxu0
        %865 = vmatprep.mubr.f32.mxu0 0.0
        %866 = vmatmul.mubr.f32.gmra.mrb[0].mxu0 %v574
        %v867 = vpop.f32.mrb[0].mxu0
        %v868 = vadd.f32 0.0, %v867
        %v869 = vpop.f32.mrb[0].mxu0
        %870 = vmatprep.mubr.f32.mxu0 0.0
        %871 = vmatmul.mubr.f32.gmra.mrb[0].mxu0 %v577
        %v872 = vpop.f32.mrb[0].mxu0
        %v873 = vadd.f32 0.0, %v872
        %v874 = vpop.f32.mrb[0].mxu0
        %875 = vmatprep.mubr.f32.mxu0 0.0
        %876 = vmatmul.mubr.f32.gmra.mrb[0].mxu0 %v580
        %v877 = vpop.f32.mrb[0].mxu0
        %v878 = vadd.f32 0.0, %v877
        %v879 = vpop.f32.mrb[0].mxu0
        %880 = vmatprep.mubr.f32.mxu0 0.0
        %881 = vmatmul.mubr.f32.gmra.mrb[0].mxu0 %v583
        %v882 = vpop.f32.mrb[0].mxu0
        %v883 = vadd.f32 0.0, %v882
        %v884 = vpop.f32.mrb[0].mxu0
        %885 = vmatprep.mubr.f32.mxu0 0.0
        %886 = vmatmul.mubr.f32.gmra.mrb[0].mxu0 %v586
        %v887 = vpop.f32.mrb[0].mxu0
        %v888 = vadd.f32 0.0, %v887
        %v889 = vpop.f32.mrb[0].mxu0
        %890 = vmatprep.mubr.f32.mxu0 0.0
        %891 = vmatmul.mubr.f32.gmra.mrb[0].mxu0 %v589
        %v892 = vpop.f32.mrb[0].mxu0
        %v893 = vadd.f32 0.0, %v892
        %v894 = vpop.f32.mrb[0].mxu0
        %895 = vmatprep.mubr.f32.mxu0 0.0
        %896 = vmatmul.mubr.f32.gmra.mrb[0].mxu0 %v592
        %v897 = vpop.f32.mrb[0].mxu0
        %v898 = vadd.f32 0.0, %v897
        %v899 = vpop.f32.mrb[0].mxu0
        %900 = vmatprep.mubr.f32.mxu0 0.0
        %901 = vmatmul.mubr.f32.gmra.mrb[0].mxu0 %v595
        %v902 = vpop.f32.mrb[0].mxu0
        %v903 = vadd.f32 0.0, %v902
        %v904 = vpop.f32.mrb[0].mxu0
        %905 = vmatprep.mubr.f32.mxu0 0.0
        %906 = vmatmul.mubr.f32.gmra.mrb[0].mxu0 %v598
        %v907 = vpop.f32.mrb[0].mxu0
        %v908 = vadd.f32 0.0, %v907
        %v909 = vpop.f32.mrb[0].mxu0
        %910 = vmatprep.mubr.f32.mxu0 0.0
        %911 = vmatmul.mubr.f32.gmra.mrb[0].mxu0 %v601
        %v912 = vpop.f32.mrb[0].mxu0
        %v913 = vadd.f32 0.0, %v912
        %v914 = vpop.f32.mrb[0].mxu0
        %915 = vmatprep.mubr.f32.mxu0 0.0
        %916 = vmatmul.mubr.f32.gmra.mrb[0].mxu0 %v604
        %v917 = vpop.f32.mrb[0].mxu0
        %v918 = vadd.f32 0.0, %v917
        %v919 = vpop.f32.mrb[0].mxu0
        %920 = vmatprep.mubr.f32.mxu0 0.0
        %921 = vmatmul.mubr.f32.gmra.mrb[0].mxu0 %v607
        %v922 = vpop.f32.mrb[0].mxu0
        %v923 = vadd.f32 0.0, %v922
        %v924 = vpop.f32.mrb[0].mxu0
        %925 = vmatprep.mubr.f32.mxu0 0.0
        %926 = vmatmul.mubr.f32.gmra.mrb[0].mxu0 %v610
        %v927 = vpop.f32.mrb[0].mxu0
        %v928 = vadd.f32 0.0, %v927
        %v929 = vpop.f32.mrb[0].mxu0
        %930 = vmatprep.mubr.f32.mxu0 0.0
        %931 = vmatmul.mubr.f32.gmra.mrb[0].mxu0 %v613
        %v932 = vpop.f32.mrb[0].mxu0
        %v933 = vadd.f32 0.0, %v932
        %v934 = vpop.f32.mrb[0].mxu0
        %935 = vmatprep.mubr.f32.mxu0 0.0
        %936 = vmatmul.mubr.f32.gmra.mrb[0].mxu0 %v616
        %v937 = vpop.f32.mrb[0].mxu0
        %v938 = vadd.f32 0.0, %v937
        %v939 = vpop.f32.mrb[0].mxu0
        %940 = vmatprep.mubr.f32.mxu0 0.0
        %941 = vmatmul.mubr.f32.gmra.mrb[0].mxu0 %v619
        %v942 = vpop.f32.mrb[0].mxu0
        %v943 = vadd.f32 0.0, %v942
        %v944 = vpop.f32.mrb[0].mxu0
        %945 = vmatprep.mubr.f32.mxu0 0.0
        %946 = vmatmul.mubr.f32.gmra.mrb[0].mxu0 %v622
        %v947 = vpop.f32.mrb[0].mxu0
        %v948 = vadd.f32 0.0, %v947
        %v949 = vpop.f32.mrb[0].mxu0
        %950 = vmatprep.mubr.f32.mxu0 0.0
        %951 = vmatmul.mubr.f32.gmra.mrb[0].mxu0 %v625
        %v952 = vpop.f32.mrb[0].mxu0
        %v953 = vadd.f32 0.0, %v952
        %v954 = vpop.f32.mrb[0].mxu0
        %955 = vmatprep.mubr.f32.mxu0 0.0
        %956 = vmatmul.mubr.f32.gmra.mrb[0].mxu0 %v628
        %v957 = vpop.f32.mrb[0].mxu0
        %v958 = vadd.f32 0.0, %v957
        %v959 = vpop.f32.mrb[0].mxu0
        %960 = vmatprep.mubr.f32.mxu0 0.0
        %961 = vmatmul.mubr.f32.gmra.mrb[0].mxu0 %v631
        %v962 = vpop.f32.mrb[0].mxu0
        %v963 = vadd.f32 0.0, %v962
        %v964 = vpop.f32.mrb[0].mxu0
        %965 = vmatprep.mubr.f32.mxu0 0.0
        %966 = vmatmul.mubr.f32.gmra.mrb[0].mxu0 %v634
        %v967 = vpop.f32.mrb[0].mxu0
        %v968 = vadd.f32 0.0, %v967
        %v969 = vpop.f32.mrb[0].mxu0
        %970 = vmatprep.mubr.f32.mxu0 0.0
        %971 = vmatmul.mubr.f32.gmra.mrb[0].mxu0 %v637
        %v972 = vpop.f32.mrb[0].mxu0
        %v973 = vadd.f32 0.0, %v972
        %v974 = vpop.f32.mrb[0].mxu0
        %975 = vmatprep.mubr.f32.mxu0 0.0
        %976 = vmatmul.mubr.f32.gmra.mrb[0].mxu0 %v640
        %v977 = vpop.f32.mrb[0].mxu0
        %v978 = vadd.f32 0.0, %v977
        %v979 = vpop.f32.mrb[0].mxu0
        %980 = vmatprep.mubr.f32.mxu0 0.0
        %981 = vmatmul.mubr.f32.gmra.mrb[0].mxu0 %v643
        %v982 = vpop.f32.mrb[0].mxu0
        %v983 = vadd.f32 0.0, %v982
        %v984 = vpop.f32.mrb[0].mxu0
        %985 = vmatprep.mubr.f32.mxu0 0.0
        %986 = vmatmul.mubr.f32.gmra.mrb[0].mxu0 %v646
        %v987 = vpop.f32.mrb[0].mxu0
        %v988 = vadd.f32 0.0, %v987
        %v989 = vpop.f32.mrb[0].mxu0
        %990 = vmatprep.mubr.f32.mxu0 0.0
        %991 = vmatmul.mubr.f32.gmra.mrb[0].mxu0 %v649
        %v992 = vpop.f32.mrb[0].mxu0
        %v993 = vadd.f32 0.0, %v992
        %v994 = vpop.f32.mrb[0].mxu0
        %995 = vmatprep.mubr.f32.mxu0 0.0
        %996 = vmatmul.mubr.f32.gmra.mrb[0].mxu0 %v652
        %v997 = vpop.f32.mrb[0].mxu0
        %v998 = vadd.f32 0.0, %v997
        %v999 = vpop.f32.mrb[0].mxu0
        %1000 = vmatprep.mubr.f32.mxu0 0.0
        %1001 = vmatmul.mubr.f32.gmra.mrb[0].mxu0 %v655
        %v1002 = vpop.f32.mrb[0].mxu0
        %v1003 = vadd.f32 0.0, %v1002
        %v1004 = vpop.f32.mrb[0].mxu0
        %1005 = vmatprep.mubr.f32.mxu0 0.0
        %1006 = vmatmul.mubr.f32.gmra.mrb[0].mxu0 %v658
        %v1007 = vpop.f32.mrb[0].mxu0
        %v1008 = vadd.f32 0.0, %v1007
        %v1009 = vpop.f32.mrb[0].mxu0
        %1010 = vmatprep.mubr.f32.mxu0 0.0
        %1011 = vmatmul.mubr.f32.gmra.mrb[0].mxu0 %v661
        %v1012 = vpop.f32.mrb[0].mxu0
        %v1013 = vadd.f32 0.0, %v1012
        %v1014 = vpop.f32.mrb[0].mxu0
        %1015 = vmatprep.mubr.f32.mxu0 0.0
        %1016 = vmatmul.mubr.f32.gmra.mrb[0].mxu0 %v664
        %v1017 = vpop.f32.mrb[0].mxu0
        %v1018 = vadd.f32 0.0, %v1017
        %v1019 = vpop.f32.mrb[0].mxu0
        %1020 = vmatprep.mubr.f32.mxu0 0.0
        %1021 = vmatmul.mubr.f32.gmra.mrb[0].mxu0 %v667
        %v1022 = vpop.f32.mrb[0].mxu0
        %v1023 = vadd.f32 0.0, %v1022
        %v1024 = vpop.f32.mrb[0].mxu0
        %1025 = vmatprep.mubr.f32.mxu0 0.0
        %1026 = vmatmul.mubr.f32.gmra.mrb[0].mxu0 %v670
        %v1027 = vpop.f32.mrb[0].mxu0
        %v1028 = vadd.f32 0.0, %v1027
        %v1029 = vpop.f32.mrb[0].mxu0
        %1030 = vmatprep.mubr.f32.mxu0 0.0
        %1031 = vmatmul.mubr.f32.gmra.mrb[0].mxu0 %v673
        %v1032 = vpop.f32.mrb[0].mxu0
        %v1033 = vadd.f32 0.0, %v1032
        %v1034 = vpop.f32.mrb[0].mxu0
        %1035 = vmatprep.mubr.f32.mxu0 0.0
        %1036 = vmatmul.mubr.f32.gmra.mrb[0].mxu0 %v676
        %v1037 = vpop.f32.mrb[0].mxu0
        %v1038 = vadd.f32 0.0, %v1037
        %v1039 = vpop.f32.mrb[0].mxu0
        %1040 = vmatprep.mubr.f32.mxu0 0.0
        %1041 = vmatmul.mubr.f32.gmra.mrb[0].mxu0 %v679
        %v1042 = vpop.f32.mrb[0].mxu0
        %v1043 = vadd.f32 0.0, %v1042
        %v1044 = vpop.f32.mrb[0].mxu0
        %1045 = vmatprep.mubr.f32.mxu0 0.0
        %1046 = vmatmul.mubr.f32.gmra.mrb[0].mxu0 %v682
        %v1047 = vpop.f32.mrb[0].mxu0
        %v1048 = vadd.f32 0.0, %v1047
        %v1049 = vpop.f32.mrb[0].mxu0
        %1050 = vmatprep.mubr.f32.mxu0 0.0
        %1051 = vmatmul.mubr.f32.gmra.mrb[0].mxu0 %v685
        %v1052 = vpop.f32.mrb[0].mxu0
        %v1053 = vadd.f32 0.0, %v1052
        %v1054 = vpop.f32.mrb[0].mxu0
        %1055 = vmatprep.mubr.f32.mxu0 0.0
        %1056 = vmatmul.mubr.f32.gmra.mrb[0].mxu0 %v688
        %v1057 = vpop.f32.mrb[0].mxu0
        %v1058 = vadd.f32 0.0, %v1057
        %v1059 = vpop.f32.mrb[0].mxu0
        %1060 = vmatprep.mubr.f32.mxu0 0.0
        %1061 = vmatmul.mubr.f32.gmra.mrb[0].mxu0 %v691
        %v1062 = vpop.f32.mrb[0].mxu0
        %v1063 = vadd.f32 0.0, %v1062
        %v1064 = vpop.f32.mrb[0].mxu0
        %1065 = vmatprep.mubr.f32.mxu0 0.0
        %1066 = vmatmul.mubr.f32.gmra.mrb[0].mxu0 %v694
        %v1067 = vpop.f32.mrb[0].mxu0
        %v1068 = vadd.f32 0.0, %v1067
        %v1069 = vpop.f32.mrb[0].mxu0
        %1070 = vmatprep.mubr.f32.mxu0 0.0
        %1071 = vmatmul.mubr.f32.gmra.mrb[0].mxu0 %v697
        %v1072 = vpop.f32.mrb[0].mxu0
        %v1073 = vadd.f32 0.0, %v1072
        %v1074 = vpop.f32.mrb[0].mxu0
        %1075 = vmatprep.mubr.f32.mxu0 0.0
        %1076 = vmatmul.mubr.f32.gmra.mrb[0].mxu0 %v700
        %v1077 = vpop.f32.mrb[0].mxu0
        %v1078 = vadd.f32 0.0, %v1077
        %v1079 = vpop.f32.mrb[0].mxu0
        %1080 = vmatprep.mubr.f32.mxu0 0.0
        %1081 = vmatmul.mubr.f32.gmra.mrb[0].mxu0 %v703
        %v1082 = vpop.f32.mrb[0].mxu0
        %v1083 = vadd.f32 0.0, %v1082
        %v1084 = vpop.f32.mrb[0].mxu0
        %1085 = vmatprep.mubr.f32.mxu0 0.0
        %1086 = vmatmul.mubr.f32.gmra.mrb[0].mxu0 %v706
        %v1087 = vpop.f32.mrb[0].mxu0
        %v1088 = vadd.f32 0.0, %v1087
        %v1089 = vpop.f32.mrb[0].mxu0
        %1090 = vmatprep.mubr.f32.mxu0 0.0
        %1091 = vmatmul.mubr.f32.gmra.mrb[0].mxu0 %v709
        %v1092 = vpop.f32.mrb[0].mxu0
        %v1093 = vadd.f32 0.0, %v1092
        %v1094 = vpop.f32.mrb[0].mxu0
        %1095 = vmatprep.mubr.f32.mxu0 0.0
        %1096 = vmatmul.mubr.f32.gmra.mrb[0].mxu0 %v712
        %v1097 = vpop.f32.mrb[0].mxu0
        %v1098 = vadd.f32 0.0, %v1097
        %v1099 = vpop.f32.mrb[0].mxu0
        %1100 = vmatprep.mubr.f32.mxu0 0.0
        %1101 = vmatmul.mubr.f32.gmra.mrb[0].mxu0 %v715
        %v1102 = vpop.f32.mrb[0].mxu0
        %v1103 = vadd.f32 0.0, %v1102
        %v1104 = vpop.f32.mrb[0].mxu0
        %1105 = vmatprep.mubr.f32.mxu0 0.0
        %1106 = vmatmul.mubr.f32.gmra.mrb[0].mxu0 %v718
        %v1107 = vpop.f32.mrb[0].mxu0
        %v1108 = vadd.f32 0.0, %v1107
        %v1109 = vpop.f32.mrb[0].mxu0
        %1110 = vmatprep.mubr.f32.mxu0 0.0
        %1111 = vmatmul.mubr.f32.gmra.mrb[0].mxu0 %v721
        %v1112 = vpop.f32.mrb[0].mxu0
        %v1113 = vadd.f32 0.0, %v1112
        %v1114 = vpop.f32.mrb[0].mxu0
        %1115 = vmatprep.mubr.f32.mxu0 0.0
        %1116 = vmatmul.mubr.f32.gmra.mrb[0].mxu0 %v724
        %v1117 = vpop.f32.mrb[0].mxu0
        %v1118 = vadd.f32 0.0, %v1117
        %v1119 = vpop.f32.mrb[0].mxu0
        %1120 = vmatprep.mubr.f32.mxu0 0.0
        %1121 = vmatmul.mubr.f32.gmra.mrb[0].mxu0 %v727
        %v1122 = vpop.f32.mrb[0].mxu0
        %v1123 = vadd.f32 0.0, %v1122
        %v1124 = vpop.f32.mrb[0].mxu0
        %1125 = vmatprep.mubr.f32.mxu0 0.0
        %1126 = vmatmul.mubr.f32.gmra.mrb[0].mxu0 %v730
        %v1127 = vpop.f32.mrb[0].mxu0
        %v1128 = vadd.f32 0.0, %v1127
        %v1129 = vpop.f32.mrb[0].mxu0
        %1130 = vmatprep.mubr.f32.mxu0 0.0
        %1131 = vmatmul.mubr.f32.gmra.mrb[0].mxu0 %v733
        %v1132 = vpop.f32.mrb[0].mxu0
        %v1133 = vadd.f32 0.0, %v1132
        %v1134 = vpop.f32.mrb[0].mxu0
        %1135 = vmatprep.mubr.f32.mxu0 0.0
        %1136 = vmatmul.mubr.f32.gmra.mrb[0].mxu0 %v736
        %v1137 = vpop.f32.mrb[0].mxu0
        %v1138 = vadd.f32 0.0, %v1137
        %v1139 = vpop.f32.mrb[0].mxu0
        %1140 = vmatprep.mubr.f32.mxu0 0.0
        %1141 = vmatmul.mubr.f32.gmra.mrb[0].mxu0 %v739
        %v1142 = vpop.f32.mrb[0].mxu0
        %v1143 = vadd.f32 0.0, %v1142
        %v1144 = vpop.f32.mrb[0].mxu0
        %1145 = vmatprep.mubr.f32.mxu0 0.0
        %1146 = vmatmul.mubr.f32.gmra.mrb[0].mxu0 %v742
        %v1147 = vpop.f32.mrb[0].mxu0
        %v1148 = vadd.f32 0.0, %v1147
        %v1149 = vpop.f32.mrb[0].mxu0
        %1150 = vmatprep.mubr.f32.mxu0 0.0
        %1151 = vmatmul.mubr.f32.gmra.mrb[0].mxu0 %v745
        %v1152 = vpop.f32.mrb[0].mxu0
        %v1153 = vadd.f32 0.0, %v1152
        %v1154 = vpop.f32.mrb[0].mxu0
        %1155 = vmatprep.mubr.f32.mxu0 0.0
        %1156 = vmatmul.mubr.f32.gmra.mrb[0].mxu0 %v748
        %v1157 = vpop.f32.mrb[0].mxu0
        %v1158 = vadd.f32 0.0, %v1157
        %v1159 = vpop.f32.mrb[0].mxu0
        %1160 = vmatprep.mubr.f32.mxu0 0.0
        %1161 = vmatmul.mubr.f32.gmra.mrb[0].mxu0 %v751
        %v1162 = vpop.f32.mrb[0].mxu0
        %v1163 = vadd.f32 0.0, %v1162
        %v1164 = vpop.f32.mrb[0].mxu0
        %1165 = vmatprep.mubr.f32.mxu0 0.0
        %1166 = vmatmul.mubr.f32.gmra.mrb[0].mxu0 %v754
        %v1167 = vpop.f32.mrb[0].mxu0
        %v1168 = vadd.f32 0.0, %v1167
        %v1169 = vpop.f32.mrb[0].mxu0
        %1170 = vmatprep.mubr.f32.mxu0 0.0
        %1171 = vmatmul.mubr.f32.gmra.mrb[0].mxu0 %v757
        %v1172 = vpop.f32.mrb[0].mxu0
        %v1173 = vadd.f32 0.0, %v1172
        %v1174 = vpop.f32.mrb[0].mxu0
        %1175 = vmatprep.mubr.f32.mxu0 0.0
        %1176 = vmatmul.mubr.f32.gmra.mrb[0].mxu0 %v760
        %v1177 = vpop.f32.mrb[0].mxu0
        %v1178 = vadd.f32 0.0, %v1177
        %v1179 = vpop.f32.mrb[0].mxu0
        %1180 = vmatprep.mubr.f32.mxu0 0.0
        %1181 = vmatmul.mubr.f32.gmra.mrb[0].mxu0 %v763
        %v1182 = vpop.f32.mrb[0].mxu0
        %v1183 = vadd.f32 0.0, %v1182
        %v1184 = vpop.f32.mrb[0].mxu0
        %1185 = vmatprep.mubr.f32.mxu0 0.0
        %1186 = vmatmul.mubr.f32.gmra.mrb[0].mxu0 %v766
        %v1187 = vpop.f32.mrb[0].mxu0
        %v1188 = vadd.f32 0.0, %v1187
        %v1189 = vpop.f32.mrb[0].mxu0
        %1190 = vmatprep.mubr.f32.mxu0 0.0
        %1191 = vmatmul.mubr.f32.gmra.mrb[0].mxu0 %v769
        %v1192 = vpop.f32.mrb[0].mxu0
        %v1193 = vadd.f32 0.0, %v1192
        %v1194 = vpop.f32.mrb[0].mxu0
        %1195 = vmatprep.mubr.f32.mxu0 0.0
        %1196 = vmatmul.mubr.f32.gmra.mrb[0].mxu0 %v772
        %v1197 = vpop.f32.mrb[0].mxu0
        %v1198 = vadd.f32 0.0, %v1197
        %v1199 = vpop.f32.mrb[0].mxu0
        %1200 = vmatprep.mubr.f32.mxu0 0.0
        %1201 = vmatmul.mubr.f32.gmra.mrb[0].mxu0 %v775
        %v1202 = vpop.f32.mrb[0].mxu0
        %v1203 = vadd.f32 0.0, %v1202
        %v1204 = vpop.f32.mrb[0].mxu0
        %1205 = vdwg.mxu0
        %v1206 = vmax.f32 %v848, %v1028
        %v1207 = vmax.f32 %v853, %v1033
        %v1208 = vmax.f32 %v858, %v1038
        %v1209 = vmax.f32 %v863, %v1043
        %v1210 = vmax.f32 %v868, %v1048
        %v1211 = vmax.f32 %v873, %v1053
        %v1212 = vmax.f32 %v878, %v1058
        %v1213 = vmax.f32 %v883, %v1063
        %v1214 = vmax.f32 %v888, %v1068
        %v1215 = vmax.f32 %v893, %v1073
        %v1216 = vmax.f32 %v898, %v1078
        %v1217 = vmax.f32 %v903, %v1083
        %v1218 = vmax.f32 %v908, %v1088
        %v1219 = vmax.f32 %v913, %v1093
        %v1220 = vmax.f32 %v918, %v1098
        %v1221 = vmax.f32 %v923, %v1103
        %v1222 = vmax.f32 %v928, %v1108
        %v1223 = vmax.f32 %v933, %v1113
        %v1224 = vmax.f32 %v938, %v1118
        %v1225 = vmax.f32 %v943, %v1123
        %v1226 = vmax.f32 %v948, %v1128
        %v1227 = vmax.f32 %v953, %v1133
        %v1228 = vmax.f32 %v958, %v1138
        %v1229 = vmax.f32 %v963, %v1143
        %v1230 = vmax.f32 %v968, %v1148
        %v1231 = vmax.f32 %v973, %v1153
        %v1232 = vmax.f32 %v978, %v1158
        %v1233 = vmax.f32 %v983, %v1163
        %v1234 = vmax.f32 %v988, %v1168
        %v1235 = vmax.f32 %v993, %v1173
        %v1236 = vmax.f32 %v998, %v1178
        %v1237 = vmax.f32 %v1003, %v1183
        %v1238 = vmax.f32 %v1008, %v1188
        %v1239 = vmax.f32 %v1013, %v1193
        %v1240 = vmax.f32 %v1018, %v1198
        %v1241 = vmax.f32 %v1023, %v1203
        %v1242 = vld [vmem:[%s2] sm:$0x1]
        %v1244 = vlaneseq
        %v1245 = vshrl.u32 %v1244, 7
        %v1246 = vsub.s32 0, %v1245
        %v1247 = vrot.slane %v1242, %v1246
        %v1249 = vadd.f32 %v1206, %v1247
        %v1250 = vadd.f32 %v1207, %v1247
        %v1251 = vadd.f32 %v1208, %v1247
        %v1252 = vadd.f32 %v1209, %v1247
        %v1253 = vadd.f32 %v1210, %v1247
        %v1254 = vadd.f32 %v1211, %v1247
        %v1255 = vadd.f32 %v1212, %v1247
        %v1256 = vadd.f32 %v1213, %v1247
        %v1257 = vadd.f32 %v1214, %v1247
        %v1258 = vadd.f32 %v1215, %v1247
        %v1259 = vadd.f32 %v1216, %v1247
        %v1260 = vadd.f32 %v1217, %v1247
        %v1261 = vadd.f32 %v1218, %v1247
        %v1262 = vadd.f32 %v1219, %v1247
        %v1263 = vadd.f32 %v1220, %v1247
        %v1264 = vadd.f32 %v1221, %v1247
        %v1265 = vadd.f32 %v1222, %v1247
        %v1266 = vadd.f32 %v1223, %v1247
        %v1267 = vadd.f32 %v1224, %v1247
        %v1268 = vadd.f32 %v1225, %v1247
        %v1269 = vadd.f32 %v1226, %v1247
        %v1270 = vadd.f32 %v1227, %v1247
        %v1271 = vadd.f32 %v1228, %v1247
        %v1272 = vadd.f32 %v1229, %v1247
        %v1273 = vadd.f32 %v1230, %v1247
        %v1274 = vadd.f32 %v1231, %v1247
        %v1275 = vadd.f32 %v1232, %v1247
        %v1276 = vadd.f32 %v1233, %v1247
        %v1277 = vadd.f32 %v1234, %v1247
        %v1278 = vadd.f32 %v1235, %v1247
        %v1279 = vadd.f32 %v1236, %v1247
        %v1280 = vadd.f32 %v1237, %v1247
        %v1281 = vadd.f32 %v1238, %v1247
        %v1282 = vadd.f32 %v1239, %v1247
        %v1283 = vadd.f32 %v1240, %v1247
        %v1284 = vadd.f32 %v1241, %v1247
        %v1285 = vmax.f32 %v1249, 0.0
        %v1286 = vmax.f32 %v1250, 0.0
        %v1287 = vmax.f32 %v1251, 0.0
        %v1288 = vmax.f32 %v1252, 0.0
        %v1289 = vmax.f32 %v1253, 0.0
        %v1290 = vmax.f32 %v1254, 0.0
        %v1291 = vmax.f32 %v1255, 0.0
        %v1292 = vmax.f32 %v1256, 0.0
        %v1293 = vmax.f32 %v1257, 0.0
        %v1294 = vmax.f32 %v1258, 0.0
        %v1295 = vmax.f32 %v1259, 0.0
        %v1296 = vmax.f32 %v1260, 0.0
        %v1297 = vmax.f32 %v1261, 0.0
        %v1298 = vmax.f32 %v1262, 0.0
        %v1299 = vmax.f32 %v1263, 0.0
        %v1300 = vmax.f32 %v1264, 0.0
        %v1301 = vmax.f32 %v1265, 0.0
        %v1302 = vmax.f32 %v1266, 0.0
        %v1303 = vmax.f32 %v1267, 0.0
        %v1304 = vmax.f32 %v1268, 0.0
        %v1305 = vmax.f32 %v1269, 0.0
        %v1306 = vmax.f32 %v1270, 0.0
        %v1307 = vmax.f32 %v1271, 0.0
        %v1308 = vmax.f32 %v1272, 0.0
        %v1309 = vmax.f32 %v1273, 0.0
        %v1310 = vmax.f32 %v1274, 0.0
        %v1311 = vmax.f32 %v1275, 0.0
        %v1312 = vmax.f32 %v1276, 0.0
        %v1313 = vmax.f32 %v1277, 0.0
        %v1314 = vmax.f32 %v1278, 0.0
        %v1315 = vmax.f32 %v1279, 0.0
        %v1316 = vmax.f32 %v1280, 0.0
        %v1317 = vmax.f32 %v1281, 0.0
        %v1318 = vmax.f32 %v1282, 0.0
        %v1319 = vmax.f32 %v1283, 0.0
        %v1320 = vmax.f32 %v1284, 0.0
        %v1321 = vld [vmem:[%s3] sm:$0xff]
        %v1322 = vld [vmem:[%s3 + $0x8] sm:$0xff]
        %v1323 = vld [vmem:[%s3 + $0x10] sm:$0xff]
        %v1324 = vld [vmem:[%s3 + $0x18] sm:$0xff]
        %v1325 = vld [vmem:[%s3 + $0x20] sm:$0xff]
        %v1326 = vld [vmem:[%s3 + $0x28] sm:$0xff]
        %v1327 = vld [vmem:[%s3 + $0x30] sm:$0xff]
        %v1328 = vld [vmem:[%s3 + $0x38] sm:$0xff]
        %v1329 = vld [vmem:[%s3 + $0x40] sm:$0xff]
        %v1330 = vld [vmem:[%s3 + $0x48] sm:$0xff]
        %v1331 = vld [vmem:[%s3 + $0x50] sm:$0xff]
        %v1332 = vld [vmem:[%s3 + $0x58] sm:$0xff]
        %v1333 = vld [vmem:[%s3 + $0x60] sm:$0xff]
        %v1334 = vld [vmem:[%s3 + $0x68] sm:$0xff]
        %v1335 = vld [vmem:[%s3 + $0x70] sm:$0xff]
        %v1336 = vld [vmem:[%s3 + $0x78] sm:$0xff]
        %v1337 = vld [vmem:[%s3 + $0x80] sm:$0xff]
        %v1338 = vld [vmem:[%s3 + $0x88] sm:$0xff]
        %v1339 = vld [vmem:[%s3 + $0x90] sm:$0xff]
        %v1340 = vld [vmem:[%s3 + $0x98] sm:$0xff]
        %v1341 = vld [vmem:[%s3 + $0xa0] sm:$0xff]
        %v1342 = vld [vmem:[%s3 + $0xa8] sm:$0xff]
        %v1343 = vld [vmem:[%s3 + $0xb0] sm:$0xff]
        %v1344 = vld [vmem:[%s3 + $0xb8] sm:$0xff]
        %v1345 = vld [vmem:[%s3 + $0xc0] sm:$0xff]
        %v1346 = vld [vmem:[%s3 + $0xc8] sm:$0xff]
        %v1347 = vld [vmem:[%s3 + $0xd0] sm:$0xff]
        %v1348 = vld [vmem:[%s3 + $0xd8] sm:$0xff]
        %v1349 = vld [vmem:[%s3 + $0xe0] sm:$0xff]
        %v1350 = vld [vmem:[%s3 + $0xe8] sm:$0xff]
        %v1351 = vld [vmem:[%s3 + $0xf0] sm:$0xff]
        %v1352 = vld [vmem:[%s3 + $0xf8] sm:$0xff]
        %v1353 = vld [vmem:[%s3 + $0x100] sm:$0xff]
        %v1354 = vld [vmem:[%s3 + $0x108] sm:$0xff]
        %v1355 = vld [vmem:[%s3 + $0x110] sm:$0xff]
        %v1356 = vld [vmem:[%s3 + $0x118] sm:$0xff]
        %v1357 = vld [vmem:[%s3 + $0x120] sm:$0xff]
        %v1358 = vld [vmem:[%s3 + $0x128] sm:$0xff]
        %v1359 = vld [vmem:[%s3 + $0x130] sm:$0xff]
        %v1360 = vld [vmem:[%s3 + $0x138] sm:$0xff]
        %v1361 = vld [vmem:[%s3 + $0x140] sm:$0xff]
        %v1362 = vld [vmem:[%s3 + $0x148] sm:$0xff]
        %v1363 = vld [vmem:[%s3 + $0x150] sm:$0xff]
        %v1364 = vld [vmem:[%s3 + $0x158] sm:$0xff]
        %v1365 = vld [vmem:[%s3 + $0x160] sm:$0xff]
        %v1366 = vld [vmem:[%s3 + $0x168] sm:$0xff]
        %v1367 = vld [vmem:[%s3 + $0x170] sm:$0xff]
        %v1368 = vld [vmem:[%s3 + $0x178] sm:$0xff]
        %v1369 = vld [vmem:[%s3 + $0x180] sm:$0xff]
        %v1370 = vld [vmem:[%s3 + $0x188] sm:$0xff]
        %v1371 = vld [vmem:[%s3 + $0x190] sm:$0xff]
        %v1372 = vld [vmem:[%s3 + $0x198] sm:$0xff]
        %v1373 = vld [vmem:[%s3 + $0x1a0] sm:$0xff]
        %v1374 = vld [vmem:[%s3 + $0x1a8] sm:$0xff]
        %v1375 = vld [vmem:[%s3 + $0x1b0] sm:$0xff]
        %v1376 = vld [vmem:[%s3 + $0x1b8] sm:$0xff]
        %v1377 = vld [vmem:[%s3 + $0x1c0] sm:$0xff]
        %v1378 = vld [vmem:[%s3 + $0x1c8] sm:$0xff]
        %v1379 = vld [vmem:[%s3 + $0x1d0] sm:$0xff]
        %v1380 = vld [vmem:[%s3 + $0x1d8] sm:$0xff]
        %v1381 = vld [vmem:[%s3 + $0x1e0] sm:$0xff]
        %v1382 = vld [vmem:[%s3 + $0x1e8] sm:$0xff]
        %v1383 = vld [vmem:[%s3 + $0x1f0] sm:$0xff]
        %v1384 = vld [vmem:[%s3 + $0x1f8] sm:$0xff]
        %v1385 = vld [vmem:[%s3 + $0x200] sm:$0xff]
        %v1386 = vld [vmem:[%s3 + $0x208] sm:$0xff]
        %v1387 = vld [vmem:[%s3 + $0x210] sm:$0xff]
        %v1388 = vld [vmem:[%s3 + $0x218] sm:$0xff]
        %v1389 = vld [vmem:[%s3 + $0x220] sm:$0xff]
        %v1390 = vld [vmem:[%s3 + $0x228] sm:$0xff]
        %v1391 = vld [vmem:[%s3 + $0x230] sm:$0xff]
        %v1392 = vld [vmem:[%s3 + $0x238] sm:$0xff]
        %v1393 = vld [vmem:[%s3 + $0x240] sm:$0xff]
        %v1394 = vld [vmem:[%s3 + $0x248] sm:$0xff]
        %v1395 = vld [vmem:[%s3 + $0x250] sm:$0xff]
        %v1396 = vld [vmem:[%s3 + $0x258] sm:$0xff]
        %v1397 = vld [vmem:[%s3 + $0x260] sm:$0xff]
        %v1398 = vld [vmem:[%s3 + $0x268] sm:$0xff]
        %v1399 = vld [vmem:[%s3 + $0x270] sm:$0xff]
        %v1400 = vld [vmem:[%s3 + $0x278] sm:$0xff]
        %v1401 = vld [vmem:[%s3 + $0x280] sm:$0xff]
        %v1402 = vld [vmem:[%s3 + $0x288] sm:$0xff]
        %v1403 = vld [vmem:[%s3 + $0x290] sm:$0xff]
        %v1404 = vld [vmem:[%s3 + $0x298] sm:$0xff]
        %v1405 = vld [vmem:[%s3 + $0x2a0] sm:$0xff]
        %v1406 = vld [vmem:[%s3 + $0x2a8] sm:$0xff]
        %v1407 = vld [vmem:[%s3 + $0x2b0] sm:$0xff]
        %v1408 = vld [vmem:[%s3 + $0x2b8] sm:$0xff]
        %v1409 = vld [vmem:[%s3 + $0x2c0] sm:$0xff]
        %v1410 = vld [vmem:[%s3 + $0x2c8] sm:$0xff]
        %v1411 = vld [vmem:[%s3 + $0x2d0] sm:$0xff]
        %v1412 = vld [vmem:[%s3 + $0x2d8] sm:$0xff]
        %v1413 = vld [vmem:[%s3 + $0x2e0] sm:$0xff]
        %v1414 = vld [vmem:[%s3 + $0x2e8] sm:$0xff]
        %v1415 = vld [vmem:[%s3 + $0x2f0] sm:$0xff]
        %v1416 = vld [vmem:[%s3 + $0x2f8] sm:$0xff]
        %v1418 = vsel %vm465, %v1323, 0
        %v1421 = vsel %vm465, %v1326, 0
        %v1424 = vsel %vm465, %v1329, 0
        %v1427 = vsel %vm465, %v1332, 0
        %v1430 = vsel %vm465, %v1335, 0
        %v1433 = vsel %vm465, %v1338, 0
        %v1436 = vsel %vm465, %v1341, 0
        %v1439 = vsel %vm465, %v1344, 0
        %v1442 = vsel %vm465, %v1347, 0
        %v1445 = vsel %vm465, %v1350, 0
        %v1448 = vsel %vm465, %v1353, 0
        %v1451 = vsel %vm465, %v1356, 0
        %v1454 = vsel %vm465, %v1359, 0
        %v1457 = vsel %vm465, %v1362, 0
        %v1460 = vsel %vm465, %v1365, 0
        %v1463 = vsel %vm465, %v1368, 0
        %v1466 = vsel %vm465, %v1371, 0
        %v1469 = vsel %vm465, %v1374, 0
        %v1472 = vsel %vm465, %v1377, 0
        %v1475 = vsel %vm465, %v1380, 0
        %v1478 = vsel %vm465, %v1383, 0
        %v1481 = vsel %vm465, %v1386, 0
        %v1484 = vsel %vm465, %v1389, 0
        %v1487 = vsel %vm465, %v1392, 0
        %v1490 = vsel %vm465, %v1395, 0
        %v1493 = vsel %vm465, %v1398, 0
        %v1496 = vsel %vm465, %v1401, 0
        %v1499 = vsel %vm465, %v1404, 0
        %v1502 = vsel %vm465, %v1407, 0
        %v1505 = vsel %vm465, %v1410, 0
        %v1508 = vsel %vm465, %v1413, 0
        %v1511 = vsel %vm465, %v1416, 0
        %1513 = vmatprep.subr.mxu0 0.0
        %1514 = vmatpush1.msra.mxu0 %v1285
        %1515 = vmatprep.subr.mxu0 0.0
        %1516 = vmatpush1.msra.mxu0 %v1286
        %1517 = vmatprep.subr.mxu0 0.0
        %1518 = vmatpush1.msra.mxu0 %v1287
        %1519 = vmatprep.subr.mxu0 0.0
        %1520 = vmatpush1.msra.mxu0 %v1288
        %1521 = vmatprep.subr.mxu0 0.0
        %1522 = vmatpush1.msra.mxu0 %v1289
        %1523 = vmatprep.subr.mxu0 0.0
        %1524 = vmatpush1.msra.mxu0 %v1290
        %1525 = vmatprep.subr.mxu0 0.0
        %1526 = vmatpush1.msra.mxu0 %v1291
        %1527 = vmatprep.subr.mxu0 0.0
        %1528 = vmatpush1.msra.mxu0 %v1292
        %1529 = vmatprep.subr.mxu0 0.0
        %1530 = vmatpush1.msra.mxu0 %v1293
        %1531 = vmatprep.subr.mxu0 0.0
        %1532 = vmatpush1.msra.mxu0 %v1294
        %1533 = vmatprep.subr.mxu0 0.0
        %1534 = vmatpush1.msra.mxu0 %v1295
        %1535 = vmatprep.subr.mxu0 0.0
        %1536 = vmatpush1.msra.mxu0 %v1296
        %1537 = vmatprep.subr.mxu0 0.0
        %1538 = vmatpush1.msra.mxu0 %v1297
        %1539 = vmatprep.subr.mxu0 0.0
        %1540 = vmatpush1.msra.mxu0 %v1298
        %1541 = vmatprep.subr.mxu0 0.0
        %1542 = vmatpush1.msra.mxu0 %v1299
        %1543 = vmatprep.subr.mxu0 0.0
        %1544 = vmatpush1.msra.mxu0 %v1300
        %1545 = vmatprep.subr.mxu0 0.0
        %1546 = vmatpush1.msra.mxu0 %v1301
        %1547 = vmatprep.subr.mxu0 0.0
        %1548 = vmatpush1.msra.mxu0 %v1302
        %1549 = vmatprep.subr.mxu0 0.0
        %1550 = vmatpush1.msra.mxu0 %v1303
        %1551 = vmatprep.subr.mxu0 0.0
        %1552 = vmatpush1.msra.mxu0 %v1304
        %1553 = vmatprep.subr.mxu0 0.0
        %1554 = vmatpush1.msra.mxu0 %v1305
        %1555 = vmatprep.subr.mxu0 0.0
        %1556 = vmatpush1.msra.mxu0 %v1306
        %1557 = vmatprep.subr.mxu0 0.0
        %1558 = vmatpush1.msra.mxu0 %v1307
        %1559 = vmatprep.subr.mxu0 0.0
        %1560 = vmatpush1.msra.mxu0 %v1308
        %1561 = vmatprep.subr.mxu0 0.0
        %1562 = vmatpush1.msra.mxu0 %v1309
        %1563 = vmatprep.subr.mxu0 0.0
        %1564 = vmatpush1.msra.mxu0 %v1310
        %1565 = vmatprep.subr.mxu0 0.0
        %1566 = vmatpush1.msra.mxu0 %v1311
        %1567 = vmatprep.subr.mxu0 0.0
        %1568 = vmatpush1.msra.mxu0 %v1312
        %1569 = vmatprep.subr.mxu0 0.0
        %1570 = vmatpush1.msra.mxu0 %v1313
        %1571 = vmatprep.subr.mxu0 0.0
        %1572 = vmatpush1.msra.mxu0 %v1314
        %1573 = vmatprep.subr.mxu0 0.0
        %1574 = vmatpush1.msra.mxu0 %v1315
        %1575 = vmatprep.subr.mxu0 0.0
        %1576 = vmatpush1.msra.mxu0 %v1316
        %1577 = vmatprep.mubr.f32.mxu0 %v1322
        %1578 = vmatmul.mubr.f32.gmra.mrb[0].mxu0 %v1321
        %v1579 = vpop.f32.mrb[0].mxu0
        %v1580 = vadd.f32 0.0, %v1579
        %v1581 = vpop.f32.mrb[0].mxu0
        %1582 = vmatprep.mubr.f32.mxu0 %v1325
        %1583 = vmatmul.mubr.f32.gmra.mrb[0].mxu0 %v1324
        %v1584 = vpop.f32.mrb[0].mxu0
        %v1585 = vadd.f32 0.0, %v1584
        %v1586 = vpop.f32.mrb[0].mxu0
        %1587 = vmatprep.mubr.f32.mxu0 %v1328
        %1588 = vmatmul.mubr.f32.gmra.mrb[0].mxu0 %v1327
        %v1589 = vpop.f32.mrb[0].mxu0
        %v1590 = vadd.f32 0.0, %v1589
        %v1591 = vpop.f32.mrb[0].mxu0
        %1592 = vmatprep.mubr.f32.mxu0 %v1331
        %1593 = vmatmul.mubr.f32.gmra.mrb[0].mxu0 %v1330
        %v1594 = vpop.f32.mrb[0].mxu0
        %v1595 = vadd.f32 0.0, %v1594
        %v1596 = vpop.f32.mrb[0].mxu0
        %1597 = vmatprep.mubr.f32.mxu0 %v1334
        %1598 = vmatmul.mubr.f32.gmra.mrb[0].mxu0 %v1333
        %v1599 = vpop.f32.mrb[0].mxu0
        %v1600 = vadd.f32 0.0, %v1599
        %v1601 = vpop.f32.mrb[0].mxu0
        %1602 = vmatprep.mubr.f32.mxu0 %v1337
        %1603 = vmatmul.mubr.f32.gmra.mrb[0].mxu0 %v1336
        %v1604 = vpop.f32.mrb[0].mxu0
        %v1605 = vadd.f32 0.0, %v1604
        %v1606 = vpop.f32.mrb[0].mxu0
        %1607 = vmatprep.mubr.f32.mxu0 %v1340
        %1608 = vmatmul.mubr.f32.gmra.mrb[0].mxu0 %v1339
        %v1609 = vpop.f32.mrb[0].mxu0
        %v1610 = vadd.f32 0.0, %v1609
        %v1611 = vpop.f32.mrb[0].mxu0
        %1612 = vmatprep.mubr.f32.mxu0 %v1343
        %1613 = vmatmul.mubr.f32.gmra.mrb[0].mxu0 %v1342
        %v1614 = vpop.f32.mrb[0].mxu0
        %v1615 = vadd.f32 0.0, %v1614
        %v1616 = vpop.f32.mrb[0].mxu0
        %1617 = vmatprep.mubr.f32.mxu0 %v1346
        %1618 = vmatmul.mubr.f32.gmra.mrb[0].mxu0 %v1345
        %v1619 = vpop.f32.mrb[0].mxu0
        %v1620 = vadd.f32 0.0, %v1619
        %v1621 = vpop.f32.mrb[0].mxu0
        %1622 = vmatprep.mubr.f32.mxu0 %v1349
        %1623 = vmatmul.mubr.f32.gmra.mrb[0].mxu0 %v1348
        %v1624 = vpop.f32.mrb[0].mxu0
        %v1625 = vadd.f32 0.0, %v1624
        %v1626 = vpop.f32.mrb[0].mxu0
        %1627 = vmatprep.mubr.f32.mxu0 %v1352
        %1628 = vmatmul.mubr.f32.gmra.mrb[0].mxu0 %v1351
        %v1629 = vpop.f32.mrb[0].mxu0
        %v1630 = vadd.f32 0.0, %v1629
        %v1631 = vpop.f32.mrb[0].mxu0
        %1632 = vmatprep.mubr.f32.mxu0 %v1355
        %1633 = vmatmul.mubr.f32.gmra.mrb[0].mxu0 %v1354
        %v1634 = vpop.f32.mrb[0].mxu0
        %v1635 = vadd.f32 0.0, %v1634
        %v1636 = vpop.f32.mrb[0].mxu0
        %1637 = vmatprep.mubr.f32.mxu0 %v1358
        %1638 = vmatmul.mubr.f32.gmra.mrb[0].mxu0 %v1357
        %v1639 = vpop.f32.mrb[0].mxu0
        %v1640 = vadd.f32 0.0, %v1639
        %v1641 = vpop.f32.mrb[0].mxu0
        %1642 = vmatprep.mubr.f32.mxu0 %v1361
        %1643 = vmatmul.mubr.f32.gmra.mrb[0].mxu0 %v1360
        %v1644 = vpop.f32.mrb[0].mxu0
        %v1645 = vadd.f32 0.0, %v1644
        %v1646 = vpop.f32.mrb[0].mxu0
        %1647 = vmatprep.mubr.f32.mxu0 %v1364
        %1648 = vmatmul.mubr.f32.gmra.mrb[0].mxu0 %v1363
        %v1649 = vpop.f32.mrb[0].mxu0
        %v1650 = vadd.f32 0.0, %v1649
        %v1651 = vpop.f32.mrb[0].mxu0
        %1652 = vmatprep.mubr.f32.mxu0 %v1367
        %1653 = vmatmul.mubr.f32.gmra.mrb[0].mxu0 %v1366
        %v1654 = vpop.f32.mrb[0].mxu0
        %v1655 = vadd.f32 0.0, %v1654
        %v1656 = vpop.f32.mrb[0].mxu0
        %1657 = vmatprep.mubr.f32.mxu0 %v1370
        %1658 = vmatmul.mubr.f32.gmra.mrb[0].mxu0 %v1369
        %v1659 = vpop.f32.mrb[0].mxu0
        %v1660 = vadd.f32 0.0, %v1659
        %v1661 = vpop.f32.mrb[0].mxu0
        %1662 = vmatprep.mubr.f32.mxu0 %v1373
        %1663 = vmatmul.mubr.f32.gmra.mrb[0].mxu0 %v1372
        %v1664 = vpop.f32.mrb[0].mxu0
        %v1665 = vadd.f32 0.0, %v1664
        %v1666 = vpop.f32.mrb[0].mxu0
        %1667 = vmatprep.mubr.f32.mxu0 %v1376
        %1668 = vmatmul.mubr.f32.gmra.mrb[0].mxu0 %v1375
        %v1669 = vpop.f32.mrb[0].mxu0
        %v1670 = vadd.f32 0.0, %v1669
        %v1671 = vpop.f32.mrb[0].mxu0
        %1672 = vmatprep.mubr.f32.mxu0 %v1379
        %1673 = vmatmul.mubr.f32.gmra.mrb[0].mxu0 %v1378
        %v1674 = vpop.f32.mrb[0].mxu0
        %v1675 = vadd.f32 0.0, %v1674
        %v1676 = vpop.f32.mrb[0].mxu0
        %1677 = vmatprep.mubr.f32.mxu0 %v1382
        %1678 = vmatmul.mubr.f32.gmra.mrb[0].mxu0 %v1381
        %v1679 = vpop.f32.mrb[0].mxu0
        %v1680 = vadd.f32 0.0, %v1679
        %v1681 = vpop.f32.mrb[0].mxu0
        %1682 = vmatprep.mubr.f32.mxu0 %v1385
        %1683 = vmatmul.mubr.f32.gmra.mrb[0].mxu0 %v1384
        %v1684 = vpop.f32.mrb[0].mxu0
        %v1685 = vadd.f32 0.0, %v1684
        %v1686 = vpop.f32.mrb[0].mxu0
        %1687 = vmatprep.mubr.f32.mxu0 %v1388
        %1688 = vmatmul.mubr.f32.gmra.mrb[0].mxu0 %v1387
        %v1689 = vpop.f32.mrb[0].mxu0
        %v1690 = vadd.f32 0.0, %v1689
        %v1691 = vpop.f32.mrb[0].mxu0
        %1692 = vmatprep.mubr.f32.mxu0 %v1391
        %1693 = vmatmul.mubr.f32.gmra.mrb[0].mxu0 %v1390
        %v1694 = vpop.f32.mrb[0].mxu0
        %v1695 = vadd.f32 0.0, %v1694
        %v1696 = vpop.f32.mrb[0].mxu0
        %1697 = vmatprep.mubr.f32.mxu0 %v1394
        %1698 = vmatmul.mubr.f32.gmra.mrb[0].mxu0 %v1393
        %v1699 = vpop.f32.mrb[0].mxu0
        %v1700 = vadd.f32 0.0, %v1699
        %v1701 = vpop.f32.mrb[0].mxu0
        %1702 = vmatprep.mubr.f32.mxu0 %v1397
        %1703 = vmatmul.mubr.f32.gmra.mrb[0].mxu0 %v1396
        %v1704 = vpop.f32.mrb[0].mxu0
        %v1705 = vadd.f32 0.0, %v1704
        %v1706 = vpop.f32.mrb[0].mxu0
        %1707 = vmatprep.mubr.f32.mxu0 %v1400
        %1708 = vmatmul.mubr.f32.gmra.mrb[0].mxu0 %v1399
        %v1709 = vpop.f32.mrb[0].mxu0
        %v1710 = vadd.f32 0.0, %v1709
        %v1711 = vpop.f32.mrb[0].mxu0
        %1712 = vmatprep.mubr.f32.mxu0 %v1403
        %1713 = vmatmul.mubr.f32.gmra.mrb[0].mxu0 %v1402
        %v1714 = vpop.f32.mrb[0].mxu0
        %v1715 = vadd.f32 0.0, %v1714
        %v1716 = vpop.f32.mrb[0].mxu0
        %1717 = vmatprep.mubr.f32.mxu0 %v1406
        %1718 = vmatmul.mubr.f32.gmra.mrb[0].mxu0 %v1405
        %v1719 = vpop.f32.mrb[0].mxu0
        %v1720 = vadd.f32 0.0, %v1719
        %v1721 = vpop.f32.mrb[0].mxu0
        %1722 = vmatprep.mubr.f32.mxu0 %v1409
        %1723 = vmatmul.mubr.f32.gmra.mrb[0].mxu0 %v1408
        %v1724 = vpop.f32.mrb[0].mxu0
        %v1725 = vadd.f32 0.0, %v1724
        %v1726 = vpop.f32.mrb[0].mxu0
        %1727 = vmatprep.mubr.f32.mxu0 %v1412
        %1728 = vmatmul.mubr.f32.gmra.mrb[0].mxu0 %v1411
        %v1729 = vpop.f32.mrb[0].mxu0
        %v1730 = vadd.f32 0.0, %v1729
        %v1731 = vpop.f32.mrb[0].mxu0
        %1732 = vmatprep.mubr.f32.mxu0 %v1415
        %1733 = vmatmul.mubr.f32.gmra.mrb[0].mxu0 %v1414
        %v1734 = vpop.f32.mrb[0].mxu0
        %v1735 = vadd.f32 0.0, %v1734
        %v1736 = vpop.f32.mrb[0].mxu0
        %1737 = vdwg.mxu0
        %1738 = vmatprep.subr.mxu0 0.0
        %1739 = vmatpush1.msra.mxu0 %v1317
        %1740 = vmatprep.subr.mxu0 0.0
        %1741 = vmatpush1.msra.mxu0 %v1318
        %1742 = vmatprep.subr.mxu0 0.0
        %1743 = vmatpush1.msra.mxu0 %v1319
        %1744 = vmatprep.subr.mxu0 0.0
        %1745 = vmatpush1.msra.mxu0 %v1320
        %1746 = vmatprep.subr.mxu0 0.0
        %1747 = vmatpush1.msra.mxu0 0.0
        %1748 = vmatprep.subr.mxu0 0.0
        %1749 = vmatpush1.msra.mxu0 0.0
        %1750 = vmatprep.subr.mxu0 0.0
        %1751 = vmatpush1.msra.mxu0 0.0
        %1752 = vmatprep.subr.mxu0 0.0
        %1753 = vmatpush1.msra.mxu0 0.0
        %1754 = vmatprep.subr.mxu0 0.0
        %1755 = vmatpush1.msra.mxu0 0.0
        %1756 = vmatprep.subr.mxu0 0.0
        %1757 = vmatpush1.msra.mxu0 0.0
        %1758 = vmatprep.subr.mxu0 0.0
        %1759 = vmatpush1.msra.mxu0 0.0
        %1760 = vmatprep.subr.mxu0 0.0
        %1761 = vmatpush1.msra.mxu0 0.0
        %1762 = vmatprep.subr.mxu0 0.0
        %1763 = vmatpush1.msra.mxu0 0.0
        %1764 = vmatprep.subr.mxu0 0.0
        %1765 = vmatpush1.msra.mxu0 0.0
        %1766 = vmatprep.subr.mxu0 0.0
        %1767 = vmatpush1.msra.mxu0 0.0
        %1768 = vmatprep.subr.mxu0 0.0
        %1769 = vmatpush1.msra.mxu0 0.0
        %1770 = vmatprep.subr.mxu0 0.0
        %1771 = vmatpush1.msra.mxu0 0.0
        %1772 = vmatprep.subr.mxu0 0.0
        %1773 = vmatpush1.msra.mxu0 0.0
        %1774 = vmatprep.subr.mxu0 0.0
        %1775 = vmatpush1.msra.mxu0 0.0
        %1776 = vmatprep.subr.mxu0 0.0
        %1777 = vmatpush1.msra.mxu0 0.0
        %1778 = vmatprep.subr.mxu0 0.0
        %1779 = vmatpush1.msra.mxu0 0.0
        %1780 = vmatprep.subr.mxu0 0.0
        %1781 = vmatpush1.msra.mxu0 0.0
        %1782 = vmatprep.subr.mxu0 0.0
        %1783 = vmatpush1.msra.mxu0 0.0
        %1784 = vmatprep.subr.mxu0 0.0
        %1785 = vmatpush1.msra.mxu0 0.0
        %1786 = vmatprep.subr.mxu0 0.0
        %1787 = vmatpush1.msra.mxu0 0.0
        %1788 = vmatprep.subr.mxu0 0.0
        %1789 = vmatpush1.msra.mxu0 0.0
        %1790 = vmatprep.subr.mxu0 0.0
        %1791 = vmatpush1.msra.mxu0 0.0
        %1792 = vmatprep.subr.mxu0 0.0
        %1793 = vmatpush1.msra.mxu0 0.0
        %1794 = vmatprep.subr.mxu0 0.0
        %1795 = vmatpush1.msra.mxu0 0.0
        %1796 = vmatprep.subr.mxu0 0.0
        %1797 = vmatpush1.msra.mxu0 0.0
        %1798 = vmatprep.subr.mxu0 0.0
        %1799 = vmatpush1.msra.mxu0 0.0
        %1800 = vmatprep.subr.mxu0 0.0
        %1801 = vmatpush1.msra.mxu0 0.0
        %1802 = vmatprep.mubr.f32.mxu0 0.0
        %1803 = vmatmul.mubr.f32.gmra.mrb[0].mxu0 %v1418
        %v1804 = vpop.f32.mrb[0].mxu0
        %v1805 = vadd.f32 %v1580, %v1804
        %v1806 = vpop.f32.mrb[0].mxu0
        %1807 = vmatprep.mubr.f32.mxu0 0.0
        %1808 = vmatmul.mubr.f32.gmra.mrb[0].mxu0 %v1421
        %v1809 = vpop.f32.mrb[0].mxu0
        %v1810 = vadd.f32 %v1585, %v1809
        %v1811 = vpop.f32.mrb[0].mxu0
        %1812 = vmatprep.mubr.f32.mxu0 0.0
        %1813 = vmatmul.mubr.f32.gmra.mrb[0].mxu0 %v1424
        %v1814 = vpop.f32.mrb[0].mxu0
        %v1815 = vadd.f32 %v1590, %v1814
        %v1816 = vpop.f32.mrb[0].mxu0
        %1817 = vmatprep.mubr.f32.mxu0 0.0
        %1818 = vmatmul.mubr.f32.gmra.mrb[0].mxu0 %v1427
        %v1819 = vpop.f32.mrb[0].mxu0
        %v1820 = vadd.f32 %v1595, %v1819
        %v1821 = vpop.f32.mrb[0].mxu0
        %1822 = vmatprep.mubr.f32.mxu0 0.0
        %1823 = vmatmul.mubr.f32.gmra.mrb[0].mxu0 %v1430
        %v1824 = vpop.f32.mrb[0].mxu0
        %v1825 = vadd.f32 %v1600, %v1824
        %v1826 = vpop.f32.mrb[0].mxu0
        %1827 = vmatprep.mubr.f32.mxu0 0.0
        %1828 = vmatmul.mubr.f32.gmra.mrb[0].mxu0 %v1433
        %v1829 = vpop.f32.mrb[0].mxu0
        %v1830 = vadd.f32 %v1605, %v1829
        %v1831 = vpop.f32.mrb[0].mxu0
        %1832 = vmatprep.mubr.f32.mxu0 0.0
        %1833 = vmatmul.mubr.f32.gmra.mrb[0].mxu0 %v1436
        %v1834 = vpop.f32.mrb[0].mxu0
        %v1835 = vadd.f32 %v1610, %v1834
        %v1836 = vpop.f32.mrb[0].mxu0
        %1837 = vmatprep.mubr.f32.mxu0 0.0
        %1838 = vmatmul.mubr.f32.gmra.mrb[0].mxu0 %v1439
        %v1839 = vpop.f32.mrb[0].mxu0
        %v1840 = vadd.f32 %v1615, %v1839
        %v1841 = vpop.f32.mrb[0].mxu0
        %1842 = vmatprep.mubr.f32.mxu0 0.0
        %1843 = vmatmul.mubr.f32.gmra.mrb[0].mxu0 %v1442
        %v1844 = vpop.f32.mrb[0].mxu0
        %v1845 = vadd.f32 %v1620, %v1844
        %v1846 = vpop.f32.mrb[0].mxu0
        %1847 = vmatprep.mubr.f32.mxu0 0.0
        %1848 = vmatmul.mubr.f32.gmra.mrb[0].mxu0 %v1445
        %v1849 = vpop.f32.mrb[0].mxu0
        %v1850 = vadd.f32 %v1625, %v1849
        %v1851 = vpop.f32.mrb[0].mxu0
        %1852 = vmatprep.mubr.f32.mxu0 0.0
        %1853 = vmatmul.mubr.f32.gmra.mrb[0].mxu0 %v1448
        %v1854 = vpop.f32.mrb[0].mxu0
        %v1855 = vadd.f32 %v1630, %v1854
        %v1856 = vpop.f32.mrb[0].mxu0
        %1857 = vmatprep.mubr.f32.mxu0 0.0
        %1858 = vmatmul.mubr.f32.gmra.mrb[0].mxu0 %v1451
        %v1859 = vpop.f32.mrb[0].mxu0
        %v1860 = vadd.f32 %v1635, %v1859
        %v1861 = vpop.f32.mrb[0].mxu0
        %1862 = vmatprep.mubr.f32.mxu0 0.0
        %1863 = vmatmul.mubr.f32.gmra.mrb[0].mxu0 %v1454
        %v1864 = vpop.f32.mrb[0].mxu0
        %v1865 = vadd.f32 %v1640, %v1864
        %v1866 = vpop.f32.mrb[0].mxu0
        %1867 = vmatprep.mubr.f32.mxu0 0.0
        %1868 = vmatmul.mubr.f32.gmra.mrb[0].mxu0 %v1457
        %v1869 = vpop.f32.mrb[0].mxu0
        %v1870 = vadd.f32 %v1645, %v1869
        %v1871 = vpop.f32.mrb[0].mxu0
        %1872 = vmatprep.mubr.f32.mxu0 0.0
        %1873 = vmatmul.mubr.f32.gmra.mrb[0].mxu0 %v1460
        %v1874 = vpop.f32.mrb[0].mxu0
        %v1875 = vadd.f32 %v1650, %v1874
        %v1876 = vpop.f32.mrb[0].mxu0
        %1877 = vmatprep.mubr.f32.mxu0 0.0
        %1878 = vmatmul.mubr.f32.gmra.mrb[0].mxu0 %v1463
        %v1879 = vpop.f32.mrb[0].mxu0
        %v1880 = vadd.f32 %v1655, %v1879
        %v1881 = vpop.f32.mrb[0].mxu0
        %1882 = vmatprep.mubr.f32.mxu0 0.0
        %1883 = vmatmul.mubr.f32.gmra.mrb[0].mxu0 %v1466
        %v1884 = vpop.f32.mrb[0].mxu0
        %v1885 = vadd.f32 %v1660, %v1884
        %v1886 = vpop.f32.mrb[0].mxu0
        %1887 = vmatprep.mubr.f32.mxu0 0.0
        %1888 = vmatmul.mubr.f32.gmra.mrb[0].mxu0 %v1469
        %v1889 = vpop.f32.mrb[0].mxu0
        %v1890 = vadd.f32 %v1665, %v1889
        %v1891 = vpop.f32.mrb[0].mxu0
        %1892 = vmatprep.mubr.f32.mxu0 0.0
        %1893 = vmatmul.mubr.f32.gmra.mrb[0].mxu0 %v1472
        %v1894 = vpop.f32.mrb[0].mxu0
        %v1895 = vadd.f32 %v1670, %v1894
        %v1896 = vpop.f32.mrb[0].mxu0
        %1897 = vmatprep.mubr.f32.mxu0 0.0
        %1898 = vmatmul.mubr.f32.gmra.mrb[0].mxu0 %v1475
        %v1899 = vpop.f32.mrb[0].mxu0
        %v1900 = vadd.f32 %v1675, %v1899
        %v1901 = vpop.f32.mrb[0].mxu0
        %1902 = vmatprep.mubr.f32.mxu0 0.0
        %1903 = vmatmul.mubr.f32.gmra.mrb[0].mxu0 %v1478
        %v1904 = vpop.f32.mrb[0].mxu0
        %v1905 = vadd.f32 %v1680, %v1904
        %v1906 = vpop.f32.mrb[0].mxu0
        %1907 = vmatprep.mubr.f32.mxu0 0.0
        %1908 = vmatmul.mubr.f32.gmra.mrb[0].mxu0 %v1481
        %v1909 = vpop.f32.mrb[0].mxu0
        %v1910 = vadd.f32 %v1685, %v1909
        %v1911 = vpop.f32.mrb[0].mxu0
        %1912 = vmatprep.mubr.f32.mxu0 0.0
        %1913 = vmatmul.mubr.f32.gmra.mrb[0].mxu0 %v1484
        %v1914 = vpop.f32.mrb[0].mxu0
        %v1915 = vadd.f32 %v1690, %v1914
        %v1916 = vpop.f32.mrb[0].mxu0
        %1917 = vmatprep.mubr.f32.mxu0 0.0
        %1918 = vmatmul.mubr.f32.gmra.mrb[0].mxu0 %v1487
        %v1919 = vpop.f32.mrb[0].mxu0
        %v1920 = vadd.f32 %v1695, %v1919
        %v1921 = vpop.f32.mrb[0].mxu0
        %1922 = vmatprep.mubr.f32.mxu0 0.0
        %1923 = vmatmul.mubr.f32.gmra.mrb[0].mxu0 %v1490
        %v1924 = vpop.f32.mrb[0].mxu0
        %v1925 = vadd.f32 %v1700, %v1924
        %v1926 = vpop.f32.mrb[0].mxu0
        %1927 = vmatprep.mubr.f32.mxu0 0.0
        %1928 = vmatmul.mubr.f32.gmra.mrb[0].mxu0 %v1493
        %v1929 = vpop.f32.mrb[0].mxu0
        %v1930 = vadd.f32 %v1705, %v1929
        %v1931 = vpop.f32.mrb[0].mxu0
        %1932 = vmatprep.mubr.f32.mxu0 0.0
        %1933 = vmatmul.mubr.f32.gmra.mrb[0].mxu0 %v1496
        %v1934 = vpop.f32.mrb[0].mxu0
        %v1935 = vadd.f32 %v1710, %v1934
        %v1936 = vpop.f32.mrb[0].mxu0
        %1937 = vmatprep.mubr.f32.mxu0 0.0
        %1938 = vmatmul.mubr.f32.gmra.mrb[0].mxu0 %v1499
        %v1939 = vpop.f32.mrb[0].mxu0
        %v1940 = vadd.f32 %v1715, %v1939
        %v1941 = vpop.f32.mrb[0].mxu0
        %1942 = vmatprep.mubr.f32.mxu0 0.0
        %1943 = vmatmul.mubr.f32.gmra.mrb[0].mxu0 %v1502
        %v1944 = vpop.f32.mrb[0].mxu0
        %v1945 = vadd.f32 %v1720, %v1944
        %v1946 = vpop.f32.mrb[0].mxu0
        %1947 = vmatprep.mubr.f32.mxu0 0.0
        %1948 = vmatmul.mubr.f32.gmra.mrb[0].mxu0 %v1505
        %v1949 = vpop.f32.mrb[0].mxu0
        %v1950 = vadd.f32 %v1725, %v1949
        %v1951 = vpop.f32.mrb[0].mxu0
        %1952 = vmatprep.mubr.f32.mxu0 0.0
        %1953 = vmatmul.mubr.f32.gmra.mrb[0].mxu0 %v1508
        %v1954 = vpop.f32.mrb[0].mxu0
        %v1955 = vadd.f32 %v1730, %v1954
        %v1956 = vpop.f32.mrb[0].mxu0
        %1957 = vmatprep.mubr.f32.mxu0 0.0
        %1958 = vmatmul.mubr.f32.gmra.mrb[0].mxu0 %v1511
        %v1959 = vpop.f32.mrb[0].mxu0
        %v1960 = vadd.f32 %v1735, %v1959
        %v1961 = vpop.f32.mrb[0].mxu0
        %1962 = vdwg.mxu0
        %s1963 = scalar_lea.vmem %s3, 768
        %v1964 = vld [vmem:[%s1963] sm:$0xff]
        %v1965 = vld [vmem:[%s1963 + $0x8] sm:$0xff]
        %v1966 = vld [vmem:[%s1963 + $0x10] sm:$0xff]
        %v1967 = vld [vmem:[%s1963 + $0x18] sm:$0xff]
        %v1968 = vld [vmem:[%s1963 + $0x20] sm:$0xff]
        %v1969 = vld [vmem:[%s1963 + $0x28] sm:$0xff]
        %v1970 = vld [vmem:[%s1963 + $0x30] sm:$0xff]
        %v1971 = vld [vmem:[%s1963 + $0x38] sm:$0xff]
        %v1972 = vld [vmem:[%s1963 + $0x40] sm:$0xff]
        %v1973 = vld [vmem:[%s1963 + $0x48] sm:$0xff]
        %v1974 = vld [vmem:[%s1963 + $0x50] sm:$0xff]
        %v1975 = vld [vmem:[%s1963 + $0x58] sm:$0xff]
        %v1976 = vld [vmem:[%s1963 + $0x60] sm:$0xff]
        %v1977 = vld [vmem:[%s1963 + $0x68] sm:$0xff]
        %v1978 = vld [vmem:[%s1963 + $0x70] sm:$0xff]
        %v1979 = vld [vmem:[%s1963 + $0x78] sm:$0xff]
        %v1980 = vld [vmem:[%s1963 + $0x80] sm:$0xff]
        %v1981 = vld [vmem:[%s1963 + $0x88] sm:$0xff]
        %v1982 = vld [vmem:[%s1963 + $0x90] sm:$0xff]
        %v1983 = vld [vmem:[%s1963 + $0x98] sm:$0xff]
        %v1984 = vld [vmem:[%s1963 + $0xa0] sm:$0xff]
        %v1985 = vld [vmem:[%s1963 + $0xa8] sm:$0xff]
        %v1986 = vld [vmem:[%s1963 + $0xb0] sm:$0xff]
        %v1987 = vld [vmem:[%s1963 + $0xb8] sm:$0xff]
        %v1988 = vld [vmem:[%s1963 + $0xc0] sm:$0xff]
        %v1989 = vld [vmem:[%s1963 + $0xc8] sm:$0xff]
        %v1990 = vld [vmem:[%s1963 + $0xd0] sm:$0xff]
        %v1991 = vld [vmem:[%s1963 + $0xd8] sm:$0xff]
        %v1992 = vld [vmem:[%s1963 + $0xe0] sm:$0xff]
        %v1993 = vld [vmem:[%s1963 + $0xe8] sm:$0xff]
        %v1994 = vld [vmem:[%s1963 + $0xf0] sm:$0xff]
        %v1995 = vld [vmem:[%s1963 + $0xf8] sm:$0xff]
        %v1996 = vld [vmem:[%s1963 + $0x100] sm:$0xff]
        %v1997 = vld [vmem:[%s1963 + $0x108] sm:$0xff]
        %v1998 = vld [vmem:[%s1963 + $0x110] sm:$0xff]
        %v1999 = vld [vmem:[%s1963 + $0x118] sm:$0xff]
        %v2000 = vld [vmem:[%s1963 + $0x120] sm:$0xff]
        %v2001 = vld [vmem:[%s1963 + $0x128] sm:$0xff]
        %v2002 = vld [vmem:[%s1963 + $0x130] sm:$0xff]
        %v2003 = vld [vmem:[%s1963 + $0x138] sm:$0xff]
        %v2004 = vld [vmem:[%s1963 + $0x140] sm:$0xff]
        %v2005 = vld [vmem:[%s1963 + $0x148] sm:$0xff]
        %v2006 = vld [vmem:[%s1963 + $0x150] sm:$0xff]
        %v2007 = vld [vmem:[%s1963 + $0x158] sm:$0xff]
        %v2008 = vld [vmem:[%s1963 + $0x160] sm:$0xff]
        %v2009 = vld [vmem:[%s1963 + $0x168] sm:$0xff]
        %v2010 = vld [vmem:[%s1963 + $0x170] sm:$0xff]
        %v2011 = vld [vmem:[%s1963 + $0x178] sm:$0xff]
        %v2012 = vld [vmem:[%s1963 + $0x180] sm:$0xff]
        %v2013 = vld [vmem:[%s1963 + $0x188] sm:$0xff]
        %v2014 = vld [vmem:[%s1963 + $0x190] sm:$0xff]
        %v2015 = vld [vmem:[%s1963 + $0x198] sm:$0xff]
        %v2016 = vld [vmem:[%s1963 + $0x1a0] sm:$0xff]
        %v2017 = vld [vmem:[%s1963 + $0x1a8] sm:$0xff]
        %v2018 = vld [vmem:[%s1963 + $0x1b0] sm:$0xff]
        %v2019 = vld [vmem:[%s1963 + $0x1b8] sm:$0xff]
        %v2020 = vld [vmem:[%s1963 + $0x1c0] sm:$0xff]
        %v2021 = vld [vmem:[%s1963 + $0x1c8] sm:$0xff]
        %v2022 = vld [vmem:[%s1963 + $0x1d0] sm:$0xff]
        %v2023 = vld [vmem:[%s1963 + $0x1d8] sm:$0xff]
        %v2024 = vld [vmem:[%s1963 + $0x1e0] sm:$0xff]
        %v2025 = vld [vmem:[%s1963 + $0x1e8] sm:$0xff]
        %v2026 = vld [vmem:[%s1963 + $0x1f0] sm:$0xff]
        %v2027 = vld [vmem:[%s1963 + $0x1f8] sm:$0xff]
        %v2028 = vld [vmem:[%s1963 + $0x200] sm:$0xff]
        %v2029 = vld [vmem:[%s1963 + $0x208] sm:$0xff]
        %v2030 = vld [vmem:[%s1963 + $0x210] sm:$0xff]
        %v2031 = vld [vmem:[%s1963 + $0x218] sm:$0xff]
        %v2032 = vld [vmem:[%s1963 + $0x220] sm:$0xff]
        %v2033 = vld [vmem:[%s1963 + $0x228] sm:$0xff]
        %v2034 = vld [vmem:[%s1963 + $0x230] sm:$0xff]
        %v2035 = vld [vmem:[%s1963 + $0x238] sm:$0xff]
        %v2036 = vld [vmem:[%s1963 + $0x240] sm:$0xff]
        %v2037 = vld [vmem:[%s1963 + $0x248] sm:$0xff]
        %v2038 = vld [vmem:[%s1963 + $0x250] sm:$0xff]
        %v2039 = vld [vmem:[%s1963 + $0x258] sm:$0xff]
        %v2040 = vld [vmem:[%s1963 + $0x260] sm:$0xff]
        %v2041 = vld [vmem:[%s1963 + $0x268] sm:$0xff]
        %v2042 = vld [vmem:[%s1963 + $0x270] sm:$0xff]
        %v2043 = vld [vmem:[%s1963 + $0x278] sm:$0xff]
        %v2044 = vld [vmem:[%s1963 + $0x280] sm:$0xff]
        %v2045 = vld [vmem:[%s1963 + $0x288] sm:$0xff]
        %v2046 = vld [vmem:[%s1963 + $0x290] sm:$0xff]
        %v2047 = vld [vmem:[%s1963 + $0x298] sm:$0xff]
        %v2048 = vld [vmem:[%s1963 + $0x2a0] sm:$0xff]
        %v2049 = vld [vmem:[%s1963 + $0x2a8] sm:$0xff]
        %v2050 = vld [vmem:[%s1963 + $0x2b0] sm:$0xff]
        %v2051 = vld [vmem:[%s1963 + $0x2b8] sm:$0xff]
        %v2052 = vld [vmem:[%s1963 + $0x2c0] sm:$0xff]
        %v2053 = vld [vmem:[%s1963 + $0x2c8] sm:$0xff]
        %v2054 = vld [vmem:[%s1963 + $0x2d0] sm:$0xff]
        %v2055 = vld [vmem:[%s1963 + $0x2d8] sm:$0xff]
        %v2056 = vld [vmem:[%s1963 + $0x2e0] sm:$0xff]
        %v2057 = vld [vmem:[%s1963 + $0x2e8] sm:$0xff]
        %v2058 = vld [vmem:[%s1963 + $0x2f0] sm:$0xff]
        %v2059 = vld [vmem:[%s1963 + $0x2f8] sm:$0xff]
        %v2061 = vsel %vm465, %v1966, 0
        %v2064 = vsel %vm465, %v1969, 0
        %v2067 = vsel %vm465, %v1972, 0
        %v2070 = vsel %vm465, %v1975, 0
        %v2073 = vsel %vm465, %v1978, 0
        %v2076 = vsel %vm465, %v1981, 0
        %v2079 = vsel %vm465, %v1984, 0
        %v2082 = vsel %vm465, %v1987, 0
        %v2085 = vsel %vm465, %v1990, 0
        %v2088 = vsel %vm465, %v1993, 0
        %v2091 = vsel %vm465, %v1996, 0
        %v2094 = vsel %vm465, %v1999, 0
        %v2097 = vsel %vm465, %v2002, 0
        %v2100 = vsel %vm465, %v2005, 0
        %v2103 = vsel %vm465, %v2008, 0
        %v2106 = vsel %vm465, %v2011, 0
        %v2109 = vsel %vm465, %v2014, 0
        %v2112 = vsel %vm465, %v2017, 0
        %v2115 = vsel %vm465, %v2020, 0
        %v2118 = vsel %vm465, %v2023, 0
        %v2121 = vsel %vm465, %v2026, 0
        %v2124 = vsel %vm465, %v2029, 0
        %v2127 = vsel %vm465, %v2032, 0
        %v2130 = vsel %vm465, %v2035, 0
        %v2133 = vsel %vm465, %v2038, 0
        %v2136 = vsel %vm465, %v2041, 0
        %v2139 = vsel %vm465, %v2044, 0
        %v2142 = vsel %vm465, %v2047, 0
        %v2145 = vsel %vm465, %v2050, 0
        %v2148 = vsel %vm465, %v2053, 0
        %v2151 = vsel %vm465, %v2056, 0
        %v2154 = vsel %vm465, %v2059, 0
        %2156 = vmatprep.subr.mxu0 0.0
        %2157 = vmatpush1.msra.mxu0 %v1285
        %2158 = vmatprep.subr.mxu0 0.0
        %2159 = vmatpush1.msra.mxu0 %v1286
        %2160 = vmatprep.subr.mxu0 0.0
        %2161 = vmatpush1.msra.mxu0 %v1287
        %2162 = vmatprep.subr.mxu0 0.0
        %2163 = vmatpush1.msra.mxu0 %v1288
        %2164 = vmatprep.subr.mxu0 0.0
        %2165 = vmatpush1.msra.mxu0 %v1289
        %2166 = vmatprep.subr.mxu0 0.0
        %2167 = vmatpush1.msra.mxu0 %v1290
        %2168 = vmatprep.subr.mxu0 0.0
        %2169 = vmatpush1.msra.mxu0 %v1291
        %2170 = vmatprep.subr.mxu0 0.0
        %2171 = vmatpush1.msra.mxu0 %v1292
        %2172 = vmatprep.subr.mxu0 0.0
        %2173 = vmatpush1.msra.mxu0 %v1293
        %2174 = vmatprep.subr.mxu0 0.0
        %2175 = vmatpush1.msra.mxu0 %v1294
        %2176 = vmatprep.subr.mxu0 0.0
        %2177 = vmatpush1.msra.mxu0 %v1295
        %2178 = vmatprep.subr.mxu0 0.0
        %2179 = vmatpush1.msra.mxu0 %v1296
        %2180 = vmatprep.subr.mxu0 0.0
        %2181 = vmatpush1.msra.mxu0 %v1297
        %2182 = vmatprep.subr.mxu0 0.0
        %2183 = vmatpush1.msra.mxu0 %v1298
        %2184 = vmatprep.subr.mxu0 0.0
        %2185 = vmatpush1.msra.mxu0 %v1299
        %2186 = vmatprep.subr.mxu0 0.0
        %2187 = vmatpush1.msra.mxu0 %v1300
        %2188 = vmatprep.subr.mxu0 0.0
        %2189 = vmatpush1.msra.mxu0 %v1301
        %2190 = vmatprep.subr.mxu0 0.0
        %2191 = vmatpush1.msra.mxu0 %v1302
        %2192 = vmatprep.subr.mxu0 0.0
        %2193 = vmatpush1.msra.mxu0 %v1303
        %2194 = vmatprep.subr.mxu0 0.0
        %2195 = vmatpush1.msra.mxu0 %v1304
        %2196 = vmatprep.subr.mxu0 0.0
        %2197 = vmatpush1.msra.mxu0 %v1305
        %2198 = vmatprep.subr.mxu0 0.0
        %2199 = vmatpush1.msra.mxu0 %v1306
        %2200 = vmatprep.subr.mxu0 0.0
        %2201 = vmatpush1.msra.mxu0 %v1307
        %2202 = vmatprep.subr.mxu0 0.0
        %2203 = vmatpush1.msra.mxu0 %v1308
        %2204 = vmatprep.subr.mxu0 0.0
        %2205 = vmatpush1.msra.mxu0 %v1309
        %2206 = vmatprep.subr.mxu0 0.0
        %2207 = vmatpush1.msra.mxu0 %v1310
        %2208 = vmatprep.subr.mxu0 0.0
        %2209 = vmatpush1.msra.mxu0 %v1311
        %2210 = vmatprep.subr.mxu0 0.0
        %2211 = vmatpush1.msra.mxu0 %v1312
        %2212 = vmatprep.subr.mxu0 0.0
        %2213 = vmatpush1.msra.mxu0 %v1313
        %2214 = vmatprep.subr.mxu0 0.0
        %2215 = vmatpush1.msra.mxu0 %v1314
        %2216 = vmatprep.subr.mxu0 0.0
        %2217 = vmatpush1.msra.mxu0 %v1315
        %2218 = vmatprep.subr.mxu0 0.0
        %2219 = vmatpush1.msra.mxu0 %v1316
        %2220 = vmatprep.mubr.f32.mxu0 %v1965
        %2221 = vmatmul.mubr.f32.gmra.mrb[0].mxu0 %v1964
        %v2222 = vpop.f32.mrb[0].mxu0
        %v2223 = vadd.f32 0.0, %v2222
        %v2224 = vpop.f32.mrb[0].mxu0
        %2225 = vmatprep.mubr.f32.mxu0 %v1968
        %2226 = vmatmul.mubr.f32.gmra.mrb[0].mxu0 %v1967
        %v2227 = vpop.f32.mrb[0].mxu0
        %v2228 = vadd.f32 0.0, %v2227
        %v2229 = vpop.f32.mrb[0].mxu0
        %2230 = vmatprep.mubr.f32.mxu0 %v1971
        %2231 = vmatmul.mubr.f32.gmra.mrb[0].mxu0 %v1970
        %v2232 = vpop.f32.mrb[0].mxu0
        %v2233 = vadd.f32 0.0, %v2232
        %v2234 = vpop.f32.mrb[0].mxu0
        %2235 = vmatprep.mubr.f32.mxu0 %v1974
        %2236 = vmatmul.mubr.f32.gmra.mrb[0].mxu0 %v1973
        %v2237 = vpop.f32.mrb[0].mxu0
        %v2238 = vadd.f32 0.0, %v2237
        %v2239 = vpop.f32.mrb[0].mxu0
        %2240 = vmatprep.mubr.f32.mxu0 %v1977
        %2241 = vmatmul.mubr.f32.gmra.mrb[0].mxu0 %v1976
        %v2242 = vpop.f32.mrb[0].mxu0
        %v2243 = vadd.f32 0.0, %v2242
        %v2244 = vpop.f32.mrb[0].mxu0
        %2245 = vmatprep.mubr.f32.mxu0 %v1980
        %2246 = vmatmul.mubr.f32.gmra.mrb[0].mxu0 %v1979
        %v2247 = vpop.f32.mrb[0].mxu0
        %v2248 = vadd.f32 0.0, %v2247
        %v2249 = vpop.f32.mrb[0].mxu0
        %2250 = vmatprep.mubr.f32.mxu0 %v1983
        %2251 = vmatmul.mubr.f32.gmra.mrb[0].mxu0 %v1982
        %v2252 = vpop.f32.mrb[0].mxu0
        %v2253 = vadd.f32 0.0, %v2252
        %v2254 = vpop.f32.mrb[0].mxu0
        %2255 = vmatprep.mubr.f32.mxu0 %v1986
        %2256 = vmatmul.mubr.f32.gmra.mrb[0].mxu0 %v1985
        %v2257 = vpop.f32.mrb[0].mxu0
        %v2258 = vadd.f32 0.0, %v2257
        %v2259 = vpop.f32.mrb[0].mxu0
        %2260 = vmatprep.mubr.f32.mxu0 %v1989
        %2261 = vmatmul.mubr.f32.gmra.mrb[0].mxu0 %v1988
        %v2262 = vpop.f32.mrb[0].mxu0
        %v2263 = vadd.f32 0.0, %v2262
        %v2264 = vpop.f32.mrb[0].mxu0
        %2265 = vmatprep.mubr.f32.mxu0 %v1992
        %2266 = vmatmul.mubr.f32.gmra.mrb[0].mxu0 %v1991
        %v2267 = vpop.f32.mrb[0].mxu0
        %v2268 = vadd.f32 0.0, %v2267
        %v2269 = vpop.f32.mrb[0].mxu0
        %2270 = vmatprep.mubr.f32.mxu0 %v1995
        %2271 = vmatmul.mubr.f32.gmra.mrb[0].mxu0 %v1994
        %v2272 = vpop.f32.mrb[0].mxu0
        %v2273 = vadd.f32 0.0, %v2272
        %v2274 = vpop.f32.mrb[0].mxu0
        %2275 = vmatprep.mubr.f32.mxu0 %v1998
        %2276 = vmatmul.mubr.f32.gmra.mrb[0].mxu0 %v1997
        %v2277 = vpop.f32.mrb[0].mxu0
        %v2278 = vadd.f32 0.0, %v2277
        %v2279 = vpop.f32.mrb[0].mxu0
        %2280 = vmatprep.mubr.f32.mxu0 %v2001
        %2281 = vmatmul.mubr.f32.gmra.mrb[0].mxu0 %v2000
        %v2282 = vpop.f32.mrb[0].mxu0
        %v2283 = vadd.f32 0.0, %v2282
        %v2284 = vpop.f32.mrb[0].mxu0
        %2285 = vmatprep.mubr.f32.mxu0 %v2004
        %2286 = vmatmul.mubr.f32.gmra.mrb[0].mxu0 %v2003
        %v2287 = vpop.f32.mrb[0].mxu0
        %v2288 = vadd.f32 0.0, %v2287
        %v2289 = vpop.f32.mrb[0].mxu0
        %2290 = vmatprep.mubr.f32.mxu0 %v2007
        %2291 = vmatmul.mubr.f32.gmra.mrb[0].mxu0 %v2006
        %v2292 = vpop.f32.mrb[0].mxu0
        %v2293 = vadd.f32 0.0, %v2292
        %v2294 = vpop.f32.mrb[0].mxu0
        %2295 = vmatprep.mubr.f32.mxu0 %v2010
        %2296 = vmatmul.mubr.f32.gmra.mrb[0].mxu0 %v2009
        %v2297 = vpop.f32.mrb[0].mxu0
        %v2298 = vadd.f32 0.0, %v2297
        %v2299 = vpop.f32.mrb[0].mxu0
        %2300 = vmatprep.mubr.f32.mxu0 %v2013
        %2301 = vmatmul.mubr.f32.gmra.mrb[0].mxu0 %v2012
        %v2302 = vpop.f32.mrb[0].mxu0
        %v2303 = vadd.f32 0.0, %v2302
        %v2304 = vpop.f32.mrb[0].mxu0
        %2305 = vmatprep.mubr.f32.mxu0 %v2016
        %2306 = vmatmul.mubr.f32.gmra.mrb[0].mxu0 %v2015
        %v2307 = vpop.f32.mrb[0].mxu0
        %v2308 = vadd.f32 0.0, %v2307
        %v2309 = vpop.f32.mrb[0].mxu0
        %2310 = vmatprep.mubr.f32.mxu0 %v2019
        %2311 = vmatmul.mubr.f32.gmra.mrb[0].mxu0 %v2018
        %v2312 = vpop.f32.mrb[0].mxu0
        %v2313 = vadd.f32 0.0, %v2312
        %v2314 = vpop.f32.mrb[0].mxu0
        %2315 = vmatprep.mubr.f32.mxu0 %v2022
        %2316 = vmatmul.mubr.f32.gmra.mrb[0].mxu0 %v2021
        %v2317 = vpop.f32.mrb[0].mxu0
        %v2318 = vadd.f32 0.0, %v2317
        %v2319 = vpop.f32.mrb[0].mxu0
        %2320 = vmatprep.mubr.f32.mxu0 %v2025
        %2321 = vmatmul.mubr.f32.gmra.mrb[0].mxu0 %v2024
        %v2322 = vpop.f32.mrb[0].mxu0
        %v2323 = vadd.f32 0.0, %v2322
        %v2324 = vpop.f32.mrb[0].mxu0
        %2325 = vmatprep.mubr.f32.mxu0 %v2028
        %2326 = vmatmul.mubr.f32.gmra.mrb[0].mxu0 %v2027
        %v2327 = vpop.f32.mrb[0].mxu0
        %v2328 = vadd.f32 0.0, %v2327
        %v2329 = vpop.f32.mrb[0].mxu0
        %2330 = vmatprep.mubr.f32.mxu0 %v2031
        %2331 = vmatmul.mubr.f32.gmra.mrb[0].mxu0 %v2030
        %v2332 = vpop.f32.mrb[0].mxu0
        %v2333 = vadd.f32 0.0, %v2332
        %v2334 = vpop.f32.mrb[0].mxu0
        %2335 = vmatprep.mubr.f32.mxu0 %v2034
        %2336 = vmatmul.mubr.f32.gmra.mrb[0].mxu0 %v2033
        %v2337 = vpop.f32.mrb[0].mxu0
        %v2338 = vadd.f32 0.0, %v2337
        %v2339 = vpop.f32.mrb[0].mxu0
        %2340 = vmatprep.mubr.f32.mxu0 %v2037
        %2341 = vmatmul.mubr.f32.gmra.mrb[0].mxu0 %v2036
        %v2342 = vpop.f32.mrb[0].mxu0
        %v2343 = vadd.f32 0.0, %v2342
        %v2344 = vpop.f32.mrb[0].mxu0
        %2345 = vmatprep.mubr.f32.mxu0 %v2040
        %2346 = vmatmul.mubr.f32.gmra.mrb[0].mxu0 %v2039
        %v2347 = vpop.f32.mrb[0].mxu0
        %v2348 = vadd.f32 0.0, %v2347
        %v2349 = vpop.f32.mrb[0].mxu0
        %2350 = vmatprep.mubr.f32.mxu0 %v2043
        %2351 = vmatmul.mubr.f32.gmra.mrb[0].mxu0 %v2042
        %v2352 = vpop.f32.mrb[0].mxu0
        %v2353 = vadd.f32 0.0, %v2352
        %v2354 = vpop.f32.mrb[0].mxu0
        %2355 = vmatprep.mubr.f32.mxu0 %v2046
        %2356 = vmatmul.mubr.f32.gmra.mrb[0].mxu0 %v2045
        %v2357 = vpop.f32.mrb[0].mxu0
        %v2358 = vadd.f32 0.0, %v2357
        %v2359 = vpop.f32.mrb[0].mxu0
        %2360 = vmatprep.mubr.f32.mxu0 %v2049
        %2361 = vmatmul.mubr.f32.gmra.mrb[0].mxu0 %v2048
        %v2362 = vpop.f32.mrb[0].mxu0
        %v2363 = vadd.f32 0.0, %v2362
        %v2364 = vpop.f32.mrb[0].mxu0
        %2365 = vmatprep.mubr.f32.mxu0 %v2052
        %2366 = vmatmul.mubr.f32.gmra.mrb[0].mxu0 %v2051
        %v2367 = vpop.f32.mrb[0].mxu0
        %v2368 = vadd.f32 0.0, %v2367
        %v2369 = vpop.f32.mrb[0].mxu0
        %2370 = vmatprep.mubr.f32.mxu0 %v2055
        %2371 = vmatmul.mubr.f32.gmra.mrb[0].mxu0 %v2054
        %v2372 = vpop.f32.mrb[0].mxu0
        %v2373 = vadd.f32 0.0, %v2372
        %v2374 = vpop.f32.mrb[0].mxu0
        %2375 = vmatprep.mubr.f32.mxu0 %v2058
        %2376 = vmatmul.mubr.f32.gmra.mrb[0].mxu0 %v2057
        %v2377 = vpop.f32.mrb[0].mxu0
        %v2378 = vadd.f32 0.0, %v2377
        %v2379 = vpop.f32.mrb[0].mxu0
        %2380 = vdwg.mxu0
        %2381 = vmatprep.subr.mxu0 0.0
        %2382 = vmatpush1.msra.mxu0 %v1317
        %2383 = vmatprep.subr.mxu0 0.0
        %2384 = vmatpush1.msra.mxu0 %v1318
        %2385 = vmatprep.subr.mxu0 0.0
        %2386 = vmatpush1.msra.mxu0 %v1319
        %2387 = vmatprep.subr.mxu0 0.0
        %2388 = vmatpush1.msra.mxu0 %v1320
        %2389 = vmatprep.subr.mxu0 0.0
        %2390 = vmatpush1.msra.mxu0 0.0
        %2391 = vmatprep.subr.mxu0 0.0
        %2392 = vmatpush1.msra.mxu0 0.0
        %2393 = vmatprep.subr.mxu0 0.0
        %2394 = vmatpush1.msra.mxu0 0.0
        %2395 = vmatprep.subr.mxu0 0.0
        %2396 = vmatpush1.msra.mxu0 0.0
        %2397 = vmatprep.subr.mxu0 0.0
        %2398 = vmatpush1.msra.mxu0 0.0
        %2399 = vmatprep.subr.mxu0 0.0
        %2400 = vmatpush1.msra.mxu0 0.0
        %2401 = vmatprep.subr.mxu0 0.0
        %2402 = vmatpush1.msra.mxu0 0.0
        %2403 = vmatprep.subr.mxu0 0.0
        %2404 = vmatpush1.msra.mxu0 0.0
        %2405 = vmatprep.subr.mxu0 0.0
        %2406 = vmatpush1.msra.mxu0 0.0
        %2407 = vmatprep.subr.mxu0 0.0
        %2408 = vmatpush1.msra.mxu0 0.0
        %2409 = vmatprep.subr.mxu0 0.0
        %2410 = vmatpush1.msra.mxu0 0.0
        %2411 = vmatprep.subr.mxu0 0.0
        %2412 = vmatpush1.msra.mxu0 0.0
        %2413 = vmatprep.subr.mxu0 0.0
        %2414 = vmatpush1.msra.mxu0 0.0
        %2415 = vmatprep.subr.mxu0 0.0
        %2416 = vmatpush1.msra.mxu0 0.0
        %2417 = vmatprep.subr.mxu0 0.0
        %2418 = vmatpush1.msra.mxu0 0.0
        %2419 = vmatprep.subr.mxu0 0.0
        %2420 = vmatpush1.msra.mxu0 0.0
        %2421 = vmatprep.subr.mxu0 0.0
        %2422 = vmatpush1.msra.mxu0 0.0
        %2423 = vmatprep.subr.mxu0 0.0
        %2424 = vmatpush1.msra.mxu0 0.0
        %2425 = vmatprep.subr.mxu0 0.0
        %2426 = vmatpush1.msra.mxu0 0.0
        %2427 = vmatprep.subr.mxu0 0.0
        %2428 = vmatpush1.msra.mxu0 0.0
        %2429 = vmatprep.subr.mxu0 0.0
        %2430 = vmatpush1.msra.mxu0 0.0
        %2431 = vmatprep.subr.mxu0 0.0
        %2432 = vmatpush1.msra.mxu0 0.0
        %2433 = vmatprep.subr.mxu0 0.0
        %2434 = vmatpush1.msra.mxu0 0.0
        %2435 = vmatprep.subr.mxu0 0.0
        %2436 = vmatpush1.msra.mxu0 0.0
        %2437 = vmatprep.subr.mxu0 0.0
        %2438 = vmatpush1.msra.mxu0 0.0
        %2439 = vmatprep.subr.mxu0 0.0
        %2440 = vmatpush1.msra.mxu0 0.0
        %2441 = vmatprep.subr.mxu0 0.0
        %2442 = vmatpush1.msra.mxu0 0.0
        %2443 = vmatprep.subr.mxu0 0.0
        %2444 = vmatpush1.msra.mxu0 0.0
        %2445 = vmatprep.mubr.f32.mxu0 0.0
        %2446 = vmatmul.mubr.f32.gmra.mrb[0].mxu0 %v2061
        %v2447 = vpop.f32.mrb[0].mxu0
        %v2448 = vadd.f32 %v2223, %v2447
        %v2449 = vpop.f32.mrb[0].mxu0
        %2450 = vmatprep.mubr.f32.mxu0 0.0
        %2451 = vmatmul.mubr.f32.gmra.mrb[0].mxu0 %v2064
        %v2452 = vpop.f32.mrb[0].mxu0
        %v2453 = vadd.f32 %v2228, %v2452
        %v2454 = vpop.f32.mrb[0].mxu0
        %2455 = vmatprep.mubr.f32.mxu0 0.0
        %2456 = vmatmul.mubr.f32.gmra.mrb[0].mxu0 %v2067
        %v2457 = vpop.f32.mrb[0].mxu0
        %v2458 = vadd.f32 %v2233, %v2457
        %v2459 = vpop.f32.mrb[0].mxu0
        %2460 = vmatprep.mubr.f32.mxu0 0.0
        %2461 = vmatmul.mubr.f32.gmra.mrb[0].mxu0 %v2070
        %v2462 = vpop.f32.mrb[0].mxu0
        %v2463 = vadd.f32 %v2238, %v2462
        %v2464 = vpop.f32.mrb[0].mxu0
        %2465 = vmatprep.mubr.f32.mxu0 0.0
        %2466 = vmatmul.mubr.f32.gmra.mrb[0].mxu0 %v2073
        %v2467 = vpop.f32.mrb[0].mxu0
        %v2468 = vadd.f32 %v2243, %v2467
        %v2469 = vpop.f32.mrb[0].mxu0
        %2470 = vmatprep.mubr.f32.mxu0 0.0
        %2471 = vmatmul.mubr.f32.gmra.mrb[0].mxu0 %v2076
        %v2472 = vpop.f32.mrb[0].mxu0
        %v2473 = vadd.f32 %v2248, %v2472
        %v2474 = vpop.f32.mrb[0].mxu0
        %2475 = vmatprep.mubr.f32.mxu0 0.0
        %2476 = vmatmul.mubr.f32.gmra.mrb[0].mxu0 %v2079
        %v2477 = vpop.f32.mrb[0].mxu0
        %v2478 = vadd.f32 %v2253, %v2477
        %v2479 = vpop.f32.mrb[0].mxu0
        %2480 = vmatprep.mubr.f32.mxu0 0.0
        %2481 = vmatmul.mubr.f32.gmra.mrb[0].mxu0 %v2082
        %v2482 = vpop.f32.mrb[0].mxu0
        %v2483 = vadd.f32 %v2258, %v2482
        %v2484 = vpop.f32.mrb[0].mxu0
        %2485 = vmatprep.mubr.f32.mxu0 0.0
        %2486 = vmatmul.mubr.f32.gmra.mrb[0].mxu0 %v2085
        %v2487 = vpop.f32.mrb[0].mxu0
        %v2488 = vadd.f32 %v2263, %v2487
        %v2489 = vpop.f32.mrb[0].mxu0
        %2490 = vmatprep.mubr.f32.mxu0 0.0
        %2491 = vmatmul.mubr.f32.gmra.mrb[0].mxu0 %v2088
        %v2492 = vpop.f32.mrb[0].mxu0
        %v2493 = vadd.f32 %v2268, %v2492
        %v2494 = vpop.f32.mrb[0].mxu0
        %2495 = vmatprep.mubr.f32.mxu0 0.0
        %2496 = vmatmul.mubr.f32.gmra.mrb[0].mxu0 %v2091
        %v2497 = vpop.f32.mrb[0].mxu0
        %v2498 = vadd.f32 %v2273, %v2497
        %v2499 = vpop.f32.mrb[0].mxu0
        %2500 = vmatprep.mubr.f32.mxu0 0.0
        %2501 = vmatmul.mubr.f32.gmra.mrb[0].mxu0 %v2094
        %v2502 = vpop.f32.mrb[0].mxu0
        %v2503 = vadd.f32 %v2278, %v2502
        %v2504 = vpop.f32.mrb[0].mxu0
        %2505 = vmatprep.mubr.f32.mxu0 0.0
        %2506 = vmatmul.mubr.f32.gmra.mrb[0].mxu0 %v2097
        %v2507 = vpop.f32.mrb[0].mxu0
        %v2508 = vadd.f32 %v2283, %v2507
        %v2509 = vpop.f32.mrb[0].mxu0
        %2510 = vmatprep.mubr.f32.mxu0 0.0
        %2511 = vmatmul.mubr.f32.gmra.mrb[0].mxu0 %v2100
        %v2512 = vpop.f32.mrb[0].mxu0
        %v2513 = vadd.f32 %v2288, %v2512
        %v2514 = vpop.f32.mrb[0].mxu0
        %2515 = vmatprep.mubr.f32.mxu0 0.0
        %2516 = vmatmul.mubr.f32.gmra.mrb[0].mxu0 %v2103
        %v2517 = vpop.f32.mrb[0].mxu0
        %v2518 = vadd.f32 %v2293, %v2517
        %v2519 = vpop.f32.mrb[0].mxu0
        %2520 = vmatprep.mubr.f32.mxu0 0.0
        %2521 = vmatmul.mubr.f32.gmra.mrb[0].mxu0 %v2106
        %v2522 = vpop.f32.mrb[0].mxu0
        %v2523 = vadd.f32 %v2298, %v2522
        %v2524 = vpop.f32.mrb[0].mxu0
        %2525 = vmatprep.mubr.f32.mxu0 0.0
        %2526 = vmatmul.mubr.f32.gmra.mrb[0].mxu0 %v2109
        %v2527 = vpop.f32.mrb[0].mxu0
        %v2528 = vadd.f32 %v2303, %v2527
        %v2529 = vpop.f32.mrb[0].mxu0
        %2530 = vmatprep.mubr.f32.mxu0 0.0
        %2531 = vmatmul.mubr.f32.gmra.mrb[0].mxu0 %v2112
        %v2532 = vpop.f32.mrb[0].mxu0
        %v2533 = vadd.f32 %v2308, %v2532
        %v2534 = vpop.f32.mrb[0].mxu0
        %2535 = vmatprep.mubr.f32.mxu0 0.0
        %2536 = vmatmul.mubr.f32.gmra.mrb[0].mxu0 %v2115
        %v2537 = vpop.f32.mrb[0].mxu0
        %v2538 = vadd.f32 %v2313, %v2537
        %v2539 = vpop.f32.mrb[0].mxu0
        %2540 = vmatprep.mubr.f32.mxu0 0.0
        %2541 = vmatmul.mubr.f32.gmra.mrb[0].mxu0 %v2118
        %v2542 = vpop.f32.mrb[0].mxu0
        %v2543 = vadd.f32 %v2318, %v2542
        %v2544 = vpop.f32.mrb[0].mxu0
        %2545 = vmatprep.mubr.f32.mxu0 0.0
        %2546 = vmatmul.mubr.f32.gmra.mrb[0].mxu0 %v2121
        %v2547 = vpop.f32.mrb[0].mxu0
        %v2548 = vadd.f32 %v2323, %v2547
        %v2549 = vpop.f32.mrb[0].mxu0
        %2550 = vmatprep.mubr.f32.mxu0 0.0
        %2551 = vmatmul.mubr.f32.gmra.mrb[0].mxu0 %v2124
        %v2552 = vpop.f32.mrb[0].mxu0
        %v2553 = vadd.f32 %v2328, %v2552
        %v2554 = vpop.f32.mrb[0].mxu0
        %2555 = vmatprep.mubr.f32.mxu0 0.0
        %2556 = vmatmul.mubr.f32.gmra.mrb[0].mxu0 %v2127
        %v2557 = vpop.f32.mrb[0].mxu0
        %v2558 = vadd.f32 %v2333, %v2557
        %v2559 = vpop.f32.mrb[0].mxu0
        %2560 = vmatprep.mubr.f32.mxu0 0.0
        %2561 = vmatmul.mubr.f32.gmra.mrb[0].mxu0 %v2130
        %v2562 = vpop.f32.mrb[0].mxu0
        %v2563 = vadd.f32 %v2338, %v2562
        %v2564 = vpop.f32.mrb[0].mxu0
        %2565 = vmatprep.mubr.f32.mxu0 0.0
        %2566 = vmatmul.mubr.f32.gmra.mrb[0].mxu0 %v2133
        %v2567 = vpop.f32.mrb[0].mxu0
        %v2568 = vadd.f32 %v2343, %v2567
        %v2569 = vpop.f32.mrb[0].mxu0
        %2570 = vmatprep.mubr.f32.mxu0 0.0
        %2571 = vmatmul.mubr.f32.gmra.mrb[0].mxu0 %v2136
        %v2572 = vpop.f32.mrb[0].mxu0
        %v2573 = vadd.f32 %v2348, %v2572
        %v2574 = vpop.f32.mrb[0].mxu0
        %2575 = vmatprep.mubr.f32.mxu0 0.0
        %2576 = vmatmul.mubr.f32.gmra.mrb[0].mxu0 %v2139
        %v2577 = vpop.f32.mrb[0].mxu0
        %v2578 = vadd.f32 %v2353, %v2577
        %v2579 = vpop.f32.mrb[0].mxu0
        %2580 = vmatprep.mubr.f32.mxu0 0.0
        %2581 = vmatmul.mubr.f32.gmra.mrb[0].mxu0 %v2142
        %v2582 = vpop.f32.mrb[0].mxu0
        %v2583 = vadd.f32 %v2358, %v2582
        %v2584 = vpop.f32.mrb[0].mxu0
        %2585 = vmatprep.mubr.f32.mxu0 0.0
        %2586 = vmatmul.mubr.f32.gmra.mrb[0].mxu0 %v2145
        %v2587 = vpop.f32.mrb[0].mxu0
        %v2588 = vadd.f32 %v2363, %v2587
        %v2589 = vpop.f32.mrb[0].mxu0
        %2590 = vmatprep.mubr.f32.mxu0 0.0
        %2591 = vmatmul.mubr.f32.gmra.mrb[0].mxu0 %v2148
        %v2592 = vpop.f32.mrb[0].mxu0
        %v2593 = vadd.f32 %v2368, %v2592
        %v2594 = vpop.f32.mrb[0].mxu0
        %2595 = vmatprep.mubr.f32.mxu0 0.0
        %2596 = vmatmul.mubr.f32.gmra.mrb[0].mxu0 %v2151
        %v2597 = vpop.f32.mrb[0].mxu0
        %v2598 = vadd.f32 %v2373, %v2597
        %v2599 = vpop.f32.mrb[0].mxu0
        %2600 = vmatprep.mubr.f32.mxu0 0.0
        %2601 = vmatmul.mubr.f32.gmra.mrb[0].mxu0 %v2154
        %v2602 = vpop.f32.mrb[0].mxu0
        %v2603 = vadd.f32 %v2378, %v2602
        %v2604 = vpop.f32.mrb[0].mxu0
        %2605 = vdwg.mxu0
        %v2606 = vmax.f32 %v1805, %v2448
        %v2607 = vmax.f32 %v1810, %v2453
        %v2608 = vmax.f32 %v1815, %v2458
        %v2609 = vmax.f32 %v1820, %v2463
        %v2610 = vmax.f32 %v1825, %v2468
        %v2611 = vmax.f32 %v1830, %v2473
        %v2612 = vmax.f32 %v1835, %v2478
        %v2613 = vmax.f32 %v1840, %v2483
        %v2614 = vmax.f32 %v1845, %v2488
        %v2615 = vmax.f32 %v1850, %v2493
        %v2616 = vmax.f32 %v1855, %v2498
        %v2617 = vmax.f32 %v1860, %v2503
        %v2618 = vmax.f32 %v1865, %v2508
        %v2619 = vmax.f32 %v1870, %v2513
        %v2620 = vmax.f32 %v1875, %v2518
        %v2621 = vmax.f32 %v1880, %v2523
        %v2622 = vmax.f32 %v1885, %v2528
        %v2623 = vmax.f32 %v1890, %v2533
        %v2624 = vmax.f32 %v1895, %v2538
        %v2625 = vmax.f32 %v1900, %v2543
        %v2626 = vmax.f32 %v1905, %v2548
        %v2627 = vmax.f32 %v1910, %v2553
        %v2628 = vmax.f32 %v1915, %v2558
        %v2629 = vmax.f32 %v1920, %v2563
        %v2630 = vmax.f32 %v1925, %v2568
        %v2631 = vmax.f32 %v1930, %v2573
        %v2632 = vmax.f32 %v1935, %v2578
        %v2633 = vmax.f32 %v1940, %v2583
        %v2634 = vmax.f32 %v1945, %v2588
        %v2635 = vmax.f32 %v1950, %v2593
        %v2636 = vmax.f32 %v1955, %v2598
        %v2637 = vmax.f32 %v1960, %v2603
        %2638 = vst.msk [vmem:[#allocation2 + $0x28] sm:$0xff] %vm465, %v2606
        %2639 = vst.msk [vmem:[#allocation2 + $0x30] sm:$0xff] %vm465, %v2607
        %2640 = vst.msk [vmem:[#allocation2 + $0x38] sm:$0xff] %vm465, %v2608
        %2641 = vst.msk [vmem:[#allocation2 + $0x40] sm:$0xff] %vm465, %v2609
        %2642 = vst.msk [vmem:[#allocation2 + $0x48] sm:$0xff] %vm465, %v2610
        %2643 = vst.msk [vmem:[#allocation2 + $0x50] sm:$0xff] %vm465, %v2611
        %2644 = vst.msk [vmem:[#allocation2 + $0x58] sm:$0xff] %vm465, %v2612
        %2645 = vst.msk [vmem:[#allocation2 + $0x60] sm:$0xff] %vm465, %v2613
        %2646 = vst.msk [vmem:[#allocation2 + $0x68] sm:$0xff] %vm465, %v2614
        %2647 = vst.msk [vmem:[#allocation2 + $0x70] sm:$0xff] %vm465, %v2615
        %2648 = vst.msk [vmem:[#allocation2 + $0x78] sm:$0xff] %vm465, %v2616
        %2649 = vst.msk [vmem:[#allocation2 + $0x80] sm:$0xff] %vm465, %v2617
        %2650 = vst.msk [vmem:[#allocation2 + $0x88] sm:$0xff] %vm465, %v2618
        %2651 = vst.msk [vmem:[#allocation2 + $0x90] sm:$0xff] %vm465, %v2619
        %2652 = vst.msk [vmem:[#allocation2 + $0x98] sm:$0xff] %vm465, %v2620
        %2653 = vst.msk [vmem:[#allocation2 + $0xa0] sm:$0xff] %vm465, %v2621
        %2654 = vst.msk [vmem:[#allocation2 + $0xa8] sm:$0xff] %vm465, %v2622
        %2655 = vst.msk [vmem:[#allocation2 + $0xb0] sm:$0xff] %vm465, %v2623
        %2656 = vst.msk [vmem:[#allocation2 + $0xb8] sm:$0xff] %vm465, %v2624
        %2657 = vst.msk [vmem:[#allocation2 + $0xc0] sm:$0xff] %vm465, %v2625
        %2658 = vst.msk [vmem:[#allocation2 + $0xc8] sm:$0xff] %vm465, %v2626
        %2659 = vst.msk [vmem:[#allocation2 + $0xd0] sm:$0xff] %vm465, %v2627
        %2660 = vst.msk [vmem:[#allocation2 + $0xd8] sm:$0xff] %vm465, %v2628
        %2661 = vst.msk [vmem:[#allocation2 + $0xe0] sm:$0xff] %vm465, %v2629
        %2662 = vst.msk [vmem:[#allocation2 + $0xe8] sm:$0xff] %vm465, %v2630
        %2663 = vst.msk [vmem:[#allocation2 + $0xf0] sm:$0xff] %vm465, %v2631
        %2664 = vst.msk [vmem:[#allocation2 + $0xf8] sm:$0xff] %vm465, %v2632
        %2665 = vst.msk [vmem:[#allocation2 + $0x100] sm:$0xff] %vm465, %v2633
        %2666 = vst.msk [vmem:[#allocation2 + $0x108] sm:$0xff] %vm465, %v2634
        %2667 = vst.msk [vmem:[#allocation2 + $0x110] sm:$0xff] %vm465, %v2635
        %2668 = vst.msk [vmem:[#allocation2 + $0x118] sm:$0xff] %vm465, %v2636
        %2669 = vst.msk [vmem:[#allocation2 + $0x120] sm:$0xff] %vm465, %v2637
        %v2670 = vld [vmem:[#allocation2 + $0x6] sm:$0xff]
        %v2671 = vld [vmem:[#allocation2 + $0xe] sm:$0xff]
        %v2672 = vld [vmem:[#allocation2 + $0x16] sm:$0xff]
        %v2673 = vld [vmem:[#allocation2 + $0x1e] sm:$0xff]
        %v2674 = vld [vmem:[#allocation2 + $0x26] sm:$0xff]
        %v2675 = vld [vmem:[#allocation2 + $0x2e] sm:$0xff]
        %v2676 = vld [vmem:[#allocation2 + $0x36] sm:$0xff]
        %v2677 = vld [vmem:[#allocation2 + $0x3e] sm:$0xff]
        %v2678 = vld [vmem:[#allocation2 + $0x46] sm:$0xff]
        %v2679 = vld [vmem:[#allocation2 + $0x4e] sm:$0xff]
        %v2680 = vld [vmem:[#allocation2 + $0x56] sm:$0xff]
        %v2681 = vld [vmem:[#allocation2 + $0x5e] sm:$0xff]
        %v2682 = vld [vmem:[#allocation2 + $0x66] sm:$0xff]
        %v2683 = vld [vmem:[#allocation2 + $0x6e] sm:$0xff]
        %v2684 = vld [vmem:[#allocation2 + $0x76] sm:$0xff]
        %v2685 = vld [vmem:[#allocation2 + $0x7e] sm:$0xff]
        %v2686 = vld [vmem:[#allocation2 + $0x86] sm:$0xff]
        %v2687 = vld [vmem:[#allocation2 + $0x8e] sm:$0xff]
        %v2688 = vld [vmem:[#allocation2 + $0x96] sm:$0xff]
        %v2689 = vld [vmem:[#allocation2 + $0x9e] sm:$0xff]
        %v2690 = vld [vmem:[#allocation2 + $0xa6] sm:$0xff]
        %v2691 = vld [vmem:[#allocation2 + $0xae] sm:$0xff]
        %v2692 = vld [vmem:[#allocation2 + $0xb6] sm:$0xff]
        %v2693 = vld [vmem:[#allocation2 + $0xbe] sm:$0xff]
        %v2694 = vld [vmem:[#allocation2 + $0xc6] sm:$0xff]
        %v2695 = vld [vmem:[#allocation2 + $0xce] sm:$0xff]
        %v2696 = vld [vmem:[#allocation2 + $0xd6] sm:$0xff]
        %v2697 = vld [vmem:[#allocation2 + $0xde] sm:$0xff]
        %v2698 = vld [vmem:[#allocation2 + $0xe6] sm:$0xff]
        %v2699 = vld [vmem:[#allocation2 + $0xee] sm:$0xff]
        %v2700 = vld [vmem:[#allocation2 + $0xf6] sm:$0xff]
        %v2701 = vld [vmem:[#allocation2 + $0xfe] sm:$0xff]
        %2702 = vst.msk [vmem:[#allocation4] sm:$0xff] %vm465, %v2670
        %2703 = vst.msk [vmem:[#allocation4 + $0x38] sm:$0xff] %vm465, %v2671
        %2704 = vst.msk [vmem:[#allocation4 + $0x70] sm:$0xff] %vm465, %v2672
        %2705 = vst.msk [vmem:[#allocation4 + $0xa8] sm:$0xff] %vm465, %v2673
        %2706 = vst.msk [vmem:[#allocation4 + $0xe0] sm:$0xff] %vm465, %v2674
        %2707 = vst.msk [vmem:[#allocation4 + $0x118] sm:$0xff] %vm465, %v2675
        %2708 = vst.msk [vmem:[#allocation4 + $0x150] sm:$0xff] %vm465, %v2676
        %2709 = vst.msk [vmem:[#allocation4 + $0x188] sm:$0xff] %vm465, %v2677
        %2710 = vst.msk [vmem:[#allocation4 + $0x1c0] sm:$0xff] %vm465, %v2678
        %2711 = vst.msk [vmem:[#allocation4 + $0x1f8] sm:$0xff] %vm465, %v2679
        %2712 = vst.msk [vmem:[#allocation4 + $0x230] sm:$0xff] %vm465, %v2680
        %2713 = vst.msk [vmem:[#allocation4 + $0x268] sm:$0xff] %vm465, %v2681
        %2714 = vst.msk [vmem:[#allocation4 + $0x2a0] sm:$0xff] %vm465, %v2682
        %2715 = vst.msk [vmem:[#allocation4 + $0x2d8] sm:$0xff] %vm465, %v2683
        %2716 = vst.msk [vmem:[#allocation4 + $0x310] sm:$0xff] %vm465, %v2684
        %2717 = vst.msk [vmem:[#allocation4 + $0x348] sm:$0xff] %vm465, %v2685
        %2718 = vst.msk [vmem:[#allocation4 + $0x380] sm:$0xff] %vm465, %v2686
        %2719 = vst.msk [vmem:[#allocation4 + $0x3b8] sm:$0xff] %vm465, %v2687
        %2720 = vst.msk [vmem:[#allocation4 + $0x3f0] sm:$0xff] %vm465, %v2688
        %2721 = vst.msk [vmem:[#allocation4 + $0x428] sm:$0xff] %vm465, %v2689
        %2722 = vst.msk [vmem:[#allocation4 + $0x460] sm:$0xff] %vm465, %v2690
        %2723 = vst.msk [vmem:[#allocation4 + $0x498] sm:$0xff] %vm465, %v2691
        %2724 = vst.msk [vmem:[#allocation4 + $0x4d0] sm:$0xff] %vm465, %v2692
        %2725 = vst.msk [vmem:[#allocation4 + $0x508] sm:$0xff] %vm465, %v2693
        %2726 = vst.msk [vmem:[#allocation4 + $0x540] sm:$0xff] %vm465, %v2694
        %2727 = vst.msk [vmem:[#allocation4 + $0x578] sm:$0xff] %vm465, %v2695
        %2728 = vst.msk [vmem:[#allocation4 + $0x5b0] sm:$0xff] %vm465, %v2696
        %2729 = vst.msk [vmem:[#allocation4 + $0x5e8] sm:$0xff] %vm465, %v2697
        %2730 = vst.msk [vmem:[#allocation4 + $0x620] sm:$0xff] %vm465, %v2698
        %2731 = vst.msk [vmem:[#allocation4 + $0x658] sm:$0xff] %vm465, %v2699
        %2732 = vst.msk [vmem:[#allocation4 + $0x690] sm:$0xff] %vm465, %v2700
        %2733 = vst.msk [vmem:[#allocation4 + $0x6c8] sm:$0xff] %vm465, %v2701
        %v2734 = vld [vmem:[#allocation2 + $0x7] sm:$0xff]
        %v2735 = vld [vmem:[#allocation2 + $0xf] sm:$0xff]
        %v2736 = vld [vmem:[#allocation2 + $0x17] sm:$0xff]
        %v2737 = vld [vmem:[#allocation2 + $0x1f] sm:$0xff]
        %v2738 = vld [vmem:[#allocation2 + $0x27] sm:$0xff]
        %v2739 = vld [vmem:[#allocation2 + $0x2f] sm:$0xff]
        %v2740 = vld [vmem:[#allocation2 + $0x37] sm:$0xff]
        %v2741 = vld [vmem:[#allocation2 + $0x3f] sm:$0xff]
        %v2742 = vld [vmem:[#allocation2 + $0x47] sm:$0xff]
        %v2743 = vld [vmem:[#allocation2 + $0x4f] sm:$0xff]
        %v2744 = vld [vmem:[#allocation2 + $0x57] sm:$0xff]
        %v2745 = vld [vmem:[#allocation2 + $0x5f] sm:$0xff]
        %v2746 = vld [vmem:[#allocation2 + $0x67] sm:$0xff]
        %v2747 = vld [vmem:[#allocation2 + $0x6f] sm:$0xff]
        %v2748 = vld [vmem:[#allocation2 + $0x77] sm:$0xff]
        %v2749 = vld [vmem:[#allocation2 + $0x7f] sm:$0xff]
        %v2750 = vld [vmem:[#allocation2 + $0x87] sm:$0xff]
        %v2751 = vld [vmem:[#allocation2 + $0x8f] sm:$0xff]
        %v2752 = vld [vmem:[#allocation2 + $0x97] sm:$0xff]
        %v2753 = vld [vmem:[#allocation2 + $0x9f] sm:$0xff]
        %v2754 = vld [vmem:[#allocation2 + $0xa7] sm:$0xff]
        %v2755 = vld [vmem:[#allocation2 + $0xaf] sm:$0xff]
        %v2756 = vld [vmem:[#allocation2 + $0xb7] sm:$0xff]
        %v2757 = vld [vmem:[#allocation2 + $0xbf] sm:$0xff]
        %v2758 = vld [vmem:[#allocation2 + $0xc7] sm:$0xff]
        %v2759 = vld [vmem:[#allocation2 + $0xcf] sm:$0xff]
        %v2760 = vld [vmem:[#allocation2 + $0xd7] sm:$0xff]
        %v2761 = vld [vmem:[#allocation2 + $0xdf] sm:$0xff]
        %v2762 = vld [vmem:[#allocation2 + $0xe7] sm:$0xff]
        %v2763 = vld [vmem:[#allocation2 + $0xef] sm:$0xff]
        %v2764 = vld [vmem:[#allocation2 + $0xf7] sm:$0xff]
        %v2765 = vld [vmem:[#allocation2 + $0xff] sm:$0xff]
        %2798 = vrot.lane.b32.xlu0 %v2734, 32
        %v2799 = vpop.permute.xlu0 %2798
        %2800 = vrot.lane.b32.xlu0 %v2735, 32
        %v2801 = vpop.permute.xlu0 %2800
        %2802 = vrot.lane.b32.xlu0 %v2736, 32
        %v2803 = vpop.permute.xlu0 %2802
        %2804 = vrot.lane.b32.xlu0 %v2737, 32
        %v2805 = vpop.permute.xlu0 %2804
        %2806 = vrot.lane.b32.xlu0 %v2738, 32
        %v2807 = vpop.permute.xlu0 %2806
        %2808 = vrot.lane.b32.xlu0 %v2739, 32
        %v2809 = vpop.permute.xlu0 %2808
        %2810 = vrot.lane.b32.xlu0 %v2740, 32
        %v2811 = vpop.permute.xlu0 %2810
        %2812 = vrot.lane.b32.xlu0 %v2741, 32
        %v2813 = vpop.permute.xlu0 %2812
        %2814 = vrot.lane.b32.xlu0 %v2742, 32
        %v2815 = vpop.permute.xlu0 %2814
        %2816 = vrot.lane.b32.xlu0 %v2743, 32
        %v2817 = vpop.permute.xlu0 %2816
        %2818 = vrot.lane.b32.xlu0 %v2744, 32
        %v2819 = vpop.permute.xlu0 %2818
        %2820 = vrot.lane.b32.xlu0 %v2745, 32
        %v2821 = vpop.permute.xlu0 %2820
        %2822 = vrot.lane.b32.xlu0 %v2746, 32
        %v2823 = vpop.permute.xlu0 %2822
        %2824 = vrot.lane.b32.xlu0 %v2747, 32
        %v2825 = vpop.permute.xlu0 %2824
        %2826 = vrot.lane.b32.xlu0 %v2748, 32
        %v2827 = vpop.permute.xlu0 %2826
        %2828 = vrot.lane.b32.xlu0 %v2749, 32
        %v2829 = vpop.permute.xlu0 %2828
        %2830 = vrot.lane.b32.xlu0 %v2750, 32
        %v2831 = vpop.permute.xlu0 %2830
        %2832 = vrot.lane.b32.xlu0 %v2751, 32
        %v2833 = vpop.permute.xlu0 %2832
        %2834 = vrot.lane.b32.xlu0 %v2752, 32
        %v2835 = vpop.permute.xlu0 %2834
        %2836 = vrot.lane.b32.xlu0 %v2753, 32
        %v2837 = vpop.permute.xlu0 %2836
        %2838 = vrot.lane.b32.xlu0 %v2754, 32
        %v2839 = vpop.permute.xlu0 %2838
        %2840 = vrot.lane.b32.xlu0 %v2755, 32
        %v2841 = vpop.permute.xlu0 %2840
        %2842 = vrot.lane.b32.xlu0 %v2756, 32
        %v2843 = vpop.permute.xlu0 %2842
        %2844 = vrot.lane.b32.xlu0 %v2757, 32
        %v2845 = vpop.permute.xlu0 %2844
        %2846 = vrot.lane.b32.xlu0 %v2758, 32
        %v2847 = vpop.permute.xlu0 %2846
        %2848 = vrot.lane.b32.xlu0 %v2759, 32
        %v2849 = vpop.permute.xlu0 %2848
        %2850 = vrot.lane.b32.xlu0 %v2760, 32
        %v2851 = vpop.permute.xlu0 %2850
        %2852 = vrot.lane.b32.xlu0 %v2761, 32
        %v2853 = vpop.permute.xlu0 %2852
        %2854 = vrot.lane.b32.xlu0 %v2762, 32
        %v2855 = vpop.permute.xlu0 %2854
        %2856 = vrot.lane.b32.xlu0 %v2763, 32
        %v2857 = vpop.permute.xlu0 %2856
        %2858 = vrot.lane.b32.xlu0 %v2764, 32
        %v2859 = vpop.permute.xlu0 %2858
        %2860 = vrot.lane.b32.xlu0 %v2765, 32
        %v2861 = vpop.permute.xlu0 %2860
        %vm2894 = vcmask 523520
        %2895 = vst.msk [vmem:[#allocation4] sm:$0xff] %vm2894, %v2799
        %2896 = vst.msk [vmem:[#allocation4 + $0x38] sm:$0xff] %vm2894, %v2801
        %2897 = vst.msk [vmem:[#allocation4 + $0x70] sm:$0xff] %vm2894, %v2803
        %2898 = vst.msk [vmem:[#allocation4 + $0xa8] sm:$0xff] %vm2894, %v2805
        %2899 = vst.msk [vmem:[#allocation4 + $0xe0] sm:$0xff] %vm2894, %v2807
        %2900 = vst.msk [vmem:[#allocation4 + $0x118] sm:$0xff] %vm2894, %v2809
        %2901 = vst.msk [vmem:[#allocation4 + $0x150] sm:$0xff] %vm2894, %v2811
        %2902 = vst.msk [vmem:[#allocation4 + $0x188] sm:$0xff] %vm2894, %v2813
        %2903 = vst.msk [vmem:[#allocation4 + $0x1c0] sm:$0xff] %vm2894, %v2815
        %2904 = vst.msk [vmem:[#allocation4 + $0x1f8] sm:$0xff] %vm2894, %v2817
        %2905 = vst.msk [vmem:[#allocation4 + $0x230] sm:$0xff] %vm2894, %v2819
        %2906 = vst.msk [vmem:[#allocation4 + $0x268] sm:$0xff] %vm2894, %v2821
        %2907 = vst.msk [vmem:[#allocation4 + $0x2a0] sm:$0xff] %vm2894, %v2823
        %2908 = vst.msk [vmem:[#allocation4 + $0x2d8] sm:$0xff] %vm2894, %v2825
        %2909 = vst.msk [vmem:[#allocation4 + $0x310] sm:$0xff] %vm2894, %v2827
        %2910 = vst.msk [vmem:[#allocation4 + $0x348] sm:$0xff] %vm2894, %v2829
        %2911 = vst.msk [vmem:[#allocation4 + $0x380] sm:$0xff] %vm2894, %v2831
        %2912 = vst.msk [vmem:[#allocation4 + $0x3b8] sm:$0xff] %vm2894, %v2833
        %2913 = vst.msk [vmem:[#allocation4 + $0x3f0] sm:$0xff] %vm2894, %v2835
        %2914 = vst.msk [vmem:[#allocation4 + $0x428] sm:$0xff] %vm2894, %v2837
        %2915 = vst.msk [vmem:[#allocation4 + $0x460] sm:$0xff] %vm2894, %v2839
        %2916 = vst.msk [vmem:[#allocation4 + $0x498] sm:$0xff] %vm2894, %v2841
        %2917 = vst.msk [vmem:[#allocation4 + $0x4d0] sm:$0xff] %vm2894, %v2843
        %2918 = vst.msk [vmem:[#allocation4 + $0x508] sm:$0xff] %vm2894, %v2845
        %2919 = vst.msk [vmem:[#allocation4 + $0x540] sm:$0xff] %vm2894, %v2847
        %2920 = vst.msk [vmem:[#allocation4 + $0x578] sm:$0xff] %vm2894, %v2849
        %2921 = vst.msk [vmem:[#allocation4 + $0x5b0] sm:$0xff] %vm2894, %v2851
        %2922 = vst.msk [vmem:[#allocation4 + $0x5e8] sm:$0xff] %vm2894, %v2853
        %2923 = vst.msk [vmem:[#allocation4 + $0x620] sm:$0xff] %vm2894, %v2855
        %2924 = vst.msk [vmem:[#allocation4 + $0x658] sm:$0xff] %vm2894, %v2857
        %2925 = vst.msk [vmem:[#allocation4 + $0x690] sm:$0xff] %vm2894, %v2859
        %2926 = vst.msk [vmem:[#allocation4 + $0x6c8] sm:$0xff] %vm2894, %v2861
        %v2927 = vld [vmem:[#allocation2 + $0x8] sm:$0xff]
        %v2928 = vld [vmem:[#allocation2 + $0x10] sm:$0xff]
        %v2929 = vld [vmem:[#allocation2 + $0x18] sm:$0xff]
        %v2930 = vld [vmem:[#allocation2 + $0x20] sm:$0xff]
        %v2931 = vld [vmem:[#allocation2 + $0x28] sm:$0xff]
        %v2932 = vld [vmem:[#allocation2 + $0x30] sm:$0xff]
        %v2933 = vld [vmem:[#allocation2 + $0x38] sm:$0xff]
        %v2934 = vld [vmem:[#allocation2 + $0x40] sm:$0xff]
        %v2935 = vld [vmem:[#allocation2 + $0x48] sm:$0xff]
        %v2936 = vld [vmem:[#allocation2 + $0x50] sm:$0xff]
        %v2937 = vld [vmem:[#allocation2 + $0x58] sm:$0xff]
        %v2938 = vld [vmem:[#allocation2 + $0x60] sm:$0xff]
        %v2939 = vld [vmem:[#allocation2 + $0x68] sm:$0xff]
        %v2940 = vld [vmem:[#allocation2 + $0x70] sm:$0xff]
        %v2941 = vld [vmem:[#allocation2 + $0x78] sm:$0xff]
        %v2942 = vld [vmem:[#allocation2 + $0x80] sm:$0xff]
        %v2943 = vld [vmem:[#allocation2 + $0x88] sm:$0xff]
        %v2944 = vld [vmem:[#allocation2 + $0x90] sm:$0xff]
        %v2945 = vld [vmem:[#allocation2 + $0x98] sm:$0xff]
        %v2946 = vld [vmem:[#allocation2 + $0xa0] sm:$0xff]
        %v2947 = vld [vmem:[#allocation2 + $0xa8] sm:$0xff]
        %v2948 = vld [vmem:[#allocation2 + $0xb0] sm:$0xff]
        %v2949 = vld [vmem:[#allocation2 + $0xb8] sm:$0xff]
        %v2950 = vld [vmem:[#allocation2 + $0xc0] sm:$0xff]
        %v2951 = vld [vmem:[#allocation2 + $0xc8] sm:$0xff]
        %v2952 = vld [vmem:[#allocation2 + $0xd0] sm:$0xff]
        %v2953 = vld [vmem:[#allocation2 + $0xd8] sm:$0xff]
        %v2954 = vld [vmem:[#allocation2 + $0xe0] sm:$0xff]
        %v2955 = vld [vmem:[#allocation2 + $0xe8] sm:$0xff]
        %v2956 = vld [vmem:[#allocation2 + $0xf0] sm:$0xff]
        %v2957 = vld [vmem:[#allocation2 + $0xf8] sm:$0xff]
        %v2958 = vld [vmem:[#allocation2 + $0x100] sm:$0xff]
        %2991 = vrot.lane.b32.xlu0 %v2927, 64
        %v2992 = vpop.permute.xlu0 %2991
        %2993 = vrot.lane.b32.xlu0 %v2928, 64
        %v2994 = vpop.permute.xlu0 %2993
        %2995 = vrot.lane.b32.xlu0 %v2929, 64
        %v2996 = vpop.permute.xlu0 %2995
        %2997 = vrot.lane.b32.xlu0 %v2930, 64
        %v2998 = vpop.permute.xlu0 %2997
        %2999 = vrot.lane.b32.xlu0 %v2931, 64
        %v3000 = vpop.permute.xlu0 %2999
        %3001 = vrot.lane.b32.xlu0 %v2932, 64
        %v3002 = vpop.permute.xlu0 %3001
        %3003 = vrot.lane.b32.xlu0 %v2933, 64
        %v3004 = vpop.permute.xlu0 %3003
        %3005 = vrot.lane.b32.xlu0 %v2934, 64
        %v3006 = vpop.permute.xlu0 %3005
        %3007 = vrot.lane.b32.xlu0 %v2935, 64
        %v3008 = vpop.permute.xlu0 %3007
        %3009 = vrot.lane.b32.xlu0 %v2936, 64
        %v3010 = vpop.permute.xlu0 %3009
        %3011 = vrot.lane.b32.xlu0 %v2937, 64
        %v3012 = vpop.permute.xlu0 %3011
        %3013 = vrot.lane.b32.xlu0 %v2938, 64
        %v3014 = vpop.permute.xlu0 %3013
        %3015 = vrot.lane.b32.xlu0 %v2939, 64
        %v3016 = vpop.permute.xlu0 %3015
        %3017 = vrot.lane.b32.xlu0 %v2940, 64
        %v3018 = vpop.permute.xlu0 %3017
        %3019 = vrot.lane.b32.xlu0 %v2941, 64
        %v3020 = vpop.permute.xlu0 %3019
        %3021 = vrot.lane.b32.xlu0 %v2942, 64
        %v3022 = vpop.permute.xlu0 %3021
        %3023 = vrot.lane.b32.xlu0 %v2943, 64
        %v3024 = vpop.permute.xlu0 %3023
        %3025 = vrot.lane.b32.xlu0 %v2944, 64
        %v3026 = vpop.permute.xlu0 %3025
        %3027 = vrot.lane.b32.xlu0 %v2945, 64
        %v3028 = vpop.permute.xlu0 %3027
        %3029 = vrot.lane.b32.xlu0 %v2946, 64
        %v3030 = vpop.permute.xlu0 %3029
        %3031 = vrot.lane.b32.xlu0 %v2947, 64
        %v3032 = vpop.permute.xlu0 %3031
        %3033 = vrot.lane.b32.xlu0 %v2948, 64
        %v3034 = vpop.permute.xlu0 %3033
        %3035 = vrot.lane.b32.xlu0 %v2949, 64
        %v3036 = vpop.permute.xlu0 %3035
        %3037 = vrot.lane.b32.xlu0 %v2950, 64
        %v3038 = vpop.permute.xlu0 %3037
        %3039 = vrot.lane.b32.xlu0 %v2951, 64
        %v3040 = vpop.permute.xlu0 %3039
        %3041 = vrot.lane.b32.xlu0 %v2952, 64
        %v3042 = vpop.permute.xlu0 %3041
        %3043 = vrot.lane.b32.xlu0 %v2953, 64
        %v3044 = vpop.permute.xlu0 %3043
        %3045 = vrot.lane.b32.xlu0 %v2954, 64
        %v3046 = vpop.permute.xlu0 %3045
        %3047 = vrot.lane.b32.xlu0 %v2955, 64
        %v3048 = vpop.permute.xlu0 %3047
        %3049 = vrot.lane.b32.xlu0 %v2956, 64
        %v3050 = vpop.permute.xlu0 %3049
        %3051 = vrot.lane.b32.xlu0 %v2957, 64
        %v3052 = vpop.permute.xlu0 %3051
        %3053 = vrot.lane.b32.xlu0 %v2958, 64
        %v3054 = vpop.permute.xlu0 %3053
        %vm3087 = vcmask 785920
        %3088 = vst.msk [vmem:[#allocation4] sm:$0xff] %vm3087, %v2992
        %3089 = vst.msk [vmem:[#allocation4 + $0x38] sm:$0xff] %vm3087, %v2994
        %3090 = vst.msk [vmem:[#allocation4 + $0x70] sm:$0xff] %vm3087, %v2996
        %3091 = vst.msk [vmem:[#allocation4 + $0xa8] sm:$0xff] %vm3087, %v2998
        %3092 = vst.msk [vmem:[#allocation4 + $0xe0] sm:$0xff] %vm3087, %v3000
        %3093 = vst.msk [vmem:[#allocation4 + $0x118] sm:$0xff] %vm3087, %v3002
        %3094 = vst.msk [vmem:[#allocation4 + $0x150] sm:$0xff] %vm3087, %v3004
        %3095 = vst.msk [vmem:[#allocation4 + $0x188] sm:$0xff] %vm3087, %v3006
        %3096 = vst.msk [vmem:[#allocation4 + $0x1c0] sm:$0xff] %vm3087, %v3008
        %3097 = vst.msk [vmem:[#allocation4 + $0x1f8] sm:$0xff] %vm3087, %v3010
        %3098 = vst.msk [vmem:[#allocation4 + $0x230] sm:$0xff] %vm3087, %v3012
        %3099 = vst.msk [vmem:[#allocation4 + $0x268] sm:$0xff] %vm3087, %v3014
        %3100 = vst.msk [vmem:[#allocation4 + $0x2a0] sm:$0xff] %vm3087, %v3016
        %3101 = vst.msk [vmem:[#allocation4 + $0x2d8] sm:$0xff] %vm3087, %v3018
        %3102 = vst.msk [vmem:[#allocation4 + $0x310] sm:$0xff] %vm3087, %v3020
        %3103 = vst.msk [vmem:[#allocation4 + $0x348] sm:$0xff] %vm3087, %v3022
        %3104 = vst.msk [vmem:[#allocation4 + $0x380] sm:$0xff] %vm3087, %v3024
        %3105 = vst.msk [vmem:[#allocation4 + $0x3b8] sm:$0xff] %vm3087, %v3026
        %3106 = vst.msk [vmem:[#allocation4 + $0x3f0] sm:$0xff] %vm3087, %v3028
        %3107 = vst.msk [vmem:[#allocation4 + $0x428] sm:$0xff] %vm3087, %v3030
        %3108 = vst.msk [vmem:[#allocation4 + $0x460] sm:$0xff] %vm3087, %v3032
        %3109 = vst.msk [vmem:[#allocation4 + $0x498] sm:$0xff] %vm3087, %v3034
        %3110 = vst.msk [vmem:[#allocation4 + $0x4d0] sm:$0xff] %vm3087, %v3036
        %3111 = vst.msk [vmem:[#allocation4 + $0x508] sm:$0xff] %vm3087, %v3038
        %3112 = vst.msk [vmem:[#allocation4 + $0x540] sm:$0xff] %vm3087, %v3040
        %3113 = vst.msk [vmem:[#allocation4 + $0x578] sm:$0xff] %vm3087, %v3042
        %3114 = vst.msk [vmem:[#allocation4 + $0x5b0] sm:$0xff] %vm3087, %v3044
        %3115 = vst.msk [vmem:[#allocation4 + $0x5e8] sm:$0xff] %vm3087, %v3046
        %3116 = vst.msk [vmem:[#allocation4 + $0x620] sm:$0xff] %vm3087, %v3048
        %3117 = vst.msk [vmem:[#allocation4 + $0x658] sm:$0xff] %vm3087, %v3050
        %3118 = vst.msk [vmem:[#allocation4 + $0x690] sm:$0xff] %vm3087, %v3052
        %3119 = vst.msk [vmem:[#allocation4 + $0x6c8] sm:$0xff] %vm3087, %v3054
        %v3120 = vld [vmem:[#allocation2 + $0x9] sm:$0xff]
        %v3121 = vld [vmem:[#allocation2 + $0x11] sm:$0xff]
        %v3122 = vld [vmem:[#allocation2 + $0x19] sm:$0xff]
        %v3123 = vld [vmem:[#allocation2 + $0x21] sm:$0xff]
        %v3124 = vld [vmem:[#allocation2 + $0x29] sm:$0xff]
        %v3125 = vld [vmem:[#allocation2 + $0x31] sm:$0xff]
        %v3126 = vld [vmem:[#allocation2 + $0x39] sm:$0xff]
        %v3127 = vld [vmem:[#allocation2 + $0x41] sm:$0xff]
        %v3128 = vld [vmem:[#allocation2 + $0x49] sm:$0xff]
        %v3129 = vld [vmem:[#allocation2 + $0x51] sm:$0xff]
        %v3130 = vld [vmem:[#allocation2 + $0x59] sm:$0xff]
        %v3131 = vld [vmem:[#allocation2 + $0x61] sm:$0xff]
        %v3132 = vld [vmem:[#allocation2 + $0x69] sm:$0xff]
        %v3133 = vld [vmem:[#allocation2 + $0x71] sm:$0xff]
        %v3134 = vld [vmem:[#allocation2 + $0x79] sm:$0xff]
        %v3135 = vld [vmem:[#allocation2 + $0x81] sm:$0xff]
        %v3136 = vld [vmem:[#allocation2 + $0x89] sm:$0xff]
        %v3137 = vld [vmem:[#allocation2 + $0x91] sm:$0xff]
        %v3138 = vld [vmem:[#allocation2 + $0x99] sm:$0xff]
        %v3139 = vld [vmem:[#allocation2 + $0xa1] sm:$0xff]
        %v3140 = vld [vmem:[#allocation2 + $0xa9] sm:$0xff]
        %v3141 = vld [vmem:[#allocation2 + $0xb1] sm:$0xff]
        %v3142 = vld [vmem:[#allocation2 + $0xb9] sm:$0xff]
        %v3143 = vld [vmem:[#allocation2 + $0xc1] sm:$0xff]
        %v3144 = vld [vmem:[#allocation2 + $0xc9] sm:$0xff]
        %v3145 = vld [vmem:[#allocation2 + $0xd1] sm:$0xff]
        %v3146 = vld [vmem:[#allocation2 + $0xd9] sm:$0xff]
        %v3147 = vld [vmem:[#allocation2 + $0xe1] sm:$0xff]
        %v3148 = vld [vmem:[#allocation2 + $0xe9] sm:$0xff]
        %v3149 = vld [vmem:[#allocation2 + $0xf1] sm:$0xff]
        %v3150 = vld [vmem:[#allocation2 + $0xf9] sm:$0xff]
        %v3151 = vld [vmem:[#allocation2 + $0x101] sm:$0xff]
        %3184 = vrot.lane.b32.xlu0 %v3120, 96
        %v3185 = vpop.permute.xlu0 %3184
        %3186 = vrot.lane.b32.xlu0 %v3121, 96
        %v3187 = vpop.permute.xlu0 %3186
        %3188 = vrot.lane.b32.xlu0 %v3122, 96
        %v3189 = vpop.permute.xlu0 %3188
        %3190 = vrot.lane.b32.xlu0 %v3123, 96
        %v3191 = vpop.permute.xlu0 %3190
        %3192 = vrot.lane.b32.xlu0 %v3124, 96
        %v3193 = vpop.permute.xlu0 %3192
        %3194 = vrot.lane.b32.xlu0 %v3125, 96
        %v3195 = vpop.permute.xlu0 %3194
        %3196 = vrot.lane.b32.xlu0 %v3126, 96
        %v3197 = vpop.permute.xlu0 %3196
        %3198 = vrot.lane.b32.xlu0 %v3127, 96
        %v3199 = vpop.permute.xlu0 %3198
        %3200 = vrot.lane.b32.xlu0 %v3128, 96
        %v3201 = vpop.permute.xlu0 %3200
        %3202 = vrot.lane.b32.xlu0 %v3129, 96
        %v3203 = vpop.permute.xlu0 %3202
        %3204 = vrot.lane.b32.xlu0 %v3130, 96
        %v3205 = vpop.permute.xlu0 %3204
        %3206 = vrot.lane.b32.xlu0 %v3131, 96
        %v3207 = vpop.permute.xlu0 %3206
        %3208 = vrot.lane.b32.xlu0 %v3132, 96
        %v3209 = vpop.permute.xlu0 %3208
        %3210 = vrot.lane.b32.xlu0 %v3133, 96
        %v3211 = vpop.permute.xlu0 %3210
        %3212 = vrot.lane.b32.xlu0 %v3134, 96
        %v3213 = vpop.permute.xlu0 %3212
        %3214 = vrot.lane.b32.xlu0 %v3135, 96
        %v3215 = vpop.permute.xlu0 %3214
        %3216 = vrot.lane.b32.xlu0 %v3136, 96
        %v3217 = vpop.permute.xlu0 %3216
        %3218 = vrot.lane.b32.xlu0 %v3137, 96
        %v3219 = vpop.permute.xlu0 %3218
        %3220 = vrot.lane.b32.xlu0 %v3138, 96
        %v3221 = vpop.permute.xlu0 %3220
        %3222 = vrot.lane.b32.xlu0 %v3139, 96
        %v3223 = vpop.permute.xlu0 %3222
        %3224 = vrot.lane.b32.xlu0 %v3140, 96
        %v3225 = vpop.permute.xlu0 %3224
        %3226 = vrot.lane.b32.xlu0 %v3141, 96
        %v3227 = vpop.permute.xlu0 %3226
        %3228 = vrot.lane.b32.xlu0 %v3142, 96
        %v3229 = vpop.permute.xlu0 %3228
        %3230 = vrot.lane.b32.xlu0 %v3143, 96
        %v3231 = vpop.permute.xlu0 %3230
        %3232 = vrot.lane.b32.xlu0 %v3144, 96
        %v3233 = vpop.permute.xlu0 %3232
        %3234 = vrot.lane.b32.xlu0 %v3145, 96
        %v3235 = vpop.permute.xlu0 %3234
        %3236 = vrot.lane.b32.xlu0 %v3146, 96
        %v3237 = vpop.permute.xlu0 %3236
        %3238 = vrot.lane.b32.xlu0 %v3147, 96
        %v3239 = vpop.permute.xlu0 %3238
        %3240 = vrot.lane.b32.xlu0 %v3148, 96
        %v3241 = vpop.permute.xlu0 %3240
        %3242 = vrot.lane.b32.xlu0 %v3149, 96
        %v3243 = vpop.permute.xlu0 %3242
        %3244 = vrot.lane.b32.xlu0 %v3150, 96
        %v3245 = vpop.permute.xlu0 %3244
        %3246 = vrot.lane.b32.xlu0 %v3151, 96
        %v3247 = vpop.permute.xlu0 %3246
        %vm3280 = vcmask 1048320
        %3281 = vst.msk [vmem:[#allocation4] sm:$0xff] %vm3280, %v3185
        %3282 = vst.msk [vmem:[#allocation4 + $0x38] sm:$0xff] %vm3280, %v3187
        %3283 = vst.msk [vmem:[#allocation4 + $0x70] sm:$0xff] %vm3280, %v3189
        %3284 = vst.msk [vmem:[#allocation4 + $0xa8] sm:$0xff] %vm3280, %v3191
        %3285 = vst.msk [vmem:[#allocation4 + $0xe0] sm:$0xff] %vm3280, %v3193
        %3286 = vst.msk [vmem:[#allocation4 + $0x118] sm:$0xff] %vm3280, %v3195
        %3287 = vst.msk [vmem:[#allocation4 + $0x150] sm:$0xff] %vm3280, %v3197
        %3288 = vst.msk [vmem:[#allocation4 + $0x188] sm:$0xff] %vm3280, %v3199
        %3289 = vst.msk [vmem:[#allocation4 + $0x1c0] sm:$0xff] %vm3280, %v3201
        %3290 = vst.msk [vmem:[#allocation4 + $0x1f8] sm:$0xff] %vm3280, %v3203
        %3291 = vst.msk [vmem:[#allocation4 + $0x230] sm:$0xff] %vm3280, %v3205
        %3292 = vst.msk [vmem:[#allocation4 + $0x268] sm:$0xff] %vm3280, %v3207
        %3293 = vst.msk [vmem:[#allocation4 + $0x2a0] sm:$0xff] %vm3280, %v3209
        %3294 = vst.msk [vmem:[#allocation4 + $0x2d8] sm:$0xff] %vm3280, %v3211
        %3295 = vst.msk [vmem:[#allocation4 + $0x310] sm:$0xff] %vm3280, %v3213
        %3296 = vst.msk [vmem:[#allocation4 + $0x348] sm:$0xff] %vm3280, %v3215
        %3297 = vst.msk [vmem:[#allocation4 + $0x380] sm:$0xff] %vm3280, %v3217
        %3298 = vst.msk [vmem:[#allocation4 + $0x3b8] sm:$0xff] %vm3280, %v3219
        %3299 = vst.msk [vmem:[#allocation4 + $0x3f0] sm:$0xff] %vm3280, %v3221
        %3300 = vst.msk [vmem:[#allocation4 + $0x428] sm:$0xff] %vm3280, %v3223
        %3301 = vst.msk [vmem:[#allocation4 + $0x460] sm:$0xff] %vm3280, %v3225
        %3302 = vst.msk [vmem:[#allocation4 + $0x498] sm:$0xff] %vm3280, %v3227
        %3303 = vst.msk [vmem:[#allocation4 + $0x4d0] sm:$0xff] %vm3280, %v3229
        %3304 = vst.msk [vmem:[#allocation4 + $0x508] sm:$0xff] %vm3280, %v3231
        %3305 = vst.msk [vmem:[#allocation4 + $0x540] sm:$0xff] %vm3280, %v3233
        %3306 = vst.msk [vmem:[#allocation4 + $0x578] sm:$0xff] %vm3280, %v3235
        %3307 = vst.msk [vmem:[#allocation4 + $0x5b0] sm:$0xff] %vm3280, %v3237
        %3308 = vst.msk [vmem:[#allocation4 + $0x5e8] sm:$0xff] %vm3280, %v3239
        %3309 = vst.msk [vmem:[#allocation4 + $0x620] sm:$0xff] %vm3280, %v3241
        %3310 = vst.msk [vmem:[#allocation4 + $0x658] sm:$0xff] %vm3280, %v3243
        %3311 = vst.msk [vmem:[#allocation4 + $0x690] sm:$0xff] %vm3280, %v3245
        %3312 = vst.msk [vmem:[#allocation4 + $0x6c8] sm:$0xff] %vm3280, %v3247
        %v3313 = vld [vmem:[#allocation2 + $0xa] sm:$0xff]
        %v3314 = vld [vmem:[#allocation2 + $0x12] sm:$0xff]
        %v3315 = vld [vmem:[#allocation2 + $0x1a] sm:$0xff]
        %v3316 = vld [vmem:[#allocation2 + $0x22] sm:$0xff]
        %v3317 = vld [vmem:[#allocation2 + $0x2a] sm:$0xff]
        %v3318 = vld [vmem:[#allocation2 + $0x32] sm:$0xff]
        %v3319 = vld [vmem:[#allocation2 + $0x3a] sm:$0xff]
        %v3320 = vld [vmem:[#allocation2 + $0x42] sm:$0xff]
        %v3321 = vld [vmem:[#allocation2 + $0x4a] sm:$0xff]
        %v3322 = vld [vmem:[#allocation2 + $0x52] sm:$0xff]
        %v3323 = vld [vmem:[#allocation2 + $0x5a] sm:$0xff]
        %v3324 = vld [vmem:[#allocation2 + $0x62] sm:$0xff]
        %v3325 = vld [vmem:[#allocation2 + $0x6a] sm:$0xff]
        %v3326 = vld [vmem:[#allocation2 + $0x72] sm:$0xff]
        %v3327 = vld [vmem:[#allocation2 + $0x7a] sm:$0xff]
        %v3328 = vld [vmem:[#allocation2 + $0x82] sm:$0xff]
        %v3329 = vld [vmem:[#allocation2 + $0x8a] sm:$0xff]
        %v3330 = vld [vmem:[#allocation2 + $0x92] sm:$0xff]
        %v3331 = vld [vmem:[#allocation2 + $0x9a] sm:$0xff]
        %v3332 = vld [vmem:[#allocation2 + $0xa2] sm:$0xff]
        %v3333 = vld [vmem:[#allocation2 + $0xaa] sm:$0xff]
        %v3334 = vld [vmem:[#allocation2 + $0xb2] sm:$0xff]
        %v3335 = vld [vmem:[#allocation2 + $0xba] sm:$0xff]
        %v3336 = vld [vmem:[#allocation2 + $0xc2] sm:$0xff]
        %v3337 = vld [vmem:[#allocation2 + $0xca] sm:$0xff]
        %v3338 = vld [vmem:[#allocation2 + $0xd2] sm:$0xff]
        %v3339 = vld [vmem:[#allocation2 + $0xda] sm:$0xff]
        %v3340 = vld [vmem:[#allocation2 + $0xe2] sm:$0xff]
        %v3341 = vld [vmem:[#allocation2 + $0xea] sm:$0xff]
        %v3342 = vld [vmem:[#allocation2 + $0xf2] sm:$0xff]
        %v3343 = vld [vmem:[#allocation2 + $0xfa] sm:$0xff]
        %v3344 = vld [vmem:[#allocation2 + $0x102] sm:$0xff]
        %3345 = vst.msk [vmem:[#allocation4 + $0x8] sm:$0xff] %vm465, %v3313
        %3346 = vst.msk [vmem:[#allocation4 + $0x40] sm:$0xff] %vm465, %v3314
        %3347 = vst.msk [vmem:[#allocation4 + $0x78] sm:$0xff] %vm465, %v3315
        %3348 = vst.msk [vmem:[#allocation4 + $0xb0] sm:$0xff] %vm465, %v3316
        %3349 = vst.msk [vmem:[#allocation4 + $0xe8] sm:$0xff] %vm465, %v3317
        %3350 = vst.msk [vmem:[#allocation4 + $0x120] sm:$0xff] %vm465, %v3318
        %3351 = vst.msk [vmem:[#allocation4 + $0x158] sm:$0xff] %vm465, %v3319
        %3352 = vst.msk [vmem:[#allocation4 + $0x190] sm:$0xff] %vm465, %v3320
        %3353 = vst.msk [vmem:[#allocation4 + $0x1c8] sm:$0xff] %vm465, %v3321
        %3354 = vst.msk [vmem:[#allocation4 + $0x200] sm:$0xff] %vm465, %v3322
        %3355 = vst.msk [vmem:[#allocation4 + $0x238] sm:$0xff] %vm465, %v3323
        %3356 = vst.msk [vmem:[#allocation4 + $0x270] sm:$0xff] %vm465, %v3324
        %3357 = vst.msk [vmem:[#allocation4 + $0x2a8] sm:$0xff] %vm465, %v3325
        %3358 = vst.msk [vmem:[#allocation4 + $0x2e0] sm:$0xff] %vm465, %v3326
        %3359 = vst.msk [vmem:[#allocation4 + $0x318] sm:$0xff] %vm465, %v3327
        %3360 = vst.msk [vmem:[#allocation4 + $0x350] sm:$0xff] %vm465, %v3328
        %3361 = vst.msk [vmem:[#allocation4 + $0x388] sm:$0xff] %vm465, %v3329
        %3362 = vst.msk [vmem:[#allocation4 + $0x3c0] sm:$0xff] %vm465, %v3330
        %3363 = vst.msk [vmem:[#allocation4 + $0x3f8] sm:$0xff] %vm465, %v3331
        %3364 = vst.msk [vmem:[#allocation4 + $0x430] sm:$0xff] %vm465, %v3332
        %3365 = vst.msk [vmem:[#allocation4 + $0x468] sm:$0xff] %vm465, %v3333
        %3366 = vst.msk [vmem:[#allocation4 + $0x4a0] sm:$0xff] %vm465, %v3334
        %3367 = vst.msk [vmem:[#allocation4 + $0x4d8] sm:$0xff] %vm465, %v3335
        %3368 = vst.msk [vmem:[#allocation4 + $0x510] sm:$0xff] %vm465, %v3336
        %3369 = vst.msk [vmem:[#allocation4 + $0x548] sm:$0xff] %vm465, %v3337
        %3370 = vst.msk [vmem:[#allocation4 + $0x580] sm:$0xff] %vm465, %v3338
        %3371 = vst.msk [vmem:[#allocation4 + $0x5b8] sm:$0xff] %vm465, %v3339
        %3372 = vst.msk [vmem:[#allocation4 + $0x5f0] sm:$0xff] %vm465, %v3340
        %3373 = vst.msk [vmem:[#allocation4 + $0x628] sm:$0xff] %vm465, %v3341
        %3374 = vst.msk [vmem:[#allocation4 + $0x660] sm:$0xff] %vm465, %v3342
        %3375 = vst.msk [vmem:[#allocation4 + $0x698] sm:$0xff] %vm465, %v3343
        %3376 = vst.msk [vmem:[#allocation4 + $0x6d0] sm:$0xff] %vm465, %v3344
        %v3377 = vld [vmem:[#allocation2 + $0x16] sm:$0xff]
        %v3378 = vld [vmem:[#allocation2 + $0x1e] sm:$0xff]
        %v3379 = vld [vmem:[#allocation2 + $0x26] sm:$0xff]
        %v3380 = vld [vmem:[#allocation2 + $0x2e] sm:$0xff]
        %v3381 = vld [vmem:[#allocation2 + $0x36] sm:$0xff]
        %v3382 = vld [vmem:[#allocation2 + $0x3e] sm:$0xff]
        %v3383 = vld [vmem:[#allocation2 + $0x46] sm:$0xff]
        %v3384 = vld [vmem:[#allocation2 + $0x4e] sm:$0xff]
        %v3385 = vld [vmem:[#allocation2 + $0x56] sm:$0xff]
        %v3386 = vld [vmem:[#allocation2 + $0x5e] sm:$0xff]
        %v3387 = vld [vmem:[#allocation2 + $0x66] sm:$0xff]
        %v3388 = vld [vmem:[#allocation2 + $0x6e] sm:$0xff]
        %v3389 = vld [vmem:[#allocation2 + $0x76] sm:$0xff]
        %v3390 = vld [vmem:[#allocation2 + $0x7e] sm:$0xff]
        %v3391 = vld [vmem:[#allocation2 + $0x86] sm:$0xff]
        %v3392 = vld [vmem:[#allocation2 + $0x8e] sm:$0xff]
        %v3393 = vld [vmem:[#allocation2 + $0x96] sm:$0xff]
        %v3394 = vld [vmem:[#allocation2 + $0x9e] sm:$0xff]
        %v3395 = vld [vmem:[#allocation2 + $0xa6] sm:$0xff]
        %v3396 = vld [vmem:[#allocation2 + $0xae] sm:$0xff]
        %v3397 = vld [vmem:[#allocation2 + $0xb6] sm:$0xff]
        %v3398 = vld [vmem:[#allocation2 + $0xbe] sm:$0xff]
        %v3399 = vld [vmem:[#allocation2 + $0xc6] sm:$0xff]
        %v3400 = vld [vmem:[#allocation2 + $0xce] sm:$0xff]
        %v3401 = vld [vmem:[#allocation2 + $0xd6] sm:$0xff]
        %v3402 = vld [vmem:[#allocation2 + $0xde] sm:$0xff]
        %v3403 = vld [vmem:[#allocation2 + $0xe6] sm:$0xff]
        %v3404 = vld [vmem:[#allocation2 + $0xee] sm:$0xff]
        %v3405 = vld [vmem:[#allocation2 + $0xf6] sm:$0xff]
        %v3406 = vld [vmem:[#allocation2 + $0xfe] sm:$0xff]
        %v3407 = vld [vmem:[#allocation2 + $0x106] sm:$0xff]
        %v3408 = vld [vmem:[#allocation2 + $0x10e] sm:$0xff]
        %3441 = vrot.lane.b32.xlu0 %v3377, 32
        %v3442 = vpop.permute.xlu0 %3441
        %3443 = vrot.lane.b32.xlu0 %v3378, 32
        %v3444 = vpop.permute.xlu0 %3443
        %3445 = vrot.lane.b32.xlu0 %v3379, 32
        %v3446 = vpop.permute.xlu0 %3445
        %3447 = vrot.lane.b32.xlu0 %v3380, 32
        %v3448 = vpop.permute.xlu0 %3447
        %3449 = vrot.lane.b32.xlu0 %v3381, 32
        %v3450 = vpop.permute.xlu0 %3449
        %3451 = vrot.lane.b32.xlu0 %v3382, 32
        %v3452 = vpop.permute.xlu0 %3451
        %3453 = vrot.lane.b32.xlu0 %v3383, 32
        %v3454 = vpop.permute.xlu0 %3453
        %3455 = vrot.lane.b32.xlu0 %v3384, 32
        %v3456 = vpop.permute.xlu0 %3455
        %3457 = vrot.lane.b32.xlu0 %v3385, 32
        %v3458 = vpop.permute.xlu0 %3457
        %3459 = vrot.lane.b32.xlu0 %v3386, 32
        %v3460 = vpop.permute.xlu0 %3459
        %3461 = vrot.lane.b32.xlu0 %v3387, 32
        %v3462 = vpop.permute.xlu0 %3461
        %3463 = vrot.lane.b32.xlu0 %v3388, 32
        %v3464 = vpop.permute.xlu0 %3463
        %3465 = vrot.lane.b32.xlu0 %v3389, 32
        %v3466 = vpop.permute.xlu0 %3465
        %3467 = vrot.lane.b32.xlu0 %v3390, 32
        %v3468 = vpop.permute.xlu0 %3467
        %3469 = vrot.lane.b32.xlu0 %v3391, 32
        %v3470 = vpop.permute.xlu0 %3469
        %3471 = vrot.lane.b32.xlu0 %v3392, 32
        %v3472 = vpop.permute.xlu0 %3471
        %3473 = vrot.lane.b32.xlu0 %v3393, 32
        %v3474 = vpop.permute.xlu0 %3473
        %3475 = vrot.lane.b32.xlu0 %v3394, 32
        %v3476 = vpop.permute.xlu0 %3475
        %3477 = vrot.lane.b32.xlu0 %v3395, 32
        %v3478 = vpop.permute.xlu0 %3477
        %3479 = vrot.lane.b32.xlu0 %v3396, 32
        %v3480 = vpop.permute.xlu0 %3479
        %3481 = vrot.lane.b32.xlu0 %v3397, 32
        %v3482 = vpop.permute.xlu0 %3481
        %3483 = vrot.lane.b32.xlu0 %v3398, 32
        %v3484 = vpop.permute.xlu0 %3483
        %3485 = vrot.lane.b32.xlu0 %v3399, 32
        %v3486 = vpop.permute.xlu0 %3485
        %3487 = vrot.lane.b32.xlu0 %v3400, 32
        %v3488 = vpop.permute.xlu0 %3487
        %3489 = vrot.lane.b32.xlu0 %v3401, 32
        %v3490 = vpop.permute.xlu0 %3489
        %3491 = vrot.lane.b32.xlu0 %v3402, 32
        %v3492 = vpop.permute.xlu0 %3491
        %3493 = vrot.lane.b32.xlu0 %v3403, 32
        %v3494 = vpop.permute.xlu0 %3493
        %3495 = vrot.lane.b32.xlu0 %v3404, 32
        %v3496 = vpop.permute.xlu0 %3495
        %3497 = vrot.lane.b32.xlu0 %v3405, 32
        %v3498 = vpop.permute.xlu0 %3497
        %3499 = vrot.lane.b32.xlu0 %v3406, 32
        %v3500 = vpop.permute.xlu0 %3499
        %3501 = vrot.lane.b32.xlu0 %v3407, 32
        %v3502 = vpop.permute.xlu0 %3501
        %3503 = vrot.lane.b32.xlu0 %v3408, 32
        %v3504 = vpop.permute.xlu0 %3503
        %3537 = vst.msk [vmem:[#allocation4 + $0x8] sm:$0xff] %vm2894, %v3442
        %3538 = vst.msk [vmem:[#allocation4 + $0x40] sm:$0xff] %vm2894, %v3444
        %3539 = vst.msk [vmem:[#allocation4 + $0x78] sm:$0xff] %vm2894, %v3446
        %3540 = vst.msk [vmem:[#allocation4 + $0xb0] sm:$0xff] %vm2894, %v3448
        %3541 = vst.msk [vmem:[#allocation4 + $0xe8] sm:$0xff] %vm2894, %v3450
        %3542 = vst.msk [vmem:[#allocation4 + $0x120] sm:$0xff] %vm2894, %v3452
        %3543 = vst.msk [vmem:[#allocation4 + $0x158] sm:$0xff] %vm2894, %v3454
        %3544 = vst.msk [vmem:[#allocation4 + $0x190] sm:$0xff] %vm2894, %v3456
        %3545 = vst.msk [vmem:[#allocation4 + $0x1c8] sm:$0xff] %vm2894, %v3458
        %3546 = vst.msk [vmem:[#allocation4 + $0x200] sm:$0xff] %vm2894, %v3460
        %3547 = vst.msk [vmem:[#allocation4 + $0x238] sm:$0xff] %vm2894, %v3462
        %3548 = vst.msk [vmem:[#allocation4 + $0x270] sm:$0xff] %vm2894, %v3464
        %3549 = vst.msk [vmem:[#allocation4 + $0x2a8] sm:$0xff] %vm2894, %v3466
        %3550 = vst.msk [vmem:[#allocation4 + $0x2e0] sm:$0xff] %vm2894, %v3468
        %3551 = vst.msk [vmem:[#allocation4 + $0x318] sm:$0xff] %vm2894, %v3470
        %3552 = vst.msk [vmem:[#allocation4 + $0x350] sm:$0xff] %vm2894, %v3472
        %3553 = vst.msk [vmem:[#allocation4 + $0x388] sm:$0xff] %vm2894, %v3474
        %3554 = vst.msk [vmem:[#allocation4 + $0x3c0] sm:$0xff] %vm2894, %v3476
        %3555 = vst.msk [vmem:[#allocation4 + $0x3f8] sm:$0xff] %vm2894, %v3478
        %3556 = vst.msk [vmem:[#allocation4 + $0x430] sm:$0xff] %vm2894, %v3480
        %3557 = vst.msk [vmem:[#allocation4 + $0x468] sm:$0xff] %vm2894, %v3482
        %3558 = vst.msk [vmem:[#allocation4 + $0x4a0] sm:$0xff] %vm2894, %v3484
        %3559 = vst.msk [vmem:[#allocation4 + $0x4d8] sm:$0xff] %vm2894, %v3486
        %3560 = vst.msk [vmem:[#allocation4 + $0x510] sm:$0xff] %vm2894, %v3488
        %3561 = vst.msk [vmem:[#allocation4 + $0x548] sm:$0xff] %vm2894, %v3490
        %3562 = vst.msk [vmem:[#allocation4 + $0x580] sm:$0xff] %vm2894, %v3492
        %3563 = vst.msk [vmem:[#allocation4 + $0x5b8] sm:$0xff] %vm2894, %v3494
        %3564 = vst.msk [vmem:[#allocation4 + $0x5f0] sm:$0xff] %vm2894, %v3496
        %3565 = vst.msk [vmem:[#allocation4 + $0x628] sm:$0xff] %vm2894, %v3498
        %3566 = vst.msk [vmem:[#allocation4 + $0x660] sm:$0xff] %vm2894, %v3500
        %3567 = vst.msk [vmem:[#allocation4 + $0x698] sm:$0xff] %vm2894, %v3502
        %3568 = vst.msk [vmem:[#allocation4 + $0x6d0] sm:$0xff] %vm2894, %v3504
        %v3569 = vld [vmem:[#allocation2 + $0x17] sm:$0xff]
        %v3570 = vld [vmem:[#allocation2 + $0x1f] sm:$0xff]
        %v3571 = vld [vmem:[#allocation2 + $0x27] sm:$0xff]
        %v3572 = vld [vmem:[#allocation2 + $0x2f] sm:$0xff]
        %v3573 = vld [vmem:[#allocation2 + $0x37] sm:$0xff]
        %v3574 = vld [vmem:[#allocation2 + $0x3f] sm:$0xff]
        %v3575 = vld [vmem:[#allocation2 + $0x47] sm:$0xff]
        %v3576 = vld [vmem:[#allocation2 + $0x4f] sm:$0xff]
        %v3577 = vld [vmem:[#allocation2 + $0x57] sm:$0xff]
        %v3578 = vld [vmem:[#allocation2 + $0x5f] sm:$0xff]
        %v3579 = vld [vmem:[#allocation2 + $0x67] sm:$0xff]
        %v3580 = vld [vmem:[#allocation2 + $0x6f] sm:$0xff]
        %v3581 = vld [vmem:[#allocation2 + $0x77] sm:$0xff]
        %v3582 = vld [vmem:[#allocation2 + $0x7f] sm:$0xff]
        %v3583 = vld [vmem:[#allocation2 + $0x87] sm:$0xff]
        %v3584 = vld [vmem:[#allocation2 + $0x8f] sm:$0xff]
        %v3585 = vld [vmem:[#allocation2 + $0x97] sm:$0xff]
        %v3586 = vld [vmem:[#allocation2 + $0x9f] sm:$0xff]
        %v3587 = vld [vmem:[#allocation2 + $0xa7] sm:$0xff]
        %v3588 = vld [vmem:[#allocation2 + $0xaf] sm:$0xff]
        %v3589 = vld [vmem:[#allocation2 + $0xb7] sm:$0xff]
        %v3590 = vld [vmem:[#allocation2 + $0xbf] sm:$0xff]
        %v3591 = vld [vmem:[#allocation2 + $0xc7] sm:$0xff]
        %v3592 = vld [vmem:[#allocation2 + $0xcf] sm:$0xff]
        %v3593 = vld [vmem:[#allocation2 + $0xd7] sm:$0xff]
        %v3594 = vld [vmem:[#allocation2 + $0xdf] sm:$0xff]
        %v3595 = vld [vmem:[#allocation2 + $0xe7] sm:$0xff]
        %v3596 = vld [vmem:[#allocation2 + $0xef] sm:$0xff]
        %v3597 = vld [vmem:[#allocation2 + $0xf7] sm:$0xff]
        %v3598 = vld [vmem:[#allocation2 + $0xff] sm:$0xff]
        %v3599 = vld [vmem:[#allocation2 + $0x107] sm:$0xff]
        %v3600 = vld [vmem:[#allocation2 + $0x10f] sm:$0xff]
        %3633 = vrot.lane.b32.xlu0 %v3569, 64
        %v3634 = vpop.permute.xlu0 %3633
        %3635 = vrot.lane.b32.xlu0 %v3570, 64
        %v3636 = vpop.permute.xlu0 %3635
        %3637 = vrot.lane.b32.xlu0 %v3571, 64
        %v3638 = vpop.permute.xlu0 %3637
        %3639 = vrot.lane.b32.xlu0 %v3572, 64
        %v3640 = vpop.permute.xlu0 %3639
        %3641 = vrot.lane.b32.xlu0 %v3573, 64
        %v3642 = vpop.permute.xlu0 %3641
        %3643 = vrot.lane.b32.xlu0 %v3574, 64
        %v3644 = vpop.permute.xlu0 %3643
        %3645 = vrot.lane.b32.xlu0 %v3575, 64
        %v3646 = vpop.permute.xlu0 %3645
        %3647 = vrot.lane.b32.xlu0 %v3576, 64
        %v3648 = vpop.permute.xlu0 %3647
        %3649 = vrot.lane.b32.xlu0 %v3577, 64
        %v3650 = vpop.permute.xlu0 %3649
        %3651 = vrot.lane.b32.xlu0 %v3578, 64
        %v3652 = vpop.permute.xlu0 %3651
        %3653 = vrot.lane.b32.xlu0 %v3579, 64
        %v3654 = vpop.permute.xlu0 %3653
        %3655 = vrot.lane.b32.xlu0 %v3580, 64
        %v3656 = vpop.permute.xlu0 %3655
        %3657 = vrot.lane.b32.xlu0 %v3581, 64
        %v3658 = vpop.permute.xlu0 %3657
        %3659 = vrot.lane.b32.xlu0 %v3582, 64
        %v3660 = vpop.permute.xlu0 %3659
        %3661 = vrot.lane.b32.xlu0 %v3583, 64
        %v3662 = vpop.permute.xlu0 %3661
        %3663 = vrot.lane.b32.xlu0 %v3584, 64
        %v3664 = vpop.permute.xlu0 %3663
        %3665 = vrot.lane.b32.xlu0 %v3585, 64
        %v3666 = vpop.permute.xlu0 %3665
        %3667 = vrot.lane.b32.xlu0 %v3586, 64
        %v3668 = vpop.permute.xlu0 %3667
        %3669 = vrot.lane.b32.xlu0 %v3587, 64
        %v3670 = vpop.permute.xlu0 %3669
        %3671 = vrot.lane.b32.xlu0 %v3588, 64
        %v3672 = vpop.permute.xlu0 %3671
        %3673 = vrot.lane.b32.xlu0 %v3589, 64
        %v3674 = vpop.permute.xlu0 %3673
        %3675 = vrot.lane.b32.xlu0 %v3590, 64
        %v3676 = vpop.permute.xlu0 %3675
        %3677 = vrot.lane.b32.xlu0 %v3591, 64
        %v3678 = vpop.permute.xlu0 %3677
        %3679 = vrot.lane.b32.xlu0 %v3592, 64
        %v3680 = vpop.permute.xlu0 %3679
        %3681 = vrot.lane.b32.xlu0 %v3593, 64
        %v3682 = vpop.permute.xlu0 %3681
        %3683 = vrot.lane.b32.xlu0 %v3594, 64
        %v3684 = vpop.permute.xlu0 %3683
        %3685 = vrot.lane.b32.xlu0 %v3595, 64
        %v3686 = vpop.permute.xlu0 %3685
        %3687 = vrot.lane.b32.xlu0 %v3596, 64
        %v3688 = vpop.permute.xlu0 %3687
        %3689 = vrot.lane.b32.xlu0 %v3597, 64
        %v3690 = vpop.permute.xlu0 %3689
        %3691 = vrot.lane.b32.xlu0 %v3598, 64
        %v3692 = vpop.permute.xlu0 %3691
        %3693 = vrot.lane.b32.xlu0 %v3599, 64
        %v3694 = vpop.permute.xlu0 %3693
        %3695 = vrot.lane.b32.xlu0 %v3600, 64
        %v3696 = vpop.permute.xlu0 %3695
        %3729 = vst.msk [vmem:[#allocation4 + $0x8] sm:$0xff] %vm3087, %v3634
        %3730 = vst.msk [vmem:[#allocation4 + $0x40] sm:$0xff] %vm3087, %v3636
        %3731 = vst.msk [vmem:[#allocation4 + $0x78] sm:$0xff] %vm3087, %v3638
        %3732 = vst.msk [vmem:[#allocation4 + $0xb0] sm:$0xff] %vm3087, %v3640
        %3733 = vst.msk [vmem:[#allocation4 + $0xe8] sm:$0xff] %vm3087, %v3642
        %3734 = vst.msk [vmem:[#allocation4 + $0x120] sm:$0xff] %vm3087, %v3644
        %3735 = vst.msk [vmem:[#allocation4 + $0x158] sm:$0xff] %vm3087, %v3646
        %3736 = vst.msk [vmem:[#allocation4 + $0x190] sm:$0xff] %vm3087, %v3648
        %3737 = vst.msk [vmem:[#allocation4 + $0x1c8] sm:$0xff] %vm3087, %v3650
        %3738 = vst.msk [vmem:[#allocation4 + $0x200] sm:$0xff] %vm3087, %v3652
        %3739 = vst.msk [vmem:[#allocation4 + $0x238] sm:$0xff] %vm3087, %v3654
        %3740 = vst.msk [vmem:[#allocation4 + $0x270] sm:$0xff] %vm3087, %v3656
        %3741 = vst.msk [vmem:[#allocation4 + $0x2a8] sm:$0xff] %vm3087, %v3658
        %3742 = vst.msk [vmem:[#allocation4 + $0x2e0] sm:$0xff] %vm3087, %v3660
        %3743 = vst.msk [vmem:[#allocation4 + $0x318] sm:$0xff] %vm3087, %v3662
        %3744 = vst.msk [vmem:[#allocation4 + $0x350] sm:$0xff] %vm3087, %v3664
        %3745 = vst.msk [vmem:[#allocation4 + $0x388] sm:$0xff] %vm3087, %v3666
        %3746 = vst.msk [vmem:[#allocation4 + $0x3c0] sm:$0xff] %vm3087, %v3668
        %3747 = vst.msk [vmem:[#allocation4 + $0x3f8] sm:$0xff] %vm3087, %v3670
        %3748 = vst.msk [vmem:[#allocation4 + $0x430] sm:$0xff] %vm3087, %v3672
        %3749 = vst.msk [vmem:[#allocation4 + $0x468] sm:$0xff] %vm3087, %v3674
        %3750 = vst.msk [vmem:[#allocation4 + $0x4a0] sm:$0xff] %vm3087, %v3676
        %3751 = vst.msk [vmem:[#allocation4 + $0x4d8] sm:$0xff] %vm3087, %v3678
        %3752 = vst.msk [vmem:[#allocation4 + $0x510] sm:$0xff] %vm3087, %v3680
        %3753 = vst.msk [vmem:[#allocation4 + $0x548] sm:$0xff] %vm3087, %v3682
        %3754 = vst.msk [vmem:[#allocation4 + $0x580] sm:$0xff] %vm3087, %v3684
        %3755 = vst.msk [vmem:[#allocation4 + $0x5b8] sm:$0xff] %vm3087, %v3686
        %3756 = vst.msk [vmem:[#allocation4 + $0x5f0] sm:$0xff] %vm3087, %v3688
        %3757 = vst.msk [vmem:[#allocation4 + $0x628] sm:$0xff] %vm3087, %v3690
        %3758 = vst.msk [vmem:[#allocation4 + $0x660] sm:$0xff] %vm3087, %v3692
        %3759 = vst.msk [vmem:[#allocation4 + $0x698] sm:$0xff] %vm3087, %v3694
        %3760 = vst.msk [vmem:[#allocation4 + $0x6d0] sm:$0xff] %vm3087, %v3696
        %v3761 = vld [vmem:[#allocation2 + $0x18] sm:$0xff]
        %v3762 = vld [vmem:[#allocation2 + $0x20] sm:$0xff]
        %v3763 = vld [vmem:[#allocation2 + $0x28] sm:$0xff]
        %v3764 = vld [vmem:[#allocation2 + $0x30] sm:$0xff]
        %v3765 = vld [vmem:[#allocation2 + $0x38] sm:$0xff]
        %v3766 = vld [vmem:[#allocation2 + $0x40] sm:$0xff]
        %v3767 = vld [vmem:[#allocation2 + $0x48] sm:$0xff]
        %v3768 = vld [vmem:[#allocation2 + $0x50] sm:$0xff]
        %v3769 = vld [vmem:[#allocation2 + $0x58] sm:$0xff]
        %v3770 = vld [vmem:[#allocation2 + $0x60] sm:$0xff]
        %v3771 = vld [vmem:[#allocation2 + $0x68] sm:$0xff]
        %v3772 = vld [vmem:[#allocation2 + $0x70] sm:$0xff]
        %v3773 = vld [vmem:[#allocation2 + $0x78] sm:$0xff]
        %v3774 = vld [vmem:[#allocation2 + $0x80] sm:$0xff]
        %v3775 = vld [vmem:[#allocation2 + $0x88] sm:$0xff]
        %v3776 = vld [vmem:[#allocation2 + $0x90] sm:$0xff]
        %v3777 = vld [vmem:[#allocation2 + $0x98] sm:$0xff]
        %v3778 = vld [vmem:[#allocation2 + $0xa0] sm:$0xff]
        %v3779 = vld [vmem:[#allocation2 + $0xa8] sm:$0xff]
        %v3780 = vld [vmem:[#allocation2 + $0xb0] sm:$0xff]
        %v3781 = vld [vmem:[#allocation2 + $0xb8] sm:$0xff]
        %v3782 = vld [vmem:[#allocation2 + $0xc0] sm:$0xff]
        %v3783 = vld [vmem:[#allocation2 + $0xc8] sm:$0xff]
        %v3784 = vld [vmem:[#allocation2 + $0xd0] sm:$0xff]
        %v3785 = vld [vmem:[#allocation2 + $0xd8] sm:$0xff]
        %v3786 = vld [vmem:[#allocation2 + $0xe0] sm:$0xff]
        %v3787 = vld [vmem:[#allocation2 + $0xe8] sm:$0xff]
        %v3788 = vld [vmem:[#allocation2 + $0xf0] sm:$0xff]
        %v3789 = vld [vmem:[#allocation2 + $0xf8] sm:$0xff]
        %v3790 = vld [vmem:[#allocation2 + $0x100] sm:$0xff]
        %v3791 = vld [vmem:[#allocation2 + $0x108] sm:$0xff]
        %v3792 = vld [vmem:[#allocation2 + $0x110] sm:$0xff]
        %3825 = vrot.lane.b32.xlu0 %v3761, 96
        %v3826 = vpop.permute.xlu0 %3825
        %3827 = vrot.lane.b32.xlu0 %v3762, 96
        %v3828 = vpop.permute.xlu0 %3827
        %3829 = vrot.lane.b32.xlu0 %v3763, 96
        %v3830 = vpop.permute.xlu0 %3829
        %3831 = vrot.lane.b32.xlu0 %v3764, 96
        %v3832 = vpop.permute.xlu0 %3831
        %3833 = vrot.lane.b32.xlu0 %v3765, 96
        %v3834 = vpop.permute.xlu0 %3833
        %3835 = vrot.lane.b32.xlu0 %v3766, 96
        %v3836 = vpop.permute.xlu0 %3835
        %3837 = vrot.lane.b32.xlu0 %v3767, 96
        %v3838 = vpop.permute.xlu0 %3837
        %3839 = vrot.lane.b32.xlu0 %v3768, 96
        %v3840 = vpop.permute.xlu0 %3839
        %3841 = vrot.lane.b32.xlu0 %v3769, 96
        %v3842 = vpop.permute.xlu0 %3841
        %3843 = vrot.lane.b32.xlu0 %v3770, 96
        %v3844 = vpop.permute.xlu0 %3843
        %3845 = vrot.lane.b32.xlu0 %v3771, 96
        %v3846 = vpop.permute.xlu0 %3845
        %3847 = vrot.lane.b32.xlu0 %v3772, 96
        %v3848 = vpop.permute.xlu0 %3847
        %3849 = vrot.lane.b32.xlu0 %v3773, 96
        %v3850 = vpop.permute.xlu0 %3849
        %3851 = vrot.lane.b32.xlu0 %v3774, 96
        %v3852 = vpop.permute.xlu0 %3851
        %3853 = vrot.lane.b32.xlu0 %v3775, 96
        %v3854 = vpop.permute.xlu0 %3853
        %3855 = vrot.lane.b32.xlu0 %v3776, 96
        %v3856 = vpop.permute.xlu0 %3855
        %3857 = vrot.lane.b32.xlu0 %v3777, 96
        %v3858 = vpop.permute.xlu0 %3857
        %3859 = vrot.lane.b32.xlu0 %v3778, 96
        %v3860 = vpop.permute.xlu0 %3859
        %3861 = vrot.lane.b32.xlu0 %v3779, 96
        %v3862 = vpop.permute.xlu0 %3861
        %3863 = vrot.lane.b32.xlu0 %v3780, 96
        %v3864 = vpop.permute.xlu0 %3863
        %3865 = vrot.lane.b32.xlu0 %v3781, 96
        %v3866 = vpop.permute.xlu0 %3865
        %3867 = vrot.lane.b32.xlu0 %v3782, 96
        %v3868 = vpop.permute.xlu0 %3867
        %3869 = vrot.lane.b32.xlu0 %v3783, 96
        %v3870 = vpop.permute.xlu0 %3869
        %3871 = vrot.lane.b32.xlu0 %v3784, 96
        %v3872 = vpop.permute.xlu0 %3871
        %3873 = vrot.lane.b32.xlu0 %v3785, 96
        %v3874 = vpop.permute.xlu0 %3873
        %3875 = vrot.lane.b32.xlu0 %v3786, 96
        %v3876 = vpop.permute.xlu0 %3875
        %3877 = vrot.lane.b32.xlu0 %v3787, 96
        %v3878 = vpop.permute.xlu0 %3877
        %3879 = vrot.lane.b32.xlu0 %v3788, 96
        %v3880 = vpop.permute.xlu0 %3879
        %3881 = vrot.lane.b32.xlu0 %v3789, 96
        %v3882 = vpop.permute.xlu0 %3881
        %3883 = vrot.lane.b32.xlu0 %v3790, 96
        %v3884 = vpop.permute.xlu0 %3883
        %3885 = vrot.lane.b32.xlu0 %v3791, 96
        %v3886 = vpop.permute.xlu0 %3885
        %3887 = vrot.lane.b32.xlu0 %v3792, 96
        %v3888 = vpop.permute.xlu0 %3887
        %3921 = vst.msk [vmem:[#allocation4 + $0x8] sm:$0xff] %vm3280, %v3826
        %3922 = vst.msk [vmem:[#allocation4 + $0x40] sm:$0xff] %vm3280, %v3828
        %3923 = vst.msk [vmem:[#allocation4 + $0x78] sm:$0xff] %vm3280, %v3830
        %3924 = vst.msk [vmem:[#allocation4 + $0xb0] sm:$0xff] %vm3280, %v3832
        %3925 = vst.msk [vmem:[#allocation4 + $0xe8] sm:$0xff] %vm3280, %v3834
        %3926 = vst.msk [vmem:[#allocation4 + $0x120] sm:$0xff] %vm3280, %v3836
        %3927 = vst.msk [vmem:[#allocation4 + $0x158] sm:$0xff] %vm3280, %v3838
        %3928 = vst.msk [vmem:[#allocation4 + $0x190] sm:$0xff] %vm3280, %v3840
        %3929 = vst.msk [vmem:[#allocation4 + $0x1c8] sm:$0xff] %vm3280, %v3842
        %3930 = vst.msk [vmem:[#allocation4 + $0x200] sm:$0xff] %vm3280, %v3844
        %3931 = vst.msk [vmem:[#allocation4 + $0x238] sm:$0xff] %vm3280, %v3846
        %3932 = vst.msk [vmem:[#allocation4 + $0x270] sm:$0xff] %vm3280, %v3848
        %3933 = vst.msk [vmem:[#allocation4 + $0x2a8] sm:$0xff] %vm3280, %v3850
        %3934 = vst.msk [vmem:[#allocation4 + $0x2e0] sm:$0xff] %vm3280, %v3852
        %3935 = vst.msk [vmem:[#allocation4 + $0x318] sm:$0xff] %vm3280, %v3854
        %3936 = vst.msk [vmem:[#allocation4 + $0x350] sm:$0xff] %vm3280, %v3856
        %3937 = vst.msk [vmem:[#allocation4 + $0x388] sm:$0xff] %vm3280, %v3858
        %3938 = vst.msk [vmem:[#allocation4 + $0x3c0] sm:$0xff] %vm3280, %v3860
        %3939 = vst.msk [vmem:[#allocation4 + $0x3f8] sm:$0xff] %vm3280, %v3862
        %3940 = vst.msk [vmem:[#allocation4 + $0x430] sm:$0xff] %vm3280, %v3864
        %3941 = vst.msk [vmem:[#allocation4 + $0x468] sm:$0xff] %vm3280, %v3866
        %3942 = vst.msk [vmem:[#allocation4 + $0x4a0] sm:$0xff] %vm3280, %v3868
        %3943 = vst.msk [vmem:[#allocation4 + $0x4d8] sm:$0xff] %vm3280, %v3870
        %3944 = vst.msk [vmem:[#allocation4 + $0x510] sm:$0xff] %vm3280, %v3872
        %3945 = vst.msk [vmem:[#allocation4 + $0x548] sm:$0xff] %vm3280, %v3874
        %3946 = vst.msk [vmem:[#allocation4 + $0x580] sm:$0xff] %vm3280, %v3876
        %3947 = vst.msk [vmem:[#allocation4 + $0x5b8] sm:$0xff] %vm3280, %v3878
        %3948 = vst.msk [vmem:[#allocation4 + $0x5f0] sm:$0xff] %vm3280, %v3880
        %3949 = vst.msk [vmem:[#allocation4 + $0x628] sm:$0xff] %vm3280, %v3882
        %3950 = vst.msk [vmem:[#allocation4 + $0x660] sm:$0xff] %vm3280, %v3884
        %3951 = vst.msk [vmem:[#allocation4 + $0x698] sm:$0xff] %vm3280, %v3886
        %3952 = vst.msk [vmem:[#allocation4 + $0x6d0] sm:$0xff] %vm3280, %v3888
        %v3953 = vld [vmem:[#allocation2 + $0x19] sm:$0xff]
        %v3954 = vld [vmem:[#allocation2 + $0x21] sm:$0xff]
        %v3955 = vld [vmem:[#allocation2 + $0x29] sm:$0xff]
        %v3956 = vld [vmem:[#allocation2 + $0x31] sm:$0xff]
        %v3957 = vld [vmem:[#allocation2 + $0x39] sm:$0xff]
        %v3958 = vld [vmem:[#allocation2 + $0x41] sm:$0xff]
        %v3959 = vld [vmem:[#allocation2 + $0x49] sm:$0xff]
        %v3960 = vld [vmem:[#allocation2 + $0x51] sm:$0xff]
        %v3961 = vld [vmem:[#allocation2 + $0x59] sm:$0xff]
        %v3962 = vld [vmem:[#allocation2 + $0x61] sm:$0xff]
        %v3963 = vld [vmem:[#allocation2 + $0x69] sm:$0xff]
        %v3964 = vld [vmem:[#allocation2 + $0x71] sm:$0xff]
        %v3965 = vld [vmem:[#allocation2 + $0x79] sm:$0xff]
        %v3966 = vld [vmem:[#allocation2 + $0x81] sm:$0xff]
        %v3967 = vld [vmem:[#allocation2 + $0x89] sm:$0xff]
        %v3968 = vld [vmem:[#allocation2 + $0x91] sm:$0xff]
        %v3969 = vld [vmem:[#allocation2 + $0x99] sm:$0xff]
        %v3970 = vld [vmem:[#allocation2 + $0xa1] sm:$0xff]
        %v3971 = vld [vmem:[#allocation2 + $0xa9] sm:$0xff]
        %v3972 = vld [vmem:[#allocation2 + $0xb1] sm:$0xff]
        %v3973 = vld [vmem:[#allocation2 + $0xb9] sm:$0xff]
        %v3974 = vld [vmem:[#allocation2 + $0xc1] sm:$0xff]
        %v3975 = vld [vmem:[#allocation2 + $0xc9] sm:$0xff]
        %v3976 = vld [vmem:[#allocation2 + $0xd1] sm:$0xff]
        %v3977 = vld [vmem:[#allocation2 + $0xd9] sm:$0xff]
        %v3978 = vld [vmem:[#allocation2 + $0xe1] sm:$0xff]
        %v3979 = vld [vmem:[#allocation2 + $0xe9] sm:$0xff]
        %v3980 = vld [vmem:[#allocation2 + $0xf1] sm:$0xff]
        %v3981 = vld [vmem:[#allocation2 + $0xf9] sm:$0xff]
        %v3982 = vld [vmem:[#allocation2 + $0x101] sm:$0xff]
        %v3983 = vld [vmem:[#allocation2 + $0x109] sm:$0xff]
        %v3984 = vld [vmem:[#allocation2 + $0x111] sm:$0xff]
        %3985 = vst.msk [vmem:[#allocation4 + $0x10] sm:$0xff] %vm465, %v3953
        %3986 = vst.msk [vmem:[#allocation4 + $0x48] sm:$0xff] %vm465, %v3954
        %3987 = vst.msk [vmem:[#allocation4 + $0x80] sm:$0xff] %vm465, %v3955
        %3988 = vst.msk [vmem:[#allocation4 + $0xb8] sm:$0xff] %vm465, %v3956
        %3989 = vst.msk [vmem:[#allocation4 + $0xf0] sm:$0xff] %vm465, %v3957
        %3990 = vst.msk [vmem:[#allocation4 + $0x128] sm:$0xff] %vm465, %v3958
        %3991 = vst.msk [vmem:[#allocation4 + $0x160] sm:$0xff] %vm465, %v3959
        %3992 = vst.msk [vmem:[#allocation4 + $0x198] sm:$0xff] %vm465, %v3960
        %3993 = vst.msk [vmem:[#allocation4 + $0x1d0] sm:$0xff] %vm465, %v3961
        %3994 = vst.msk [vmem:[#allocation4 + $0x208] sm:$0xff] %vm465, %v3962
        %3995 = vst.msk [vmem:[#allocation4 + $0x240] sm:$0xff] %vm465, %v3963
        %3996 = vst.msk [vmem:[#allocation4 + $0x278] sm:$0xff] %vm465, %v3964
        %3997 = vst.msk [vmem:[#allocation4 + $0x2b0] sm:$0xff] %vm465, %v3965
        %3998 = vst.msk [vmem:[#allocation4 + $0x2e8] sm:$0xff] %vm465, %v3966
        %3999 = vst.msk [vmem:[#allocation4 + $0x320] sm:$0xff] %vm465, %v3967
        %4000 = vst.msk [vmem:[#allocation4 + $0x358] sm:$0xff] %vm465, %v3968
        %4001 = vst.msk [vmem:[#allocation4 + $0x390] sm:$0xff] %vm465, %v3969
        %4002 = vst.msk [vmem:[#allocation4 + $0x3c8] sm:$0xff] %vm465, %v3970
        %4003 = vst.msk [vmem:[#allocation4 + $0x400] sm:$0xff] %vm465, %v3971
        %4004 = vst.msk [vmem:[#allocation4 + $0x438] sm:$0xff] %vm465, %v3972
        %4005 = vst.msk [vmem:[#allocation4 + $0x470] sm:$0xff] %vm465, %v3973
        %4006 = vst.msk [vmem:[#allocation4 + $0x4a8] sm:$0xff] %vm465, %v3974
        %4007 = vst.msk [vmem:[#allocation4 + $0x4e0] sm:$0xff] %vm465, %v3975
        %4008 = vst.msk [vmem:[#allocation4 + $0x518] sm:$0xff] %vm465, %v3976
        %4009 = vst.msk [vmem:[#allocation4 + $0x550] sm:$0xff] %vm465, %v3977
        %4010 = vst.msk [vmem:[#allocation4 + $0x588] sm:$0xff] %vm465, %v3978
        %4011 = vst.msk [vmem:[#allocation4 + $0x5c0] sm:$0xff] %vm465, %v3979
        %4012 = vst.msk [vmem:[#allocation4 + $0x5f8] sm:$0xff] %vm465, %v3980
        %4013 = vst.msk [vmem:[#allocation4 + $0x630] sm:$0xff] %vm465, %v3981
        %4014 = vst.msk [vmem:[#allocation4 + $0x668] sm:$0xff] %vm465, %v3982
        %4015 = vst.msk [vmem:[#allocation4 + $0x6a0] sm:$0xff] %vm465, %v3983
        %4016 = vst.msk [vmem:[#allocation4 + $0x6d8] sm:$0xff] %vm465, %v3984
        %v4017 = vld [vmem:[#allocation2 + $0x1a] sm:$0xff]
        %v4018 = vld [vmem:[#allocation2 + $0x22] sm:$0xff]
        %v4019 = vld [vmem:[#allocation2 + $0x2a] sm:$0xff]
        %v4020 = vld [vmem:[#allocation2 + $0x32] sm:$0xff]
        %v4021 = vld [vmem:[#allocation2 + $0x3a] sm:$0xff]
        %v4022 = vld [vmem:[#allocation2 + $0x42] sm:$0xff]
        %v4023 = vld [vmem:[#allocation2 + $0x4a] sm:$0xff]
        %v4024 = vld [vmem:[#allocation2 + $0x52] sm:$0xff]
        %v4025 = vld [vmem:[#allocation2 + $0x5a] sm:$0xff]
        %v4026 = vld [vmem:[#allocation2 + $0x62] sm:$0xff]
        %v4027 = vld [vmem:[#allocation2 + $0x6a] sm:$0xff]
        %v4028 = vld [vmem:[#allocation2 + $0x72] sm:$0xff]
        %v4029 = vld [vmem:[#allocation2 + $0x7a] sm:$0xff]
        %v4030 = vld [vmem:[#allocation2 + $0x82] sm:$0xff]
        %v4031 = vld [vmem:[#allocation2 + $0x8a] sm:$0xff]
        %v4032 = vld [vmem:[#allocation2 + $0x92] sm:$0xff]
        %v4033 = vld [vmem:[#allocation2 + $0x9a] sm:$0xff]
        %v4034 = vld [vmem:[#allocation2 + $0xa2] sm:$0xff]
        %v4035 = vld [vmem:[#allocation2 + $0xaa] sm:$0xff]
        %v4036 = vld [vmem:[#allocation2 + $0xb2] sm:$0xff]
        %v4037 = vld [vmem:[#allocation2 + $0xba] sm:$0xff]
        %v4038 = vld [vmem:[#allocation2 + $0xc2] sm:$0xff]
        %v4039 = vld [vmem:[#allocation2 + $0xca] sm:$0xff]
        %v4040 = vld [vmem:[#allocation2 + $0xd2] sm:$0xff]
        %v4041 = vld [vmem:[#allocation2 + $0xda] sm:$0xff]
        %v4042 = vld [vmem:[#allocation2 + $0xe2] sm:$0xff]
        %v4043 = vld [vmem:[#allocation2 + $0xea] sm:$0xff]
        %v4044 = vld [vmem:[#allocation2 + $0xf2] sm:$0xff]
        %v4045 = vld [vmem:[#allocation2 + $0xfa] sm:$0xff]
        %v4046 = vld [vmem:[#allocation2 + $0x102] sm:$0xff]
        %v4047 = vld [vmem:[#allocation2 + $0x10a] sm:$0xff]
        %v4048 = vld [vmem:[#allocation2 + $0x112] sm:$0xff]
        %4081 = vrot.lane.b32.xlu0 %v4017, 32
        %v4082 = vpop.permute.xlu0 %4081
        %4083 = vrot.lane.b32.xlu0 %v4018, 32
        %v4084 = vpop.permute.xlu0 %4083
        %4085 = vrot.lane.b32.xlu0 %v4019, 32
        %v4086 = vpop.permute.xlu0 %4085
        %4087 = vrot.lane.b32.xlu0 %v4020, 32
        %v4088 = vpop.permute.xlu0 %4087
        %4089 = vrot.lane.b32.xlu0 %v4021, 32
        %v4090 = vpop.permute.xlu0 %4089
        %4091 = vrot.lane.b32.xlu0 %v4022, 32
        %v4092 = vpop.permute.xlu0 %4091
        %4093 = vrot.lane.b32.xlu0 %v4023, 32
        %v4094 = vpop.permute.xlu0 %4093
        %4095 = vrot.lane.b32.xlu0 %v4024, 32
        %v4096 = vpop.permute.xlu0 %4095
        %4097 = vrot.lane.b32.xlu0 %v4025, 32
        %v4098 = vpop.permute.xlu0 %4097
        %4099 = vrot.lane.b32.xlu0 %v4026, 32
        %v4100 = vpop.permute.xlu0 %4099
        %4101 = vrot.lane.b32.xlu0 %v4027, 32
        %v4102 = vpop.permute.xlu0 %4101
        %4103 = vrot.lane.b32.xlu0 %v4028, 32
        %v4104 = vpop.permute.xlu0 %4103
        %4105 = vrot.lane.b32.xlu0 %v4029, 32
        %v4106 = vpop.permute.xlu0 %4105
        %4107 = vrot.lane.b32.xlu0 %v4030, 32
        %v4108 = vpop.permute.xlu0 %4107
        %4109 = vrot.lane.b32.xlu0 %v4031, 32
        %v4110 = vpop.permute.xlu0 %4109
        %4111 = vrot.lane.b32.xlu0 %v4032, 32
        %v4112 = vpop.permute.xlu0 %4111
        %4113 = vrot.lane.b32.xlu0 %v4033, 32
        %v4114 = vpop.permute.xlu0 %4113
        %4115 = vrot.lane.b32.xlu0 %v4034, 32
        %v4116 = vpop.permute.xlu0 %4115
        %4117 = vrot.lane.b32.xlu0 %v4035, 32
        %v4118 = vpop.permute.xlu0 %4117
        %4119 = vrot.lane.b32.xlu0 %v4036, 32
        %v4120 = vpop.permute.xlu0 %4119
        %4121 = vrot.lane.b32.xlu0 %v4037, 32
        %v4122 = vpop.permute.xlu0 %4121
        %4123 = vrot.lane.b32.xlu0 %v4038, 32
        %v4124 = vpop.permute.xlu0 %4123
        %4125 = vrot.lane.b32.xlu0 %v4039, 32
        %v4126 = vpop.permute.xlu0 %4125
        %4127 = vrot.lane.b32.xlu0 %v4040, 32
        %v4128 = vpop.permute.xlu0 %4127
        %4129 = vrot.lane.b32.xlu0 %v4041, 32
        %v4130 = vpop.permute.xlu0 %4129
        %4131 = vrot.lane.b32.xlu0 %v4042, 32
        %v4132 = vpop.permute.xlu0 %4131
        %4133 = vrot.lane.b32.xlu0 %v4043, 32
        %v4134 = vpop.permute.xlu0 %4133
        %4135 = vrot.lane.b32.xlu0 %v4044, 32
        %v4136 = vpop.permute.xlu0 %4135
        %4137 = vrot.lane.b32.xlu0 %v4045, 32
        %v4138 = vpop.permute.xlu0 %4137
        %4139 = vrot.lane.b32.xlu0 %v4046, 32
        %v4140 = vpop.permute.xlu0 %4139
        %4141 = vrot.lane.b32.xlu0 %v4047, 32
        %v4142 = vpop.permute.xlu0 %4141
        %4143 = vrot.lane.b32.xlu0 %v4048, 32
        %v4144 = vpop.permute.xlu0 %4143
        %4177 = vst.msk [vmem:[#allocation4 + $0x10] sm:$0xff] %vm2894, %v4082
        %4178 = vst.msk [vmem:[#allocation4 + $0x48] sm:$0xff] %vm2894, %v4084
        %4179 = vst.msk [vmem:[#allocation4 + $0x80] sm:$0xff] %vm2894, %v4086
        %4180 = vst.msk [vmem:[#allocation4 + $0xb8] sm:$0xff] %vm2894, %v4088
        %4181 = vst.msk [vmem:[#allocation4 + $0xf0] sm:$0xff] %vm2894, %v4090
        %4182 = vst.msk [vmem:[#allocation4 + $0x128] sm:$0xff] %vm2894, %v4092
        %4183 = vst.msk [vmem:[#allocation4 + $0x160] sm:$0xff] %vm2894, %v4094
        %4184 = vst.msk [vmem:[#allocation4 + $0x198] sm:$0xff] %vm2894, %v4096
        %4185 = vst.msk [vmem:[#allocation4 + $0x1d0] sm:$0xff] %vm2894, %v4098
        %4186 = vst.msk [vmem:[#allocation4 + $0x208] sm:$0xff] %vm2894, %v4100
        %4187 = vst.msk [vmem:[#allocation4 + $0x240] sm:$0xff] %vm2894, %v4102
        %4188 = vst.msk [vmem:[#allocation4 + $0x278] sm:$0xff] %vm2894, %v4104
        %4189 = vst.msk [vmem:[#allocation4 + $0x2b0] sm:$0xff] %vm2894, %v4106
        %4190 = vst.msk [vmem:[#allocation4 + $0x2e8] sm:$0xff] %vm2894, %v4108
        %4191 = vst.msk [vmem:[#allocation4 + $0x320] sm:$0xff] %vm2894, %v4110
        %4192 = vst.msk [vmem:[#allocation4 + $0x358] sm:$0xff] %vm2894, %v4112
        %4193 = vst.msk [vmem:[#allocation4 + $0x390] sm:$0xff] %vm2894, %v4114
        %4194 = vst.msk [vmem:[#allocation4 + $0x3c8] sm:$0xff] %vm2894, %v4116
        %4195 = vst.msk [vmem:[#allocation4 + $0x400] sm:$0xff] %vm2894, %v4118
        %4196 = vst.msk [vmem:[#allocation4 + $0x438] sm:$0xff] %vm2894, %v4120
        %4197 = vst.msk [vmem:[#allocation4 + $0x470] sm:$0xff] %vm2894, %v4122
        %4198 = vst.msk [vmem:[#allocation4 + $0x4a8] sm:$0xff] %vm2894, %v4124
        %4199 = vst.msk [vmem:[#allocation4 + $0x4e0] sm:$0xff] %vm2894, %v4126
        %4200 = vst.msk [vmem:[#allocation4 + $0x518] sm:$0xff] %vm2894, %v4128
        %4201 = vst.msk [vmem:[#allocation4 + $0x550] sm:$0xff] %vm2894, %v4130
        %4202 = vst.msk [vmem:[#allocation4 + $0x588] sm:$0xff] %vm2894, %v4132
        %4203 = vst.msk [vmem:[#allocation4 + $0x5c0] sm:$0xff] %vm2894, %v4134
        %4204 = vst.msk [vmem:[#allocation4 + $0x5f8] sm:$0xff] %vm2894, %v4136
        %4205 = vst.msk [vmem:[#allocation4 + $0x630] sm:$0xff] %vm2894, %v4138
        %4206 = vst.msk [vmem:[#allocation4 + $0x668] sm:$0xff] %vm2894, %v4140
        %4207 = vst.msk [vmem:[#allocation4 + $0x6a0] sm:$0xff] %vm2894, %v4142
        %4208 = vst.msk [vmem:[#allocation4 + $0x6d8] sm:$0xff] %vm2894, %v4144
        %v4209 = vld [vmem:[#allocation2 + $0x26] sm:$0xff]
        %v4210 = vld [vmem:[#allocation2 + $0x2e] sm:$0xff]
        %v4211 = vld [vmem:[#allocation2 + $0x36] sm:$0xff]
        %v4212 = vld [vmem:[#allocation2 + $0x3e] sm:$0xff]
        %v4213 = vld [vmem:[#allocation2 + $0x46] sm:$0xff]
        %v4214 = vld [vmem:[#allocation2 + $0x4e] sm:$0xff]
        %v4215 = vld [vmem:[#allocation2 + $0x56] sm:$0xff]
        %v4216 = vld [vmem:[#allocation2 + $0x5e] sm:$0xff]
        %v4217 = vld [vmem:[#allocation2 + $0x66] sm:$0xff]
        %v4218 = vld [vmem:[#allocation2 + $0x6e] sm:$0xff]
        %v4219 = vld [vmem:[#allocation2 + $0x76] sm:$0xff]
        %v4220 = vld [vmem:[#allocation2 + $0x7e] sm:$0xff]
        %v4221 = vld [vmem:[#allocation2 + $0x86] sm:$0xff]
        %v4222 = vld [vmem:[#allocation2 + $0x8e] sm:$0xff]
        %v4223 = vld [vmem:[#allocation2 + $0x96] sm:$0xff]
        %v4224 = vld [vmem:[#allocation2 + $0x9e] sm:$0xff]
        %v4225 = vld [vmem:[#allocation2 + $0xa6] sm:$0xff]
        %v4226 = vld [vmem:[#allocation2 + $0xae] sm:$0xff]
        %v4227 = vld [vmem:[#allocation2 + $0xb6] sm:$0xff]
        %v4228 = vld [vmem:[#allocation2 + $0xbe] sm:$0xff]
        %v4229 = vld [vmem:[#allocation2 + $0xc6] sm:$0xff]
        %v4230 = vld [vmem:[#allocation2 + $0xce] sm:$0xff]
        %v4231 = vld [vmem:[#allocation2 + $0xd6] sm:$0xff]
        %v4232 = vld [vmem:[#allocation2 + $0xde] sm:$0xff]
        %v4233 = vld [vmem:[#allocation2 + $0xe6] sm:$0xff]
        %v4234 = vld [vmem:[#allocation2 + $0xee] sm:$0xff]
        %v4235 = vld [vmem:[#allocation2 + $0xf6] sm:$0xff]
        %v4236 = vld [vmem:[#allocation2 + $0xfe] sm:$0xff]
        %v4237 = vld [vmem:[#allocation2 + $0x106] sm:$0xff]
        %v4238 = vld [vmem:[#allocation2 + $0x10e] sm:$0xff]
        %v4239 = vld [vmem:[#allocation2 + $0x116] sm:$0xff]
        %v4240 = vld [vmem:[#allocation2 + $0x11e] sm:$0xff]
        %4273 = vrot.lane.b32.xlu0 %v4209, 64
        %v4274 = vpop.permute.xlu0 %4273
        %4275 = vrot.lane.b32.xlu0 %v4210, 64
        %v4276 = vpop.permute.xlu0 %4275
        %4277 = vrot.lane.b32.xlu0 %v4211, 64
        %v4278 = vpop.permute.xlu0 %4277
        %4279 = vrot.lane.b32.xlu0 %v4212, 64
        %v4280 = vpop.permute.xlu0 %4279
        %4281 = vrot.lane.b32.xlu0 %v4213, 64
        %v4282 = vpop.permute.xlu0 %4281
        %4283 = vrot.lane.b32.xlu0 %v4214, 64
        %v4284 = vpop.permute.xlu0 %4283
        %4285 = vrot.lane.b32.xlu0 %v4215, 64
        %v4286 = vpop.permute.xlu0 %4285
        %4287 = vrot.lane.b32.xlu0 %v4216, 64
        %v4288 = vpop.permute.xlu0 %4287
        %4289 = vrot.lane.b32.xlu0 %v4217, 64
        %v4290 = vpop.permute.xlu0 %4289
        %4291 = vrot.lane.b32.xlu0 %v4218, 64
        %v4292 = vpop.permute.xlu0 %4291
        %4293 = vrot.lane.b32.xlu0 %v4219, 64
        %v4294 = vpop.permute.xlu0 %4293
        %4295 = vrot.lane.b32.xlu0 %v4220, 64
        %v4296 = vpop.permute.xlu0 %4295
        %4297 = vrot.lane.b32.xlu0 %v4221, 64
        %v4298 = vpop.permute.xlu0 %4297
        %4299 = vrot.lane.b32.xlu0 %v4222, 64
        %v4300 = vpop.permute.xlu0 %4299
        %4301 = vrot.lane.b32.xlu0 %v4223, 64
        %v4302 = vpop.permute.xlu0 %4301
        %4303 = vrot.lane.b32.xlu0 %v4224, 64
        %v4304 = vpop.permute.xlu0 %4303
        %4305 = vrot.lane.b32.xlu0 %v4225, 64
        %v4306 = vpop.permute.xlu0 %4305
        %4307 = vrot.lane.b32.xlu0 %v4226, 64
        %v4308 = vpop.permute.xlu0 %4307
        %4309 = vrot.lane.b32.xlu0 %v4227, 64
        %v4310 = vpop.permute.xlu0 %4309
        %4311 = vrot.lane.b32.xlu0 %v4228, 64
        %v4312 = vpop.permute.xlu0 %4311
        %4313 = vrot.lane.b32.xlu0 %v4229, 64
        %v4314 = vpop.permute.xlu0 %4313
        %4315 = vrot.lane.b32.xlu0 %v4230, 64
        %v4316 = vpop.permute.xlu0 %4315
        %4317 = vrot.lane.b32.xlu0 %v4231, 64
        %v4318 = vpop.permute.xlu0 %4317
        %4319 = vrot.lane.b32.xlu0 %v4232, 64
        %v4320 = vpop.permute.xlu0 %4319
        %4321 = vrot.lane.b32.xlu0 %v4233, 64
        %v4322 = vpop.permute.xlu0 %4321
        %4323 = vrot.lane.b32.xlu0 %v4234, 64
        %v4324 = vpop.permute.xlu0 %4323
        %4325 = vrot.lane.b32.xlu0 %v4235, 64
        %v4326 = vpop.permute.xlu0 %4325
        %4327 = vrot.lane.b32.xlu0 %v4236, 64
        %v4328 = vpop.permute.xlu0 %4327
        %4329 = vrot.lane.b32.xlu0 %v4237, 64
        %v4330 = vpop.permute.xlu0 %4329
        %4331 = vrot.lane.b32.xlu0 %v4238, 64
        %v4332 = vpop.permute.xlu0 %4331
        %4333 = vrot.lane.b32.xlu0 %v4239, 64
        %v4334 = vpop.permute.xlu0 %4333
        %4335 = vrot.lane.b32.xlu0 %v4240, 64
        %v4336 = vpop.permute.xlu0 %4335
        %4369 = vst.msk [vmem:[#allocation4 + $0x10] sm:$0xff] %vm3087, %v4274
        %4370 = vst.msk [vmem:[#allocation4 + $0x48] sm:$0xff] %vm3087, %v4276
        %4371 = vst.msk [vmem:[#allocation4 + $0x80] sm:$0xff] %vm3087, %v4278
        %4372 = vst.msk [vmem:[#allocation4 + $0xb8] sm:$0xff] %vm3087, %v4280
        %4373 = vst.msk [vmem:[#allocation4 + $0xf0] sm:$0xff] %vm3087, %v4282
        %4374 = vst.msk [vmem:[#allocation4 + $0x128] sm:$0xff] %vm3087, %v4284
        %4375 = vst.msk [vmem:[#allocation4 + $0x160] sm:$0xff] %vm3087, %v4286
        %4376 = vst.msk [vmem:[#allocation4 + $0x198] sm:$0xff] %vm3087, %v4288
        %4377 = vst.msk [vmem:[#allocation4 + $0x1d0] sm:$0xff] %vm3087, %v4290
        %4378 = vst.msk [vmem:[#allocation4 + $0x208] sm:$0xff] %vm3087, %v4292
        %4379 = vst.msk [vmem:[#allocation4 + $0x240] sm:$0xff] %vm3087, %v4294
        %4380 = vst.msk [vmem:[#allocation4 + $0x278] sm:$0xff] %vm3087, %v4296
        %4381 = vst.msk [vmem:[#allocation4 + $0x2b0] sm:$0xff] %vm3087, %v4298
        %4382 = vst.msk [vmem:[#allocation4 + $0x2e8] sm:$0xff] %vm3087, %v4300
        %4383 = vst.msk [vmem:[#allocation4 + $0x320] sm:$0xff] %vm3087, %v4302
        %4384 = vst.msk [vmem:[#allocation4 + $0x358] sm:$0xff] %vm3087, %v4304
        %4385 = vst.msk [vmem:[#allocation4 + $0x390] sm:$0xff] %vm3087, %v4306
        %4386 = vst.msk [vmem:[#allocation4 + $0x3c8] sm:$0xff] %vm3087, %v4308
        %4387 = vst.msk [vmem:[#allocation4 + $0x400] sm:$0xff] %vm3087, %v4310
        %4388 = vst.msk [vmem:[#allocation4 + $0x438] sm:$0xff] %vm3087, %v4312
        %4389 = vst.msk [vmem:[#allocation4 + $0x470] sm:$0xff] %vm3087, %v4314
        %4390 = vst.msk [vmem:[#allocation4 + $0x4a8] sm:$0xff] %vm3087, %v4316
        %4391 = vst.msk [vmem:[#allocation4 + $0x4e0] sm:$0xff] %vm3087, %v4318
        %4392 = vst.msk [vmem:[#allocation4 + $0x518] sm:$0xff] %vm3087, %v4320
        %4393 = vst.msk [vmem:[#allocation4 + $0x550] sm:$0xff] %vm3087, %v4322
        %4394 = vst.msk [vmem:[#allocation4 + $0x588] sm:$0xff] %vm3087, %v4324
        %4395 = vst.msk [vmem:[#allocation4 + $0x5c0] sm:$0xff] %vm3087, %v4326
        %4396 = vst.msk [vmem:[#allocation4 + $0x5f8] sm:$0xff] %vm3087, %v4328
        %4397 = vst.msk [vmem:[#allocation4 + $0x630] sm:$0xff] %vm3087, %v4330
        %4398 = vst.msk [vmem:[#allocation4 + $0x668] sm:$0xff] %vm3087, %v4332
        %4399 = vst.msk [vmem:[#allocation4 + $0x6a0] sm:$0xff] %vm3087, %v4334
        %4400 = vst.msk [vmem:[#allocation4 + $0x6d8] sm:$0xff] %vm3087, %v4336
        %v4401 = vld [vmem:[#allocation2 + $0x27] sm:$0xff]
        %v4402 = vld [vmem:[#allocation2 + $0x2f] sm:$0xff]
        %v4403 = vld [vmem:[#allocation2 + $0x37] sm:$0xff]
        %v4404 = vld [vmem:[#allocation2 + $0x3f] sm:$0xff]
        %v4405 = vld [vmem:[#allocation2 + $0x47] sm:$0xff]
        %v4406 = vld [vmem:[#allocation2 + $0x4f] sm:$0xff]
        %v4407 = vld [vmem:[#allocation2 + $0x57] sm:$0xff]
        %v4408 = vld [vmem:[#allocation2 + $0x5f] sm:$0xff]
        %v4409 = vld [vmem:[#allocation2 + $0x67] sm:$0xff]
        %v4410 = vld [vmem:[#allocation2 + $0x6f] sm:$0xff]
        %v4411 = vld [vmem:[#allocation2 + $0x77] sm:$0xff]
        %v4412 = vld [vmem:[#allocation2 + $0x7f] sm:$0xff]
        %v4413 = vld [vmem:[#allocation2 + $0x87] sm:$0xff]
        %v4414 = vld [vmem:[#allocation2 + $0x8f] sm:$0xff]
        %v4415 = vld [vmem:[#allocation2 + $0x97] sm:$0xff]
        %v4416 = vld [vmem:[#allocation2 + $0x9f] sm:$0xff]
        %v4417 = vld [vmem:[#allocation2 + $0xa7] sm:$0xff]
        %v4418 = vld [vmem:[#allocation2 + $0xaf] sm:$0xff]
        %v4419 = vld [vmem:[#allocation2 + $0xb7] sm:$0xff]
        %v4420 = vld [vmem:[#allocation2 + $0xbf] sm:$0xff]
        %v4421 = vld [vmem:[#allocation2 + $0xc7] sm:$0xff]
        %v4422 = vld [vmem:[#allocation2 + $0xcf] sm:$0xff]
        %v4423 = vld [vmem:[#allocation2 + $0xd7] sm:$0xff]
        %v4424 = vld [vmem:[#allocation2 + $0xdf] sm:$0xff]
        %v4425 = vld [vmem:[#allocation2 + $0xe7] sm:$0xff]
        %v4426 = vld [vmem:[#allocation2 + $0xef] sm:$0xff]
        %v4427 = vld [vmem:[#allocation2 + $0xf7] sm:$0xff]
        %v4428 = vld [vmem:[#allocation2 + $0xff] sm:$0xff]
        %v4429 = vld [vmem:[#allocation2 + $0x107] sm:$0xff]
        %v4430 = vld [vmem:[#allocation2 + $0x10f] sm:$0xff]
        %v4431 = vld [vmem:[#allocation2 + $0x117] sm:$0xff]
        %v4432 = vld [vmem:[#allocation2 + $0x11f] sm:$0xff]
        %4465 = vrot.lane.b32.xlu0 %v4401, 96
        %v4466 = vpop.permute.xlu0 %4465
        %4467 = vrot.lane.b32.xlu0 %v4402, 96
        %v4468 = vpop.permute.xlu0 %4467
        %4469 = vrot.lane.b32.xlu0 %v4403, 96
        %v4470 = vpop.permute.xlu0 %4469
        %4471 = vrot.lane.b32.xlu0 %v4404, 96
        %v4472 = vpop.permute.xlu0 %4471
        %4473 = vrot.lane.b32.xlu0 %v4405, 96
        %v4474 = vpop.permute.xlu0 %4473
        %4475 = vrot.lane.b32.xlu0 %v4406, 96
        %v4476 = vpop.permute.xlu0 %4475
        %4477 = vrot.lane.b32.xlu0 %v4407, 96
        %v4478 = vpop.permute.xlu0 %4477
        %4479 = vrot.lane.b32.xlu0 %v4408, 96
        %v4480 = vpop.permute.xlu0 %4479
        %4481 = vrot.lane.b32.xlu0 %v4409, 96
        %v4482 = vpop.permute.xlu0 %4481
        %4483 = vrot.lane.b32.xlu0 %v4410, 96
        %v4484 = vpop.permute.xlu0 %4483
        %4485 = vrot.lane.b32.xlu0 %v4411, 96
        %v4486 = vpop.permute.xlu0 %4485
        %4487 = vrot.lane.b32.xlu0 %v4412, 96
        %v4488 = vpop.permute.xlu0 %4487
        %4489 = vrot.lane.b32.xlu0 %v4413, 96
        %v4490 = vpop.permute.xlu0 %4489
        %4491 = vrot.lane.b32.xlu0 %v4414, 96
        %v4492 = vpop.permute.xlu0 %4491
        %4493 = vrot.lane.b32.xlu0 %v4415, 96
        %v4494 = vpop.permute.xlu0 %4493
        %4495 = vrot.lane.b32.xlu0 %v4416, 96
        %v4496 = vpop.permute.xlu0 %4495
        %4497 = vrot.lane.b32.xlu0 %v4417, 96
        %v4498 = vpop.permute.xlu0 %4497
        %4499 = vrot.lane.b32.xlu0 %v4418, 96
        %v4500 = vpop.permute.xlu0 %4499
        %4501 = vrot.lane.b32.xlu0 %v4419, 96
        %v4502 = vpop.permute.xlu0 %4501
        %4503 = vrot.lane.b32.xlu0 %v4420, 96
        %v4504 = vpop.permute.xlu0 %4503
        %4505 = vrot.lane.b32.xlu0 %v4421, 96
        %v4506 = vpop.permute.xlu0 %4505
        %4507 = vrot.lane.b32.xlu0 %v4422, 96
        %v4508 = vpop.permute.xlu0 %4507
        %4509 = vrot.lane.b32.xlu0 %v4423, 96
        %v4510 = vpop.permute.xlu0 %4509
        %4511 = vrot.lane.b32.xlu0 %v4424, 96
        %v4512 = vpop.permute.xlu0 %4511
        %4513 = vrot.lane.b32.xlu0 %v4425, 96
        %v4514 = vpop.permute.xlu0 %4513
        %4515 = vrot.lane.b32.xlu0 %v4426, 96
        %v4516 = vpop.permute.xlu0 %4515
        %4517 = vrot.lane.b32.xlu0 %v4427, 96
        %v4518 = vpop.permute.xlu0 %4517
        %4519 = vrot.lane.b32.xlu0 %v4428, 96
        %v4520 = vpop.permute.xlu0 %4519
        %4521 = vrot.lane.b32.xlu0 %v4429, 96
        %v4522 = vpop.permute.xlu0 %4521
        %4523 = vrot.lane.b32.xlu0 %v4430, 96
        %v4524 = vpop.permute.xlu0 %4523
        %4525 = vrot.lane.b32.xlu0 %v4431, 96
        %v4526 = vpop.permute.xlu0 %4525
        %4527 = vrot.lane.b32.xlu0 %v4432, 96
        %v4528 = vpop.permute.xlu0 %4527
        %4561 = vst.msk [vmem:[#allocation4 + $0x10] sm:$0xff] %vm3280, %v4466
        %4562 = vst.msk [vmem:[#allocation4 + $0x48] sm:$0xff] %vm3280, %v4468
        %4563 = vst.msk [vmem:[#allocation4 + $0x80] sm:$0xff] %vm3280, %v4470
        %4564 = vst.msk [vmem:[#allocation4 + $0xb8] sm:$0xff] %vm3280, %v4472
        %4565 = vst.msk [vmem:[#allocation4 + $0xf0] sm:$0xff] %vm3280, %v4474
        %4566 = vst.msk [vmem:[#allocation4 + $0x128] sm:$0xff] %vm3280, %v4476
        %4567 = vst.msk [vmem:[#allocation4 + $0x160] sm:$0xff] %vm3280, %v4478
        %4568 = vst.msk [vmem:[#allocation4 + $0x198] sm:$0xff] %vm3280, %v4480
        %4569 = vst.msk [vmem:[#allocation4 + $0x1d0] sm:$0xff] %vm3280, %v4482
        %4570 = vst.msk [vmem:[#allocation4 + $0x208] sm:$0xff] %vm3280, %v4484
        %4571 = vst.msk [vmem:[#allocation4 + $0x240] sm:$0xff] %vm3280, %v4486
        %4572 = vst.msk [vmem:[#allocation4 + $0x278] sm:$0xff] %vm3280, %v4488
        %4573 = vst.msk [vmem:[#allocation4 + $0x2b0] sm:$0xff] %vm3280, %v4490
        %4574 = vst.msk [vmem:[#allocation4 + $0x2e8] sm:$0xff] %vm3280, %v4492
        %4575 = vst.msk [vmem:[#allocation4 + $0x320] sm:$0xff] %vm3280, %v4494
        %4576 = vst.msk [vmem:[#allocation4 + $0x358] sm:$0xff] %vm3280, %v4496
        %4577 = vst.msk [vmem:[#allocation4 + $0x390] sm:$0xff] %vm3280, %v4498
        %4578 = vst.msk [vmem:[#allocation4 + $0x3c8] sm:$0xff] %vm3280, %v4500
        %4579 = vst.msk [vmem:[#allocation4 + $0x400] sm:$0xff] %vm3280, %v4502
        %4580 = vst.msk [vmem:[#allocation4 + $0x438] sm:$0xff] %vm3280, %v4504
        %4581 = vst.msk [vmem:[#allocation4 + $0x470] sm:$0xff] %vm3280, %v4506
        %4582 = vst.msk [vmem:[#allocation4 + $0x4a8] sm:$0xff] %vm3280, %v4508
        %4583 = vst.msk [vmem:[#allocation4 + $0x4e0] sm:$0xff] %vm3280, %v4510
        %4584 = vst.msk [vmem:[#allocation4 + $0x518] sm:$0xff] %vm3280, %v4512
        %4585 = vst.msk [vmem:[#allocation4 + $0x550] sm:$0xff] %vm3280, %v4514
        %4586 = vst.msk [vmem:[#allocation4 + $0x588] sm:$0xff] %vm3280, %v4516
        %4587 = vst.msk [vmem:[#allocation4 + $0x5c0] sm:$0xff] %vm3280, %v4518
        %4588 = vst.msk [vmem:[#allocation4 + $0x5f8] sm:$0xff] %vm3280, %v4520
        %4589 = vst.msk [vmem:[#allocation4 + $0x630] sm:$0xff] %vm3280, %v4522
        %4590 = vst.msk [vmem:[#allocation4 + $0x668] sm:$0xff] %vm3280, %v4524
        %4591 = vst.msk [vmem:[#allocation4 + $0x6a0] sm:$0xff] %vm3280, %v4526
        %4592 = vst.msk [vmem:[#allocation4 + $0x6d8] sm:$0xff] %vm3280, %v4528
        %v4593 = vld [vmem:[#allocation2 + $0x28] sm:$0xff]
        %v4594 = vld [vmem:[#allocation2 + $0x30] sm:$0xff]
        %v4595 = vld [vmem:[#allocation2 + $0x38] sm:$0xff]
        %v4596 = vld [vmem:[#allocation2 + $0x40] sm:$0xff]
        %v4597 = vld [vmem:[#allocation2 + $0x48] sm:$0xff]
        %v4598 = vld [vmem:[#allocation2 + $0x50] sm:$0xff]
        %v4599 = vld [vmem:[#allocation2 + $0x58] sm:$0xff]
        %v4600 = vld [vmem:[#allocation2 + $0x60] sm:$0xff]
        %v4601 = vld [vmem:[#allocation2 + $0x68] sm:$0xff]
        %v4602 = vld [vmem:[#allocation2 + $0x70] sm:$0xff]
        %v4603 = vld [vmem:[#allocation2 + $0x78] sm:$0xff]
        %v4604 = vld [vmem:[#allocation2 + $0x80] sm:$0xff]
        %v4605 = vld [vmem:[#allocation2 + $0x88] sm:$0xff]
        %v4606 = vld [vmem:[#allocation2 + $0x90] sm:$0xff]
        %v4607 = vld [vmem:[#allocation2 + $0x98] sm:$0xff]
        %v4608 = vld [vmem:[#allocation2 + $0xa0] sm:$0xff]
        %v4609 = vld [vmem:[#allocation2 + $0xa8] sm:$0xff]
        %v4610 = vld [vmem:[#allocation2 + $0xb0] sm:$0xff]
        %v4611 = vld [vmem:[#allocation2 + $0xb8] sm:$0xff]
        %v4612 = vld [vmem:[#allocation2 + $0xc0] sm:$0xff]
        %v4613 = vld [vmem:[#allocation2 + $0xc8] sm:$0xff]
        %v4614 = vld [vmem:[#allocation2 + $0xd0] sm:$0xff]
        %v4615 = vld [vmem:[#allocation2 + $0xd8] sm:$0xff]
        %v4616 = vld [vmem:[#allocation2 + $0xe0] sm:$0xff]
        %v4617 = vld [vmem:[#allocation2 + $0xe8] sm:$0xff]
        %v4618 = vld [vmem:[#allocation2 + $0xf0] sm:$0xff]
        %v4619 = vld [vmem:[#allocation2 + $0xf8] sm:$0xff]
        %v4620 = vld [vmem:[#allocation2 + $0x100] sm:$0xff]
        %v4621 = vld [vmem:[#allocation2 + $0x108] sm:$0xff]
        %v4622 = vld [vmem:[#allocation2 + $0x110] sm:$0xff]
        %v4623 = vld [vmem:[#allocation2 + $0x118] sm:$0xff]
        %v4624 = vld [vmem:[#allocation2 + $0x120] sm:$0xff]
        %4625 = vst.msk [vmem:[#allocation4 + $0x18] sm:$0xff] %vm465, %v4593
        %4626 = vst.msk [vmem:[#allocation4 + $0x50] sm:$0xff] %vm465, %v4594
        %4627 = vst.msk [vmem:[#allocation4 + $0x88] sm:$0xff] %vm465, %v4595
        %4628 = vst.msk [vmem:[#allocation4 + $0xc0] sm:$0xff] %vm465, %v4596
        %4629 = vst.msk [vmem:[#allocation4 + $0xf8] sm:$0xff] %vm465, %v4597
        %4630 = vst.msk [vmem:[#allocation4 + $0x130] sm:$0xff] %vm465, %v4598
        %4631 = vst.msk [vmem:[#allocation4 + $0x168] sm:$0xff] %vm465, %v4599
        %4632 = vst.msk [vmem:[#allocation4 + $0x1a0] sm:$0xff] %vm465, %v4600
        %4633 = vst.msk [vmem:[#allocation4 + $0x1d8] sm:$0xff] %vm465, %v4601
        %4634 = vst.msk [vmem:[#allocation4 + $0x210] sm:$0xff] %vm465, %v4602
        %4635 = vst.msk [vmem:[#allocation4 + $0x248] sm:$0xff] %vm465, %v4603
        %4636 = vst.msk [vmem:[#allocation4 + $0x280] sm:$0xff] %vm465, %v4604
        %4637 = vst.msk [vmem:[#allocation4 + $0x2b8] sm:$0xff] %vm465, %v4605
        %4638 = vst.msk [vmem:[#allocation4 + $0x2f0] sm:$0xff] %vm465, %v4606
        %4639 = vst.msk [vmem:[#allocation4 + $0x328] sm:$0xff] %vm465, %v4607
        %4640 = vst.msk [vmem:[#allocation4 + $0x360] sm:$0xff] %vm465, %v4608
        %4641 = vst.msk [vmem:[#allocation4 + $0x398] sm:$0xff] %vm465, %v4609
        %4642 = vst.msk [vmem:[#allocation4 + $0x3d0] sm:$0xff] %vm465, %v4610
        %4643 = vst.msk [vmem:[#allocation4 + $0x408] sm:$0xff] %vm465, %v4611
        %4644 = vst.msk [vmem:[#allocation4 + $0x440] sm:$0xff] %vm465, %v4612
        %4645 = vst.msk [vmem:[#allocation4 + $0x478] sm:$0xff] %vm465, %v4613
        %4646 = vst.msk [vmem:[#allocation4 + $0x4b0] sm:$0xff] %vm465, %v4614
        %4647 = vst.msk [vmem:[#allocation4 + $0x4e8] sm:$0xff] %vm465, %v4615
        %4648 = vst.msk [vmem:[#allocation4 + $0x520] sm:$0xff] %vm465, %v4616
        %4649 = vst.msk [vmem:[#allocation4 + $0x558] sm:$0xff] %vm465, %v4617
        %4650 = vst.msk [vmem:[#allocation4 + $0x590] sm:$0xff] %vm465, %v4618
        %4651 = vst.msk [vmem:[#allocation4 + $0x5c8] sm:$0xff] %vm465, %v4619
        %4652 = vst.msk [vmem:[#allocation4 + $0x600] sm:$0xff] %vm465, %v4620
        %4653 = vst.msk [vmem:[#allocation4 + $0x638] sm:$0xff] %vm465, %v4621
        %4654 = vst.msk [vmem:[#allocation4 + $0x670] sm:$0xff] %vm465, %v4622
        %4655 = vst.msk [vmem:[#allocation4 + $0x6a8] sm:$0xff] %vm465, %v4623
        %4656 = vst.msk [vmem:[#allocation4 + $0x6e0] sm:$0xff] %vm465, %v4624
        %v4657 = vld [vmem:[#allocation2 + $0x29] sm:$0xff]
        %v4658 = vld [vmem:[#allocation2 + $0x31] sm:$0xff]
        %v4659 = vld [vmem:[#allocation2 + $0x39] sm:$0xff]
        %v4660 = vld [vmem:[#allocation2 + $0x41] sm:$0xff]
        %v4661 = vld [vmem:[#allocation2 + $0x49] sm:$0xff]
        %v4662 = vld [vmem:[#allocation2 + $0x51] sm:$0xff]
        %v4663 = vld [vmem:[#allocation2 + $0x59] sm:$0xff]
        %v4664 = vld [vmem:[#allocation2 + $0x61] sm:$0xff]
        %v4665 = vld [vmem:[#allocation2 + $0x69] sm:$0xff]
        %v4666 = vld [vmem:[#allocation2 + $0x71] sm:$0xff]
        %v4667 = vld [vmem:[#allocation2 + $0x79] sm:$0xff]
        %v4668 = vld [vmem:[#allocation2 + $0x81] sm:$0xff]
        %v4669 = vld [vmem:[#allocation2 + $0x89] sm:$0xff]
        %v4670 = vld [vmem:[#allocation2 + $0x91] sm:$0xff]
        %v4671 = vld [vmem:[#allocation2 + $0x99] sm:$0xff]
        %v4672 = vld [vmem:[#allocation2 + $0xa1] sm:$0xff]
        %v4673 = vld [vmem:[#allocation2 + $0xa9] sm:$0xff]
        %v4674 = vld [vmem:[#allocation2 + $0xb1] sm:$0xff]
        %v4675 = vld [vmem:[#allocation2 + $0xb9] sm:$0xff]
        %v4676 = vld [vmem:[#allocation2 + $0xc1] sm:$0xff]
        %v4677 = vld [vmem:[#allocation2 + $0xc9] sm:$0xff]
        %v4678 = vld [vmem:[#allocation2 + $0xd1] sm:$0xff]
        %v4679 = vld [vmem:[#allocation2 + $0xd9] sm:$0xff]
        %v4680 = vld [vmem:[#allocation2 + $0xe1] sm:$0xff]
        %v4681 = vld [vmem:[#allocation2 + $0xe9] sm:$0xff]
        %v4682 = vld [vmem:[#allocation2 + $0xf1] sm:$0xff]
        %v4683 = vld [vmem:[#allocation2 + $0xf9] sm:$0xff]
        %v4684 = vld [vmem:[#allocation2 + $0x101] sm:$0xff]
        %v4685 = vld [vmem:[#allocation2 + $0x109] sm:$0xff]
        %v4686 = vld [vmem:[#allocation2 + $0x111] sm:$0xff]
        %v4687 = vld [vmem:[#allocation2 + $0x119] sm:$0xff]
        %v4688 = vld [vmem:[#allocation2 + $0x121] sm:$0xff]
        %4721 = vrot.lane.b32.xlu0 %v4657, 32
        %v4722 = vpop.permute.xlu0 %4721
        %4723 = vrot.lane.b32.xlu0 %v4658, 32
        %v4724 = vpop.permute.xlu0 %4723
        %4725 = vrot.lane.b32.xlu0 %v4659, 32
        %v4726 = vpop.permute.xlu0 %4725
        %4727 = vrot.lane.b32.xlu0 %v4660, 32
        %v4728 = vpop.permute.xlu0 %4727
        %4729 = vrot.lane.b32.xlu0 %v4661, 32
        %v4730 = vpop.permute.xlu0 %4729
        %4731 = vrot.lane.b32.xlu0 %v4662, 32
        %v4732 = vpop.permute.xlu0 %4731
        %4733 = vrot.lane.b32.xlu0 %v4663, 32
        %v4734 = vpop.permute.xlu0 %4733
        %4735 = vrot.lane.b32.xlu0 %v4664, 32
        %v4736 = vpop.permute.xlu0 %4735
        %4737 = vrot.lane.b32.xlu0 %v4665, 32
        %v4738 = vpop.permute.xlu0 %4737
        %4739 = vrot.lane.b32.xlu0 %v4666, 32
        %v4740 = vpop.permute.xlu0 %4739
        %4741 = vrot.lane.b32.xlu0 %v4667, 32
        %v4742 = vpop.permute.xlu0 %4741
        %4743 = vrot.lane.b32.xlu0 %v4668, 32
        %v4744 = vpop.permute.xlu0 %4743
        %4745 = vrot.lane.b32.xlu0 %v4669, 32
        %v4746 = vpop.permute.xlu0 %4745
        %4747 = vrot.lane.b32.xlu0 %v4670, 32
        %v4748 = vpop.permute.xlu0 %4747
        %4749 = vrot.lane.b32.xlu0 %v4671, 32
        %v4750 = vpop.permute.xlu0 %4749
        %4751 = vrot.lane.b32.xlu0 %v4672, 32
        %v4752 = vpop.permute.xlu0 %4751
        %4753 = vrot.lane.b32.xlu0 %v4673, 32
        %v4754 = vpop.permute.xlu0 %4753
        %4755 = vrot.lane.b32.xlu0 %v4674, 32
        %v4756 = vpop.permute.xlu0 %4755
        %4757 = vrot.lane.b32.xlu0 %v4675, 32
        %v4758 = vpop.permute.xlu0 %4757
        %4759 = vrot.lane.b32.xlu0 %v4676, 32
        %v4760 = vpop.permute.xlu0 %4759
        %4761 = vrot.lane.b32.xlu0 %v4677, 32
        %v4762 = vpop.permute.xlu0 %4761
        %4763 = vrot.lane.b32.xlu0 %v4678, 32
        %v4764 = vpop.permute.xlu0 %4763
        %4765 = vrot.lane.b32.xlu0 %v4679, 32
        %v4766 = vpop.permute.xlu0 %4765
        %4767 = vrot.lane.b32.xlu0 %v4680, 32
        %v4768 = vpop.permute.xlu0 %4767
        %4769 = vrot.lane.b32.xlu0 %v4681, 32
        %v4770 = vpop.permute.xlu0 %4769
        %4771 = vrot.lane.b32.xlu0 %v4682, 32
        %v4772 = vpop.permute.xlu0 %4771
        %4773 = vrot.lane.b32.xlu0 %v4683, 32
        %v4774 = vpop.permute.xlu0 %4773
        %4775 = vrot.lane.b32.xlu0 %v4684, 32
        %v4776 = vpop.permute.xlu0 %4775
        %4777 = vrot.lane.b32.xlu0 %v4685, 32
        %v4778 = vpop.permute.xlu0 %4777
        %4779 = vrot.lane.b32.xlu0 %v4686, 32
        %v4780 = vpop.permute.xlu0 %4779
        %4781 = vrot.lane.b32.xlu0 %v4687, 32
        %v4782 = vpop.permute.xlu0 %4781
        %4783 = vrot.lane.b32.xlu0 %v4688, 32
        %v4784 = vpop.permute.xlu0 %4783
        %4817 = vst.msk [vmem:[#allocation4 + $0x18] sm:$0xff] %vm2894, %v4722
        %4818 = vst.msk [vmem:[#allocation4 + $0x50] sm:$0xff] %vm2894, %v4724
        %4819 = vst.msk [vmem:[#allocation4 + $0x88] sm:$0xff] %vm2894, %v4726
        %4820 = vst.msk [vmem:[#allocation4 + $0xc0] sm:$0xff] %vm2894, %v4728
        %4821 = vst.msk [vmem:[#allocation4 + $0xf8] sm:$0xff] %vm2894, %v4730
        %4822 = vst.msk [vmem:[#allocation4 + $0x130] sm:$0xff] %vm2894, %v4732
        %4823 = vst.msk [vmem:[#allocation4 + $0x168] sm:$0xff] %vm2894, %v4734
        %4824 = vst.msk [vmem:[#allocation4 + $0x1a0] sm:$0xff] %vm2894, %v4736
        %4825 = vst.msk [vmem:[#allocation4 + $0x1d8] sm:$0xff] %vm2894, %v4738
        %4826 = vst.msk [vmem:[#allocation4 + $0x210] sm:$0xff] %vm2894, %v4740
        %4827 = vst.msk [vmem:[#allocation4 + $0x248] sm:$0xff] %vm2894, %v4742
        %4828 = vst.msk [vmem:[#allocation4 + $0x280] sm:$0xff] %vm2894, %v4744
        %4829 = vst.msk [vmem:[#allocation4 + $0x2b8] sm:$0xff] %vm2894, %v4746
        %4830 = vst.msk [vmem:[#allocation4 + $0x2f0] sm:$0xff] %vm2894, %v4748
        %4831 = vst.msk [vmem:[#allocation4 + $0x328] sm:$0xff] %vm2894, %v4750
        %4832 = vst.msk [vmem:[#allocation4 + $0x360] sm:$0xff] %vm2894, %v4752
        %4833 = vst.msk [vmem:[#allocation4 + $0x398] sm:$0xff] %vm2894, %v4754
        %4834 = vst.msk [vmem:[#allocation4 + $0x3d0] sm:$0xff] %vm2894, %v4756
        %4835 = vst.msk [vmem:[#allocation4 + $0x408] sm:$0xff] %vm2894, %v4758
        %4836 = vst.msk [vmem:[#allocation4 + $0x440] sm:$0xff] %vm2894, %v4760
        %4837 = vst.msk [vmem:[#allocation4 + $0x478] sm:$0xff] %vm2894, %v4762
        %4838 = vst.msk [vmem:[#allocation4 + $0x4b0] sm:$0xff] %vm2894, %v4764
        %4839 = vst.msk [vmem:[#allocation4 + $0x4e8] sm:$0xff] %vm2894, %v4766
        %4840 = vst.msk [vmem:[#allocation4 + $0x520] sm:$0xff] %vm2894, %v4768
        %4841 = vst.msk [vmem:[#allocation4 + $0x558] sm:$0xff] %vm2894, %v4770
        %4842 = vst.msk [vmem:[#allocation4 + $0x590] sm:$0xff] %vm2894, %v4772
        %4843 = vst.msk [vmem:[#allocation4 + $0x5c8] sm:$0xff] %vm2894, %v4774
        %4844 = vst.msk [vmem:[#allocation4 + $0x600] sm:$0xff] %vm2894, %v4776
        %4845 = vst.msk [vmem:[#allocation4 + $0x638] sm:$0xff] %vm2894, %v4778
        %4846 = vst.msk [vmem:[#allocation4 + $0x670] sm:$0xff] %vm2894, %v4780
        %4847 = vst.msk [vmem:[#allocation4 + $0x6a8] sm:$0xff] %vm2894, %v4782
        %4848 = vst.msk [vmem:[#allocation4 + $0x6e0] sm:$0xff] %vm2894, %v4784
        %v4849 = vld [vmem:[#allocation2 + $0x2a] sm:$0xff]
        %v4850 = vld [vmem:[#allocation2 + $0x32] sm:$0xff]
        %v4851 = vld [vmem:[#allocation2 + $0x3a] sm:$0xff]
        %v4852 = vld [vmem:[#allocation2 + $0x42] sm:$0xff]
        %v4853 = vld [vmem:[#allocation2 + $0x4a] sm:$0xff]
        %v4854 = vld [vmem:[#allocation2 + $0x52] sm:$0xff]
        %v4855 = vld [vmem:[#allocation2 + $0x5a] sm:$0xff]
        %v4856 = vld [vmem:[#allocation2 + $0x62] sm:$0xff]
        %v4857 = vld [vmem:[#allocation2 + $0x6a] sm:$0xff]
        %v4858 = vld [vmem:[#allocation2 + $0x72] sm:$0xff]
        %v4859 = vld [vmem:[#allocation2 + $0x7a] sm:$0xff]
        %v4860 = vld [vmem:[#allocation2 + $0x82] sm:$0xff]
        %v4861 = vld [vmem:[#allocation2 + $0x8a] sm:$0xff]
        %v4862 = vld [vmem:[#allocation2 + $0x92] sm:$0xff]
        %v4863 = vld [vmem:[#allocation2 + $0x9a] sm:$0xff]
        %v4864 = vld [vmem:[#allocation2 + $0xa2] sm:$0xff]
        %v4865 = vld [vmem:[#allocation2 + $0xaa] sm:$0xff]
        %v4866 = vld [vmem:[#allocation2 + $0xb2] sm:$0xff]
        %v4867 = vld [vmem:[#allocation2 + $0xba] sm:$0xff]
        %v4868 = vld [vmem:[#allocation2 + $0xc2] sm:$0xff]
        %v4869 = vld [vmem:[#allocation2 + $0xca] sm:$0xff]
        %v4870 = vld [vmem:[#allocation2 + $0xd2] sm:$0xff]
        %v4871 = vld [vmem:[#allocation2 + $0xda] sm:$0xff]
        %v4872 = vld [vmem:[#allocation2 + $0xe2] sm:$0xff]
        %v4873 = vld [vmem:[#allocation2 + $0xea] sm:$0xff]
        %v4874 = vld [vmem:[#allocation2 + $0xf2] sm:$0xff]
        %v4875 = vld [vmem:[#allocation2 + $0xfa] sm:$0xff]
        %v4876 = vld [vmem:[#allocation2 + $0x102] sm:$0xff]
        %v4877 = vld [vmem:[#allocation2 + $0x10a] sm:$0xff]
        %v4878 = vld [vmem:[#allocation2 + $0x112] sm:$0xff]
        %v4879 = vld [vmem:[#allocation2 + $0x11a] sm:$0xff]
        %v4880 = vld [vmem:[#allocation2 + $0x122] sm:$0xff]
        %4913 = vrot.lane.b32.xlu0 %v4849, 64
        %v4914 = vpop.permute.xlu0 %4913
        %4915 = vrot.lane.b32.xlu0 %v4850, 64
        %v4916 = vpop.permute.xlu0 %4915
        %4917 = vrot.lane.b32.xlu0 %v4851, 64
        %v4918 = vpop.permute.xlu0 %4917
        %4919 = vrot.lane.b32.xlu0 %v4852, 64
        %v4920 = vpop.permute.xlu0 %4919
        %4921 = vrot.lane.b32.xlu0 %v4853, 64
        %v4922 = vpop.permute.xlu0 %4921
        %4923 = vrot.lane.b32.xlu0 %v4854, 64
        %v4924 = vpop.permute.xlu0 %4923
        %4925 = vrot.lane.b32.xlu0 %v4855, 64
        %v4926 = vpop.permute.xlu0 %4925
        %4927 = vrot.lane.b32.xlu0 %v4856, 64
        %v4928 = vpop.permute.xlu0 %4927
        %4929 = vrot.lane.b32.xlu0 %v4857, 64
        %v4930 = vpop.permute.xlu0 %4929
        %4931 = vrot.lane.b32.xlu0 %v4858, 64
        %v4932 = vpop.permute.xlu0 %4931
        %4933 = vrot.lane.b32.xlu0 %v4859, 64
        %v4934 = vpop.permute.xlu0 %4933
        %4935 = vrot.lane.b32.xlu0 %v4860, 64
        %v4936 = vpop.permute.xlu0 %4935
        %4937 = vrot.lane.b32.xlu0 %v4861, 64
        %v4938 = vpop.permute.xlu0 %4937
        %4939 = vrot.lane.b32.xlu0 %v4862, 64
        %v4940 = vpop.permute.xlu0 %4939
        %4941 = vrot.lane.b32.xlu0 %v4863, 64
        %v4942 = vpop.permute.xlu0 %4941
        %4943 = vrot.lane.b32.xlu0 %v4864, 64
        %v4944 = vpop.permute.xlu0 %4943
        %4945 = vrot.lane.b32.xlu0 %v4865, 64
        %v4946 = vpop.permute.xlu0 %4945
        %4947 = vrot.lane.b32.xlu0 %v4866, 64
        %v4948 = vpop.permute.xlu0 %4947
        %4949 = vrot.lane.b32.xlu0 %v4867, 64
        %v4950 = vpop.permute.xlu0 %4949
        %4951 = vrot.lane.b32.xlu0 %v4868, 64
        %v4952 = vpop.permute.xlu0 %4951
        %4953 = vrot.lane.b32.xlu0 %v4869, 64
        %v4954 = vpop.permute.xlu0 %4953
        %4955 = vrot.lane.b32.xlu0 %v4870, 64
        %v4956 = vpop.permute.xlu0 %4955
        %4957 = vrot.lane.b32.xlu0 %v4871, 64
        %v4958 = vpop.permute.xlu0 %4957
        %4959 = vrot.lane.b32.xlu0 %v4872, 64
        %v4960 = vpop.permute.xlu0 %4959
        %4961 = vrot.lane.b32.xlu0 %v4873, 64
        %v4962 = vpop.permute.xlu0 %4961
        %4963 = vrot.lane.b32.xlu0 %v4874, 64
        %v4964 = vpop.permute.xlu0 %4963
        %4965 = vrot.lane.b32.xlu0 %v4875, 64
        %v4966 = vpop.permute.xlu0 %4965
        %4967 = vrot.lane.b32.xlu0 %v4876, 64
        %v4968 = vpop.permute.xlu0 %4967
        %4969 = vrot.lane.b32.xlu0 %v4877, 64
        %v4970 = vpop.permute.xlu0 %4969
        %4971 = vrot.lane.b32.xlu0 %v4878, 64
        %v4972 = vpop.permute.xlu0 %4971
        %4973 = vrot.lane.b32.xlu0 %v4879, 64
        %v4974 = vpop.permute.xlu0 %4973
        %4975 = vrot.lane.b32.xlu0 %v4880, 64
        %v4976 = vpop.permute.xlu0 %4975
        %5009 = vst.msk [vmem:[#allocation4 + $0x18] sm:$0xff] %vm3087, %v4914
        %5010 = vst.msk [vmem:[#allocation4 + $0x50] sm:$0xff] %vm3087, %v4916
        %5011 = vst.msk [vmem:[#allocation4 + $0x88] sm:$0xff] %vm3087, %v4918
        %5012 = vst.msk [vmem:[#allocation4 + $0xc0] sm:$0xff] %vm3087, %v4920
        %5013 = vst.msk [vmem:[#allocation4 + $0xf8] sm:$0xff] %vm3087, %v4922
        %5014 = vst.msk [vmem:[#allocation4 + $0x130] sm:$0xff] %vm3087, %v4924
        %5015 = vst.msk [vmem:[#allocation4 + $0x168] sm:$0xff] %vm3087, %v4926
        %5016 = vst.msk [vmem:[#allocation4 + $0x1a0] sm:$0xff] %vm3087, %v4928
        %5017 = vst.msk [vmem:[#allocation4 + $0x1d8] sm:$0xff] %vm3087, %v4930
        %5018 = vst.msk [vmem:[#allocation4 + $0x210] sm:$0xff] %vm3087, %v4932
        %5019 = vst.msk [vmem:[#allocation4 + $0x248] sm:$0xff] %vm3087, %v4934
        %5020 = vst.msk [vmem:[#allocation4 + $0x280] sm:$0xff] %vm3087, %v4936
        %5021 = vst.msk [vmem:[#allocation4 + $0x2b8] sm:$0xff] %vm3087, %v4938
        %5022 = vst.msk [vmem:[#allocation4 + $0x2f0] sm:$0xff] %vm3087, %v4940
        %5023 = vst.msk [vmem:[#allocation4 + $0x328] sm:$0xff] %vm3087, %v4942
        %5024 = vst.msk [vmem:[#allocation4 + $0x360] sm:$0xff] %vm3087, %v4944
        %5025 = vst.msk [vmem:[#allocation4 + $0x398] sm:$0xff] %vm3087, %v4946
        %5026 = vst.msk [vmem:[#allocation4 + $0x3d0] sm:$0xff] %vm3087, %v4948
        %5027 = vst.msk [vmem:[#allocation4 + $0x408] sm:$0xff] %vm3087, %v4950
        %5028 = vst.msk [vmem:[#allocation4 + $0x440] sm:$0xff] %vm3087, %v4952
        %5029 = vst.msk [vmem:[#allocation4 + $0x478] sm:$0xff] %vm3087, %v4954
        %5030 = vst.msk [vmem:[#allocation4 + $0x4b0] sm:$0xff] %vm3087, %v4956
        %5031 = vst.msk [vmem:[#allocation4 + $0x4e8] sm:$0xff] %vm3087, %v4958
        %5032 = vst.msk [vmem:[#allocation4 + $0x520] sm:$0xff] %vm3087, %v4960
        %5033 = vst.msk [vmem:[#allocation4 + $0x558] sm:$0xff] %vm3087, %v4962
        %5034 = vst.msk [vmem:[#allocation4 + $0x590] sm:$0xff] %vm3087, %v4964
        %5035 = vst.msk [vmem:[#allocation4 + $0x5c8] sm:$0xff] %vm3087, %v4966
        %5036 = vst.msk [vmem:[#allocation4 + $0x600] sm:$0xff] %vm3087, %v4968
        %5037 = vst.msk [vmem:[#allocation4 + $0x638] sm:$0xff] %vm3087, %v4970
        %5038 = vst.msk [vmem:[#allocation4 + $0x670] sm:$0xff] %vm3087, %v4972
        %5039 = vst.msk [vmem:[#allocation4 + $0x6a8] sm:$0xff] %vm3087, %v4974
        %5040 = vst.msk [vmem:[#allocation4 + $0x6e0] sm:$0xff] %vm3087, %v4976
        %v5041 = vld [vmem:[#allocation2 + $0x36] sm:$0xff]
        %v5042 = vld [vmem:[#allocation2 + $0x3e] sm:$0xff]
        %v5043 = vld [vmem:[#allocation2 + $0x46] sm:$0xff]
        %v5044 = vld [vmem:[#allocation2 + $0x4e] sm:$0xff]
        %v5045 = vld [vmem:[#allocation2 + $0x56] sm:$0xff]
        %v5046 = vld [vmem:[#allocation2 + $0x5e] sm:$0xff]
        %v5047 = vld [vmem:[#allocation2 + $0x66] sm:$0xff]
        %v5048 = vld [vmem:[#allocation2 + $0x6e] sm:$0xff]
        %v5049 = vld [vmem:[#allocation2 + $0x76] sm:$0xff]
        %v5050 = vld [vmem:[#allocation2 + $0x7e] sm:$0xff]
        %v5051 = vld [vmem:[#allocation2 + $0x86] sm:$0xff]
        %v5052 = vld [vmem:[#allocation2 + $0x8e] sm:$0xff]
        %v5053 = vld [vmem:[#allocation2 + $0x96] sm:$0xff]
        %v5054 = vld [vmem:[#allocation2 + $0x9e] sm:$0xff]
        %v5055 = vld [vmem:[#allocation2 + $0xa6] sm:$0xff]
        %v5056 = vld [vmem:[#allocation2 + $0xae] sm:$0xff]
        %v5057 = vld [vmem:[#allocation2 + $0xb6] sm:$0xff]
        %v5058 = vld [vmem:[#allocation2 + $0xbe] sm:$0xff]
        %v5059 = vld [vmem:[#allocation2 + $0xc6] sm:$0xff]
        %v5060 = vld [vmem:[#allocation2 + $0xce] sm:$0xff]
        %v5061 = vld [vmem:[#allocation2 + $0xd6] sm:$0xff]
        %v5062 = vld [vmem:[#allocation2 + $0xde] sm:$0xff]
        %v5063 = vld [vmem:[#allocation2 + $0xe6] sm:$0xff]
        %v5064 = vld [vmem:[#allocation2 + $0xee] sm:$0xff]
        %v5065 = vld [vmem:[#allocation2 + $0xf6] sm:$0xff]
        %v5066 = vld [vmem:[#allocation2 + $0xfe] sm:$0xff]
        %v5067 = vld [vmem:[#allocation2 + $0x106] sm:$0xff]
        %v5068 = vld [vmem:[#allocation2 + $0x10e] sm:$0xff]
        %v5069 = vld [vmem:[#allocation2 + $0x116] sm:$0xff]
        %v5070 = vld [vmem:[#allocation2 + $0x11e] sm:$0xff]
        %v5071 = vld [vmem:[#allocation2 + $0x126] sm:$0xff]
        %v5072 = vld [vmem:[#allocation2 + $0x12e] sm:$0xff]
        %5105 = vrot.lane.b32.xlu0 %v5041, 96
        %v5106 = vpop.permute.xlu0 %5105
        %5107 = vrot.lane.b32.xlu0 %v5042, 96
        %v5108 = vpop.permute.xlu0 %5107
        %5109 = vrot.lane.b32.xlu0 %v5043, 96
        %v5110 = vpop.permute.xlu0 %5109
        %5111 = vrot.lane.b32.xlu0 %v5044, 96
        %v5112 = vpop.permute.xlu0 %5111
        %5113 = vrot.lane.b32.xlu0 %v5045, 96
        %v5114 = vpop.permute.xlu0 %5113
        %5115 = vrot.lane.b32.xlu0 %v5046, 96
        %v5116 = vpop.permute.xlu0 %5115
        %5117 = vrot.lane.b32.xlu0 %v5047, 96
        %v5118 = vpop.permute.xlu0 %5117
        %5119 = vrot.lane.b32.xlu0 %v5048, 96
        %v5120 = vpop.permute.xlu0 %5119
        %5121 = vrot.lane.b32.xlu0 %v5049, 96
        %v5122 = vpop.permute.xlu0 %5121
        %5123 = vrot.lane.b32.xlu0 %v5050, 96
        %v5124 = vpop.permute.xlu0 %5123
        %5125 = vrot.lane.b32.xlu0 %v5051, 96
        %v5126 = vpop.permute.xlu0 %5125
        %5127 = vrot.lane.b32.xlu0 %v5052, 96
        %v5128 = vpop.permute.xlu0 %5127
        %5129 = vrot.lane.b32.xlu0 %v5053, 96
        %v5130 = vpop.permute.xlu0 %5129
        %5131 = vrot.lane.b32.xlu0 %v5054, 96
        %v5132 = vpop.permute.xlu0 %5131
        %5133 = vrot.lane.b32.xlu0 %v5055, 96
        %v5134 = vpop.permute.xlu0 %5133
        %5135 = vrot.lane.b32.xlu0 %v5056, 96
        %v5136 = vpop.permute.xlu0 %5135
        %5137 = vrot.lane.b32.xlu0 %v5057, 96
        %v5138 = vpop.permute.xlu0 %5137
        %5139 = vrot.lane.b32.xlu0 %v5058, 96
        %v5140 = vpop.permute.xlu0 %5139
        %5141 = vrot.lane.b32.xlu0 %v5059, 96
        %v5142 = vpop.permute.xlu0 %5141
        %5143 = vrot.lane.b32.xlu0 %v5060, 96
        %v5144 = vpop.permute.xlu0 %5143
        %5145 = vrot.lane.b32.xlu0 %v5061, 96
        %v5146 = vpop.permute.xlu0 %5145
        %5147 = vrot.lane.b32.xlu0 %v5062, 96
        %v5148 = vpop.permute.xlu0 %5147
        %5149 = vrot.lane.b32.xlu0 %v5063, 96
        %v5150 = vpop.permute.xlu0 %5149
        %5151 = vrot.lane.b32.xlu0 %v5064, 96
        %v5152 = vpop.permute.xlu0 %5151
        %5153 = vrot.lane.b32.xlu0 %v5065, 96
        %v5154 = vpop.permute.xlu0 %5153
        %5155 = vrot.lane.b32.xlu0 %v5066, 96
        %v5156 = vpop.permute.xlu0 %5155
        %5157 = vrot.lane.b32.xlu0 %v5067, 96
        %v5158 = vpop.permute.xlu0 %5157
        %5159 = vrot.lane.b32.xlu0 %v5068, 96
        %v5160 = vpop.permute.xlu0 %5159
        %5161 = vrot.lane.b32.xlu0 %v5069, 96
        %v5162 = vpop.permute.xlu0 %5161
        %5163 = vrot.lane.b32.xlu0 %v5070, 96
        %v5164 = vpop.permute.xlu0 %5163
        %5165 = vrot.lane.b32.xlu0 %v5071, 96
        %v5166 = vpop.permute.xlu0 %5165
        %5167 = vrot.lane.b32.xlu0 %v5072, 96
        %v5168 = vpop.permute.xlu0 %5167
        %5201 = vst.msk [vmem:[#allocation4 + $0x18] sm:$0xff] %vm3280, %v5106
        %5202 = vst.msk [vmem:[#allocation4 + $0x50] sm:$0xff] %vm3280, %v5108
        %5203 = vst.msk [vmem:[#allocation4 + $0x88] sm:$0xff] %vm3280, %v5110
        %5204 = vst.msk [vmem:[#allocation4 + $0xc0] sm:$0xff] %vm3280, %v5112
        %5205 = vst.msk [vmem:[#allocation4 + $0xf8] sm:$0xff] %vm3280, %v5114
        %5206 = vst.msk [vmem:[#allocation4 + $0x130] sm:$0xff] %vm3280, %v5116
        %5207 = vst.msk [vmem:[#allocation4 + $0x168] sm:$0xff] %vm3280, %v5118
        %5208 = vst.msk [vmem:[#allocation4 + $0x1a0] sm:$0xff] %vm3280, %v5120
        %5209 = vst.msk [vmem:[#allocation4 + $0x1d8] sm:$0xff] %vm3280, %v5122
        %5210 = vst.msk [vmem:[#allocation4 + $0x210] sm:$0xff] %vm3280, %v5124
        %5211 = vst.msk [vmem:[#allocation4 + $0x248] sm:$0xff] %vm3280, %v5126
        %5212 = vst.msk [vmem:[#allocation4 + $0x280] sm:$0xff] %vm3280, %v5128
        %5213 = vst.msk [vmem:[#allocation4 + $0x2b8] sm:$0xff] %vm3280, %v5130
        %5214 = vst.msk [vmem:[#allocation4 + $0x2f0] sm:$0xff] %vm3280, %v5132
        %5215 = vst.msk [vmem:[#allocation4 + $0x328] sm:$0xff] %vm3280, %v5134
        %5216 = vst.msk [vmem:[#allocation4 + $0x360] sm:$0xff] %vm3280, %v5136
        %5217 = vst.msk [vmem:[#allocation4 + $0x398] sm:$0xff] %vm3280, %v5138
        %5218 = vst.msk [vmem:[#allocation4 + $0x3d0] sm:$0xff] %vm3280, %v5140
        %5219 = vst.msk [vmem:[#allocation4 + $0x408] sm:$0xff] %vm3280, %v5142
        %5220 = vst.msk [vmem:[#allocation4 + $0x440] sm:$0xff] %vm3280, %v5144
        %5221 = vst.msk [vmem:[#allocation4 + $0x478] sm:$0xff] %vm3280, %v5146
        %5222 = vst.msk [vmem:[#allocation4 + $0x4b0] sm:$0xff] %vm3280, %v5148
        %5223 = vst.msk [vmem:[#allocation4 + $0x4e8] sm:$0xff] %vm3280, %v5150
        %5224 = vst.msk [vmem:[#allocation4 + $0x520] sm:$0xff] %vm3280, %v5152
        %5225 = vst.msk [vmem:[#allocation4 + $0x558] sm:$0xff] %vm3280, %v5154
        %5226 = vst.msk [vmem:[#allocation4 + $0x590] sm:$0xff] %vm3280, %v5156
        %5227 = vst.msk [vmem:[#allocation4 + $0x5c8] sm:$0xff] %vm3280, %v5158
        %5228 = vst.msk [vmem:[#allocation4 + $0x600] sm:$0xff] %vm3280, %v5160
        %5229 = vst.msk [vmem:[#allocation4 + $0x638] sm:$0xff] %vm3280, %v5162
        %5230 = vst.msk [vmem:[#allocation4 + $0x670] sm:$0xff] %vm3280, %v5164
        %5231 = vst.msk [vmem:[#allocation4 + $0x6a8] sm:$0xff] %vm3280, %v5166
        %5232 = vst.msk [vmem:[#allocation4 + $0x6e0] sm:$0xff] %vm3280, %v5168
        %v5233 = vld [vmem:[#allocation2 + $0x37] sm:$0xff]
        %v5234 = vld [vmem:[#allocation2 + $0x3f] sm:$0xff]
        %v5235 = vld [vmem:[#allocation2 + $0x47] sm:$0xff]
        %v5236 = vld [vmem:[#allocation2 + $0x4f] sm:$0xff]
        %v5237 = vld [vmem:[#allocation2 + $0x57] sm:$0xff]
        %v5238 = vld [vmem:[#allocation2 + $0x5f] sm:$0xff]
        %v5239 = vld [vmem:[#allocation2 + $0x67] sm:$0xff]
        %v5240 = vld [vmem:[#allocation2 + $0x6f] sm:$0xff]
        %v5241 = vld [vmem:[#allocation2 + $0x77] sm:$0xff]
        %v5242 = vld [vmem:[#allocation2 + $0x7f] sm:$0xff]
        %v5243 = vld [vmem:[#allocation2 + $0x87] sm:$0xff]
        %v5244 = vld [vmem:[#allocation2 + $0x8f] sm:$0xff]
        %v5245 = vld [vmem:[#allocation2 + $0x97] sm:$0xff]
        %v5246 = vld [vmem:[#allocation2 + $0x9f] sm:$0xff]
        %v5247 = vld [vmem:[#allocation2 + $0xa7] sm:$0xff]
        %v5248 = vld [vmem:[#allocation2 + $0xaf] sm:$0xff]
        %v5249 = vld [vmem:[#allocation2 + $0xb7] sm:$0xff]
        %v5250 = vld [vmem:[#allocation2 + $0xbf] sm:$0xff]
        %v5251 = vld [vmem:[#allocation2 + $0xc7] sm:$0xff]
        %v5252 = vld [vmem:[#allocation2 + $0xcf] sm:$0xff]
        %v5253 = vld [vmem:[#allocation2 + $0xd7] sm:$0xff]
        %v5254 = vld [vmem:[#allocation2 + $0xdf] sm:$0xff]
        %v5255 = vld [vmem:[#allocation2 + $0xe7] sm:$0xff]
        %v5256 = vld [vmem:[#allocation2 + $0xef] sm:$0xff]
        %v5257 = vld [vmem:[#allocation2 + $0xf7] sm:$0xff]
        %v5258 = vld [vmem:[#allocation2 + $0xff] sm:$0xff]
        %v5259 = vld [vmem:[#allocation2 + $0x107] sm:$0xff]
        %v5260 = vld [vmem:[#allocation2 + $0x10f] sm:$0xff]
        %v5261 = vld [vmem:[#allocation2 + $0x117] sm:$0xff]
        %v5262 = vld [vmem:[#allocation2 + $0x11f] sm:$0xff]
        %v5263 = vld [vmem:[#allocation2 + $0x127] sm:$0xff]
        %v5264 = vld [vmem:[#allocation2 + $0x12f] sm:$0xff]
        %5265 = vst.msk [vmem:[#allocation4 + $0x20] sm:$0xff] %vm465, %v5233
        %5266 = vst.msk [vmem:[#allocation4 + $0x58] sm:$0xff] %vm465, %v5234
        %5267 = vst.msk [vmem:[#allocation4 + $0x90] sm:$0xff] %vm465, %v5235
        %5268 = vst.msk [vmem:[#allocation4 + $0xc8] sm:$0xff] %vm465, %v5236
        %5269 = vst.msk [vmem:[#allocation4 + $0x100] sm:$0xff] %vm465, %v5237
        %5270 = vst.msk [vmem:[#allocation4 + $0x138] sm:$0xff] %vm465, %v5238
        %5271 = vst.msk [vmem:[#allocation4 + $0x170] sm:$0xff] %vm465, %v5239
        %5272 = vst.msk [vmem:[#allocation4 + $0x1a8] sm:$0xff] %vm465, %v5240
        %5273 = vst.msk [vmem:[#allocation4 + $0x1e0] sm:$0xff] %vm465, %v5241
        %5274 = vst.msk [vmem:[#allocation4 + $0x218] sm:$0xff] %vm465, %v5242
        %5275 = vst.msk [vmem:[#allocation4 + $0x250] sm:$0xff] %vm465, %v5243
        %5276 = vst.msk [vmem:[#allocation4 + $0x288] sm:$0xff] %vm465, %v5244
        %5277 = vst.msk [vmem:[#allocation4 + $0x2c0] sm:$0xff] %vm465, %v5245
        %5278 = vst.msk [vmem:[#allocation4 + $0x2f8] sm:$0xff] %vm465, %v5246
        %5279 = vst.msk [vmem:[#allocation4 + $0x330] sm:$0xff] %vm465, %v5247
        %5280 = vst.msk [vmem:[#allocation4 + $0x368] sm:$0xff] %vm465, %v5248
        %5281 = vst.msk [vmem:[#allocation4 + $0x3a0] sm:$0xff] %vm465, %v5249
        %5282 = vst.msk [vmem:[#allocation4 + $0x3d8] sm:$0xff] %vm465, %v5250
        %5283 = vst.msk [vmem:[#allocation4 + $0x410] sm:$0xff] %vm465, %v5251
        %5284 = vst.msk [vmem:[#allocation4 + $0x448] sm:$0xff] %vm465, %v5252
        %5285 = vst.msk [vmem:[#allocation4 + $0x480] sm:$0xff] %vm465, %v5253
        %5286 = vst.msk [vmem:[#allocation4 + $0x4b8] sm:$0xff] %vm465, %v5254
        %5287 = vst.msk [vmem:[#allocation4 + $0x4f0] sm:$0xff] %vm465, %v5255
        %5288 = vst.msk [vmem:[#allocation4 + $0x528] sm:$0xff] %vm465, %v5256
        %5289 = vst.msk [vmem:[#allocation4 + $0x560] sm:$0xff] %vm465, %v5257
        %5290 = vst.msk [vmem:[#allocation4 + $0x598] sm:$0xff] %vm465, %v5258
        %5291 = vst.msk [vmem:[#allocation4 + $0x5d0] sm:$0xff] %vm465, %v5259
        %5292 = vst.msk [vmem:[#allocation4 + $0x608] sm:$0xff] %vm465, %v5260
        %5293 = vst.msk [vmem:[#allocation4 + $0x640] sm:$0xff] %vm465, %v5261
        %5294 = vst.msk [vmem:[#allocation4 + $0x678] sm:$0xff] %vm465, %v5262
        %5295 = vst.msk [vmem:[#allocation4 + $0x6b0] sm:$0xff] %vm465, %v5263
        %5296 = vst.msk [vmem:[#allocation4 + $0x6e8] sm:$0xff] %vm465, %v5264
        %v5297 = vld [vmem:[#allocation2 + $0x38] sm:$0xff]
        %v5298 = vld [vmem:[#allocation2 + $0x40] sm:$0xff]
        %v5299 = vld [vmem:[#allocation2 + $0x48] sm:$0xff]
        %v5300 = vld [vmem:[#allocation2 + $0x50] sm:$0xff]
        %v5301 = vld [vmem:[#allocation2 + $0x58] sm:$0xff]
        %v5302 = vld [vmem:[#allocation2 + $0x60] sm:$0xff]
        %v5303 = vld [vmem:[#allocation2 + $0x68] sm:$0xff]
        %v5304 = vld [vmem:[#allocation2 + $0x70] sm:$0xff]
        %v5305 = vld [vmem:[#allocation2 + $0x78] sm:$0xff]
        %v5306 = vld [vmem:[#allocation2 + $0x80] sm:$0xff]
        %v5307 = vld [vmem:[#allocation2 + $0x88] sm:$0xff]
        %v5308 = vld [vmem:[#allocation2 + $0x90] sm:$0xff]
        %v5309 = vld [vmem:[#allocation2 + $0x98] sm:$0xff]
        %v5310 = vld [vmem:[#allocation2 + $0xa0] sm:$0xff]
        %v5311 = vld [vmem:[#allocation2 + $0xa8] sm:$0xff]
        %v5312 = vld [vmem:[#allocation2 + $0xb0] sm:$0xff]
        %v5313 = vld [vmem:[#allocation2 + $0xb8] sm:$0xff]
        %v5314 = vld [vmem:[#allocation2 + $0xc0] sm:$0xff]
        %v5315 = vld [vmem:[#allocation2 + $0xc8] sm:$0xff]
        %v5316 = vld [vmem:[#allocation2 + $0xd0] sm:$0xff]
        %v5317 = vld [vmem:[#allocation2 + $0xd8] sm:$0xff]
        %v5318 = vld [vmem:[#allocation2 + $0xe0] sm:$0xff]
        %v5319 = vld [vmem:[#allocation2 + $0xe8] sm:$0xff]
        %v5320 = vld [vmem:[#allocation2 + $0xf0] sm:$0xff]
        %v5321 = vld [vmem:[#allocation2 + $0xf8] sm:$0xff]
        %v5322 = vld [vmem:[#allocation2 + $0x100] sm:$0xff]
        %v5323 = vld [vmem:[#allocation2 + $0x108] sm:$0xff]
        %v5324 = vld [vmem:[#allocation2 + $0x110] sm:$0xff]
        %v5325 = vld [vmem:[#allocation2 + $0x118] sm:$0xff]
        %v5326 = vld [vmem:[#allocation2 + $0x120] sm:$0xff]
        %v5327 = vld [vmem:[#allocation2 + $0x128] sm:$0xff]
        %v5328 = vld [vmem:[#allocation2 + $0x130] sm:$0xff]
        %5361 = vrot.lane.b32.xlu0 %v5297, 32
        %v5362 = vpop.permute.xlu0 %5361
        %5363 = vrot.lane.b32.xlu0 %v5298, 32
        %v5364 = vpop.permute.xlu0 %5363
        %5365 = vrot.lane.b32.xlu0 %v5299, 32
        %v5366 = vpop.permute.xlu0 %5365
        %5367 = vrot.lane.b32.xlu0 %v5300, 32
        %v5368 = vpop.permute.xlu0 %5367
        %5369 = vrot.lane.b32.xlu0 %v5301, 32
        %v5370 = vpop.permute.xlu0 %5369
        %5371 = vrot.lane.b32.xlu0 %v5302, 32
        %v5372 = vpop.permute.xlu0 %5371
        %5373 = vrot.lane.b32.xlu0 %v5303, 32
        %v5374 = vpop.permute.xlu0 %5373
        %5375 = vrot.lane.b32.xlu0 %v5304, 32
        %v5376 = vpop.permute.xlu0 %5375
        %5377 = vrot.lane.b32.xlu0 %v5305, 32
        %v5378 = vpop.permute.xlu0 %5377
        %5379 = vrot.lane.b32.xlu0 %v5306, 32
        %v5380 = vpop.permute.xlu0 %5379
        %5381 = vrot.lane.b32.xlu0 %v5307, 32
        %v5382 = vpop.permute.xlu0 %5381
        %5383 = vrot.lane.b32.xlu0 %v5308, 32
        %v5384 = vpop.permute.xlu0 %5383
        %5385 = vrot.lane.b32.xlu0 %v5309, 32
        %v5386 = vpop.permute.xlu0 %5385
        %5387 = vrot.lane.b32.xlu0 %v5310, 32
        %v5388 = vpop.permute.xlu0 %5387
        %5389 = vrot.lane.b32.xlu0 %v5311, 32
        %v5390 = vpop.permute.xlu0 %5389
        %5391 = vrot.lane.b32.xlu0 %v5312, 32
        %v5392 = vpop.permute.xlu0 %5391
        %5393 = vrot.lane.b32.xlu0 %v5313, 32
        %v5394 = vpop.permute.xlu0 %5393
        %5395 = vrot.lane.b32.xlu0 %v5314, 32
        %v5396 = vpop.permute.xlu0 %5395
        %5397 = vrot.lane.b32.xlu0 %v5315, 32
        %v5398 = vpop.permute.xlu0 %5397
        %5399 = vrot.lane.b32.xlu0 %v5316, 32
        %v5400 = vpop.permute.xlu0 %5399
        %5401 = vrot.lane.b32.xlu0 %v5317, 32
        %v5402 = vpop.permute.xlu0 %5401
        %5403 = vrot.lane.b32.xlu0 %v5318, 32
        %v5404 = vpop.permute.xlu0 %5403
        %5405 = vrot.lane.b32.xlu0 %v5319, 32
        %v5406 = vpop.permute.xlu0 %5405
        %5407 = vrot.lane.b32.xlu0 %v5320, 32
        %v5408 = vpop.permute.xlu0 %5407
        %5409 = vrot.lane.b32.xlu0 %v5321, 32
        %v5410 = vpop.permute.xlu0 %5409
        %5411 = vrot.lane.b32.xlu0 %v5322, 32
        %v5412 = vpop.permute.xlu0 %5411
        %5413 = vrot.lane.b32.xlu0 %v5323, 32
        %v5414 = vpop.permute.xlu0 %5413
        %5415 = vrot.lane.b32.xlu0 %v5324, 32
        %v5416 = vpop.permute.xlu0 %5415
        %5417 = vrot.lane.b32.xlu0 %v5325, 32
        %v5418 = vpop.permute.xlu0 %5417
        %5419 = vrot.lane.b32.xlu0 %v5326, 32
        %v5420 = vpop.permute.xlu0 %5419
        %5421 = vrot.lane.b32.xlu0 %v5327, 32
        %v5422 = vpop.permute.xlu0 %5421
        %5423 = vrot.lane.b32.xlu0 %v5328, 32
        %v5424 = vpop.permute.xlu0 %5423
        %5457 = vst.msk [vmem:[#allocation4 + $0x20] sm:$0xff] %vm2894, %v5362
        %5458 = vst.msk [vmem:[#allocation4 + $0x58] sm:$0xff] %vm2894, %v5364
        %5459 = vst.msk [vmem:[#allocation4 + $0x90] sm:$0xff] %vm2894, %v5366
        %5460 = vst.msk [vmem:[#allocation4 + $0xc8] sm:$0xff] %vm2894, %v5368
        %5461 = vst.msk [vmem:[#allocation4 + $0x100] sm:$0xff] %vm2894, %v5370
        %5462 = vst.msk [vmem:[#allocation4 + $0x138] sm:$0xff] %vm2894, %v5372
        %5463 = vst.msk [vmem:[#allocation4 + $0x170] sm:$0xff] %vm2894, %v5374
        %5464 = vst.msk [vmem:[#allocation4 + $0x1a8] sm:$0xff] %vm2894, %v5376
        %5465 = vst.msk [vmem:[#allocation4 + $0x1e0] sm:$0xff] %vm2894, %v5378
        %5466 = vst.msk [vmem:[#allocation4 + $0x218] sm:$0xff] %vm2894, %v5380
        %5467 = vst.msk [vmem:[#allocation4 + $0x250] sm:$0xff] %vm2894, %v5382
        %5468 = vst.msk [vmem:[#allocation4 + $0x288] sm:$0xff] %vm2894, %v5384
        %5469 = vst.msk [vmem:[#allocation4 + $0x2c0] sm:$0xff] %vm2894, %v5386
        %5470 = vst.msk [vmem:[#allocation4 + $0x2f8] sm:$0xff] %vm2894, %v5388
        %5471 = vst.msk [vmem:[#allocation4 + $0x330] sm:$0xff] %vm2894, %v5390
        %5472 = vst.msk [vmem:[#allocation4 + $0x368] sm:$0xff] %vm2894, %v5392
        %5473 = vst.msk [vmem:[#allocation4 + $0x3a0] sm:$0xff] %vm2894, %v5394
        %5474 = vst.msk [vmem:[#allocation4 + $0x3d8] sm:$0xff] %vm2894, %v5396
        %5475 = vst.msk [vmem:[#allocation4 + $0x410] sm:$0xff] %vm2894, %v5398
        %5476 = vst.msk [vmem:[#allocation4 + $0x448] sm:$0xff] %vm2894, %v5400
        %5477 = vst.msk [vmem:[#allocation4 + $0x480] sm:$0xff] %vm2894, %v5402
        %5478 = vst.msk [vmem:[#allocation4 + $0x4b8] sm:$0xff] %vm2894, %v5404
        %5479 = vst.msk [vmem:[#allocation4 + $0x4f0] sm:$0xff] %vm2894, %v5406
        %5480 = vst.msk [vmem:[#allocation4 + $0x528] sm:$0xff] %vm2894, %v5408
        %5481 = vst.msk [vmem:[#allocation4 + $0x560] sm:$0xff] %vm2894, %v5410
        %5482 = vst.msk [vmem:[#allocation4 + $0x598] sm:$0xff] %vm2894, %v5412
        %5483 = vst.msk [vmem:[#allocation4 + $0x5d0] sm:$0xff] %vm2894, %v5414
        %5484 = vst.msk [vmem:[#allocation4 + $0x608] sm:$0xff] %vm2894, %v5416
        %5485 = vst.msk [vmem:[#allocation4 + $0x640] sm:$0xff] %vm2894, %v5418
        %5486 = vst.msk [vmem:[#allocation4 + $0x678] sm:$0xff] %vm2894, %v5420
        %5487 = vst.msk [vmem:[#allocation4 + $0x6b0] sm:$0xff] %vm2894, %v5422
        %5488 = vst.msk [vmem:[#allocation4 + $0x6e8] sm:$0xff] %vm2894, %v5424
        %v5489 = vld [vmem:[#allocation2 + $0x39] sm:$0xff]
        %v5490 = vld [vmem:[#allocation2 + $0x41] sm:$0xff]
        %v5491 = vld [vmem:[#allocation2 + $0x49] sm:$0xff]
        %v5492 = vld [vmem:[#allocation2 + $0x51] sm:$0xff]
        %v5493 = vld [vmem:[#allocation2 + $0x59] sm:$0xff]
        %v5494 = vld [vmem:[#allocation2 + $0x61] sm:$0xff]
        %v5495 = vld [vmem:[#allocation2 + $0x69] sm:$0xff]
        %v5496 = vld [vmem:[#allocation2 + $0x71] sm:$0xff]
        %v5497 = vld [vmem:[#allocation2 + $0x79] sm:$0xff]
        %v5498 = vld [vmem:[#allocation2 + $0x81] sm:$0xff]
        %v5499 = vld [vmem:[#allocation2 + $0x89] sm:$0xff]
        %v5500 = vld [vmem:[#allocation2 + $0x91] sm:$0xff]
        %v5501 = vld [vmem:[#allocation2 + $0x99] sm:$0xff]
        %v5502 = vld [vmem:[#allocation2 + $0xa1] sm:$0xff]
        %v5503 = vld [vmem:[#allocation2 + $0xa9] sm:$0xff]
        %v5504 = vld [vmem:[#allocation2 + $0xb1] sm:$0xff]
        %v5505 = vld [vmem:[#allocation2 + $0xb9] sm:$0xff]
        %v5506 = vld [vmem:[#allocation2 + $0xc1] sm:$0xff]
        %v5507 = vld [vmem:[#allocation2 + $0xc9] sm:$0xff]
        %v5508 = vld [vmem:[#allocation2 + $0xd1] sm:$0xff]
        %v5509 = vld [vmem:[#allocation2 + $0xd9] sm:$0xff]
        %v5510 = vld [vmem:[#allocation2 + $0xe1] sm:$0xff]
        %v5511 = vld [vmem:[#allocation2 + $0xe9] sm:$0xff]
        %v5512 = vld [vmem:[#allocation2 + $0xf1] sm:$0xff]
        %v5513 = vld [vmem:[#allocation2 + $0xf9] sm:$0xff]
        %v5514 = vld [vmem:[#allocation2 + $0x101] sm:$0xff]
        %v5515 = vld [vmem:[#allocation2 + $0x109] sm:$0xff]
        %v5516 = vld [vmem:[#allocation2 + $0x111] sm:$0xff]
        %v5517 = vld [vmem:[#allocation2 + $0x119] sm:$0xff]
        %v5518 = vld [vmem:[#allocation2 + $0x121] sm:$0xff]
        %v5519 = vld [vmem:[#allocation2 + $0x129] sm:$0xff]
        %v5520 = vld [vmem:[#allocation2 + $0x131] sm:$0xff]
        %5553 = vrot.lane.b32.xlu0 %v5489, 64
        %v5554 = vpop.permute.xlu0 %5553
        %5555 = vrot.lane.b32.xlu0 %v5490, 64
        %v5556 = vpop.permute.xlu0 %5555
        %5557 = vrot.lane.b32.xlu0 %v5491, 64
        %v5558 = vpop.permute.xlu0 %5557
        %5559 = vrot.lane.b32.xlu0 %v5492, 64
        %v5560 = vpop.permute.xlu0 %5559
        %5561 = vrot.lane.b32.xlu0 %v5493, 64
        %v5562 = vpop.permute.xlu0 %5561
        %5563 = vrot.lane.b32.xlu0 %v5494, 64
        %v5564 = vpop.permute.xlu0 %5563
        %5565 = vrot.lane.b32.xlu0 %v5495, 64
        %v5566 = vpop.permute.xlu0 %5565
        %5567 = vrot.lane.b32.xlu0 %v5496, 64
        %v5568 = vpop.permute.xlu0 %5567
        %5569 = vrot.lane.b32.xlu0 %v5497, 64
        %v5570 = vpop.permute.xlu0 %5569
        %5571 = vrot.lane.b32.xlu0 %v5498, 64
        %v5572 = vpop.permute.xlu0 %5571
        %5573 = vrot.lane.b32.xlu0 %v5499, 64
        %v5574 = vpop.permute.xlu0 %5573
        %5575 = vrot.lane.b32.xlu0 %v5500, 64
        %v5576 = vpop.permute.xlu0 %5575
        %5577 = vrot.lane.b32.xlu0 %v5501, 64
        %v5578 = vpop.permute.xlu0 %5577
        %5579 = vrot.lane.b32.xlu0 %v5502, 64
        %v5580 = vpop.permute.xlu0 %5579
        %5581 = vrot.lane.b32.xlu0 %v5503, 64
        %v5582 = vpop.permute.xlu0 %5581
        %5583 = vrot.lane.b32.xlu0 %v5504, 64
        %v5584 = vpop.permute.xlu0 %5583
        %5585 = vrot.lane.b32.xlu0 %v5505, 64
        %v5586 = vpop.permute.xlu0 %5585
        %5587 = vrot.lane.b32.xlu0 %v5506, 64
        %v5588 = vpop.permute.xlu0 %5587
        %5589 = vrot.lane.b32.xlu0 %v5507, 64
        %v5590 = vpop.permute.xlu0 %5589
        %5591 = vrot.lane.b32.xlu0 %v5508, 64
        %v5592 = vpop.permute.xlu0 %5591
        %5593 = vrot.lane.b32.xlu0 %v5509, 64
        %v5594 = vpop.permute.xlu0 %5593
        %5595 = vrot.lane.b32.xlu0 %v5510, 64
        %v5596 = vpop.permute.xlu0 %5595
        %5597 = vrot.lane.b32.xlu0 %v5511, 64
        %v5598 = vpop.permute.xlu0 %5597
        %5599 = vrot.lane.b32.xlu0 %v5512, 64
        %v5600 = vpop.permute.xlu0 %5599
        %5601 = vrot.lane.b32.xlu0 %v5513, 64
        %v5602 = vpop.permute.xlu0 %5601
        %5603 = vrot.lane.b32.xlu0 %v5514, 64
        %v5604 = vpop.permute.xlu0 %5603
        %5605 = vrot.lane.b32.xlu0 %v5515, 64
        %v5606 = vpop.permute.xlu0 %5605
        %5607 = vrot.lane.b32.xlu0 %v5516, 64
        %v5608 = vpop.permute.xlu0 %5607
        %5609 = vrot.lane.b32.xlu0 %v5517, 64
        %v5610 = vpop.permute.xlu0 %5609
        %5611 = vrot.lane.b32.xlu0 %v5518, 64
        %v5612 = vpop.permute.xlu0 %5611
        %5613 = vrot.lane.b32.xlu0 %v5519, 64
        %v5614 = vpop.permute.xlu0 %5613
        %5615 = vrot.lane.b32.xlu0 %v5520, 64
        %v5616 = vpop.permute.xlu0 %5615
        %5649 = vst.msk [vmem:[#allocation4 + $0x20] sm:$0xff] %vm3087, %v5554
        %5650 = vst.msk [vmem:[#allocation4 + $0x58] sm:$0xff] %vm3087, %v5556
        %5651 = vst.msk [vmem:[#allocation4 + $0x90] sm:$0xff] %vm3087, %v5558
        %5652 = vst.msk [vmem:[#allocation4 + $0xc8] sm:$0xff] %vm3087, %v5560
        %5653 = vst.msk [vmem:[#allocation4 + $0x100] sm:$0xff] %vm3087, %v5562
        %5654 = vst.msk [vmem:[#allocation4 + $0x138] sm:$0xff] %vm3087, %v5564
        %5655 = vst.msk [vmem:[#allocation4 + $0x170] sm:$0xff] %vm3087, %v5566
        %5656 = vst.msk [vmem:[#allocation4 + $0x1a8] sm:$0xff] %vm3087, %v5568
        %5657 = vst.msk [vmem:[#allocation4 + $0x1e0] sm:$0xff] %vm3087, %v5570
        %5658 = vst.msk [vmem:[#allocation4 + $0x218] sm:$0xff] %vm3087, %v5572
        %5659 = vst.msk [vmem:[#allocation4 + $0x250] sm:$0xff] %vm3087, %v5574
        %5660 = vst.msk [vmem:[#allocation4 + $0x288] sm:$0xff] %vm3087, %v5576
        %5661 = vst.msk [vmem:[#allocation4 + $0x2c0] sm:$0xff] %vm3087, %v5578
        %5662 = vst.msk [vmem:[#allocation4 + $0x2f8] sm:$0xff] %vm3087, %v5580
        %5663 = vst.msk [vmem:[#allocation4 + $0x330] sm:$0xff] %vm3087, %v5582
        %5664 = vst.msk [vmem:[#allocation4 + $0x368] sm:$0xff] %vm3087, %v5584
        %5665 = vst.msk [vmem:[#allocation4 + $0x3a0] sm:$0xff] %vm3087, %v5586
        %5666 = vst.msk [vmem:[#allocation4 + $0x3d8] sm:$0xff] %vm3087, %v5588
        %5667 = vst.msk [vmem:[#allocation4 + $0x410] sm:$0xff] %vm3087, %v5590
        %5668 = vst.msk [vmem:[#allocation4 + $0x448] sm:$0xff] %vm3087, %v5592
        %5669 = vst.msk [vmem:[#allocation4 + $0x480] sm:$0xff] %vm3087, %v5594
        %5670 = vst.msk [vmem:[#allocation4 + $0x4b8] sm:$0xff] %vm3087, %v5596
        %5671 = vst.msk [vmem:[#allocation4 + $0x4f0] sm:$0xff] %vm3087, %v5598
        %5672 = vst.msk [vmem:[#allocation4 + $0x528] sm:$0xff] %vm3087, %v5600
        %5673 = vst.msk [vmem:[#allocation4 + $0x560] sm:$0xff] %vm3087, %v5602
        %5674 = vst.msk [vmem:[#allocation4 + $0x598] sm:$0xff] %vm3087, %v5604
        %5675 = vst.msk [vmem:[#allocation4 + $0x5d0] sm:$0xff] %vm3087, %v5606
        %5676 = vst.msk [vmem:[#allocation4 + $0x608] sm:$0xff] %vm3087, %v5608
        %5677 = vst.msk [vmem:[#allocation4 + $0x640] sm:$0xff] %vm3087, %v5610
        %5678 = vst.msk [vmem:[#allocation4 + $0x678] sm:$0xff] %vm3087, %v5612
        %5679 = vst.msk [vmem:[#allocation4 + $0x6b0] sm:$0xff] %vm3087, %v5614
        %5680 = vst.msk [vmem:[#allocation4 + $0x6e8] sm:$0xff] %vm3087, %v5616
        %v5681 = vld [vmem:[#allocation2 + $0x3a] sm:$0xff]
        %v5682 = vld [vmem:[#allocation2 + $0x42] sm:$0xff]
        %v5683 = vld [vmem:[#allocation2 + $0x4a] sm:$0xff]
        %v5684 = vld [vmem:[#allocation2 + $0x52] sm:$0xff]
        %v5685 = vld [vmem:[#allocation2 + $0x5a] sm:$0xff]
        %v5686 = vld [vmem:[#allocation2 + $0x62] sm:$0xff]
        %v5687 = vld [vmem:[#allocation2 + $0x6a] sm:$0xff]
        %v5688 = vld [vmem:[#allocation2 + $0x72] sm:$0xff]
        %v5689 = vld [vmem:[#allocation2 + $0x7a] sm:$0xff]
        %v5690 = vld [vmem:[#allocation2 + $0x82] sm:$0xff]
        %v5691 = vld [vmem:[#allocation2 + $0x8a] sm:$0xff]
        %v5692 = vld [vmem:[#allocation2 + $0x92] sm:$0xff]
        %v5693 = vld [vmem:[#allocation2 + $0x9a] sm:$0xff]
        %v5694 = vld [vmem:[#allocation2 + $0xa2] sm:$0xff]
        %v5695 = vld [vmem:[#allocation2 + $0xaa] sm:$0xff]
        %v5696 = vld [vmem:[#allocation2 + $0xb2] sm:$0xff]
        %v5697 = vld [vmem:[#allocation2 + $0xba] sm:$0xff]
        %v5698 = vld [vmem:[#allocation2 + $0xc2] sm:$0xff]
        %v5699 = vld [vmem:[#allocation2 + $0xca] sm:$0xff]
        %v5700 = vld [vmem:[#allocation2 + $0xd2] sm:$0xff]
        %v5701 = vld [vmem:[#allocation2 + $0xda] sm:$0xff]
        %v5702 = vld [vmem:[#allocation2 + $0xe2] sm:$0xff]
        %v5703 = vld [vmem:[#allocation2 + $0xea] sm:$0xff]
        %v5704 = vld [vmem:[#allocation2 + $0xf2] sm:$0xff]
        %v5705 = vld [vmem:[#allocation2 + $0xfa] sm:$0xff]
        %v5706 = vld [vmem:[#allocation2 + $0x102] sm:$0xff]
        %v5707 = vld [vmem:[#allocation2 + $0x10a] sm:$0xff]
        %v5708 = vld [vmem:[#allocation2 + $0x112] sm:$0xff]
        %v5709 = vld [vmem:[#allocation2 + $0x11a] sm:$0xff]
        %v5710 = vld [vmem:[#allocation2 + $0x122] sm:$0xff]
        %v5711 = vld [vmem:[#allocation2 + $0x12a] sm:$0xff]
        %v5712 = vld [vmem:[#allocation2 + $0x132] sm:$0xff]
        %5745 = vrot.lane.b32.xlu0 %v5681, 96
        %v5746 = vpop.permute.xlu0 %5745
        %5747 = vrot.lane.b32.xlu0 %v5682, 96
        %v5748 = vpop.permute.xlu0 %5747
        %5749 = vrot.lane.b32.xlu0 %v5683, 96
        %v5750 = vpop.permute.xlu0 %5749
        %5751 = vrot.lane.b32.xlu0 %v5684, 96
        %v5752 = vpop.permute.xlu0 %5751
        %5753 = vrot.lane.b32.xlu0 %v5685, 96
        %v5754 = vpop.permute.xlu0 %5753
        %5755 = vrot.lane.b32.xlu0 %v5686, 96
        %v5756 = vpop.permute.xlu0 %5755
        %5757 = vrot.lane.b32.xlu0 %v5687, 96
        %v5758 = vpop.permute.xlu0 %5757
        %5759 = vrot.lane.b32.xlu0 %v5688, 96
        %v5760 = vpop.permute.xlu0 %5759
        %5761 = vrot.lane.b32.xlu0 %v5689, 96
        %v5762 = vpop.permute.xlu0 %5761
        %5763 = vrot.lane.b32.xlu0 %v5690, 96
        %v5764 = vpop.permute.xlu0 %5763
        %5765 = vrot.lane.b32.xlu0 %v5691, 96
        %v5766 = vpop.permute.xlu0 %5765
        %5767 = vrot.lane.b32.xlu0 %v5692, 96
        %v5768 = vpop.permute.xlu0 %5767
        %5769 = vrot.lane.b32.xlu0 %v5693, 96
        %v5770 = vpop.permute.xlu0 %5769
        %5771 = vrot.lane.b32.xlu0 %v5694, 96
        %v5772 = vpop.permute.xlu0 %5771
        %5773 = vrot.lane.b32.xlu0 %v5695, 96
        %v5774 = vpop.permute.xlu0 %5773
        %5775 = vrot.lane.b32.xlu0 %v5696, 96
        %v5776 = vpop.permute.xlu0 %5775
        %5777 = vrot.lane.b32.xlu0 %v5697, 96
        %v5778 = vpop.permute.xlu0 %5777
        %5779 = vrot.lane.b32.xlu0 %v5698, 96
        %v5780 = vpop.permute.xlu0 %5779
        %5781 = vrot.lane.b32.xlu0 %v5699, 96
        %v5782 = vpop.permute.xlu0 %5781
        %5783 = vrot.lane.b32.xlu0 %v5700, 96
        %v5784 = vpop.permute.xlu0 %5783
        %5785 = vrot.lane.b32.xlu0 %v5701, 96
        %v5786 = vpop.permute.xlu0 %5785
        %5787 = vrot.lane.b32.xlu0 %v5702, 96
        %v5788 = vpop.permute.xlu0 %5787
        %5789 = vrot.lane.b32.xlu0 %v5703, 96
        %v5790 = vpop.permute.xlu0 %5789
        %5791 = vrot.lane.b32.xlu0 %v5704, 96
        %v5792 = vpop.permute.xlu0 %5791
        %5793 = vrot.lane.b32.xlu0 %v5705, 96
        %v5794 = vpop.permute.xlu0 %5793
        %5795 = vrot.lane.b32.xlu0 %v5706, 96
        %v5796 = vpop.permute.xlu0 %5795
        %5797 = vrot.lane.b32.xlu0 %v5707, 96
        %v5798 = vpop.permute.xlu0 %5797
        %5799 = vrot.lane.b32.xlu0 %v5708, 96
        %v5800 = vpop.permute.xlu0 %5799
        %5801 = vrot.lane.b32.xlu0 %v5709, 96
        %v5802 = vpop.permute.xlu0 %5801
        %5803 = vrot.lane.b32.xlu0 %v5710, 96
        %v5804 = vpop.permute.xlu0 %5803
        %5805 = vrot.lane.b32.xlu0 %v5711, 96
        %v5806 = vpop.permute.xlu0 %5805
        %5807 = vrot.lane.b32.xlu0 %v5712, 96
        %v5808 = vpop.permute.xlu0 %5807
        %5841 = vst.msk [vmem:[#allocation4 + $0x20] sm:$0xff] %vm3280, %v5746
        %5842 = vst.msk [vmem:[#allocation4 + $0x58] sm:$0xff] %vm3280, %v5748
        %5843 = vst.msk [vmem:[#allocation4 + $0x90] sm:$0xff] %vm3280, %v5750
        %5844 = vst.msk [vmem:[#allocation4 + $0xc8] sm:$0xff] %vm3280, %v5752
        %5845 = vst.msk [vmem:[#allocation4 + $0x100] sm:$0xff] %vm3280, %v5754
        %5846 = vst.msk [vmem:[#allocation4 + $0x138] sm:$0xff] %vm3280, %v5756
        %5847 = vst.msk [vmem:[#allocation4 + $0x170] sm:$0xff] %vm3280, %v5758
        %5848 = vst.msk [vmem:[#allocation4 + $0x1a8] sm:$0xff] %vm3280, %v5760
        %5849 = vst.msk [vmem:[#allocation4 + $0x1e0] sm:$0xff] %vm3280, %v5762
        %5850 = vst.msk [vmem:[#allocation4 + $0x218] sm:$0xff] %vm3280, %v5764
        %5851 = vst.msk [vmem:[#allocation4 + $0x250] sm:$0xff] %vm3280, %v5766
        %5852 = vst.msk [vmem:[#allocation4 + $0x288] sm:$0xff] %vm3280, %v5768
        %5853 = vst.msk [vmem:[#allocation4 + $0x2c0] sm:$0xff] %vm3280, %v5770
        %5854 = vst.msk [vmem:[#allocation4 + $0x2f8] sm:$0xff] %vm3280, %v5772
        %5855 = vst.msk [vmem:[#allocation4 + $0x330] sm:$0xff] %vm3280, %v5774
        %5856 = vst.msk [vmem:[#allocation4 + $0x368] sm:$0xff] %vm3280, %v5776
        %5857 = vst.msk [vmem:[#allocation4 + $0x3a0] sm:$0xff] %vm3280, %v5778
        %5858 = vst.msk [vmem:[#allocation4 + $0x3d8] sm:$0xff] %vm3280, %v5780
        %5859 = vst.msk [vmem:[#allocation4 + $0x410] sm:$0xff] %vm3280, %v5782
        %5860 = vst.msk [vmem:[#allocation4 + $0x448] sm:$0xff] %vm3280, %v5784
        %5861 = vst.msk [vmem:[#allocation4 + $0x480] sm:$0xff] %vm3280, %v5786
        %5862 = vst.msk [vmem:[#allocation4 + $0x4b8] sm:$0xff] %vm3280, %v5788
        %5863 = vst.msk [vmem:[#allocation4 + $0x4f0] sm:$0xff] %vm3280, %v5790
        %5864 = vst.msk [vmem:[#allocation4 + $0x528] sm:$0xff] %vm3280, %v5792
        %5865 = vst.msk [vmem:[#allocation4 + $0x560] sm:$0xff] %vm3280, %v5794
        %5866 = vst.msk [vmem:[#allocation4 + $0x598] sm:$0xff] %vm3280, %v5796
        %5867 = vst.msk [vmem:[#allocation4 + $0x5d0] sm:$0xff] %vm3280, %v5798
        %5868 = vst.msk [vmem:[#allocation4 + $0x608] sm:$0xff] %vm3280, %v5800
        %5869 = vst.msk [vmem:[#allocation4 + $0x640] sm:$0xff] %vm3280, %v5802
        %5870 = vst.msk [vmem:[#allocation4 + $0x678] sm:$0xff] %vm3280, %v5804
        %5871 = vst.msk [vmem:[#allocation4 + $0x6b0] sm:$0xff] %vm3280, %v5806
        %5872 = vst.msk [vmem:[#allocation4 + $0x6e8] sm:$0xff] %vm3280, %v5808
        %v5873 = vld [vmem:[#allocation2 + $0x46] sm:$0xff]
        %v5874 = vld [vmem:[#allocation2 + $0x4e] sm:$0xff]
        %v5875 = vld [vmem:[#allocation2 + $0x56] sm:$0xff]
        %v5876 = vld [vmem:[#allocation2 + $0x5e] sm:$0xff]
        %v5877 = vld [vmem:[#allocation2 + $0x66] sm:$0xff]
        %v5878 = vld [vmem:[#allocation2 + $0x6e] sm:$0xff]
        %v5879 = vld [vmem:[#allocation2 + $0x76] sm:$0xff]
        %v5880 = vld [vmem:[#allocation2 + $0x7e] sm:$0xff]
        %v5881 = vld [vmem:[#allocation2 + $0x86] sm:$0xff]
        %v5882 = vld [vmem:[#allocation2 + $0x8e] sm:$0xff]
        %v5883 = vld [vmem:[#allocation2 + $0x96] sm:$0xff]
        %v5884 = vld [vmem:[#allocation2 + $0x9e] sm:$0xff]
        %v5885 = vld [vmem:[#allocation2 + $0xa6] sm:$0xff]
        %v5886 = vld [vmem:[#allocation2 + $0xae] sm:$0xff]
        %v5887 = vld [vmem:[#allocation2 + $0xb6] sm:$0xff]
        %v5888 = vld [vmem:[#allocation2 + $0xbe] sm:$0xff]
        %v5889 = vld [vmem:[#allocation2 + $0xc6] sm:$0xff]
        %v5890 = vld [vmem:[#allocation2 + $0xce] sm:$0xff]
        %v5891 = vld [vmem:[#allocation2 + $0xd6] sm:$0xff]
        %v5892 = vld [vmem:[#allocation2 + $0xde] sm:$0xff]
        %v5893 = vld [vmem:[#allocation2 + $0xe6] sm:$0xff]
        %v5894 = vld [vmem:[#allocation2 + $0xee] sm:$0xff]
        %v5895 = vld [vmem:[#allocation2 + $0xf6] sm:$0xff]
        %v5896 = vld [vmem:[#allocation2 + $0xfe] sm:$0xff]
        %v5897 = vld [vmem:[#allocation2 + $0x106] sm:$0xff]
        %v5898 = vld [vmem:[#allocation2 + $0x10e] sm:$0xff]
        %v5899 = vld [vmem:[#allocation2 + $0x116] sm:$0xff]
        %v5900 = vld [vmem:[#allocation2 + $0x11e] sm:$0xff]
        %v5901 = vld [vmem:[#allocation2 + $0x126] sm:$0xff]
        %v5902 = vld [vmem:[#allocation2 + $0x12e] sm:$0xff]
        %v5903 = vld [vmem:[#allocation2 + $0x136] sm:$0xff]
        %v5904 = vld [vmem:[#allocation2 + $0x13e] sm:$0xff]
        %5905 = vst.msk [vmem:[#allocation4 + $0x28] sm:$0xff] %vm465, %v5873
        %5906 = vst.msk [vmem:[#allocation4 + $0x60] sm:$0xff] %vm465, %v5874
        %5907 = vst.msk [vmem:[#allocation4 + $0x98] sm:$0xff] %vm465, %v5875
        %5908 = vst.msk [vmem:[#allocation4 + $0xd0] sm:$0xff] %vm465, %v5876
        %5909 = vst.msk [vmem:[#allocation4 + $0x108] sm:$0xff] %vm465, %v5877
        %5910 = vst.msk [vmem:[#allocation4 + $0x140] sm:$0xff] %vm465, %v5878
        %5911 = vst.msk [vmem:[#allocation4 + $0x178] sm:$0xff] %vm465, %v5879
        %5912 = vst.msk [vmem:[#allocation4 + $0x1b0] sm:$0xff] %vm465, %v5880
        %5913 = vst.msk [vmem:[#allocation4 + $0x1e8] sm:$0xff] %vm465, %v5881
        %5914 = vst.msk [vmem:[#allocation4 + $0x220] sm:$0xff] %vm465, %v5882
        %5915 = vst.msk [vmem:[#allocation4 + $0x258] sm:$0xff] %vm465, %v5883
        %5916 = vst.msk [vmem:[#allocation4 + $0x290] sm:$0xff] %vm465, %v5884
        %5917 = vst.msk [vmem:[#allocation4 + $0x2c8] sm:$0xff] %vm465, %v5885
        %5918 = vst.msk [vmem:[#allocation4 + $0x300] sm:$0xff] %vm465, %v5886
        %5919 = vst.msk [vmem:[#allocation4 + $0x338] sm:$0xff] %vm465, %v5887
        %5920 = vst.msk [vmem:[#allocation4 + $0x370] sm:$0xff] %vm465, %v5888
        %5921 = vst.msk [vmem:[#allocation4 + $0x3a8] sm:$0xff] %vm465, %v5889
        %5922 = vst.msk [vmem:[#allocation4 + $0x3e0] sm:$0xff] %vm465, %v5890
        %5923 = vst.msk [vmem:[#allocation4 + $0x418] sm:$0xff] %vm465, %v5891
        %5924 = vst.msk [vmem:[#allocation4 + $0x450] sm:$0xff] %vm465, %v5892
        %5925 = vst.msk [vmem:[#allocation4 + $0x488] sm:$0xff] %vm465, %v5893
        %5926 = vst.msk [vmem:[#allocation4 + $0x4c0] sm:$0xff] %vm465, %v5894
        %5927 = vst.msk [vmem:[#allocation4 + $0x4f8] sm:$0xff] %vm465, %v5895
        %5928 = vst.msk [vmem:[#allocation4 + $0x530] sm:$0xff] %vm465, %v5896
        %5929 = vst.msk [vmem:[#allocation4 + $0x568] sm:$0xff] %vm465, %v5897
        %5930 = vst.msk [vmem:[#allocation4 + $0x5a0] sm:$0xff] %vm465, %v5898
        %5931 = vst.msk [vmem:[#allocation4 + $0x5d8] sm:$0xff] %vm465, %v5899
        %5932 = vst.msk [vmem:[#allocation4 + $0x610] sm:$0xff] %vm465, %v5900
        %5933 = vst.msk [vmem:[#allocation4 + $0x648] sm:$0xff] %vm465, %v5901
        %5934 = vst.msk [vmem:[#allocation4 + $0x680] sm:$0xff] %vm465, %v5902
        %5935 = vst.msk [vmem:[#allocation4 + $0x6b8] sm:$0xff] %vm465, %v5903
        %5936 = vst.msk [vmem:[#allocation4 + $0x6f0] sm:$0xff] %vm465, %v5904
        %v5937 = vld [vmem:[#allocation2 + $0x47] sm:$0xff]
        %v5938 = vld [vmem:[#allocation2 + $0x4f] sm:$0xff]
        %v5939 = vld [vmem:[#allocation2 + $0x57] sm:$0xff]
        %v5940 = vld [vmem:[#allocation2 + $0x5f] sm:$0xff]
        %v5941 = vld [vmem:[#allocation2 + $0x67] sm:$0xff]
        %v5942 = vld [vmem:[#allocation2 + $0x6f] sm:$0xff]
        %v5943 = vld [vmem:[#allocation2 + $0x77] sm:$0xff]
        %v5944 = vld [vmem:[#allocation2 + $0x7f] sm:$0xff]
        %v5945 = vld [vmem:[#allocation2 + $0x87] sm:$0xff]
        %v5946 = vld [vmem:[#allocation2 + $0x8f] sm:$0xff]
        %v5947 = vld [vmem:[#allocation2 + $0x97] sm:$0xff]
        %v5948 = vld [vmem:[#allocation2 + $0x9f] sm:$0xff]
        %v5949 = vld [vmem:[#allocation2 + $0xa7] sm:$0xff]
        %v5950 = vld [vmem:[#allocation2 + $0xaf] sm:$0xff]
        %v5951 = vld [vmem:[#allocation2 + $0xb7] sm:$0xff]
        %v5952 = vld [vmem:[#allocation2 + $0xbf] sm:$0xff]
        %v5953 = vld [vmem:[#allocation2 + $0xc7] sm:$0xff]
        %v5954 = vld [vmem:[#allocation2 + $0xcf] sm:$0xff]
        %v5955 = vld [vmem:[#allocation2 + $0xd7] sm:$0xff]
        %v5956 = vld [vmem:[#allocation2 + $0xdf] sm:$0xff]
        %v5957 = vld [vmem:[#allocation2 + $0xe7] sm:$0xff]
        %v5958 = vld [vmem:[#allocation2 + $0xef] sm:$0xff]
        %v5959 = vld [vmem:[#allocation2 + $0xf7] sm:$0xff]
        %v5960 = vld [vmem:[#allocation2 + $0xff] sm:$0xff]
        %v5961 = vld [vmem:[#allocation2 + $0x107] sm:$0xff]
        %v5962 = vld [vmem:[#allocation2 + $0x10f] sm:$0xff]
        %v5963 = vld [vmem:[#allocation2 + $0x117] sm:$0xff]
        %v5964 = vld [vmem:[#allocation2 + $0x11f] sm:$0xff]
        %v5965 = vld [vmem:[#allocation2 + $0x127] sm:$0xff]
        %v5966 = vld [vmem:[#allocation2 + $0x12f] sm:$0xff]
        %v5967 = vld [vmem:[#allocation2 + $0x137] sm:$0xff]
        %v5968 = vld [vmem:[#allocation2 + $0x13f] sm:$0xff]
        %6001 = vrot.lane.b32.xlu0 %v5937, 32
        %v6002 = vpop.permute.xlu0 %6001
        %6003 = vrot.lane.b32.xlu0 %v5938, 32
        %v6004 = vpop.permute.xlu0 %6003
        %6005 = vrot.lane.b32.xlu0 %v5939, 32
        %v6006 = vpop.permute.xlu0 %6005
        %6007 = vrot.lane.b32.xlu0 %v5940, 32
        %v6008 = vpop.permute.xlu0 %6007
        %6009 = vrot.lane.b32.xlu0 %v5941, 32
        %v6010 = vpop.permute.xlu0 %6009
        %6011 = vrot.lane.b32.xlu0 %v5942, 32
        %v6012 = vpop.permute.xlu0 %6011
        %6013 = vrot.lane.b32.xlu0 %v5943, 32
        %v6014 = vpop.permute.xlu0 %6013
        %6015 = vrot.lane.b32.xlu0 %v5944, 32
        %v6016 = vpop.permute.xlu0 %6015
        %6017 = vrot.lane.b32.xlu0 %v5945, 32
        %v6018 = vpop.permute.xlu0 %6017
        %6019 = vrot.lane.b32.xlu0 %v5946, 32
        %v6020 = vpop.permute.xlu0 %6019
        %6021 = vrot.lane.b32.xlu0 %v5947, 32
        %v6022 = vpop.permute.xlu0 %6021
        %6023 = vrot.lane.b32.xlu0 %v5948, 32
        %v6024 = vpop.permute.xlu0 %6023
        %6025 = vrot.lane.b32.xlu0 %v5949, 32
        %v6026 = vpop.permute.xlu0 %6025
        %6027 = vrot.lane.b32.xlu0 %v5950, 32
        %v6028 = vpop.permute.xlu0 %6027
        %6029 = vrot.lane.b32.xlu0 %v5951, 32
        %v6030 = vpop.permute.xlu0 %6029
        %6031 = vrot.lane.b32.xlu0 %v5952, 32
        %v6032 = vpop.permute.xlu0 %6031
        %6033 = vrot.lane.b32.xlu0 %v5953, 32
        %v6034 = vpop.permute.xlu0 %6033
        %6035 = vrot.lane.b32.xlu0 %v5954, 32
        %v6036 = vpop.permute.xlu0 %6035
        %6037 = vrot.lane.b32.xlu0 %v5955, 32
        %v6038 = vpop.permute.xlu0 %6037
        %6039 = vrot.lane.b32.xlu0 %v5956, 32
        %v6040 = vpop.permute.xlu0 %6039
        %6041 = vrot.lane.b32.xlu0 %v5957, 32
        %v6042 = vpop.permute.xlu0 %6041
        %6043 = vrot.lane.b32.xlu0 %v5958, 32
        %v6044 = vpop.permute.xlu0 %6043
        %6045 = vrot.lane.b32.xlu0 %v5959, 32
        %v6046 = vpop.permute.xlu0 %6045
        %6047 = vrot.lane.b32.xlu0 %v5960, 32
        %v6048 = vpop.permute.xlu0 %6047
        %6049 = vrot.lane.b32.xlu0 %v5961, 32
        %v6050 = vpop.permute.xlu0 %6049
        %6051 = vrot.lane.b32.xlu0 %v5962, 32
        %v6052 = vpop.permute.xlu0 %6051
        %6053 = vrot.lane.b32.xlu0 %v5963, 32
        %v6054 = vpop.permute.xlu0 %6053
        %6055 = vrot.lane.b32.xlu0 %v5964, 32
        %v6056 = vpop.permute.xlu0 %6055
        %6057 = vrot.lane.b32.xlu0 %v5965, 32
        %v6058 = vpop.permute.xlu0 %6057
        %6059 = vrot.lane.b32.xlu0 %v5966, 32
        %v6060 = vpop.permute.xlu0 %6059
        %6061 = vrot.lane.b32.xlu0 %v5967, 32
        %v6062 = vpop.permute.xlu0 %6061
        %6063 = vrot.lane.b32.xlu0 %v5968, 32
        %v6064 = vpop.permute.xlu0 %6063
        %6097 = vst.msk [vmem:[#allocation4 + $0x28] sm:$0xff] %vm2894, %v6002
        %6098 = vst.msk [vmem:[#allocation4 + $0x60] sm:$0xff] %vm2894, %v6004
        %6099 = vst.msk [vmem:[#allocation4 + $0x98] sm:$0xff] %vm2894, %v6006
        %6100 = vst.msk [vmem:[#allocation4 + $0xd0] sm:$0xff] %vm2894, %v6008
        %6101 = vst.msk [vmem:[#allocation4 + $0x108] sm:$0xff] %vm2894, %v6010
        %6102 = vst.msk [vmem:[#allocation4 + $0x140] sm:$0xff] %vm2894, %v6012
        %6103 = vst.msk [vmem:[#allocation4 + $0x178] sm:$0xff] %vm2894, %v6014
        %6104 = vst.msk [vmem:[#allocation4 + $0x1b0] sm:$0xff] %vm2894, %v6016
        %6105 = vst.msk [vmem:[#allocation4 + $0x1e8] sm:$0xff] %vm2894, %v6018
        %6106 = vst.msk [vmem:[#allocation4 + $0x220] sm:$0xff] %vm2894, %v6020
        %6107 = vst.msk [vmem:[#allocation4 + $0x258] sm:$0xff] %vm2894, %v6022
        %6108 = vst.msk [vmem:[#allocation4 + $0x290] sm:$0xff] %vm2894, %v6024
        %6109 = vst.msk [vmem:[#allocation4 + $0x2c8] sm:$0xff] %vm2894, %v6026
        %6110 = vst.msk [vmem:[#allocation4 + $0x300] sm:$0xff] %vm2894, %v6028
        %6111 = vst.msk [vmem:[#allocation4 + $0x338] sm:$0xff] %vm2894, %v6030
        %6112 = vst.msk [vmem:[#allocation4 + $0x370] sm:$0xff] %vm2894, %v6032
        %6113 = vst.msk [vmem:[#allocation4 + $0x3a8] sm:$0xff] %vm2894, %v6034
        %6114 = vst.msk [vmem:[#allocation4 + $0x3e0] sm:$0xff] %vm2894, %v6036
        %6115 = vst.msk [vmem:[#allocation4 + $0x418] sm:$0xff] %vm2894, %v6038
        %6116 = vst.msk [vmem:[#allocation4 + $0x450] sm:$0xff] %vm2894, %v6040
        %6117 = vst.msk [vmem:[#allocation4 + $0x488] sm:$0xff] %vm2894, %v6042
        %6118 = vst.msk [vmem:[#allocation4 + $0x4c0] sm:$0xff] %vm2894, %v6044
        %6119 = vst.msk [vmem:[#allocation4 + $0x4f8] sm:$0xff] %vm2894, %v6046
        %6120 = vst.msk [vmem:[#allocation4 + $0x530] sm:$0xff] %vm2894, %v6048
        %6121 = vst.msk [vmem:[#allocation4 + $0x568] sm:$0xff] %vm2894, %v6050
        %6122 = vst.msk [vmem:[#allocation4 + $0x5a0] sm:$0xff] %vm2894, %v6052
        %6123 = vst.msk [vmem:[#allocation4 + $0x5d8] sm:$0xff] %vm2894, %v6054
        %6124 = vst.msk [vmem:[#allocation4 + $0x610] sm:$0xff] %vm2894, %v6056
        %6125 = vst.msk [vmem:[#allocation4 + $0x648] sm:$0xff] %vm2894, %v6058
        %6126 = vst.msk [vmem:[#allocation4 + $0x680] sm:$0xff] %vm2894, %v6060
        %6127 = vst.msk [vmem:[#allocation4 + $0x6b8] sm:$0xff] %vm2894, %v6062
        %6128 = vst.msk [vmem:[#allocation4 + $0x6f0] sm:$0xff] %vm2894, %v6064
        %v6129 = vld [vmem:[#allocation2 + $0x48] sm:$0xff]
        %v6130 = vld [vmem:[#allocation2 + $0x50] sm:$0xff]
        %v6131 = vld [vmem:[#allocation2 + $0x58] sm:$0xff]
        %v6132 = vld [vmem:[#allocation2 + $0x60] sm:$0xff]
        %v6133 = vld [vmem:[#allocation2 + $0x68] sm:$0xff]
        %v6134 = vld [vmem:[#allocation2 + $0x70] sm:$0xff]
        %v6135 = vld [vmem:[#allocation2 + $0x78] sm:$0xff]
        %v6136 = vld [vmem:[#allocation2 + $0x80] sm:$0xff]
        %v6137 = vld [vmem:[#allocation2 + $0x88] sm:$0xff]
        %v6138 = vld [vmem:[#allocation2 + $0x90] sm:$0xff]
        %v6139 = vld [vmem:[#allocation2 + $0x98] sm:$0xff]
        %v6140 = vld [vmem:[#allocation2 + $0xa0] sm:$0xff]
        %v6141 = vld [vmem:[#allocation2 + $0xa8] sm:$0xff]
        %v6142 = vld [vmem:[#allocation2 + $0xb0] sm:$0xff]
        %v6143 = vld [vmem:[#allocation2 + $0xb8] sm:$0xff]
        %v6144 = vld [vmem:[#allocation2 + $0xc0] sm:$0xff]
        %v6145 = vld [vmem:[#allocation2 + $0xc8] sm:$0xff]
        %v6146 = vld [vmem:[#allocation2 + $0xd0] sm:$0xff]
        %v6147 = vld [vmem:[#allocation2 + $0xd8] sm:$0xff]
        %v6148 = vld [vmem:[#allocation2 + $0xe0] sm:$0xff]
        %v6149 = vld [vmem:[#allocation2 + $0xe8] sm:$0xff]
        %v6150 = vld [vmem:[#allocation2 + $0xf0] sm:$0xff]
        %v6151 = vld [vmem:[#allocation2 + $0xf8] sm:$0xff]
        %v6152 = vld [vmem:[#allocation2 + $0x100] sm:$0xff]
        %v6153 = vld [vmem:[#allocation2 + $0x108] sm:$0xff]
        %v6154 = vld [vmem:[#allocation2 + $0x110] sm:$0xff]
        %v6155 = vld [vmem:[#allocation2 + $0x118] sm:$0xff]
        %v6156 = vld [vmem:[#allocation2 + $0x120] sm:$0xff]
        %v6157 = vld [vmem:[#allocation2 + $0x128] sm:$0xff]
        %v6158 = vld [vmem:[#allocation2 + $0x130] sm:$0xff]
        %v6159 = vld [vmem:[#allocation2 + $0x138] sm:$0xff]
        %v6160 = vld [vmem:[#allocation2 + $0x140] sm:$0xff]
        %6193 = vrot.lane.b32.xlu0 %v6129, 64
        %v6194 = vpop.permute.xlu0 %6193
        %6195 = vrot.lane.b32.xlu0 %v6130, 64
        %v6196 = vpop.permute.xlu0 %6195
        %6197 = vrot.lane.b32.xlu0 %v6131, 64
        %v6198 = vpop.permute.xlu0 %6197
        %6199 = vrot.lane.b32.xlu0 %v6132, 64
        %v6200 = vpop.permute.xlu0 %6199
        %6201 = vrot.lane.b32.xlu0 %v6133, 64
        %v6202 = vpop.permute.xlu0 %6201
        %6203 = vrot.lane.b32.xlu0 %v6134, 64
        %v6204 = vpop.permute.xlu0 %6203
        %6205 = vrot.lane.b32.xlu0 %v6135, 64
        %v6206 = vpop.permute.xlu0 %6205
        %6207 = vrot.lane.b32.xlu0 %v6136, 64
        %v6208 = vpop.permute.xlu0 %6207
        %6209 = vrot.lane.b32.xlu0 %v6137, 64
        %v6210 = vpop.permute.xlu0 %6209
        %6211 = vrot.lane.b32.xlu0 %v6138, 64
        %v6212 = vpop.permute.xlu0 %6211
        %6213 = vrot.lane.b32.xlu0 %v6139, 64
        %v6214 = vpop.permute.xlu0 %6213
        %6215 = vrot.lane.b32.xlu0 %v6140, 64
        %v6216 = vpop.permute.xlu0 %6215
        %6217 = vrot.lane.b32.xlu0 %v6141, 64
        %v6218 = vpop.permute.xlu0 %6217
        %6219 = vrot.lane.b32.xlu0 %v6142, 64
        %v6220 = vpop.permute.xlu0 %6219
        %6221 = vrot.lane.b32.xlu0 %v6143, 64
        %v6222 = vpop.permute.xlu0 %6221
        %6223 = vrot.lane.b32.xlu0 %v6144, 64
        %v6224 = vpop.permute.xlu0 %6223
        %6225 = vrot.lane.b32.xlu0 %v6145, 64
        %v6226 = vpop.permute.xlu0 %6225
        %6227 = vrot.lane.b32.xlu0 %v6146, 64
        %v6228 = vpop.permute.xlu0 %6227
        %6229 = vrot.lane.b32.xlu0 %v6147, 64
        %v6230 = vpop.permute.xlu0 %6229
        %6231 = vrot.lane.b32.xlu0 %v6148, 64
        %v6232 = vpop.permute.xlu0 %6231
        %6233 = vrot.lane.b32.xlu0 %v6149, 64
        %v6234 = vpop.permute.xlu0 %6233
        %6235 = vrot.lane.b32.xlu0 %v6150, 64
        %v6236 = vpop.permute.xlu0 %6235
        %6237 = vrot.lane.b32.xlu0 %v6151, 64
        %v6238 = vpop.permute.xlu0 %6237
        %6239 = vrot.lane.b32.xlu0 %v6152, 64
        %v6240 = vpop.permute.xlu0 %6239
        %6241 = vrot.lane.b32.xlu0 %v6153, 64
        %v6242 = vpop.permute.xlu0 %6241
        %6243 = vrot.lane.b32.xlu0 %v6154, 64
        %v6244 = vpop.permute.xlu0 %6243
        %6245 = vrot.lane.b32.xlu0 %v6155, 64
        %v6246 = vpop.permute.xlu0 %6245
        %6247 = vrot.lane.b32.xlu0 %v6156, 64
        %v6248 = vpop.permute.xlu0 %6247
        %6249 = vrot.lane.b32.xlu0 %v6157, 64
        %v6250 = vpop.permute.xlu0 %6249
        %6251 = vrot.lane.b32.xlu0 %v6158, 64
        %v6252 = vpop.permute.xlu0 %6251
        %6253 = vrot.lane.b32.xlu0 %v6159, 64
        %v6254 = vpop.permute.xlu0 %6253
        %6255 = vrot.lane.b32.xlu0 %v6160, 64
        %v6256 = vpop.permute.xlu0 %6255
        %6289 = vst.msk [vmem:[#allocation4 + $0x28] sm:$0xff] %vm3087, %v6194
        %6290 = vst.msk [vmem:[#allocation4 + $0x60] sm:$0xff] %vm3087, %v6196
        %6291 = vst.msk [vmem:[#allocation4 + $0x98] sm:$0xff] %vm3087, %v6198
        %6292 = vst.msk [vmem:[#allocation4 + $0xd0] sm:$0xff] %vm3087, %v6200
        %6293 = vst.msk [vmem:[#allocation4 + $0x108] sm:$0xff] %vm3087, %v6202
        %6294 = vst.msk [vmem:[#allocation4 + $0x140] sm:$0xff] %vm3087, %v6204
        %6295 = vst.msk [vmem:[#allocation4 + $0x178] sm:$0xff] %vm3087, %v6206
        %6296 = vst.msk [vmem:[#allocation4 + $0x1b0] sm:$0xff] %vm3087, %v6208
        %6297 = vst.msk [vmem:[#allocation4 + $0x1e8] sm:$0xff] %vm3087, %v6210
        %6298 = vst.msk [vmem:[#allocation4 + $0x220] sm:$0xff] %vm3087, %v6212
        %6299 = vst.msk [vmem:[#allocation4 + $0x258] sm:$0xff] %vm3087, %v6214
        %6300 = vst.msk [vmem:[#allocation4 + $0x290] sm:$0xff] %vm3087, %v6216
        %6301 = vst.msk [vmem:[#allocation4 + $0x2c8] sm:$0xff] %vm3087, %v6218
        %6302 = vst.msk [vmem:[#allocation4 + $0x300] sm:$0xff] %vm3087, %v6220
        %6303 = vst.msk [vmem:[#allocation4 + $0x338] sm:$0xff] %vm3087, %v6222
        %6304 = vst.msk [vmem:[#allocation4 + $0x370] sm:$0xff] %vm3087, %v6224
        %6305 = vst.msk [vmem:[#allocation4 + $0x3a8] sm:$0xff] %vm3087, %v6226
        %6306 = vst.msk [vmem:[#allocation4 + $0x3e0] sm:$0xff] %vm3087, %v6228
        %6307 = vst.msk [vmem:[#allocation4 + $0x418] sm:$0xff] %vm3087, %v6230
        %6308 = vst.msk [vmem:[#allocation4 + $0x450] sm:$0xff] %vm3087, %v6232
        %6309 = vst.msk [vmem:[#allocation4 + $0x488] sm:$0xff] %vm3087, %v6234
        %6310 = vst.msk [vmem:[#allocation4 + $0x4c0] sm:$0xff] %vm3087, %v6236
        %6311 = vst.msk [vmem:[#allocation4 + $0x4f8] sm:$0xff] %vm3087, %v6238
        %6312 = vst.msk [vmem:[#allocation4 + $0x530] sm:$0xff] %vm3087, %v6240
        %6313 = vst.msk [vmem:[#allocation4 + $0x568] sm:$0xff] %vm3087, %v6242
        %6314 = vst.msk [vmem:[#allocation4 + $0x5a0] sm:$0xff] %vm3087, %v6244
        %6315 = vst.msk [vmem:[#allocation4 + $0x5d8] sm:$0xff] %vm3087, %v6246
        %6316 = vst.msk [vmem:[#allocation4 + $0x610] sm:$0xff] %vm3087, %v6248
        %6317 = vst.msk [vmem:[#allocation4 + $0x648] sm:$0xff] %vm3087, %v6250
        %6318 = vst.msk [vmem:[#allocation4 + $0x680] sm:$0xff] %vm3087, %v6252
        %6319 = vst.msk [vmem:[#allocation4 + $0x6b8] sm:$0xff] %vm3087, %v6254
        %6320 = vst.msk [vmem:[#allocation4 + $0x6f0] sm:$0xff] %vm3087, %v6256
        %v6321 = vld [vmem:[#allocation2 + $0x49] sm:$0xff]
        %v6322 = vld [vmem:[#allocation2 + $0x51] sm:$0xff]
        %v6323 = vld [vmem:[#allocation2 + $0x59] sm:$0xff]
        %v6324 = vld [vmem:[#allocation2 + $0x61] sm:$0xff]
        %v6325 = vld [vmem:[#allocation2 + $0x69] sm:$0xff]
        %v6326 = vld [vmem:[#allocation2 + $0x71] sm:$0xff]
        %v6327 = vld [vmem:[#allocation2 + $0x79] sm:$0xff]
        %v6328 = vld [vmem:[#allocation2 + $0x81] sm:$0xff]
        %v6329 = vld [vmem:[#allocation2 + $0x89] sm:$0xff]
        %v6330 = vld [vmem:[#allocation2 + $0x91] sm:$0xff]
        %v6331 = vld [vmem:[#allocation2 + $0x99] sm:$0xff]
        %v6332 = vld [vmem:[#allocation2 + $0xa1] sm:$0xff]
        %v6333 = vld [vmem:[#allocation2 + $0xa9] sm:$0xff]
        %v6334 = vld [vmem:[#allocation2 + $0xb1] sm:$0xff]
        %v6335 = vld [vmem:[#allocation2 + $0xb9] sm:$0xff]
        %v6336 = vld [vmem:[#allocation2 + $0xc1] sm:$0xff]
        %v6337 = vld [vmem:[#allocation2 + $0xc9] sm:$0xff]
        %v6338 = vld [vmem:[#allocation2 + $0xd1] sm:$0xff]
        %v6339 = vld [vmem:[#allocation2 + $0xd9] sm:$0xff]
        %v6340 = vld [vmem:[#allocation2 + $0xe1] sm:$0xff]
        %v6341 = vld [vmem:[#allocation2 + $0xe9] sm:$0xff]
        %v6342 = vld [vmem:[#allocation2 + $0xf1] sm:$0xff]
        %v6343 = vld [vmem:[#allocation2 + $0xf9] sm:$0xff]
        %v6344 = vld [vmem:[#allocation2 + $0x101] sm:$0xff]
        %v6345 = vld [vmem:[#allocation2 + $0x109] sm:$0xff]
        %v6346 = vld [vmem:[#allocation2 + $0x111] sm:$0xff]
        %v6347 = vld [vmem:[#allocation2 + $0x119] sm:$0xff]
        %v6348 = vld [vmem:[#allocation2 + $0x121] sm:$0xff]
        %v6349 = vld [vmem:[#allocation2 + $0x129] sm:$0xff]
        %v6350 = vld [vmem:[#allocation2 + $0x131] sm:$0xff]
        %v6351 = vld [vmem:[#allocation2 + $0x139] sm:$0xff]
        %v6352 = vld [vmem:[#allocation2 + $0x141] sm:$0xff]
        %6385 = vrot.lane.b32.xlu0 %v6321, 96
        %v6386 = vpop.permute.xlu0 %6385
        %6387 = vrot.lane.b32.xlu0 %v6322, 96
        %v6388 = vpop.permute.xlu0 %6387
        %6389 = vrot.lane.b32.xlu0 %v6323, 96
        %v6390 = vpop.permute.xlu0 %6389
        %6391 = vrot.lane.b32.xlu0 %v6324, 96
        %v6392 = vpop.permute.xlu0 %6391
        %6393 = vrot.lane.b32.xlu0 %v6325, 96
        %v6394 = vpop.permute.xlu0 %6393
        %6395 = vrot.lane.b32.xlu0 %v6326, 96
        %v6396 = vpop.permute.xlu0 %6395
        %6397 = vrot.lane.b32.xlu0 %v6327, 96
        %v6398 = vpop.permute.xlu0 %6397
        %6399 = vrot.lane.b32.xlu0 %v6328, 96
        %v6400 = vpop.permute.xlu0 %6399
        %6401 = vrot.lane.b32.xlu0 %v6329, 96
        %v6402 = vpop.permute.xlu0 %6401
        %6403 = vrot.lane.b32.xlu0 %v6330, 96
        %v6404 = vpop.permute.xlu0 %6403
        %6405 = vrot.lane.b32.xlu0 %v6331, 96
        %v6406 = vpop.permute.xlu0 %6405
        %6407 = vrot.lane.b32.xlu0 %v6332, 96
        %v6408 = vpop.permute.xlu0 %6407
        %6409 = vrot.lane.b32.xlu0 %v6333, 96
        %v6410 = vpop.permute.xlu0 %6409
        %6411 = vrot.lane.b32.xlu0 %v6334, 96
        %v6412 = vpop.permute.xlu0 %6411
        %6413 = vrot.lane.b32.xlu0 %v6335, 96
        %v6414 = vpop.permute.xlu0 %6413
        %6415 = vrot.lane.b32.xlu0 %v6336, 96
        %v6416 = vpop.permute.xlu0 %6415
        %6417 = vrot.lane.b32.xlu0 %v6337, 96
        %v6418 = vpop.permute.xlu0 %6417
        %6419 = vrot.lane.b32.xlu0 %v6338, 96
        %v6420 = vpop.permute.xlu0 %6419
        %6421 = vrot.lane.b32.xlu0 %v6339, 96
        %v6422 = vpop.permute.xlu0 %6421
        %6423 = vrot.lane.b32.xlu0 %v6340, 96
        %v6424 = vpop.permute.xlu0 %6423
        %6425 = vrot.lane.b32.xlu0 %v6341, 96
        %v6426 = vpop.permute.xlu0 %6425
        %6427 = vrot.lane.b32.xlu0 %v6342, 96
        %v6428 = vpop.permute.xlu0 %6427
        %6429 = vrot.lane.b32.xlu0 %v6343, 96
        %v6430 = vpop.permute.xlu0 %6429
        %6431 = vrot.lane.b32.xlu0 %v6344, 96
        %v6432 = vpop.permute.xlu0 %6431
        %6433 = vrot.lane.b32.xlu0 %v6345, 96
        %v6434 = vpop.permute.xlu0 %6433
        %6435 = vrot.lane.b32.xlu0 %v6346, 96
        %v6436 = vpop.permute.xlu0 %6435
        %6437 = vrot.lane.b32.xlu0 %v6347, 96
        %v6438 = vpop.permute.xlu0 %6437
        %6439 = vrot.lane.b32.xlu0 %v6348, 96
        %v6440 = vpop.permute.xlu0 %6439
        %6441 = vrot.lane.b32.xlu0 %v6349, 96
        %v6442 = vpop.permute.xlu0 %6441
        %6443 = vrot.lane.b32.xlu0 %v6350, 96
        %v6444 = vpop.permute.xlu0 %6443
        %6445 = vrot.lane.b32.xlu0 %v6351, 96
        %v6446 = vpop.permute.xlu0 %6445
        %6447 = vrot.lane.b32.xlu0 %v6352, 96
        %v6448 = vpop.permute.xlu0 %6447
        %6481 = vst.msk [vmem:[#allocation4 + $0x28] sm:$0xff] %vm3280, %v6386
        %6482 = vst.msk [vmem:[#allocation4 + $0x60] sm:$0xff] %vm3280, %v6388
        %6483 = vst.msk [vmem:[#allocation4 + $0x98] sm:$0xff] %vm3280, %v6390
        %6484 = vst.msk [vmem:[#allocation4 + $0xd0] sm:$0xff] %vm3280, %v6392
        %6485 = vst.msk [vmem:[#allocation4 + $0x108] sm:$0xff] %vm3280, %v6394
        %6486 = vst.msk [vmem:[#allocation4 + $0x140] sm:$0xff] %vm3280, %v6396
        %6487 = vst.msk [vmem:[#allocation4 + $0x178] sm:$0xff] %vm3280, %v6398
        %6488 = vst.msk [vmem:[#allocation4 + $0x1b0] sm:$0xff] %vm3280, %v6400
        %6489 = vst.msk [vmem:[#allocation4 + $0x1e8] sm:$0xff] %vm3280, %v6402
        %6490 = vst.msk [vmem:[#allocation4 + $0x220] sm:$0xff] %vm3280, %v6404
        %6491 = vst.msk [vmem:[#allocation4 + $0x258] sm:$0xff] %vm3280, %v6406
        %6492 = vst.msk [vmem:[#allocation4 + $0x290] sm:$0xff] %vm3280, %v6408
        %6493 = vst.msk [vmem:[#allocation4 + $0x2c8] sm:$0xff] %vm3280, %v6410
        %6494 = vst.msk [vmem:[#allocation4 + $0x300] sm:$0xff] %vm3280, %v6412
        %6495 = vst.msk [vmem:[#allocation4 + $0x338] sm:$0xff] %vm3280, %v6414
        %6496 = vst.msk [vmem:[#allocation4 + $0x370] sm:$0xff] %vm3280, %v6416
        %6497 = vst.msk [vmem:[#allocation4 + $0x3a8] sm:$0xff] %vm3280, %v6418
        %6498 = vst.msk [vmem:[#allocation4 + $0x3e0] sm:$0xff] %vm3280, %v6420
        %6499 = vst.msk [vmem:[#allocation4 + $0x418] sm:$0xff] %vm3280, %v6422
        %6500 = vst.msk [vmem:[#allocation4 + $0x450] sm:$0xff] %vm3280, %v6424
        %6501 = vst.msk [vmem:[#allocation4 + $0x488] sm:$0xff] %vm3280, %v6426
        %6502 = vst.msk [vmem:[#allocation4 + $0x4c0] sm:$0xff] %vm3280, %v6428
        %6503 = vst.msk [vmem:[#allocation4 + $0x4f8] sm:$0xff] %vm3280, %v6430
        %6504 = vst.msk [vmem:[#allocation4 + $0x530] sm:$0xff] %vm3280, %v6432
        %6505 = vst.msk [vmem:[#allocation4 + $0x568] sm:$0xff] %vm3280, %v6434
        %6506 = vst.msk [vmem:[#allocation4 + $0x5a0] sm:$0xff] %vm3280, %v6436
        %6507 = vst.msk [vmem:[#allocation4 + $0x5d8] sm:$0xff] %vm3280, %v6438
        %6508 = vst.msk [vmem:[#allocation4 + $0x610] sm:$0xff] %vm3280, %v6440
        %6509 = vst.msk [vmem:[#allocation4 + $0x648] sm:$0xff] %vm3280, %v6442
        %6510 = vst.msk [vmem:[#allocation4 + $0x680] sm:$0xff] %vm3280, %v6444
        %6511 = vst.msk [vmem:[#allocation4 + $0x6b8] sm:$0xff] %vm3280, %v6446
        %6512 = vst.msk [vmem:[#allocation4 + $0x6f0] sm:$0xff] %vm3280, %v6448
        %v6513 = vld [vmem:[#allocation2 + $0x4a] sm:$0xff]
        %v6514 = vld [vmem:[#allocation2 + $0x52] sm:$0xff]
        %v6515 = vld [vmem:[#allocation2 + $0x5a] sm:$0xff]
        %v6516 = vld [vmem:[#allocation2 + $0x62] sm:$0xff]
        %v6517 = vld [vmem:[#allocation2 + $0x6a] sm:$0xff]
        %v6518 = vld [vmem:[#allocation2 + $0x72] sm:$0xff]
        %v6519 = vld [vmem:[#allocation2 + $0x7a] sm:$0xff]
        %v6520 = vld [vmem:[#allocation2 + $0x82] sm:$0xff]
        %v6521 = vld [vmem:[#allocation2 + $0x8a] sm:$0xff]
        %v6522 = vld [vmem:[#allocation2 + $0x92] sm:$0xff]
        %v6523 = vld [vmem:[#allocation2 + $0x9a] sm:$0xff]
        %v6524 = vld [vmem:[#allocation2 + $0xa2] sm:$0xff]
        %v6525 = vld [vmem:[#allocation2 + $0xaa] sm:$0xff]
        %v6526 = vld [vmem:[#allocation2 + $0xb2] sm:$0xff]
        %v6527 = vld [vmem:[#allocation2 + $0xba] sm:$0xff]
        %v6528 = vld [vmem:[#allocation2 + $0xc2] sm:$0xff]
        %v6529 = vld [vmem:[#allocation2 + $0xca] sm:$0xff]
        %v6530 = vld [vmem:[#allocation2 + $0xd2] sm:$0xff]
        %v6531 = vld [vmem:[#allocation2 + $0xda] sm:$0xff]
        %v6532 = vld [vmem:[#allocation2 + $0xe2] sm:$0xff]
        %v6533 = vld [vmem:[#allocation2 + $0xea] sm:$0xff]
        %v6534 = vld [vmem:[#allocation2 + $0xf2] sm:$0xff]
        %v6535 = vld [vmem:[#allocation2 + $0xfa] sm:$0xff]
        %v6536 = vld [vmem:[#allocation2 + $0x102] sm:$0xff]
        %v6537 = vld [vmem:[#allocation2 + $0x10a] sm:$0xff]
        %v6538 = vld [vmem:[#allocation2 + $0x112] sm:$0xff]
        %v6539 = vld [vmem:[#allocation2 + $0x11a] sm:$0xff]
        %v6540 = vld [vmem:[#allocation2 + $0x122] sm:$0xff]
        %v6541 = vld [vmem:[#allocation2 + $0x12a] sm:$0xff]
        %v6542 = vld [vmem:[#allocation2 + $0x132] sm:$0xff]
        %v6543 = vld [vmem:[#allocation2 + $0x13a] sm:$0xff]
        %v6544 = vld [vmem:[#allocation2 + $0x142] sm:$0xff]
        %6545 = vst.msk [vmem:[#allocation4 + $0x30] sm:$0xff] %vm465, %v6513
        %6546 = vst.msk [vmem:[#allocation4 + $0x68] sm:$0xff] %vm465, %v6514
        %6547 = vst.msk [vmem:[#allocation4 + $0xa0] sm:$0xff] %vm465, %v6515
        %6548 = vst.msk [vmem:[#allocation4 + $0xd8] sm:$0xff] %vm465, %v6516
        %6549 = vst.msk [vmem:[#allocation4 + $0x110] sm:$0xff] %vm465, %v6517
        %6550 = vst.msk [vmem:[#allocation4 + $0x148] sm:$0xff] %vm465, %v6518
        %6551 = vst.msk [vmem:[#allocation4 + $0x180] sm:$0xff] %vm465, %v6519
        %6552 = vst.msk [vmem:[#allocation4 + $0x1b8] sm:$0xff] %vm465, %v6520
        %6553 = vst.msk [vmem:[#allocation4 + $0x1f0] sm:$0xff] %vm465, %v6521
        %6554 = vst.msk [vmem:[#allocation4 + $0x228] sm:$0xff] %vm465, %v6522
        %6555 = vst.msk [vmem:[#allocation4 + $0x260] sm:$0xff] %vm465, %v6523
        %6556 = vst.msk [vmem:[#allocation4 + $0x298] sm:$0xff] %vm465, %v6524
        %6557 = vst.msk [vmem:[#allocation4 + $0x2d0] sm:$0xff] %vm465, %v6525
        %6558 = vst.msk [vmem:[#allocation4 + $0x308] sm:$0xff] %vm465, %v6526
        %6559 = vst.msk [vmem:[#allocation4 + $0x340] sm:$0xff] %vm465, %v6527
        %6560 = vst.msk [vmem:[#allocation4 + $0x378] sm:$0xff] %vm465, %v6528
        %6561 = vst.msk [vmem:[#allocation4 + $0x3b0] sm:$0xff] %vm465, %v6529
        %6562 = vst.msk [vmem:[#allocation4 + $0x3e8] sm:$0xff] %vm465, %v6530
        %6563 = vst.msk [vmem:[#allocation4 + $0x420] sm:$0xff] %vm465, %v6531
        %6564 = vst.msk [vmem:[#allocation4 + $0x458] sm:$0xff] %vm465, %v6532
        %6565 = vst.msk [vmem:[#allocation4 + $0x490] sm:$0xff] %vm465, %v6533
        %6566 = vst.msk [vmem:[#allocation4 + $0x4c8] sm:$0xff] %vm465, %v6534
        %6567 = vst.msk [vmem:[#allocation4 + $0x500] sm:$0xff] %vm465, %v6535
        %6568 = vst.msk [vmem:[#allocation4 + $0x538] sm:$0xff] %vm465, %v6536
        %6569 = vst.msk [vmem:[#allocation4 + $0x570] sm:$0xff] %vm465, %v6537
        %6570 = vst.msk [vmem:[#allocation4 + $0x5a8] sm:$0xff] %vm465, %v6538
        %6571 = vst.msk [vmem:[#allocation4 + $0x5e0] sm:$0xff] %vm465, %v6539
        %6572 = vst.msk [vmem:[#allocation4 + $0x618] sm:$0xff] %vm465, %v6540
        %6573 = vst.msk [vmem:[#allocation4 + $0x650] sm:$0xff] %vm465, %v6541
        %6574 = vst.msk [vmem:[#allocation4 + $0x688] sm:$0xff] %vm465, %v6542
        %6575 = vst.msk [vmem:[#allocation4 + $0x6c0] sm:$0xff] %vm465, %v6543
        %6576 = vst.msk [vmem:[#allocation4 + $0x6f8] sm:$0xff] %vm465, %v6544
        %v6577 = vld [vmem:[#allocation4] sm:$0xff]
        %v6578 = vld [vmem:[#allocation4 + $0x8] sm:$0xff]
        %v6579 = vld [vmem:[#allocation4 + $0x10] sm:$0xff]
        %v6580 = vld [vmem:[#allocation4 + $0x18] sm:$0xff]
        %v6581 = vld [vmem:[#allocation4 + $0x20] sm:$0xff]
        %v6582 = vld [vmem:[#allocation4 + $0x28] sm:$0xff]
        %v6583 = vld [vmem:[#allocation4 + $0x30] sm:$0xff]
        %v6584 = vld [vmem:[#allocation4 + $0x38] sm:$0xff]
        %v6585 = vld [vmem:[#allocation4 + $0x40] sm:$0xff]
        %v6586 = vld [vmem:[#allocation4 + $0x48] sm:$0xff]
        %v6587 = vld [vmem:[#allocation4 + $0x50] sm:$0xff]
        %v6588 = vld [vmem:[#allocation4 + $0x58] sm:$0xff]
        %v6589 = vld [vmem:[#allocation4 + $0x60] sm:$0xff]
        %v6590 = vld [vmem:[#allocation4 + $0x68] sm:$0xff]
        %v6591 = vld [vmem:[#allocation4 + $0x70] sm:$0xff]
        %v6592 = vld [vmem:[#allocation4 + $0x78] sm:$0xff]
        %v6593 = vld [vmem:[#allocation4 + $0x80] sm:$0xff]
        %v6594 = vld [vmem:[#allocation4 + $0x88] sm:$0xff]
        %v6595 = vld [vmem:[#allocation4 + $0x90] sm:$0xff]
        %v6596 = vld [vmem:[#allocation4 + $0x98] sm:$0xff]
        %v6597 = vld [vmem:[#allocation4 + $0xa0] sm:$0xff]
        %v6598 = vld [vmem:[#allocation4 + $0xa8] sm:$0xff]
        %v6599 = vld [vmem:[#allocation4 + $0xb0] sm:$0xff]
        %v6600 = vld [vmem:[#allocation4 + $0xb8] sm:$0xff]
        %v6601 = vld [vmem:[#allocation4 + $0xc0] sm:$0xff]
        %v6602 = vld [vmem:[#allocation4 + $0xc8] sm:$0xff]
        %v6603 = vld [vmem:[#allocation4 + $0xd0] sm:$0xff]
        %v6604 = vld [vmem:[#allocation4 + $0xd8] sm:$0xff]
        %v6605 = vld [vmem:[#allocation4 + $0xe0] sm:$0xff]
        %v6606 = vld [vmem:[#allocation4 + $0xe8] sm:$0xff]
        %v6607 = vld [vmem:[#allocation4 + $0xf0] sm:$0xff]
        %v6608 = vld [vmem:[#allocation4 + $0xf8] sm:$0xff]
        %v6609 = vld [vmem:[#allocation4 + $0x100] sm:$0xff]
        %v6610 = vld [vmem:[#allocation4 + $0x108] sm:$0xff]
        %v6611 = vld [vmem:[#allocation4 + $0x110] sm:$0xff]
        %v6612 = vld [vmem:[#allocation4 + $0x118] sm:$0xff]
        %v6613 = vld [vmem:[#allocation4 + $0x120] sm:$0xff]
        %v6614 = vld [vmem:[#allocation4 + $0x128] sm:$0xff]
        %v6615 = vld [vmem:[#allocation4 + $0x130] sm:$0xff]
        %v6616 = vld [vmem:[#allocation4 + $0x138] sm:$0xff]
        %v6617 = vld [vmem:[#allocation4 + $0x140] sm:$0xff]
        %v6618 = vld [vmem:[#allocation4 + $0x148] sm:$0xff]
        %v6619 = vld [vmem:[#allocation4 + $0x150] sm:$0xff]
        %v6620 = vld [vmem:[#allocation4 + $0x158] sm:$0xff]
        %v6621 = vld [vmem:[#allocation4 + $0x160] sm:$0xff]
        %v6622 = vld [vmem:[#allocation4 + $0x168] sm:$0xff]
        %v6623 = vld [vmem:[#allocation4 + $0x170] sm:$0xff]
        %v6624 = vld [vmem:[#allocation4 + $0x178] sm:$0xff]
        %v6625 = vld [vmem:[#allocation4 + $0x180] sm:$0xff]
        %v6626 = vld [vmem:[#allocation4 + $0x188] sm:$0xff]
        %v6627 = vld [vmem:[#allocation4 + $0x190] sm:$0xff]
        %v6628 = vld [vmem:[#allocation4 + $0x198] sm:$0xff]
        %v6629 = vld [vmem:[#allocation4 + $0x1a0] sm:$0xff]
        %v6630 = vld [vmem:[#allocation4 + $0x1a8] sm:$0xff]
        %v6631 = vld [vmem:[#allocation4 + $0x1b0] sm:$0xff]
        %v6632 = vld [vmem:[#allocation4 + $0x1b8] sm:$0xff]
        %v6633 = vld [vmem:[#allocation4 + $0x1c0] sm:$0xff]
        %v6634 = vld [vmem:[#allocation4 + $0x1c8] sm:$0xff]
        %v6635 = vld [vmem:[#allocation4 + $0x1d0] sm:$0xff]
        %v6636 = vld [vmem:[#allocation4 + $0x1d8] sm:$0xff]
        %v6637 = vld [vmem:[#allocation4 + $0x1e0] sm:$0xff]
        %v6638 = vld [vmem:[#allocation4 + $0x1e8] sm:$0xff]
        %v6639 = vld [vmem:[#allocation4 + $0x1f0] sm:$0xff]
        %v6640 = vld [vmem:[#allocation4 + $0x1f8] sm:$0xff]
        %v6641 = vld [vmem:[#allocation4 + $0x200] sm:$0xff]
        %v6642 = vld [vmem:[#allocation4 + $0x208] sm:$0xff]
        %v6643 = vld [vmem:[#allocation4 + $0x210] sm:$0xff]
        %v6644 = vld [vmem:[#allocation4 + $0x218] sm:$0xff]
        %v6645 = vld [vmem:[#allocation4 + $0x220] sm:$0xff]
        %v6646 = vld [vmem:[#allocation4 + $0x228] sm:$0xff]
        %v6647 = vld [vmem:[#allocation4 + $0x230] sm:$0xff]
        %v6648 = vld [vmem:[#allocation4 + $0x238] sm:$0xff]
        %v6649 = vld [vmem:[#allocation4 + $0x240] sm:$0xff]
        %v6650 = vld [vmem:[#allocation4 + $0x248] sm:$0xff]
        %v6651 = vld [vmem:[#allocation4 + $0x250] sm:$0xff]
        %v6652 = vld [vmem:[#allocation4 + $0x258] sm:$0xff]
        %v6653 = vld [vmem:[#allocation4 + $0x260] sm:$0xff]
        %v6654 = vld [vmem:[#allocation4 + $0x268] sm:$0xff]
        %v6655 = vld [vmem:[#allocation4 + $0x270] sm:$0xff]
        %v6656 = vld [vmem:[#allocation4 + $0x278] sm:$0xff]
        %v6657 = vld [vmem:[#allocation4 + $0x280] sm:$0xff]
        %v6658 = vld [vmem:[#allocation4 + $0x288] sm:$0xff]
        %v6659 = vld [vmem:[#allocation4 + $0x290] sm:$0xff]
        %v6660 = vld [vmem:[#allocation4 + $0x298] sm:$0xff]
        %v6661 = vld [vmem:[#allocation4 + $0x2a0] sm:$0xff]
        %v6662 = vld [vmem:[#allocation4 + $0x2a8] sm:$0xff]
        %v6663 = vld [vmem:[#allocation4 + $0x2b0] sm:$0xff]
        %v6664 = vld [vmem:[#allocation4 + $0x2b8] sm:$0xff]
        %v6665 = vld [vmem:[#allocation4 + $0x2c0] sm:$0xff]
        %v6666 = vld [vmem:[#allocation4 + $0x2c8] sm:$0xff]
        %v6667 = vld [vmem:[#allocation4 + $0x2d0] sm:$0xff]
        %v6668 = vld [vmem:[#allocation4 + $0x2d8] sm:$0xff]
        %v6669 = vld [vmem:[#allocation4 + $0x2e0] sm:$0xff]
        %v6670 = vld [vmem:[#allocation4 + $0x2e8] sm:$0xff]
        %v6671 = vld [vmem:[#allocation4 + $0x2f0] sm:$0xff]
        %v6672 = vld [vmem:[#allocation4 + $0x2f8] sm:$0xff]
        %v6673 = vld [vmem:[#allocation4 + $0x300] sm:$0xff]
        %v6674 = vld [vmem:[#allocation4 + $0x308] sm:$0xff]
        %v6675 = vld [vmem:[#allocation4 + $0x310] sm:$0xff]
        %v6676 = vld [vmem:[#allocation4 + $0x318] sm:$0xff]
        %v6677 = vld [vmem:[#allocation4 + $0x320] sm:$0xff]
        %v6678 = vld [vmem:[#allocation4 + $0x328] sm:$0xff]
        %v6679 = vld [vmem:[#allocation4 + $0x330] sm:$0xff]
        %v6680 = vld [vmem:[#allocation4 + $0x338] sm:$0xff]
        %v6681 = vld [vmem:[#allocation4 + $0x340] sm:$0xff]
        %v6682 = vld [vmem:[#allocation4 + $0x348] sm:$0xff]
        %v6683 = vld [vmem:[#allocation4 + $0x350] sm:$0xff]
        %v6684 = vld [vmem:[#allocation4 + $0x358] sm:$0xff]
        %v6685 = vld [vmem:[#allocation4 + $0x360] sm:$0xff]
        %v6686 = vld [vmem:[#allocation4 + $0x368] sm:$0xff]
        %v6687 = vld [vmem:[#allocation4 + $0x370] sm:$0xff]
        %v6688 = vld [vmem:[#allocation4 + $0x378] sm:$0xff]
        %v6689 = vld [vmem:[#allocation4 + $0x380] sm:$0xff]
        %v6690 = vld [vmem:[#allocation4 + $0x388] sm:$0xff]
        %v6691 = vld [vmem:[#allocation4 + $0x390] sm:$0xff]
        %v6692 = vld [vmem:[#allocation4 + $0x398] sm:$0xff]
        %v6693 = vld [vmem:[#allocation4 + $0x3a0] sm:$0xff]
        %v6694 = vld [vmem:[#allocation4 + $0x3a8] sm:$0xff]
        %v6695 = vld [vmem:[#allocation4 + $0x3b0] sm:$0xff]
        %v6696 = vld [vmem:[#allocation4 + $0x3b8] sm:$0xff]
        %v6697 = vld [vmem:[#allocation4 + $0x3c0] sm:$0xff]
        %v6698 = vld [vmem:[#allocation4 + $0x3c8] sm:$0xff]
        %v6699 = vld [vmem:[#allocation4 + $0x3d0] sm:$0xff]
        %v6700 = vld [vmem:[#allocation4 + $0x3d8] sm:$0xff]
        %v6701 = vld [vmem:[#allocation4 + $0x3e0] sm:$0xff]
        %v6702 = vld [vmem:[#allocation4 + $0x3e8] sm:$0xff]
        %v6703 = vld [vmem:[#allocation4 + $0x3f0] sm:$0xff]
        %v6704 = vld [vmem:[#allocation4 + $0x3f8] sm:$0xff]
        %v6705 = vld [vmem:[#allocation4 + $0x400] sm:$0xff]
        %v6706 = vld [vmem:[#allocation4 + $0x408] sm:$0xff]
        %v6707 = vld [vmem:[#allocation4 + $0x410] sm:$0xff]
        %v6708 = vld [vmem:[#allocation4 + $0x418] sm:$0xff]
        %v6709 = vld [vmem:[#allocation4 + $0x420] sm:$0xff]
        %v6710 = vld [vmem:[#allocation4 + $0x428] sm:$0xff]
        %v6711 = vld [vmem:[#allocation4 + $0x430] sm:$0xff]
        %v6712 = vld [vmem:[#allocation4 + $0x438] sm:$0xff]
        %v6713 = vld [vmem:[#allocation4 + $0x440] sm:$0xff]
        %v6714 = vld [vmem:[#allocation4 + $0x448] sm:$0xff]
        %v6715 = vld [vmem:[#allocation4 + $0x450] sm:$0xff]
        %v6716 = vld [vmem:[#allocation4 + $0x458] sm:$0xff]
        %v6717 = vld [vmem:[#allocation4 + $0x460] sm:$0xff]
        %v6718 = vld [vmem:[#allocation4 + $0x468] sm:$0xff]
        %v6719 = vld [vmem:[#allocation4 + $0x470] sm:$0xff]
        %v6720 = vld [vmem:[#allocation4 + $0x478] sm:$0xff]
        %v6721 = vld [vmem:[#allocation4 + $0x480] sm:$0xff]
        %v6722 = vld [vmem:[#allocation4 + $0x488] sm:$0xff]
        %v6723 = vld [vmem:[#allocation4 + $0x490] sm:$0xff]
        %v6724 = vld [vmem:[#allocation4 + $0x498] sm:$0xff]
        %v6725 = vld [vmem:[#allocation4 + $0x4a0] sm:$0xff]
        %v6726 = vld [vmem:[#allocation4 + $0x4a8] sm:$0xff]
        %v6727 = vld [vmem:[#allocation4 + $0x4b0] sm:$0xff]
        %v6728 = vld [vmem:[#allocation4 + $0x4b8] sm:$0xff]
        %v6729 = vld [vmem:[#allocation4 + $0x4c0] sm:$0xff]
        %v6730 = vld [vmem:[#allocation4 + $0x4c8] sm:$0xff]
        %v6731 = vld [vmem:[#allocation4 + $0x4d0] sm:$0xff]
        %v6732 = vld [vmem:[#allocation4 + $0x4d8] sm:$0xff]
        %v6733 = vld [vmem:[#allocation4 + $0x4e0] sm:$0xff]
        %v6734 = vld [vmem:[#allocation4 + $0x4e8] sm:$0xff]
        %v6735 = vld [vmem:[#allocation4 + $0x4f0] sm:$0xff]
        %v6736 = vld [vmem:[#allocation4 + $0x4f8] sm:$0xff]
        %v6737 = vld [vmem:[#allocation4 + $0x500] sm:$0xff]
        %v6738 = vld [vmem:[#allocation4 + $0x508] sm:$0xff]
        %v6739 = vld [vmem:[#allocation4 + $0x510] sm:$0xff]
        %v6740 = vld [vmem:[#allocation4 + $0x518] sm:$0xff]
        %v6741 = vld [vmem:[#allocation4 + $0x520] sm:$0xff]
        %v6742 = vld [vmem:[#allocation4 + $0x528] sm:$0xff]
        %v6743 = vld [vmem:[#allocation4 + $0x530] sm:$0xff]
        %v6744 = vld [vmem:[#allocation4 + $0x538] sm:$0xff]
        %v6745 = vld [vmem:[#allocation4 + $0x540] sm:$0xff]
        %v6746 = vld [vmem:[#allocation4 + $0x548] sm:$0xff]
        %v6747 = vld [vmem:[#allocation4 + $0x550] sm:$0xff]
        %v6748 = vld [vmem:[#allocation4 + $0x558] sm:$0xff]
        %v6749 = vld [vmem:[#allocation4 + $0x560] sm:$0xff]
        %v6750 = vld [vmem:[#allocation4 + $0x568] sm:$0xff]
        %v6751 = vld [vmem:[#allocation4 + $0x570] sm:$0xff]
        %v6752 = vld [vmem:[#allocation4 + $0x578] sm:$0xff]
        %v6753 = vld [vmem:[#allocation4 + $0x580] sm:$0xff]
        %v6754 = vld [vmem:[#allocation4 + $0x588] sm:$0xff]
        %v6755 = vld [vmem:[#allocation4 + $0x590] sm:$0xff]
        %v6756 = vld [vmem:[#allocation4 + $0x598] sm:$0xff]
        %v6757 = vld [vmem:[#allocation4 + $0x5a0] sm:$0xff]
        %v6758 = vld [vmem:[#allocation4 + $0x5a8] sm:$0xff]
        %v6759 = vld [vmem:[#allocation4 + $0x5b0] sm:$0xff]
        %v6760 = vld [vmem:[#allocation4 + $0x5b8] sm:$0xff]
        %v6761 = vld [vmem:[#allocation4 + $0x5c0] sm:$0xff]
        %v6762 = vld [vmem:[#allocation4 + $0x5c8] sm:$0xff]
        %v6763 = vld [vmem:[#allocation4 + $0x5d0] sm:$0xff]
        %v6764 = vld [vmem:[#allocation4 + $0x5d8] sm:$0xff]
        %v6765 = vld [vmem:[#allocation4 + $0x5e0] sm:$0xff]
        %v6766 = vld [vmem:[#allocation4 + $0x5e8] sm:$0xff]
        %v6767 = vld [vmem:[#allocation4 + $0x5f0] sm:$0xff]
        %v6768 = vld [vmem:[#allocation4 + $0x5f8] sm:$0xff]
        %v6769 = vld [vmem:[#allocation4 + $0x600] sm:$0xff]
        %v6770 = vld [vmem:[#allocation4 + $0x608] sm:$0xff]
        %v6771 = vld [vmem:[#allocation4 + $0x610] sm:$0xff]
        %v6772 = vld [vmem:[#allocation4 + $0x618] sm:$0xff]
        %v6773 = vld [vmem:[#allocation4 + $0x620] sm:$0xff]
        %v6774 = vld [vmem:[#allocation4 + $0x628] sm:$0xff]
        %v6775 = vld [vmem:[#allocation4 + $0x630] sm:$0xff]
        %v6776 = vld [vmem:[#allocation4 + $0x638] sm:$0xff]
        %v6777 = vld [vmem:[#allocation4 + $0x640] sm:$0xff]
        %v6778 = vld [vmem:[#allocation4 + $0x648] sm:$0xff]
        %v6779 = vld [vmem:[#allocation4 + $0x650] sm:$0xff]
        %v6780 = vld [vmem:[#allocation4 + $0x658] sm:$0xff]
        %v6781 = vld [vmem:[#allocation4 + $0x660] sm:$0xff]
        %v6782 = vld [vmem:[#allocation4 + $0x668] sm:$0xff]
        %v6783 = vld [vmem:[#allocation4 + $0x670] sm:$0xff]
        %v6784 = vld [vmem:[#allocation4 + $0x678] sm:$0xff]
        %v6785 = vld [vmem:[#allocation4 + $0x680] sm:$0xff]
        %v6786 = vld [vmem:[#allocation4 + $0x688] sm:$0xff]
        %v6787 = vld [vmem:[#allocation4 + $0x690] sm:$0xff]
        %v6788 = vld [vmem:[#allocation4 + $0x698] sm:$0xff]
        %v6789 = vld [vmem:[#allocation4 + $0x6a0] sm:$0xff]
        %v6790 = vld [vmem:[#allocation4 + $0x6a8] sm:$0xff]
        %v6791 = vld [vmem:[#allocation4 + $0x6b0] sm:$0xff]
        %v6792 = vld [vmem:[#allocation4 + $0x6b8] sm:$0xff]
        %v6793 = vld [vmem:[#allocation4 + $0x6c0] sm:$0xff]
        %v6794 = vld [vmem:[#allocation4 + $0x6c8] sm:$0xff]
        %v6795 = vld [vmem:[#allocation4 + $0x6d0] sm:$0xff]
        %v6796 = vld [vmem:[#allocation4 + $0x6d8] sm:$0xff]
        %v6797 = vld [vmem:[#allocation4 + $0x6e0] sm:$0xff]
        %v6798 = vld [vmem:[#allocation4 + $0x6e8] sm:$0xff]
        %v6799 = vld [vmem:[#allocation4 + $0x6f0] sm:$0xff]
        %v6800 = vld [vmem:[#allocation4 + $0x6f8] sm:$0xff]
        %v6801 = vld [vmem:[%s4] sm:$0xff]
        %v6802 = vld [vmem:[%s4 + $0x8] sm:$0xff]
        %v6803 = vld [vmem:[%s4 + $0x10] sm:$0xff]
        %v6804 = vld [vmem:[%s4 + $0x18] sm:$0xff]
        %v6805 = vld [vmem:[%s4 + $0x20] sm:$0xff]
        %v6806 = vld [vmem:[%s4 + $0x28] sm:$0xff]
        %v6807 = vld [vmem:[%s4 + $0x30] sm:$0xff]
        %v6808 = vld [vmem:[%s4 + $0x38] sm:$0xff]
        %v6809 = vld [vmem:[%s4 + $0x40] sm:$0xff]
        %v6810 = vld [vmem:[%s4 + $0x48] sm:$0xff]
        %v6811 = vld [vmem:[%s4 + $0x50] sm:$0xff]
        %v6812 = vld [vmem:[%s4 + $0x58] sm:$0xff]
        %v6813 = vld [vmem:[%s4 + $0x60] sm:$0xff]
        %v6814 = vld [vmem:[%s4 + $0x68] sm:$0xff]
        %v6815 = vld [vmem:[%s4 + $0x70] sm:$0xff]
        %v6816 = vld [vmem:[%s4 + $0x78] sm:$0xff]
        %v6817 = vld [vmem:[%s4 + $0x80] sm:$0xff]
        %v6818 = vld [vmem:[%s4 + $0x88] sm:$0xff]
        %v6819 = vld [vmem:[%s4 + $0x90] sm:$0xff]
        %v6820 = vld [vmem:[%s4 + $0x98] sm:$0xff]
        %v6821 = vld [vmem:[%s4 + $0xa0] sm:$0xff]
        %v6822 = vld [vmem:[%s4 + $0xa8] sm:$0xff]
        %v6823 = vld [vmem:[%s4 + $0xb0] sm:$0xff]
        %v6824 = vld [vmem:[%s4 + $0xb8] sm:$0xff]
        %v6825 = vld [vmem:[%s4 + $0xc0] sm:$0xff]
        %v6826 = vld [vmem:[%s4 + $0xc8] sm:$0xff]
        %v6827 = vld [vmem:[%s4 + $0xd0] sm:$0xff]
        %v6828 = vld [vmem:[%s4 + $0xd8] sm:$0xff]
        %v6829 = vld [vmem:[%s4 + $0xe0] sm:$0xff]
        %v6830 = vld [vmem:[%s4 + $0xe8] sm:$0xff]
        %v6831 = vld [vmem:[%s4 + $0xf0] sm:$0xff]
        %v6832 = vld [vmem:[%s4 + $0xf8] sm:$0xff]
        %v6833 = vld [vmem:[%s4 + $0x100] sm:$0xff]
        %v6834 = vld [vmem:[%s4 + $0x108] sm:$0xff]
        %v6835 = vld [vmem:[%s4 + $0x110] sm:$0xff]
        %v6836 = vld [vmem:[%s4 + $0x118] sm:$0xff]
        %v6837 = vld [vmem:[%s4 + $0x120] sm:$0xff]
        %v6838 = vld [vmem:[%s4 + $0x128] sm:$0xff]
        %v6839 = vld [vmem:[%s4 + $0x130] sm:$0xff]
        %v6840 = vld [vmem:[%s4 + $0x138] sm:$0xff]
        %v6841 = vld [vmem:[%s4 + $0x140] sm:$0xff]
        %v6842 = vld [vmem:[%s4 + $0x148] sm:$0xff]
        %v6843 = vld [vmem:[%s4 + $0x150] sm:$0xff]
        %v6844 = vld [vmem:[%s4 + $0x158] sm:$0xff]
        %v6845 = vld [vmem:[%s4 + $0x160] sm:$0xff]
        %v6846 = vld [vmem:[%s4 + $0x168] sm:$0xff]
        %v6847 = vld [vmem:[%s4 + $0x170] sm:$0xff]
        %v6848 = vld [vmem:[%s4 + $0x178] sm:$0xff]
        %v6849 = vld [vmem:[%s4 + $0x180] sm:$0xff]
        %v6850 = vld [vmem:[%s4 + $0x188] sm:$0xff]
        %v6851 = vld [vmem:[%s4 + $0x190] sm:$0xff]
        %v6852 = vld [vmem:[%s4 + $0x198] sm:$0xff]
        %v6853 = vld [vmem:[%s4 + $0x1a0] sm:$0xff]
        %v6854 = vld [vmem:[%s4 + $0x1a8] sm:$0xff]
        %v6855 = vld [vmem:[%s4 + $0x1b0] sm:$0xff]
        %v6856 = vld [vmem:[%s4 + $0x1b8] sm:$0xff]
        %v6857 = vld [vmem:[%s4 + $0x1c0] sm:$0xff]
        %v6858 = vld [vmem:[%s4 + $0x1c8] sm:$0xff]
        %v6859 = vld [vmem:[%s4 + $0x1d0] sm:$0xff]
        %v6860 = vld [vmem:[%s4 + $0x1d8] sm:$0xff]
        %v6861 = vld [vmem:[%s4 + $0x1e0] sm:$0xff]
        %v6862 = vld [vmem:[%s4 + $0x1e8] sm:$0xff]
        %v6863 = vld [vmem:[%s4 + $0x1f0] sm:$0xff]
        %v6864 = vld [vmem:[%s4 + $0x1f8] sm:$0xff]
        %v6865 = vld [vmem:[%s4 + $0x200] sm:$0xff]
        %v6866 = vld [vmem:[%s4 + $0x208] sm:$0xff]
        %v6867 = vld [vmem:[%s4 + $0x210] sm:$0xff]
        %v6868 = vld [vmem:[%s4 + $0x218] sm:$0xff]
        %v6869 = vld [vmem:[%s4 + $0x220] sm:$0xff]
        %v6870 = vld [vmem:[%s4 + $0x228] sm:$0xff]
        %v6871 = vld [vmem:[%s4 + $0x230] sm:$0xff]
        %v6872 = vld [vmem:[%s4 + $0x238] sm:$0xff]
        %v6873 = vld [vmem:[%s4 + $0x240] sm:$0xff]
        %v6874 = vld [vmem:[%s4 + $0x248] sm:$0xff]
        %v6875 = vld [vmem:[%s4 + $0x250] sm:$0xff]
        %v6876 = vld [vmem:[%s4 + $0x258] sm:$0xff]
        %v6877 = vld [vmem:[%s4 + $0x260] sm:$0xff]
        %v6878 = vld [vmem:[%s4 + $0x268] sm:$0xff]
        %v6879 = vld [vmem:[%s4 + $0x270] sm:$0xff]
        %v6880 = vld [vmem:[%s4 + $0x278] sm:$0xff]
        %v6881 = vld [vmem:[%s4 + $0x280] sm:$0xff]
        %v6882 = vld [vmem:[%s4 + $0x288] sm:$0xff]
        %v6883 = vld [vmem:[%s4 + $0x290] sm:$0xff]
        %v6884 = vld [vmem:[%s4 + $0x298] sm:$0xff]
        %v6885 = vld [vmem:[%s4 + $0x2a0] sm:$0xff]
        %v6886 = vld [vmem:[%s4 + $0x2a8] sm:$0xff]
        %v6887 = vld [vmem:[%s4 + $0x2b0] sm:$0xff]
        %v6888 = vld [vmem:[%s4 + $0x2b8] sm:$0xff]
        %v6889 = vld [vmem:[%s4 + $0x2c0] sm:$0xff]
        %v6890 = vld [vmem:[%s4 + $0x2c8] sm:$0xff]
        %v6891 = vld [vmem:[%s4 + $0x2d0] sm:$0xff]
        %v6892 = vld [vmem:[%s4 + $0x2d8] sm:$0xff]
        %v6893 = vld [vmem:[%s4 + $0x2e0] sm:$0xff]
        %v6894 = vld [vmem:[%s4 + $0x2e8] sm:$0xff]
        %v6895 = vld [vmem:[%s4 + $0x2f0] sm:$0xff]
        %v6896 = vld [vmem:[%s4 + $0x2f8] sm:$0xff]
        %v6897 = vld [vmem:[%s4 + $0x300] sm:$0xff]
        %v6898 = vld [vmem:[%s4 + $0x308] sm:$0xff]
        %v6899 = vld [vmem:[%s4 + $0x310] sm:$0xff]
        %v6900 = vld [vmem:[%s4 + $0x318] sm:$0xff]
        %v6901 = vld [vmem:[%s5] sm:$0x1]
        %v6903 = vlaneseq
        %v6904 = vshrl.u32 %v6903, 7
        %v6905 = vsub.s32 0, %v6904
        %v6906 = vrot.slane %v6901, %v6905
        %v6909 = vsel %vm465, %v6583, 0
        %v6912 = vsel %vm465, %v6590, 0
        %v6915 = vsel %vm465, %v6597, 0
        %v6918 = vsel %vm465, %v6604, 0
        %v6921 = vsel %vm465, %v6611, 0
        %v6924 = vsel %vm465, %v6618, 0
        %v6927 = vsel %vm465, %v6625, 0
        %v6930 = vsel %vm465, %v6632, 0
        %v6933 = vsel %vm465, %v6639, 0
        %v6936 = vsel %vm465, %v6646, 0
        %v6939 = vsel %vm465, %v6653, 0
        %v6942 = vsel %vm465, %v6660, 0
        %v6945 = vsel %vm465, %v6667, 0
        %v6948 = vsel %vm465, %v6674, 0
        %v6951 = vsel %vm465, %v6681, 0
        %v6954 = vsel %vm465, %v6688, 0
        %v6957 = vsel %vm465, %v6695, 0
        %v6960 = vsel %vm465, %v6702, 0
        %v6963 = vsel %vm465, %v6709, 0
        %v6966 = vsel %vm465, %v6716, 0
        %v6969 = vsel %vm465, %v6723, 0
        %v6972 = vsel %vm465, %v6730, 0
        %v6975 = vsel %vm465, %v6737, 0
        %v6978 = vsel %vm465, %v6744, 0
        %v6981 = vsel %vm465, %v6751, 0
        %v6984 = vsel %vm465, %v6758, 0
        %v6987 = vsel %vm465, %v6765, 0
        %v6990 = vsel %vm465, %v6772, 0
        %v6993 = vsel %vm465, %v6779, 0
        %v6996 = vsel %vm465, %v6786, 0
        %v6999 = vsel %vm465, %v6793, 0
        %v7002 = vsel %vm465, %v6800, 0
        %7004 = vmatprep.subr.mxu0 0.0
        %7005 = vmatpush1.msra.mxu0 %v6801
        %7006 = vmatprep.subr.mxu0 0.0
        %7007 = vmatpush1.msra.mxu0 %v6802
        %7008 = vmatprep.subr.mxu0 0.0
        %7009 = vmatpush1.msra.mxu0 %v6803
        %7010 = vmatprep.subr.mxu0 0.0
        %7011 = vmatpush1.msra.mxu0 %v6804
        %7012 = vmatprep.subr.mxu0 0.0
        %7013 = vmatpush1.msra.mxu0 %v6805
        %7014 = vmatprep.subr.mxu0 0.0
        %7015 = vmatpush1.msra.mxu0 %v6806
        %7016 = vmatprep.subr.mxu0 0.0
        %7017 = vmatpush1.msra.mxu0 %v6807
        %7018 = vmatprep.subr.mxu0 0.0
        %7019 = vmatpush1.msra.mxu0 %v6808
        %7020 = vmatprep.subr.mxu0 0.0
        %7021 = vmatpush1.msra.mxu0 %v6809
        %7022 = vmatprep.subr.mxu0 0.0
        %7023 = vmatpush1.msra.mxu0 %v6810
        %7024 = vmatprep.subr.mxu0 0.0
        %7025 = vmatpush1.msra.mxu0 %v6811
        %7026 = vmatprep.subr.mxu0 0.0
        %7027 = vmatpush1.msra.mxu0 %v6812
        %7028 = vmatprep.subr.mxu0 0.0
        %7029 = vmatpush1.msra.mxu0 %v6813
        %7030 = vmatprep.subr.mxu0 0.0
        %7031 = vmatpush1.msra.mxu0 %v6814
        %7032 = vmatprep.subr.mxu0 0.0
        %7033 = vmatpush1.msra.mxu0 %v6815
        %7034 = vmatprep.subr.mxu0 0.0
        %7035 = vmatpush1.msra.mxu0 %v6816
        %7036 = vmatprep.subr.mxu0 0.0
        %7037 = vmatpush1.msra.mxu0 %v6817
        %7038 = vmatprep.subr.mxu0 0.0
        %7039 = vmatpush1.msra.mxu0 %v6818
        %7040 = vmatprep.subr.mxu0 0.0
        %7041 = vmatpush1.msra.mxu0 %v6819
        %7042 = vmatprep.subr.mxu0 0.0
        %7043 = vmatpush1.msra.mxu0 %v6820
        %7044 = vmatprep.subr.mxu0 0.0
        %7045 = vmatpush1.msra.mxu0 %v6821
        %7046 = vmatprep.subr.mxu0 0.0
        %7047 = vmatpush1.msra.mxu0 %v6822
        %7048 = vmatprep.subr.mxu0 0.0
        %7049 = vmatpush1.msra.mxu0 %v6823
        %7050 = vmatprep.subr.mxu0 0.0
        %7051 = vmatpush1.msra.mxu0 %v6824
        %7052 = vmatprep.subr.mxu0 0.0
        %7053 = vmatpush1.msra.mxu0 %v6825
        %7054 = vmatprep.subr.mxu0 0.0
        %7055 = vmatpush1.msra.mxu0 %v6826
        %7056 = vmatprep.subr.mxu0 0.0
        %7057 = vmatpush1.msra.mxu0 %v6827
        %7058 = vmatprep.subr.mxu0 0.0
        %7059 = vmatpush1.msra.mxu0 %v6828
        %7060 = vmatprep.subr.mxu0 0.0
        %7061 = vmatpush1.msra.mxu0 %v6829
        %7062 = vmatprep.subr.mxu0 0.0
        %7063 = vmatpush1.msra.mxu0 %v6830
        %7064 = vmatprep.subr.mxu0 0.0
        %7065 = vmatpush1.msra.mxu0 %v6831
        %7066 = vmatprep.subr.mxu0 0.0
        %7067 = vmatpush1.msra.mxu0 %v6832
        %7068 = vmatprep.mubr.f32.mxu0 %v6578
        %7069 = vmatmul.mubr.f32.gmra.mrb[0].mxu0 %v6577
        %v7070 = vpop.f32.mrb[0].mxu0
        %v7071 = vadd.f32 %v6906, %v7070
        %v7072 = vpop.f32.mrb[0].mxu0
        %7073 = vmatprep.mubr.f32.mxu0 %v6585
        %7074 = vmatmul.mubr.f32.gmra.mrb[0].mxu0 %v6584
        %v7075 = vpop.f32.mrb[0].mxu0
        %v7076 = vadd.f32 %v6906, %v7075
        %v7077 = vpop.f32.mrb[0].mxu0
        %7078 = vmatprep.mubr.f32.mxu0 %v6592
        %7079 = vmatmul.mubr.f32.gmra.mrb[0].mxu0 %v6591
        %v7080 = vpop.f32.mrb[0].mxu0
        %v7081 = vadd.f32 %v6906, %v7080
        %v7082 = vpop.f32.mrb[0].mxu0
        %7083 = vmatprep.mubr.f32.mxu0 %v6599
        %7084 = vmatmul.mubr.f32.gmra.mrb[0].mxu0 %v6598
        %v7085 = vpop.f32.mrb[0].mxu0
        %v7086 = vadd.f32 %v6906, %v7085
        %v7087 = vpop.f32.mrb[0].mxu0
        %7088 = vmatprep.mubr.f32.mxu0 %v6606
        %7089 = vmatmul.mubr.f32.gmra.mrb[0].mxu0 %v6605
        %v7090 = vpop.f32.mrb[0].mxu0
        %v7091 = vadd.f32 %v6906, %v7090
        %v7092 = vpop.f32.mrb[0].mxu0
        %7093 = vmatprep.mubr.f32.mxu0 %v6613
        %7094 = vmatmul.mubr.f32.gmra.mrb[0].mxu0 %v6612
        %v7095 = vpop.f32.mrb[0].mxu0
        %v7096 = vadd.f32 %v6906, %v7095
        %v7097 = vpop.f32.mrb[0].mxu0
        %7098 = vmatprep.mubr.f32.mxu0 %v6620
        %7099 = vmatmul.mubr.f32.gmra.mrb[0].mxu0 %v6619
        %v7100 = vpop.f32.mrb[0].mxu0
        %v7101 = vadd.f32 %v6906, %v7100
        %v7102 = vpop.f32.mrb[0].mxu0
        %7103 = vmatprep.mubr.f32.mxu0 %v6627
        %7104 = vmatmul.mubr.f32.gmra.mrb[0].mxu0 %v6626
        %v7105 = vpop.f32.mrb[0].mxu0
        %v7106 = vadd.f32 %v6906, %v7105
        %v7107 = vpop.f32.mrb[0].mxu0
        %7108 = vmatprep.mubr.f32.mxu0 %v6634
        %7109 = vmatmul.mubr.f32.gmra.mrb[0].mxu0 %v6633
        %v7110 = vpop.f32.mrb[0].mxu0
        %v7111 = vadd.f32 %v6906, %v7110
        %v7112 = vpop.f32.mrb[0].mxu0
        %7113 = vmatprep.mubr.f32.mxu0 %v6641
        %7114 = vmatmul.mubr.f32.gmra.mrb[0].mxu0 %v6640
        %v7115 = vpop.f32.mrb[0].mxu0
        %v7116 = vadd.f32 %v6906, %v7115
        %v7117 = vpop.f32.mrb[0].mxu0
        %7118 = vmatprep.mubr.f32.mxu0 %v6648
        %7119 = vmatmul.mubr.f32.gmra.mrb[0].mxu0 %v6647
        %v7120 = vpop.f32.mrb[0].mxu0
        %v7121 = vadd.f32 %v6906, %v7120
        %v7122 = vpop.f32.mrb[0].mxu0
        %7123 = vmatprep.mubr.f32.mxu0 %v6655
        %7124 = vmatmul.mubr.f32.gmra.mrb[0].mxu0 %v6654
        %v7125 = vpop.f32.mrb[0].mxu0
        %v7126 = vadd.f32 %v6906, %v7125
        %v7127 = vpop.f32.mrb[0].mxu0
        %7128 = vmatprep.mubr.f32.mxu0 %v6662
        %7129 = vmatmul.mubr.f32.gmra.mrb[0].mxu0 %v6661
        %v7130 = vpop.f32.mrb[0].mxu0
        %v7131 = vadd.f32 %v6906, %v7130
        %v7132 = vpop.f32.mrb[0].mxu0
        %7133 = vmatprep.mubr.f32.mxu0 %v6669
        %7134 = vmatmul.mubr.f32.gmra.mrb[0].mxu0 %v6668
        %v7135 = vpop.f32.mrb[0].mxu0
        %v7136 = vadd.f32 %v6906, %v7135
        %v7137 = vpop.f32.mrb[0].mxu0
        %7138 = vmatprep.mubr.f32.mxu0 %v6676
        %7139 = vmatmul.mubr.f32.gmra.mrb[0].mxu0 %v6675
        %v7140 = vpop.f32.mrb[0].mxu0
        %v7141 = vadd.f32 %v6906, %v7140
        %v7142 = vpop.f32.mrb[0].mxu0
        %7143 = vmatprep.mubr.f32.mxu0 %v6683
        %7144 = vmatmul.mubr.f32.gmra.mrb[0].mxu0 %v6682
        %v7145 = vpop.f32.mrb[0].mxu0
        %v7146 = vadd.f32 %v6906, %v7145
        %v7147 = vpop.f32.mrb[0].mxu0
        %7148 = vmatprep.mubr.f32.mxu0 %v6690
        %7149 = vmatmul.mubr.f32.gmra.mrb[0].mxu0 %v6689
        %v7150 = vpop.f32.mrb[0].mxu0
        %v7151 = vadd.f32 %v6906, %v7150
        %v7152 = vpop.f32.mrb[0].mxu0
        %7153 = vmatprep.mubr.f32.mxu0 %v6697
        %7154 = vmatmul.mubr.f32.gmra.mrb[0].mxu0 %v6696
        %v7155 = vpop.f32.mrb[0].mxu0
        %v7156 = vadd.f32 %v6906, %v7155
        %v7157 = vpop.f32.mrb[0].mxu0
        %7158 = vmatprep.mubr.f32.mxu0 %v6704
        %7159 = vmatmul.mubr.f32.gmra.mrb[0].mxu0 %v6703
        %v7160 = vpop.f32.mrb[0].mxu0
        %v7161 = vadd.f32 %v6906, %v7160
        %v7162 = vpop.f32.mrb[0].mxu0
        %7163 = vmatprep.mubr.f32.mxu0 %v6711
        %7164 = vmatmul.mubr.f32.gmra.mrb[0].mxu0 %v6710
        %v7165 = vpop.f32.mrb[0].mxu0
        %v7166 = vadd.f32 %v6906, %v7165
        %v7167 = vpop.f32.mrb[0].mxu0
        %7168 = vmatprep.mubr.f32.mxu0 %v6718
        %7169 = vmatmul.mubr.f32.gmra.mrb[0].mxu0 %v6717
        %v7170 = vpop.f32.mrb[0].mxu0
        %v7171 = vadd.f32 %v6906, %v7170
        %v7172 = vpop.f32.mrb[0].mxu0
        %7173 = vmatprep.mubr.f32.mxu0 %v6725
        %7174 = vmatmul.mubr.f32.gmra.mrb[0].mxu0 %v6724
        %v7175 = vpop.f32.mrb[0].mxu0
        %v7176 = vadd.f32 %v6906, %v7175
        %v7177 = vpop.f32.mrb[0].mxu0
        %7178 = vmatprep.mubr.f32.mxu0 %v6732
        %7179 = vmatmul.mubr.f32.gmra.mrb[0].mxu0 %v6731
        %v7180 = vpop.f32.mrb[0].mxu0
        %v7181 = vadd.f32 %v6906, %v7180
        %v7182 = vpop.f32.mrb[0].mxu0
        %7183 = vmatprep.mubr.f32.mxu0 %v6739
        %7184 = vmatmul.mubr.f32.gmra.mrb[0].mxu0 %v6738
        %v7185 = vpop.f32.mrb[0].mxu0
        %v7186 = vadd.f32 %v6906, %v7185
        %v7187 = vpop.f32.mrb[0].mxu0
        %7188 = vmatprep.mubr.f32.mxu0 %v6746
        %7189 = vmatmul.mubr.f32.gmra.mrb[0].mxu0 %v6745
        %v7190 = vpop.f32.mrb[0].mxu0
        %v7191 = vadd.f32 %v6906, %v7190
        %v7192 = vpop.f32.mrb[0].mxu0
        %7193 = vmatprep.mubr.f32.mxu0 %v6753
        %7194 = vmatmul.mubr.f32.gmra.mrb[0].mxu0 %v6752
        %v7195 = vpop.f32.mrb[0].mxu0
        %v7196 = vadd.f32 %v6906, %v7195
        %v7197 = vpop.f32.mrb[0].mxu0
        %7198 = vmatprep.mubr.f32.mxu0 %v6760
        %7199 = vmatmul.mubr.f32.gmra.mrb[0].mxu0 %v6759
        %v7200 = vpop.f32.mrb[0].mxu0
        %v7201 = vadd.f32 %v6906, %v7200
        %v7202 = vpop.f32.mrb[0].mxu0
        %7203 = vmatprep.mubr.f32.mxu0 %v6767
        %7204 = vmatmul.mubr.f32.gmra.mrb[0].mxu0 %v6766
        %v7205 = vpop.f32.mrb[0].mxu0
        %v7206 = vadd.f32 %v6906, %v7205
        %v7207 = vpop.f32.mrb[0].mxu0
        %7208 = vmatprep.mubr.f32.mxu0 %v6774
        %7209 = vmatmul.mubr.f32.gmra.mrb[0].mxu0 %v6773
        %v7210 = vpop.f32.mrb[0].mxu0
        %v7211 = vadd.f32 %v6906, %v7210
        %v7212 = vpop.f32.mrb[0].mxu0
        %7213 = vmatprep.mubr.f32.mxu0 %v6781
        %7214 = vmatmul.mubr.f32.gmra.mrb[0].mxu0 %v6780
        %v7215 = vpop.f32.mrb[0].mxu0
        %v7216 = vadd.f32 %v6906, %v7215
        %v7217 = vpop.f32.mrb[0].mxu0
        %7218 = vmatprep.mubr.f32.mxu0 %v6788
        %7219 = vmatmul.mubr.f32.gmra.mrb[0].mxu0 %v6787
        %v7220 = vpop.f32.mrb[0].mxu0
        %v7221 = vadd.f32 %v6906, %v7220
        %v7222 = vpop.f32.mrb[0].mxu0
        %7223 = vmatprep.mubr.f32.mxu0 %v6795
        %7224 = vmatmul.mubr.f32.gmra.mrb[0].mxu0 %v6794
        %v7225 = vpop.f32.mrb[0].mxu0
        %v7226 = vadd.f32 %v6906, %v7225
        %v7227 = vpop.f32.mrb[0].mxu0
        %7228 = vdwg.mxu0
        %7229 = vmatprep.subr.mxu0 0.0
        %7230 = vmatpush1.msra.mxu0 %v6833
        %7231 = vmatprep.subr.mxu0 0.0
        %7232 = vmatpush1.msra.mxu0 %v6834
        %7233 = vmatprep.subr.mxu0 0.0
        %7234 = vmatpush1.msra.mxu0 %v6835
        %7235 = vmatprep.subr.mxu0 0.0
        %7236 = vmatpush1.msra.mxu0 %v6836
        %7237 = vmatprep.subr.mxu0 0.0
        %7238 = vmatpush1.msra.mxu0 %v6837
        %7239 = vmatprep.subr.mxu0 0.0
        %7240 = vmatpush1.msra.mxu0 %v6838
        %7241 = vmatprep.subr.mxu0 0.0
        %7242 = vmatpush1.msra.mxu0 %v6839
        %7243 = vmatprep.subr.mxu0 0.0
        %7244 = vmatpush1.msra.mxu0 %v6840
        %7245 = vmatprep.subr.mxu0 0.0
        %7246 = vmatpush1.msra.mxu0 %v6841
        %7247 = vmatprep.subr.mxu0 0.0
        %7248 = vmatpush1.msra.mxu0 %v6842
        %7249 = vmatprep.subr.mxu0 0.0
        %7250 = vmatpush1.msra.mxu0 %v6843
        %7251 = vmatprep.subr.mxu0 0.0
        %7252 = vmatpush1.msra.mxu0 %v6844
        %7253 = vmatprep.subr.mxu0 0.0
        %7254 = vmatpush1.msra.mxu0 %v6845
        %7255 = vmatprep.subr.mxu0 0.0
        %7256 = vmatpush1.msra.mxu0 %v6846
        %7257 = vmatprep.subr.mxu0 0.0
        %7258 = vmatpush1.msra.mxu0 %v6847
        %7259 = vmatprep.subr.mxu0 0.0
        %7260 = vmatpush1.msra.mxu0 %v6848
        %7261 = vmatprep.subr.mxu0 0.0
        %7262 = vmatpush1.msra.mxu0 %v6849
        %7263 = vmatprep.subr.mxu0 0.0
        %7264 = vmatpush1.msra.mxu0 %v6850
        %7265 = vmatprep.subr.mxu0 0.0
        %7266 = vmatpush1.msra.mxu0 %v6851
        %7267 = vmatprep.subr.mxu0 0.0
        %7268 = vmatpush1.msra.mxu0 %v6852
        %7269 = vmatprep.subr.mxu0 0.0
        %7270 = vmatpush1.msra.mxu0 %v6853
        %7271 = vmatprep.subr.mxu0 0.0
        %7272 = vmatpush1.msra.mxu0 %v6854
        %7273 = vmatprep.subr.mxu0 0.0
        %7274 = vmatpush1.msra.mxu0 %v6855
        %7275 = vmatprep.subr.mxu0 0.0
        %7276 = vmatpush1.msra.mxu0 %v6856
        %7277 = vmatprep.subr.mxu0 0.0
        %7278 = vmatpush1.msra.mxu0 %v6857
        %7279 = vmatprep.subr.mxu0 0.0
        %7280 = vmatpush1.msra.mxu0 %v6858
        %7281 = vmatprep.subr.mxu0 0.0
        %7282 = vmatpush1.msra.mxu0 %v6859
        %7283 = vmatprep.subr.mxu0 0.0
        %7284 = vmatpush1.msra.mxu0 %v6860
        %7285 = vmatprep.subr.mxu0 0.0
        %7286 = vmatpush1.msra.mxu0 %v6861
        %7287 = vmatprep.subr.mxu0 0.0
        %7288 = vmatpush1.msra.mxu0 %v6862
        %7289 = vmatprep.subr.mxu0 0.0
        %7290 = vmatpush1.msra.mxu0 %v6863
        %7291 = vmatprep.subr.mxu0 0.0
        %7292 = vmatpush1.msra.mxu0 %v6864
        %7293 = vmatprep.mubr.f32.mxu0 %v6580
        %7294 = vmatmul.mubr.f32.gmra.mrb[0].mxu0 %v6579
        %v7295 = vpop.f32.mrb[0].mxu0
        %v7296 = vadd.f32 %v7071, %v7295
        %v7297 = vpop.f32.mrb[0].mxu0
        %7298 = vmatprep.mubr.f32.mxu0 %v6587
        %7299 = vmatmul.mubr.f32.gmra.mrb[0].mxu0 %v6586
        %v7300 = vpop.f32.mrb[0].mxu0
        %v7301 = vadd.f32 %v7076, %v7300
        %v7302 = vpop.f32.mrb[0].mxu0
        %7303 = vmatprep.mubr.f32.mxu0 %v6594
        %7304 = vmatmul.mubr.f32.gmra.mrb[0].mxu0 %v6593
        %v7305 = vpop.f32.mrb[0].mxu0
        %v7306 = vadd.f32 %v7081, %v7305
        %v7307 = vpop.f32.mrb[0].mxu0
        %7308 = vmatprep.mubr.f32.mxu0 %v6601
        %7309 = vmatmul.mubr.f32.gmra.mrb[0].mxu0 %v6600
        %v7310 = vpop.f32.mrb[0].mxu0
        %v7311 = vadd.f32 %v7086, %v7310
        %v7312 = vpop.f32.mrb[0].mxu0
        %7313 = vmatprep.mubr.f32.mxu0 %v6608
        %7314 = vmatmul.mubr.f32.gmra.mrb[0].mxu0 %v6607
        %v7315 = vpop.f32.mrb[0].mxu0
        %v7316 = vadd.f32 %v7091, %v7315
        %v7317 = vpop.f32.mrb[0].mxu0
        %7318 = vmatprep.mubr.f32.mxu0 %v6615
        %7319 = vmatmul.mubr.f32.gmra.mrb[0].mxu0 %v6614
        %v7320 = vpop.f32.mrb[0].mxu0
        %v7321 = vadd.f32 %v7096, %v7320
        %v7322 = vpop.f32.mrb[0].mxu0
        %7323 = vmatprep.mubr.f32.mxu0 %v6622
        %7324 = vmatmul.mubr.f32.gmra.mrb[0].mxu0 %v6621
        %v7325 = vpop.f32.mrb[0].mxu0
        %v7326 = vadd.f32 %v7101, %v7325
        %v7327 = vpop.f32.mrb[0].mxu0
        %7328 = vmatprep.mubr.f32.mxu0 %v6629
        %7329 = vmatmul.mubr.f32.gmra.mrb[0].mxu0 %v6628
        %v7330 = vpop.f32.mrb[0].mxu0
        %v7331 = vadd.f32 %v7106, %v7330
        %v7332 = vpop.f32.mrb[0].mxu0
        %7333 = vmatprep.mubr.f32.mxu0 %v6636
        %7334 = vmatmul.mubr.f32.gmra.mrb[0].mxu0 %v6635
        %v7335 = vpop.f32.mrb[0].mxu0
        %v7336 = vadd.f32 %v7111, %v7335
        %v7337 = vpop.f32.mrb[0].mxu0
        %7338 = vmatprep.mubr.f32.mxu0 %v6643
        %7339 = vmatmul.mubr.f32.gmra.mrb[0].mxu0 %v6642
        %v7340 = vpop.f32.mrb[0].mxu0
        %v7341 = vadd.f32 %v7116, %v7340
        %v7342 = vpop.f32.mrb[0].mxu0
        %7343 = vmatprep.mubr.f32.mxu0 %v6650
        %7344 = vmatmul.mubr.f32.gmra.mrb[0].mxu0 %v6649
        %v7345 = vpop.f32.mrb[0].mxu0
        %v7346 = vadd.f32 %v7121, %v7345
        %v7347 = vpop.f32.mrb[0].mxu0
        %7348 = vmatprep.mubr.f32.mxu0 %v6657
        %7349 = vmatmul.mubr.f32.gmra.mrb[0].mxu0 %v6656
        %v7350 = vpop.f32.mrb[0].mxu0
        %v7351 = vadd.f32 %v7126, %v7350
        %v7352 = vpop.f32.mrb[0].mxu0
        %7353 = vmatprep.mubr.f32.mxu0 %v6664
        %7354 = vmatmul.mubr.f32.gmra.mrb[0].mxu0 %v6663
        %v7355 = vpop.f32.mrb[0].mxu0
        %v7356 = vadd.f32 %v7131, %v7355
        %v7357 = vpop.f32.mrb[0].mxu0
        %7358 = vmatprep.mubr.f32.mxu0 %v6671
        %7359 = vmatmul.mubr.f32.gmra.mrb[0].mxu0 %v6670
        %v7360 = vpop.f32.mrb[0].mxu0
        %v7361 = vadd.f32 %v7136, %v7360
        %v7362 = vpop.f32.mrb[0].mxu0
        %7363 = vmatprep.mubr.f32.mxu0 %v6678
        %7364 = vmatmul.mubr.f32.gmra.mrb[0].mxu0 %v6677
        %v7365 = vpop.f32.mrb[0].mxu0
        %v7366 = vadd.f32 %v7141, %v7365
        %v7367 = vpop.f32.mrb[0].mxu0
        %7368 = vmatprep.mubr.f32.mxu0 %v6685
        %7369 = vmatmul.mubr.f32.gmra.mrb[0].mxu0 %v6684
        %v7370 = vpop.f32.mrb[0].mxu0
        %v7371 = vadd.f32 %v7146, %v7370
        %v7372 = vpop.f32.mrb[0].mxu0
        %7373 = vmatprep.mubr.f32.mxu0 %v6692
        %7374 = vmatmul.mubr.f32.gmra.mrb[0].mxu0 %v6691
        %v7375 = vpop.f32.mrb[0].mxu0
        %v7376 = vadd.f32 %v7151, %v7375
        %v7377 = vpop.f32.mrb[0].mxu0
        %7378 = vmatprep.mubr.f32.mxu0 %v6699
        %7379 = vmatmul.mubr.f32.gmra.mrb[0].mxu0 %v6698
        %v7380 = vpop.f32.mrb[0].mxu0
        %v7381 = vadd.f32 %v7156, %v7380
        %v7382 = vpop.f32.mrb[0].mxu0
        %7383 = vmatprep.mubr.f32.mxu0 %v6706
        %7384 = vmatmul.mubr.f32.gmra.mrb[0].mxu0 %v6705
        %v7385 = vpop.f32.mrb[0].mxu0
        %v7386 = vadd.f32 %v7161, %v7385
        %v7387 = vpop.f32.mrb[0].mxu0
        %7388 = vmatprep.mubr.f32.mxu0 %v6713
        %7389 = vmatmul.mubr.f32.gmra.mrb[0].mxu0 %v6712
        %v7390 = vpop.f32.mrb[0].mxu0
        %v7391 = vadd.f32 %v7166, %v7390
        %v7392 = vpop.f32.mrb[0].mxu0
        %7393 = vmatprep.mubr.f32.mxu0 %v6720
        %7394 = vmatmul.mubr.f32.gmra.mrb[0].mxu0 %v6719
        %v7395 = vpop.f32.mrb[0].mxu0
        %v7396 = vadd.f32 %v7171, %v7395
        %v7397 = vpop.f32.mrb[0].mxu0
        %7398 = vmatprep.mubr.f32.mxu0 %v6727
        %7399 = vmatmul.mubr.f32.gmra.mrb[0].mxu0 %v6726
        %v7400 = vpop.f32.mrb[0].mxu0
        %v7401 = vadd.f32 %v7176, %v7400
        %v7402 = vpop.f32.mrb[0].mxu0
        %7403 = vmatprep.mubr.f32.mxu0 %v6734
        %7404 = vmatmul.mubr.f32.gmra.mrb[0].mxu0 %v6733
        %v7405 = vpop.f32.mrb[0].mxu0
        %v7406 = vadd.f32 %v7181, %v7405
        %v7407 = vpop.f32.mrb[0].mxu0
        %7408 = vmatprep.mubr.f32.mxu0 %v6741
        %7409 = vmatmul.mubr.f32.gmra.mrb[0].mxu0 %v6740
        %v7410 = vpop.f32.mrb[0].mxu0
        %v7411 = vadd.f32 %v7186, %v7410
        %v7412 = vpop.f32.mrb[0].mxu0
        %7413 = vmatprep.mubr.f32.mxu0 %v6748
        %7414 = vmatmul.mubr.f32.gmra.mrb[0].mxu0 %v6747
        %v7415 = vpop.f32.mrb[0].mxu0
        %v7416 = vadd.f32 %v7191, %v7415
        %v7417 = vpop.f32.mrb[0].mxu0
        %7418 = vmatprep.mubr.f32.mxu0 %v6755
        %7419 = vmatmul.mubr.f32.gmra.mrb[0].mxu0 %v6754
        %v7420 = vpop.f32.mrb[0].mxu0
        %v7421 = vadd.f32 %v7196, %v7420
        %v7422 = vpop.f32.mrb[0].mxu0
        %7423 = vmatprep.mubr.f32.mxu0 %v6762
        %7424 = vmatmul.mubr.f32.gmra.mrb[0].mxu0 %v6761
        %v7425 = vpop.f32.mrb[0].mxu0
        %v7426 = vadd.f32 %v7201, %v7425
        %v7427 = vpop.f32.mrb[0].mxu0
        %7428 = vmatprep.mubr.f32.mxu0 %v6769
        %7429 = vmatmul.mubr.f32.gmra.mrb[0].mxu0 %v6768
        %v7430 = vpop.f32.mrb[0].mxu0
        %v7431 = vadd.f32 %v7206, %v7430
        %v7432 = vpop.f32.mrb[0].mxu0
        %7433 = vmatprep.mubr.f32.mxu0 %v6776
        %7434 = vmatmul.mubr.f32.gmra.mrb[0].mxu0 %v6775
        %v7435 = vpop.f32.mrb[0].mxu0
        %v7436 = vadd.f32 %v7211, %v7435
        %v7437 = vpop.f32.mrb[0].mxu0
        %7438 = vmatprep.mubr.f32.mxu0 %v6783
        %7439 = vmatmul.mubr.f32.gmra.mrb[0].mxu0 %v6782
        %v7440 = vpop.f32.mrb[0].mxu0
        %v7441 = vadd.f32 %v7216, %v7440
        %v7442 = vpop.f32.mrb[0].mxu0
        %7443 = vmatprep.mubr.f32.mxu0 %v6790
        %7444 = vmatmul.mubr.f32.gmra.mrb[0].mxu0 %v6789
        %v7445 = vpop.f32.mrb[0].mxu0
        %v7446 = vadd.f32 %v7221, %v7445
        %v7447 = vpop.f32.mrb[0].mxu0
        %7448 = vmatprep.mubr.f32.mxu0 %v6797
        %7449 = vmatmul.mubr.f32.gmra.mrb[0].mxu0 %v6796
        %v7450 = vpop.f32.mrb[0].mxu0
        %v7451 = vadd.f32 %v7226, %v7450
        %v7452 = vpop.f32.mrb[0].mxu0
        %7453 = vdwg.mxu0
        %7454 = vmatprep.subr.mxu0 0.0
        %7455 = vmatpush1.msra.mxu0 %v6865
        %7456 = vmatprep.subr.mxu0 0.0
        %7457 = vmatpush1.msra.mxu0 %v6866
        %7458 = vmatprep.subr.mxu0 0.0
        %7459 = vmatpush1.msra.mxu0 %v6867
        %7460 = vmatprep.subr.mxu0 0.0
        %7461 = vmatpush1.msra.mxu0 %v6868
        %7462 = vmatprep.subr.mxu0 0.0
        %7463 = vmatpush1.msra.mxu0 %v6869
        %7464 = vmatprep.subr.mxu0 0.0
        %7465 = vmatpush1.msra.mxu0 %v6870
        %7466 = vmatprep.subr.mxu0 0.0
        %7467 = vmatpush1.msra.mxu0 %v6871
        %7468 = vmatprep.subr.mxu0 0.0
        %7469 = vmatpush1.msra.mxu0 %v6872
        %7470 = vmatprep.subr.mxu0 0.0
        %7471 = vmatpush1.msra.mxu0 %v6873
        %7472 = vmatprep.subr.mxu0 0.0
        %7473 = vmatpush1.msra.mxu0 %v6874
        %7474 = vmatprep.subr.mxu0 0.0
        %7475 = vmatpush1.msra.mxu0 %v6875
        %7476 = vmatprep.subr.mxu0 0.0
        %7477 = vmatpush1.msra.mxu0 %v6876
        %7478 = vmatprep.subr.mxu0 0.0
        %7479 = vmatpush1.msra.mxu0 %v6877
        %7480 = vmatprep.subr.mxu0 0.0
        %7481 = vmatpush1.msra.mxu0 %v6878
        %7482 = vmatprep.subr.mxu0 0.0
        %7483 = vmatpush1.msra.mxu0 %v6879
        %7484 = vmatprep.subr.mxu0 0.0
        %7485 = vmatpush1.msra.mxu0 %v6880
        %7486 = vmatprep.subr.mxu0 0.0
        %7487 = vmatpush1.msra.mxu0 %v6881
        %7488 = vmatprep.subr.mxu0 0.0
        %7489 = vmatpush1.msra.mxu0 %v6882
        %7490 = vmatprep.subr.mxu0 0.0
        %7491 = vmatpush1.msra.mxu0 %v6883
        %7492 = vmatprep.subr.mxu0 0.0
        %7493 = vmatpush1.msra.mxu0 %v6884
        %7494 = vmatprep.subr.mxu0 0.0
        %7495 = vmatpush1.msra.mxu0 %v6885
        %7496 = vmatprep.subr.mxu0 0.0
        %7497 = vmatpush1.msra.mxu0 %v6886
        %7498 = vmatprep.subr.mxu0 0.0
        %7499 = vmatpush1.msra.mxu0 %v6887
        %7500 = vmatprep.subr.mxu0 0.0
        %7501 = vmatpush1.msra.mxu0 %v6888
        %7502 = vmatprep.subr.mxu0 0.0
        %7503 = vmatpush1.msra.mxu0 %v6889
        %7504 = vmatprep.subr.mxu0 0.0
        %7505 = vmatpush1.msra.mxu0 %v6890
        %7506 = vmatprep.subr.mxu0 0.0
        %7507 = vmatpush1.msra.mxu0 %v6891
        %7508 = vmatprep.subr.mxu0 0.0
        %7509 = vmatpush1.msra.mxu0 %v6892
        %7510 = vmatprep.subr.mxu0 0.0
        %7511 = vmatpush1.msra.mxu0 %v6893
        %7512 = vmatprep.subr.mxu0 0.0
        %7513 = vmatpush1.msra.mxu0 %v6894
        %7514 = vmatprep.subr.mxu0 0.0
        %7515 = vmatpush1.msra.mxu0 %v6895
        %7516 = vmatprep.subr.mxu0 0.0
        %7517 = vmatpush1.msra.mxu0 %v6896
        %7518 = vmatprep.mubr.f32.mxu0 %v6582
        %7519 = vmatmul.mubr.f32.gmra.mrb[0].mxu0 %v6581
        %v7520 = vpop.f32.mrb[0].mxu0
        %v7521 = vadd.f32 %v7296, %v7520
        %v7522 = vpop.f32.mrb[0].mxu0
        %7523 = vmatprep.mubr.f32.mxu0 %v6589
        %7524 = vmatmul.mubr.f32.gmra.mrb[0].mxu0 %v6588
        %v7525 = vpop.f32.mrb[0].mxu0
        %v7526 = vadd.f32 %v7301, %v7525
        %v7527 = vpop.f32.mrb[0].mxu0
        %7528 = vmatprep.mubr.f32.mxu0 %v6596
        %7529 = vmatmul.mubr.f32.gmra.mrb[0].mxu0 %v6595
        %v7530 = vpop.f32.mrb[0].mxu0
        %v7531 = vadd.f32 %v7306, %v7530
        %v7532 = vpop.f32.mrb[0].mxu0
        %7533 = vmatprep.mubr.f32.mxu0 %v6603
        %7534 = vmatmul.mubr.f32.gmra.mrb[0].mxu0 %v6602
        %v7535 = vpop.f32.mrb[0].mxu0
        %v7536 = vadd.f32 %v7311, %v7535
        %v7537 = vpop.f32.mrb[0].mxu0
        %7538 = vmatprep.mubr.f32.mxu0 %v6610
        %7539 = vmatmul.mubr.f32.gmra.mrb[0].mxu0 %v6609
        %v7540 = vpop.f32.mrb[0].mxu0
        %v7541 = vadd.f32 %v7316, %v7540
        %v7542 = vpop.f32.mrb[0].mxu0
        %7543 = vmatprep.mubr.f32.mxu0 %v6617
        %7544 = vmatmul.mubr.f32.gmra.mrb[0].mxu0 %v6616
        %v7545 = vpop.f32.mrb[0].mxu0
        %v7546 = vadd.f32 %v7321, %v7545
        %v7547 = vpop.f32.mrb[0].mxu0
        %7548 = vmatprep.mubr.f32.mxu0 %v6624
        %7549 = vmatmul.mubr.f32.gmra.mrb[0].mxu0 %v6623
        %v7550 = vpop.f32.mrb[0].mxu0
        %v7551 = vadd.f32 %v7326, %v7550
        %v7552 = vpop.f32.mrb[0].mxu0
        %7553 = vmatprep.mubr.f32.mxu0 %v6631
        %7554 = vmatmul.mubr.f32.gmra.mrb[0].mxu0 %v6630
        %v7555 = vpop.f32.mrb[0].mxu0
        %v7556 = vadd.f32 %v7331, %v7555
        %v7557 = vpop.f32.mrb[0].mxu0
        %7558 = vmatprep.mubr.f32.mxu0 %v6638
        %7559 = vmatmul.mubr.f32.gmra.mrb[0].mxu0 %v6637
        %v7560 = vpop.f32.mrb[0].mxu0
        %v7561 = vadd.f32 %v7336, %v7560
        %v7562 = vpop.f32.mrb[0].mxu0
        %7563 = vmatprep.mubr.f32.mxu0 %v6645
        %7564 = vmatmul.mubr.f32.gmra.mrb[0].mxu0 %v6644
        %v7565 = vpop.f32.mrb[0].mxu0
        %v7566 = vadd.f32 %v7341, %v7565
        %v7567 = vpop.f32.mrb[0].mxu0
        %7568 = vmatprep.mubr.f32.mxu0 %v6652
        %7569 = vmatmul.mubr.f32.gmra.mrb[0].mxu0 %v6651
        %v7570 = vpop.f32.mrb[0].mxu0
        %v7571 = vadd.f32 %v7346, %v7570
        %v7572 = vpop.f32.mrb[0].mxu0
        %7573 = vmatprep.mubr.f32.mxu0 %v6659
        %7574 = vmatmul.mubr.f32.gmra.mrb[0].mxu0 %v6658
        %v7575 = vpop.f32.mrb[0].mxu0
        %v7576 = vadd.f32 %v7351, %v7575
        %v7577 = vpop.f32.mrb[0].mxu0
        %7578 = vmatprep.mubr.f32.mxu0 %v6666
        %7579 = vmatmul.mubr.f32.gmra.mrb[0].mxu0 %v6665
        %v7580 = vpop.f32.mrb[0].mxu0
        %v7581 = vadd.f32 %v7356, %v7580
        %v7582 = vpop.f32.mrb[0].mxu0
        %7583 = vmatprep.mubr.f32.mxu0 %v6673
        %7584 = vmatmul.mubr.f32.gmra.mrb[0].mxu0 %v6672
        %v7585 = vpop.f32.mrb[0].mxu0
        %v7586 = vadd.f32 %v7361, %v7585
        %v7587 = vpop.f32.mrb[0].mxu0
        %7588 = vmatprep.mubr.f32.mxu0 %v6680
        %7589 = vmatmul.mubr.f32.gmra.mrb[0].mxu0 %v6679
        %v7590 = vpop.f32.mrb[0].mxu0
        %v7591 = vadd.f32 %v7366, %v7590
        %v7592 = vpop.f32.mrb[0].mxu0
        %7593 = vmatprep.mubr.f32.mxu0 %v6687
        %7594 = vmatmul.mubr.f32.gmra.mrb[0].mxu0 %v6686
        %v7595 = vpop.f32.mrb[0].mxu0
        %v7596 = vadd.f32 %v7371, %v7595
        %v7597 = vpop.f32.mrb[0].mxu0
        %7598 = vmatprep.mubr.f32.mxu0 %v6694
        %7599 = vmatmul.mubr.f32.gmra.mrb[0].mxu0 %v6693
        %v7600 = vpop.f32.mrb[0].mxu0
        %v7601 = vadd.f32 %v7376, %v7600
        %v7602 = vpop.f32.mrb[0].mxu0
        %7603 = vmatprep.mubr.f32.mxu0 %v6701
        %7604 = vmatmul.mubr.f32.gmra.mrb[0].mxu0 %v6700
        %v7605 = vpop.f32.mrb[0].mxu0
        %v7606 = vadd.f32 %v7381, %v7605
        %v7607 = vpop.f32.mrb[0].mxu0
        %7608 = vmatprep.mubr.f32.mxu0 %v6708
        %7609 = vmatmul.mubr.f32.gmra.mrb[0].mxu0 %v6707
        %v7610 = vpop.f32.mrb[0].mxu0
        %v7611 = vadd.f32 %v7386, %v7610
        %v7612 = vpop.f32.mrb[0].mxu0
        %7613 = vmatprep.mubr.f32.mxu0 %v6715
        %7614 = vmatmul.mubr.f32.gmra.mrb[0].mxu0 %v6714
        %v7615 = vpop.f32.mrb[0].mxu0
        %v7616 = vadd.f32 %v7391, %v7615
        %v7617 = vpop.f32.mrb[0].mxu0
        %7618 = vmatprep.mubr.f32.mxu0 %v6722
        %7619 = vmatmul.mubr.f32.gmra.mrb[0].mxu0 %v6721
        %v7620 = vpop.f32.mrb[0].mxu0
        %v7621 = vadd.f32 %v7396, %v7620
        %v7622 = vpop.f32.mrb[0].mxu0
        %7623 = vmatprep.mubr.f32.mxu0 %v6729
        %7624 = vmatmul.mubr.f32.gmra.mrb[0].mxu0 %v6728
        %v7625 = vpop.f32.mrb[0].mxu0
        %v7626 = vadd.f32 %v7401, %v7625
        %v7627 = vpop.f32.mrb[0].mxu0
        %7628 = vmatprep.mubr.f32.mxu0 %v6736
        %7629 = vmatmul.mubr.f32.gmra.mrb[0].mxu0 %v6735
        %v7630 = vpop.f32.mrb[0].mxu0
        %v7631 = vadd.f32 %v7406, %v7630
        %v7632 = vpop.f32.mrb[0].mxu0
        %7633 = vmatprep.mubr.f32.mxu0 %v6743
        %7634 = vmatmul.mubr.f32.gmra.mrb[0].mxu0 %v6742
        %v7635 = vpop.f32.mrb[0].mxu0
        %v7636 = vadd.f32 %v7411, %v7635
        %v7637 = vpop.f32.mrb[0].mxu0
        %7638 = vmatprep.mubr.f32.mxu0 %v6750
        %7639 = vmatmul.mubr.f32.gmra.mrb[0].mxu0 %v6749
        %v7640 = vpop.f32.mrb[0].mxu0
        %v7641 = vadd.f32 %v7416, %v7640
        %v7642 = vpop.f32.mrb[0].mxu0
        %7643 = vmatprep.mubr.f32.mxu0 %v6757
        %7644 = vmatmul.mubr.f32.gmra.mrb[0].mxu0 %v6756
        %v7645 = vpop.f32.mrb[0].mxu0
        %v7646 = vadd.f32 %v7421, %v7645
        %v7647 = vpop.f32.mrb[0].mxu0
        %7648 = vmatprep.mubr.f32.mxu0 %v6764
        %7649 = vmatmul.mubr.f32.gmra.mrb[0].mxu0 %v6763
        %v7650 = vpop.f32.mrb[0].mxu0
        %v7651 = vadd.f32 %v7426, %v7650
        %v7652 = vpop.f32.mrb[0].mxu0
        %7653 = vmatprep.mubr.f32.mxu0 %v6771
        %7654 = vmatmul.mubr.f32.gmra.mrb[0].mxu0 %v6770
        %v7655 = vpop.f32.mrb[0].mxu0
        %v7656 = vadd.f32 %v7431, %v7655
        %v7657 = vpop.f32.mrb[0].mxu0
        %7658 = vmatprep.mubr.f32.mxu0 %v6778
        %7659 = vmatmul.mubr.f32.gmra.mrb[0].mxu0 %v6777
        %v7660 = vpop.f32.mrb[0].mxu0
        %v7661 = vadd.f32 %v7436, %v7660
        %v7662 = vpop.f32.mrb[0].mxu0
        %7663 = vmatprep.mubr.f32.mxu0 %v6785
        %7664 = vmatmul.mubr.f32.gmra.mrb[0].mxu0 %v6784
        %v7665 = vpop.f32.mrb[0].mxu0
        %v7666 = vadd.f32 %v7441, %v7665
        %v7667 = vpop.f32.mrb[0].mxu0
        %7668 = vmatprep.mubr.f32.mxu0 %v6792
        %7669 = vmatmul.mubr.f32.gmra.mrb[0].mxu0 %v6791
        %v7670 = vpop.f32.mrb[0].mxu0
        %v7671 = vadd.f32 %v7446, %v7670
        %v7672 = vpop.f32.mrb[0].mxu0
        %7673 = vmatprep.mubr.f32.mxu0 %v6799
        %7674 = vmatmul.mubr.f32.gmra.mrb[0].mxu0 %v6798
        %v7675 = vpop.f32.mrb[0].mxu0
        %v7676 = vadd.f32 %v7451, %v7675
        %v7677 = vpop.f32.mrb[0].mxu0
        %7678 = vdwg.mxu0
        %7679 = vmatprep.subr.mxu0 0.0
        %7680 = vmatpush1.msra.mxu0 %v6897
        %7681 = vmatprep.subr.mxu0 0.0
        %7682 = vmatpush1.msra.mxu0 %v6898
        %7683 = vmatprep.subr.mxu0 0.0
        %7684 = vmatpush1.msra.mxu0 %v6899
        %7685 = vmatprep.subr.mxu0 0.0
        %7686 = vmatpush1.msra.mxu0 %v6900
        %7687 = vmatprep.subr.mxu0 0.0
        %7688 = vmatpush1.msra.mxu0 0.0
        %7689 = vmatprep.subr.mxu0 0.0
        %7690 = vmatpush1.msra.mxu0 0.0
        %7691 = vmatprep.subr.mxu0 0.0
        %7692 = vmatpush1.msra.mxu0 0.0
        %7693 = vmatprep.subr.mxu0 0.0
        %7694 = vmatpush1.msra.mxu0 0.0
        %7695 = vmatprep.subr.mxu0 0.0
        %7696 = vmatpush1.msra.mxu0 0.0
        %7697 = vmatprep.subr.mxu0 0.0
        %7698 = vmatpush1.msra.mxu0 0.0
        %7699 = vmatprep.subr.mxu0 0.0
        %7700 = vmatpush1.msra.mxu0 0.0
        %7701 = vmatprep.subr.mxu0 0.0
        %7702 = vmatpush1.msra.mxu0 0.0
        %7703 = vmatprep.subr.mxu0 0.0
        %7704 = vmatpush1.msra.mxu0 0.0
        %7705 = vmatprep.subr.mxu0 0.0
        %7706 = vmatpush1.msra.mxu0 0.0
        %7707 = vmatprep.subr.mxu0 0.0
        %7708 = vmatpush1.msra.mxu0 0.0
        %7709 = vmatprep.subr.mxu0 0.0
        %7710 = vmatpush1.msra.mxu0 0.0
        %7711 = vmatprep.subr.mxu0 0.0
        %7712 = vmatpush1.msra.mxu0 0.0
        %7713 = vmatprep.subr.mxu0 0.0
        %7714 = vmatpush1.msra.mxu0 0.0
        %7715 = vmatprep.subr.mxu0 0.0
        %7716 = vmatpush1.msra.mxu0 0.0
        %7717 = vmatprep.subr.mxu0 0.0
        %7718 = vmatpush1.msra.mxu0 0.0
        %7719 = vmatprep.subr.mxu0 0.0
        %7720 = vmatpush1.msra.mxu0 0.0
        %7721 = vmatprep.subr.mxu0 0.0
        %7722 = vmatpush1.msra.mxu0 0.0
        %7723 = vmatprep.subr.mxu0 0.0
        %7724 = vmatpush1.msra.mxu0 0.0
        %7725 = vmatprep.subr.mxu0 0.0
        %7726 = vmatpush1.msra.mxu0 0.0
        %7727 = vmatprep.subr.mxu0 0.0
        %7728 = vmatpush1.msra.mxu0 0.0
        %7729 = vmatprep.subr.mxu0 0.0
        %7730 = vmatpush1.msra.mxu0 0.0
        %7731 = vmatprep.subr.mxu0 0.0
        %7732 = vmatpush1.msra.mxu0 0.0
        %7733 = vmatprep.subr.mxu0 0.0
        %7734 = vmatpush1.msra.mxu0 0.0
        %7735 = vmatprep.subr.mxu0 0.0
        %7736 = vmatpush1.msra.mxu0 0.0
        %7737 = vmatprep.subr.mxu0 0.0
        %7738 = vmatpush1.msra.mxu0 0.0
        %7739 = vmatprep.subr.mxu0 0.0
        %7740 = vmatpush1.msra.mxu0 0.0
        %7741 = vmatprep.subr.mxu0 0.0
        %7742 = vmatpush1.msra.mxu0 0.0
        %7743 = vmatprep.mubr.f32.mxu0 0.0
        %7744 = vmatmul.mubr.f32.gmra.mrb[0].mxu0 %v6909
        %v7745 = vpop.f32.mrb[0].mxu0
        %v7746 = vadd.f32 %v7521, %v7745
        %v7747 = vpop.f32.mrb[0].mxu0
        %7748 = vmatprep.mubr.f32.mxu0 0.0
        %7749 = vmatmul.mubr.f32.gmra.mrb[0].mxu0 %v6912
        %v7750 = vpop.f32.mrb[0].mxu0
        %v7751 = vadd.f32 %v7526, %v7750
        %v7752 = vpop.f32.mrb[0].mxu0
        %7753 = vmatprep.mubr.f32.mxu0 0.0
        %7754 = vmatmul.mubr.f32.gmra.mrb[0].mxu0 %v6915
        %v7755 = vpop.f32.mrb[0].mxu0
        %v7756 = vadd.f32 %v7531, %v7755
        %v7757 = vpop.f32.mrb[0].mxu0
        %7758 = vmatprep.mubr.f32.mxu0 0.0
        %7759 = vmatmul.mubr.f32.gmra.mrb[0].mxu0 %v6918
        %v7760 = vpop.f32.mrb[0].mxu0
        %v7761 = vadd.f32 %v7536, %v7760
        %v7762 = vpop.f32.mrb[0].mxu0
        %7763 = vmatprep.mubr.f32.mxu0 0.0
        %7764 = vmatmul.mubr.f32.gmra.mrb[0].mxu0 %v6921
        %v7765 = vpop.f32.mrb[0].mxu0
        %v7766 = vadd.f32 %v7541, %v7765
        %v7767 = vpop.f32.mrb[0].mxu0
        %7768 = vmatprep.mubr.f32.mxu0 0.0
        %7769 = vmatmul.mubr.f32.gmra.mrb[0].mxu0 %v6924
        %v7770 = vpop.f32.mrb[0].mxu0
        %v7771 = vadd.f32 %v7546, %v7770
        %v7772 = vpop.f32.mrb[0].mxu0
        %7773 = vmatprep.mubr.f32.mxu0 0.0
        %7774 = vmatmul.mubr.f32.gmra.mrb[0].mxu0 %v6927
        %v7775 = vpop.f32.mrb[0].mxu0
        %v7776 = vadd.f32 %v7551, %v7775
        %v7777 = vpop.f32.mrb[0].mxu0
        %7778 = vmatprep.mubr.f32.mxu0 0.0
        %7779 = vmatmul.mubr.f32.gmra.mrb[0].mxu0 %v6930
        %v7780 = vpop.f32.mrb[0].mxu0
        %v7781 = vadd.f32 %v7556, %v7780
        %v7782 = vpop.f32.mrb[0].mxu0
        %7783 = vmatprep.mubr.f32.mxu0 0.0
        %7784 = vmatmul.mubr.f32.gmra.mrb[0].mxu0 %v6933
        %v7785 = vpop.f32.mrb[0].mxu0
        %v7786 = vadd.f32 %v7561, %v7785
        %v7787 = vpop.f32.mrb[0].mxu0
        %7788 = vmatprep.mubr.f32.mxu0 0.0
        %7789 = vmatmul.mubr.f32.gmra.mrb[0].mxu0 %v6936
        %v7790 = vpop.f32.mrb[0].mxu0
        %v7791 = vadd.f32 %v7566, %v7790
        %v7792 = vpop.f32.mrb[0].mxu0
        %7793 = vmatprep.mubr.f32.mxu0 0.0
        %7794 = vmatmul.mubr.f32.gmra.mrb[0].mxu0 %v6939
        %v7795 = vpop.f32.mrb[0].mxu0
        %v7796 = vadd.f32 %v7571, %v7795
        %v7797 = vpop.f32.mrb[0].mxu0
        %7798 = vmatprep.mubr.f32.mxu0 0.0
        %7799 = vmatmul.mubr.f32.gmra.mrb[0].mxu0 %v6942
        %v7800 = vpop.f32.mrb[0].mxu0
        %v7801 = vadd.f32 %v7576, %v7800
        %v7802 = vpop.f32.mrb[0].mxu0
        %7803 = vmatprep.mubr.f32.mxu0 0.0
        %7804 = vmatmul.mubr.f32.gmra.mrb[0].mxu0 %v6945
        %v7805 = vpop.f32.mrb[0].mxu0
        %v7806 = vadd.f32 %v7581, %v7805
        %v7807 = vpop.f32.mrb[0].mxu0
        %7808 = vmatprep.mubr.f32.mxu0 0.0
        %7809 = vmatmul.mubr.f32.gmra.mrb[0].mxu0 %v6948
        %v7810 = vpop.f32.mrb[0].mxu0
        %v7811 = vadd.f32 %v7586, %v7810
        %v7812 = vpop.f32.mrb[0].mxu0
        %7813 = vmatprep.mubr.f32.mxu0 0.0
        %7814 = vmatmul.mubr.f32.gmra.mrb[0].mxu0 %v6951
        %v7815 = vpop.f32.mrb[0].mxu0
        %v7816 = vadd.f32 %v7591, %v7815
        %v7817 = vpop.f32.mrb[0].mxu0
        %7818 = vmatprep.mubr.f32.mxu0 0.0
        %7819 = vmatmul.mubr.f32.gmra.mrb[0].mxu0 %v6954
        %v7820 = vpop.f32.mrb[0].mxu0
        %v7821 = vadd.f32 %v7596, %v7820
        %v7822 = vpop.f32.mrb[0].mxu0
        %7823 = vmatprep.mubr.f32.mxu0 0.0
        %7824 = vmatmul.mubr.f32.gmra.mrb[0].mxu0 %v6957
        %v7825 = vpop.f32.mrb[0].mxu0
        %v7826 = vadd.f32 %v7601, %v7825
        %v7827 = vpop.f32.mrb[0].mxu0
        %7828 = vmatprep.mubr.f32.mxu0 0.0
        %7829 = vmatmul.mubr.f32.gmra.mrb[0].mxu0 %v6960
        %v7830 = vpop.f32.mrb[0].mxu0
        %v7831 = vadd.f32 %v7606, %v7830
        %v7832 = vpop.f32.mrb[0].mxu0
        %7833 = vmatprep.mubr.f32.mxu0 0.0
        %7834 = vmatmul.mubr.f32.gmra.mrb[0].mxu0 %v6963
        %v7835 = vpop.f32.mrb[0].mxu0
        %v7836 = vadd.f32 %v7611, %v7835
        %v7837 = vpop.f32.mrb[0].mxu0
        %7838 = vmatprep.mubr.f32.mxu0 0.0
        %7839 = vmatmul.mubr.f32.gmra.mrb[0].mxu0 %v6966
        %v7840 = vpop.f32.mrb[0].mxu0
        %v7841 = vadd.f32 %v7616, %v7840
        %v7842 = vpop.f32.mrb[0].mxu0
        %7843 = vmatprep.mubr.f32.mxu0 0.0
        %7844 = vmatmul.mubr.f32.gmra.mrb[0].mxu0 %v6969
        %v7845 = vpop.f32.mrb[0].mxu0
        %v7846 = vadd.f32 %v7621, %v7845
        %v7847 = vpop.f32.mrb[0].mxu0
        %7848 = vmatprep.mubr.f32.mxu0 0.0
        %7849 = vmatmul.mubr.f32.gmra.mrb[0].mxu0 %v6972
        %v7850 = vpop.f32.mrb[0].mxu0
        %v7851 = vadd.f32 %v7626, %v7850
        %v7852 = vpop.f32.mrb[0].mxu0
        %7853 = vmatprep.mubr.f32.mxu0 0.0
        %7854 = vmatmul.mubr.f32.gmra.mrb[0].mxu0 %v6975
        %v7855 = vpop.f32.mrb[0].mxu0
        %v7856 = vadd.f32 %v7631, %v7855
        %v7857 = vpop.f32.mrb[0].mxu0
        %7858 = vmatprep.mubr.f32.mxu0 0.0
        %7859 = vmatmul.mubr.f32.gmra.mrb[0].mxu0 %v6978
        %v7860 = vpop.f32.mrb[0].mxu0
        %v7861 = vadd.f32 %v7636, %v7860
        %v7862 = vpop.f32.mrb[0].mxu0
        %7863 = vmatprep.mubr.f32.mxu0 0.0
        %7864 = vmatmul.mubr.f32.gmra.mrb[0].mxu0 %v6981
        %v7865 = vpop.f32.mrb[0].mxu0
        %v7866 = vadd.f32 %v7641, %v7865
        %v7867 = vpop.f32.mrb[0].mxu0
        %7868 = vmatprep.mubr.f32.mxu0 0.0
        %7869 = vmatmul.mubr.f32.gmra.mrb[0].mxu0 %v6984
        %v7870 = vpop.f32.mrb[0].mxu0
        %v7871 = vadd.f32 %v7646, %v7870
        %v7872 = vpop.f32.mrb[0].mxu0
        %7873 = vmatprep.mubr.f32.mxu0 0.0
        %7874 = vmatmul.mubr.f32.gmra.mrb[0].mxu0 %v6987
        %v7875 = vpop.f32.mrb[0].mxu0
        %v7876 = vadd.f32 %v7651, %v7875
        %v7877 = vpop.f32.mrb[0].mxu0
        %7878 = vmatprep.mubr.f32.mxu0 0.0
        %7879 = vmatmul.mubr.f32.gmra.mrb[0].mxu0 %v6990
        %v7880 = vpop.f32.mrb[0].mxu0
        %v7881 = vadd.f32 %v7656, %v7880
        %v7882 = vpop.f32.mrb[0].mxu0
        %7883 = vmatprep.mubr.f32.mxu0 0.0
        %7884 = vmatmul.mubr.f32.gmra.mrb[0].mxu0 %v6993
        %v7885 = vpop.f32.mrb[0].mxu0
        %v7886 = vadd.f32 %v7661, %v7885
        %v7887 = vpop.f32.mrb[0].mxu0
        %7888 = vmatprep.mubr.f32.mxu0 0.0
        %7889 = vmatmul.mubr.f32.gmra.mrb[0].mxu0 %v6996
        %v7890 = vpop.f32.mrb[0].mxu0
        %v7891 = vadd.f32 %v7666, %v7890
        %v7892 = vpop.f32.mrb[0].mxu0
        %7893 = vmatprep.mubr.f32.mxu0 0.0
        %7894 = vmatmul.mubr.f32.gmra.mrb[0].mxu0 %v6999
        %v7895 = vpop.f32.mrb[0].mxu0
        %v7896 = vadd.f32 %v7671, %v7895
        %v7897 = vpop.f32.mrb[0].mxu0
        %7898 = vmatprep.mubr.f32.mxu0 0.0
        %7899 = vmatmul.mubr.f32.gmra.mrb[0].mxu0 %v7002
        %v7900 = vpop.f32.mrb[0].mxu0
        %v7901 = vadd.f32 %v7676, %v7900
        %v7902 = vpop.f32.mrb[0].mxu0
        %7903 = vdwg.mxu0
        %v7904 = vmax.f32 %v7746, 0.0
        %v7905 = vmax.f32 %v7751, 0.0
        %v7906 = vmax.f32 %v7756, 0.0
        %v7907 = vmax.f32 %v7761, 0.0
        %v7908 = vmax.f32 %v7766, 0.0
        %v7909 = vmax.f32 %v7771, 0.0
        %v7910 = vmax.f32 %v7776, 0.0
        %v7911 = vmax.f32 %v7781, 0.0
        %v7912 = vmax.f32 %v7786, 0.0
        %v7913 = vmax.f32 %v7791, 0.0
        %v7914 = vmax.f32 %v7796, 0.0
        %v7915 = vmax.f32 %v7801, 0.0
        %v7916 = vmax.f32 %v7806, 0.0
        %v7917 = vmax.f32 %v7811, 0.0
        %v7918 = vmax.f32 %v7816, 0.0
        %v7919 = vmax.f32 %v7821, 0.0
        %v7920 = vmax.f32 %v7826, 0.0
        %v7921 = vmax.f32 %v7831, 0.0
        %v7922 = vmax.f32 %v7836, 0.0
        %v7923 = vmax.f32 %v7841, 0.0
        %v7924 = vmax.f32 %v7846, 0.0
        %v7925 = vmax.f32 %v7851, 0.0
        %v7926 = vmax.f32 %v7856, 0.0
        %v7927 = vmax.f32 %v7861, 0.0
        %v7928 = vmax.f32 %v7866, 0.0
        %v7929 = vmax.f32 %v7871, 0.0
        %v7930 = vmax.f32 %v7876, 0.0
        %v7931 = vmax.f32 %v7881, 0.0
        %v7932 = vmax.f32 %v7886, 0.0
        %v7933 = vmax.f32 %v7891, 0.0
        %v7934 = vmax.f32 %v7896, 0.0
        %v7935 = vmax.f32 %v7901, 0.0
        %v7936 = vld [vmem:[%s6] sm:$0xff]
        %v7937 = vld [vmem:[%s6 + $0x8] sm:$0xff]
        %v7938 = vld [vmem:[%s6 + $0x10] sm:$0xff]
        %v7939 = vld [vmem:[%s6 + $0x18] sm:$0xff]
        %v7940 = vld [vmem:[%s6 + $0x20] sm:$0xff]
        %v7941 = vld [vmem:[%s6 + $0x28] sm:$0xff]
        %v7942 = vld [vmem:[%s6 + $0x30] sm:$0xff]
        %v7943 = vld [vmem:[%s6 + $0x38] sm:$0xff]
        %v7944 = vld [vmem:[%s6 + $0x40] sm:$0xff]
        %v7945 = vld [vmem:[%s6 + $0x48] sm:$0xff]
        %v7946 = vld [vmem:[%s6 + $0x50] sm:$0xff]
        %v7947 = vld [vmem:[%s6 + $0x58] sm:$0xff]
        %v7948 = vld [vmem:[%s6 + $0x60] sm:$0xff]
        %v7949 = vld [vmem:[%s6 + $0x68] sm:$0xff]
        %v7950 = vld [vmem:[%s6 + $0x70] sm:$0xff]
        %v7951 = vld [vmem:[%s6 + $0x78] sm:$0xff]
        %7952 = vmatprep.subr.mxu0 0.0
        %7953 = vmatpush1.msra.mxu0 %v7904
        %7954 = vmatprep.subr.mxu0 0.0
        %7955 = vmatpush1.msra.mxu0 %v7905
        %7956 = vmatprep.subr.mxu0 0.0
        %7957 = vmatpush1.msra.mxu0 %v7906
        %7958 = vmatprep.subr.mxu0 0.0
        %7959 = vmatpush1.msra.mxu0 %v7907
        %7960 = vmatprep.subr.mxu0 0.0
        %7961 = vmatpush1.msra.mxu0 %v7908
        %7962 = vmatprep.subr.mxu0 0.0
        %7963 = vmatpush1.msra.mxu0 %v7909
        %7964 = vmatprep.subr.mxu0 0.0
        %7965 = vmatpush1.msra.mxu0 %v7910
        %7966 = vmatprep.subr.mxu0 0.0
        %7967 = vmatpush1.msra.mxu0 %v7911
        %7968 = vmatprep.subr.mxu0 0.0
        %7969 = vmatpush1.msra.mxu0 %v7912
        %7970 = vmatprep.subr.mxu0 0.0
        %7971 = vmatpush1.msra.mxu0 %v7913
        %7972 = vmatprep.subr.mxu0 0.0
        %7973 = vmatpush1.msra.mxu0 %v7914
        %7974 = vmatprep.subr.mxu0 0.0
        %7975 = vmatpush1.msra.mxu0 %v7915
        %7976 = vmatprep.subr.mxu0 0.0
        %7977 = vmatpush1.msra.mxu0 %v7916
        %7978 = vmatprep.subr.mxu0 0.0
        %7979 = vmatpush1.msra.mxu0 %v7917
        %7980 = vmatprep.subr.mxu0 0.0
        %7981 = vmatpush1.msra.mxu0 %v7918
        %7982 = vmatprep.subr.mxu0 0.0
        %7983 = vmatpush1.msra.mxu0 %v7919
        %7984 = vmatprep.subr.mxu0 0.0
        %7985 = vmatpush1.msra.mxu0 %v7920
        %7986 = vmatprep.subr.mxu0 0.0
        %7987 = vmatpush1.msra.mxu0 %v7921
        %7988 = vmatprep.subr.mxu0 0.0
        %7989 = vmatpush1.msra.mxu0 %v7922
        %7990 = vmatprep.subr.mxu0 0.0
        %7991 = vmatpush1.msra.mxu0 %v7923
        %7992 = vmatprep.subr.mxu0 0.0
        %7993 = vmatpush1.msra.mxu0 %v7924
        %7994 = vmatprep.subr.mxu0 0.0
        %7995 = vmatpush1.msra.mxu0 %v7925
        %7996 = vmatprep.subr.mxu0 0.0
        %7997 = vmatpush1.msra.mxu0 %v7926
        %7998 = vmatprep.subr.mxu0 0.0
        %7999 = vmatpush1.msra.mxu0 %v7927
        %8000 = vmatprep.subr.mxu0 0.0
        %8001 = vmatpush1.msra.mxu0 %v7928
        %8002 = vmatprep.subr.mxu0 0.0
        %8003 = vmatpush1.msra.mxu0 %v7929
        %8004 = vmatprep.subr.mxu0 0.0
        %8005 = vmatpush1.msra.mxu0 %v7930
        %8006 = vmatprep.subr.mxu0 0.0
        %8007 = vmatpush1.msra.mxu0 %v7931
        %8008 = vmatprep.subr.mxu0 0.0
        %8009 = vmatpush1.msra.mxu0 %v7932
        %8010 = vmatprep.subr.mxu0 0.0
        %8011 = vmatpush1.msra.mxu0 %v7933
        %8012 = vmatprep.subr.mxu0 0.0
        %8013 = vmatpush1.msra.mxu0 %v7934
        %8014 = vmatprep.subr.mxu0 0.0
        %8015 = vmatpush1.msra.mxu0 %v7935
        %8016 = vmatprep.mubr.f32.mxu0 %v7937
        %8017 = vmatmul.mubr.f32.gmra.mrb[0].mxu0 %v7936
        %v8018 = vpop.f32.mrb[0].mxu0
        %v8019 = vadd.f32 0.0, %v8018
        %v8020 = vpop.f32.mrb[0].mxu0
        %8021 = vmatprep.mubr.f32.mxu0 %v7939
        %8022 = vmatmul.mubr.f32.gmra.mrb[0].mxu0 %v7938
        %v8023 = vpop.f32.mrb[0].mxu0
        %v8024 = vadd.f32 0.0, %v8023
        %v8025 = vpop.f32.mrb[0].mxu0
        %8026 = vmatprep.mubr.f32.mxu0 %v7941
        %8027 = vmatmul.mubr.f32.gmra.mrb[0].mxu0 %v7940
        %v8028 = vpop.f32.mrb[0].mxu0
        %v8029 = vadd.f32 0.0, %v8028
        %v8030 = vpop.f32.mrb[0].mxu0
        %8031 = vmatprep.mubr.f32.mxu0 %v7943
        %8032 = vmatmul.mubr.f32.gmra.mrb[0].mxu0 %v7942
        %v8033 = vpop.f32.mrb[0].mxu0
        %v8034 = vadd.f32 0.0, %v8033
        %v8035 = vpop.f32.mrb[0].mxu0
        %8036 = vmatprep.mubr.f32.mxu0 %v7945
        %8037 = vmatmul.mubr.f32.gmra.mrb[0].mxu0 %v7944
        %v8038 = vpop.f32.mrb[0].mxu0
        %v8039 = vadd.f32 0.0, %v8038
        %v8040 = vpop.f32.mrb[0].mxu0
        %8041 = vmatprep.mubr.f32.mxu0 %v7947
        %8042 = vmatmul.mubr.f32.gmra.mrb[0].mxu0 %v7946
        %v8043 = vpop.f32.mrb[0].mxu0
        %v8044 = vadd.f32 0.0, %v8043
        %v8045 = vpop.f32.mrb[0].mxu0
        %8046 = vmatprep.mubr.f32.mxu0 %v7949
        %8047 = vmatmul.mubr.f32.gmra.mrb[0].mxu0 %v7948
        %v8048 = vpop.f32.mrb[0].mxu0
        %v8049 = vadd.f32 0.0, %v8048
        %v8050 = vpop.f32.mrb[0].mxu0
        %8051 = vmatprep.mubr.f32.mxu0 %v7951
        %8052 = vmatmul.mubr.f32.gmra.mrb[0].mxu0 %v7950
        %v8053 = vpop.f32.mrb[0].mxu0
        %v8054 = vadd.f32 0.0, %v8053
        %v8055 = vpop.f32.mrb[0].mxu0
        %8056 = vdwg.mxu0
        %s8057 = scalar_lea.vmem %s6, 128
        %v8058 = vld [vmem:[%s8057] sm:$0xff]
        %v8059 = vld [vmem:[%s8057 + $0x8] sm:$0xff]
        %v8060 = vld [vmem:[%s8057 + $0x10] sm:$0xff]
        %v8061 = vld [vmem:[%s8057 + $0x18] sm:$0xff]
        %v8062 = vld [vmem:[%s8057 + $0x20] sm:$0xff]
        %v8063 = vld [vmem:[%s8057 + $0x28] sm:$0xff]
        %v8064 = vld [vmem:[%s8057 + $0x30] sm:$0xff]
        %v8065 = vld [vmem:[%s8057 + $0x38] sm:$0xff]
        %v8066 = vld [vmem:[%s8057 + $0x40] sm:$0xff]
        %v8067 = vld [vmem:[%s8057 + $0x48] sm:$0xff]
        %v8068 = vld [vmem:[%s8057 + $0x50] sm:$0xff]
        %v8069 = vld [vmem:[%s8057 + $0x58] sm:$0xff]
        %v8070 = vld [vmem:[%s8057 + $0x60] sm:$0xff]
        %v8071 = vld [vmem:[%s8057 + $0x68] sm:$0xff]
        %v8072 = vld [vmem:[%s8057 + $0x70] sm:$0xff]
        %v8073 = vld [vmem:[%s8057 + $0x78] sm:$0xff]
        %8074 = vmatprep.subr.mxu0 0.0
        %8075 = vmatpush1.msra.mxu0 %v7904
        %8076 = vmatprep.subr.mxu0 0.0
        %8077 = vmatpush1.msra.mxu0 %v7905
        %8078 = vmatprep.subr.mxu0 0.0
        %8079 = vmatpush1.msra.mxu0 %v7906
        %8080 = vmatprep.subr.mxu0 0.0
        %8081 = vmatpush1.msra.mxu0 %v7907
        %8082 = vmatprep.subr.mxu0 0.0
        %8083 = vmatpush1.msra.mxu0 %v7908
        %8084 = vmatprep.subr.mxu0 0.0
        %8085 = vmatpush1.msra.mxu0 %v7909
        %8086 = vmatprep.subr.mxu0 0.0
        %8087 = vmatpush1.msra.mxu0 %v7910
        %8088 = vmatprep.subr.mxu0 0.0
        %8089 = vmatpush1.msra.mxu0 %v7911
        %8090 = vmatprep.subr.mxu0 0.0
        %8091 = vmatpush1.msra.mxu0 %v7912
        %8092 = vmatprep.subr.mxu0 0.0
        %8093 = vmatpush1.msra.mxu0 %v7913
        %8094 = vmatprep.subr.mxu0 0.0
        %8095 = vmatpush1.msra.mxu0 %v7914
        %8096 = vmatprep.subr.mxu0 0.0
        %8097 = vmatpush1.msra.mxu0 %v7915
        %8098 = vmatprep.subr.mxu0 0.0
        %8099 = vmatpush1.msra.mxu0 %v7916
        %8100 = vmatprep.subr.mxu0 0.0
        %8101 = vmatpush1.msra.mxu0 %v7917
        %8102 = vmatprep.subr.mxu0 0.0
        %8103 = vmatpush1.msra.mxu0 %v7918
        %8104 = vmatprep.subr.mxu0 0.0
        %8105 = vmatpush1.msra.mxu0 %v7919
        %8106 = vmatprep.subr.mxu0 0.0
        %8107 = vmatpush1.msra.mxu0 %v7920
        %8108 = vmatprep.subr.mxu0 0.0
        %8109 = vmatpush1.msra.mxu0 %v7921
        %8110 = vmatprep.subr.mxu0 0.0
        %8111 = vmatpush1.msra.mxu0 %v7922
        %8112 = vmatprep.subr.mxu0 0.0
        %8113 = vmatpush1.msra.mxu0 %v7923
        %8114 = vmatprep.subr.mxu0 0.0
        %8115 = vmatpush1.msra.mxu0 %v7924
        %8116 = vmatprep.subr.mxu0 0.0
        %8117 = vmatpush1.msra.mxu0 %v7925
        %8118 = vmatprep.subr.mxu0 0.0
        %8119 = vmatpush1.msra.mxu0 %v7926
        %8120 = vmatprep.subr.mxu0 0.0
        %8121 = vmatpush1.msra.mxu0 %v7927
        %8122 = vmatprep.subr.mxu0 0.0
        %8123 = vmatpush1.msra.mxu0 %v7928
        %8124 = vmatprep.subr.mxu0 0.0
        %8125 = vmatpush1.msra.mxu0 %v7929
        %8126 = vmatprep.subr.mxu0 0.0
        %8127 = vmatpush1.msra.mxu0 %v7930
        %8128 = vmatprep.subr.mxu0 0.0
        %8129 = vmatpush1.msra.mxu0 %v7931
        %8130 = vmatprep.subr.mxu0 0.0
        %8131 = vmatpush1.msra.mxu0 %v7932
        %8132 = vmatprep.subr.mxu0 0.0
        %8133 = vmatpush1.msra.mxu0 %v7933
        %8134 = vmatprep.subr.mxu0 0.0
        %8135 = vmatpush1.msra.mxu0 %v7934
        %8136 = vmatprep.subr.mxu0 0.0
        %8137 = vmatpush1.msra.mxu0 %v7935
        %8138 = vmatprep.mubr.f32.mxu0 %v8059
        %8139 = vmatmul.mubr.f32.gmra.mrb[0].mxu0 %v8058
        %v8140 = vpop.f32.mrb[0].mxu0
        %v8141 = vadd.f32 0.0, %v8140
        %v8142 = vpop.f32.mrb[0].mxu0
        %8143 = vmatprep.mubr.f32.mxu0 %v8061
        %8144 = vmatmul.mubr.f32.gmra.mrb[0].mxu0 %v8060
        %v8145 = vpop.f32.mrb[0].mxu0
        %v8146 = vadd.f32 0.0, %v8145
        %v8147 = vpop.f32.mrb[0].mxu0
        %8148 = vmatprep.mubr.f32.mxu0 %v8063
        %8149 = vmatmul.mubr.f32.gmra.mrb[0].mxu0 %v8062
        %v8150 = vpop.f32.mrb[0].mxu0
        %v8151 = vadd.f32 0.0, %v8150
        %v8152 = vpop.f32.mrb[0].mxu0
        %8153 = vmatprep.mubr.f32.mxu0 %v8065
        %8154 = vmatmul.mubr.f32.gmra.mrb[0].mxu0 %v8064
        %v8155 = vpop.f32.mrb[0].mxu0
        %v8156 = vadd.f32 0.0, %v8155
        %v8157 = vpop.f32.mrb[0].mxu0
        %8158 = vmatprep.mubr.f32.mxu0 %v8067
        %8159 = vmatmul.mubr.f32.gmra.mrb[0].mxu0 %v8066
        %v8160 = vpop.f32.mrb[0].mxu0
        %v8161 = vadd.f32 0.0, %v8160
        %v8162 = vpop.f32.mrb[0].mxu0
        %8163 = vmatprep.mubr.f32.mxu0 %v8069
        %8164 = vmatmul.mubr.f32.gmra.mrb[0].mxu0 %v8068
        %v8165 = vpop.f32.mrb[0].mxu0
        %v8166 = vadd.f32 0.0, %v8165
        %v8167 = vpop.f32.mrb[0].mxu0
        %8168 = vmatprep.mubr.f32.mxu0 %v8071
        %8169 = vmatmul.mubr.f32.gmra.mrb[0].mxu0 %v8070
        %v8170 = vpop.f32.mrb[0].mxu0
        %v8171 = vadd.f32 0.0, %v8170
        %v8172 = vpop.f32.mrb[0].mxu0
        %8173 = vmatprep.mubr.f32.mxu0 %v8073
        %8174 = vmatmul.mubr.f32.gmra.mrb[0].mxu0 %v8072
        %v8175 = vpop.f32.mrb[0].mxu0
        %v8176 = vadd.f32 0.0, %v8175
        %v8177 = vpop.f32.mrb[0].mxu0
        %8178 = vdwg.mxu0
        %v8179 = vmax.f32 %v8019, %v8141
        %v8180 = vmax.f32 %v8024, %v8146
        %v8181 = vmax.f32 %v8029, %v8151
        %v8182 = vmax.f32 %v8034, %v8156
        %v8183 = vmax.f32 %v8039, %v8161
        %v8184 = vmax.f32 %v8044, %v8166
        %v8185 = vmax.f32 %v8049, %v8171
        %v8186 = vmax.f32 %v8054, %v8176
        %s8187 = scalar_lea.vmem %s6, 256
        %v8188 = vld [vmem:[%s8187] sm:$0xff]
        %v8189 = vld [vmem:[%s8187 + $0x8] sm:$0xff]
        %v8190 = vld [vmem:[%s8187 + $0x10] sm:$0xff]
        %v8191 = vld [vmem:[%s8187 + $0x18] sm:$0xff]
        %v8192 = vld [vmem:[%s8187 + $0x20] sm:$0xff]
        %v8193 = vld [vmem:[%s8187 + $0x28] sm:$0xff]
        %v8194 = vld [vmem:[%s8187 + $0x30] sm:$0xff]
        %v8195 = vld [vmem:[%s8187 + $0x38] sm:$0xff]
        %v8196 = vld [vmem:[%s8187 + $0x40] sm:$0xff]
        %v8197 = vld [vmem:[%s8187 + $0x48] sm:$0xff]
        %v8198 = vld [vmem:[%s8187 + $0x50] sm:$0xff]
        %v8199 = vld [vmem:[%s8187 + $0x58] sm:$0xff]
        %v8200 = vld [vmem:[%s8187 + $0x60] sm:$0xff]
        %v8201 = vld [vmem:[%s8187 + $0x68] sm:$0xff]
        %v8202 = vld [vmem:[%s8187 + $0x70] sm:$0xff]
        %v8203 = vld [vmem:[%s8187 + $0x78] sm:$0xff]
        %8204 = vmatprep.subr.mxu0 0.0
        %8205 = vmatpush1.msra.mxu0 %v7904
        %8206 = vmatprep.subr.mxu0 0.0
        %8207 = vmatpush1.msra.mxu0 %v7905
        %8208 = vmatprep.subr.mxu0 0.0
        %8209 = vmatpush1.msra.mxu0 %v7906
        %8210 = vmatprep.subr.mxu0 0.0
        %8211 = vmatpush1.msra.mxu0 %v7907
        %8212 = vmatprep.subr.mxu0 0.0
        %8213 = vmatpush1.msra.mxu0 %v7908
        %8214 = vmatprep.subr.mxu0 0.0
        %8215 = vmatpush1.msra.mxu0 %v7909
        %8216 = vmatprep.subr.mxu0 0.0
        %8217 = vmatpush1.msra.mxu0 %v7910
        %8218 = vmatprep.subr.mxu0 0.0
        %8219 = vmatpush1.msra.mxu0 %v7911
        %8220 = vmatprep.subr.mxu0 0.0
        %8221 = vmatpush1.msra.mxu0 %v7912
        %8222 = vmatprep.subr.mxu0 0.0
        %8223 = vmatpush1.msra.mxu0 %v7913
        %8224 = vmatprep.subr.mxu0 0.0
        %8225 = vmatpush1.msra.mxu0 %v7914
        %8226 = vmatprep.subr.mxu0 0.0
        %8227 = vmatpush1.msra.mxu0 %v7915
        %8228 = vmatprep.subr.mxu0 0.0
        %8229 = vmatpush1.msra.mxu0 %v7916
        %8230 = vmatprep.subr.mxu0 0.0
        %8231 = vmatpush1.msra.mxu0 %v7917
        %8232 = vmatprep.subr.mxu0 0.0
        %8233 = vmatpush1.msra.mxu0 %v7918
        %8234 = vmatprep.subr.mxu0 0.0
        %8235 = vmatpush1.msra.mxu0 %v7919
        %8236 = vmatprep.subr.mxu0 0.0
        %8237 = vmatpush1.msra.mxu0 %v7920
        %8238 = vmatprep.subr.mxu0 0.0
        %8239 = vmatpush1.msra.mxu0 %v7921
        %8240 = vmatprep.subr.mxu0 0.0
        %8241 = vmatpush1.msra.mxu0 %v7922
        %8242 = vmatprep.subr.mxu0 0.0
        %8243 = vmatpush1.msra.mxu0 %v7923
        %8244 = vmatprep.subr.mxu0 0.0
        %8245 = vmatpush1.msra.mxu0 %v7924
        %8246 = vmatprep.subr.mxu0 0.0
        %8247 = vmatpush1.msra.mxu0 %v7925
        %8248 = vmatprep.subr.mxu0 0.0
        %8249 = vmatpush1.msra.mxu0 %v7926
        %8250 = vmatprep.subr.mxu0 0.0
        %8251 = vmatpush1.msra.mxu0 %v7927
        %8252 = vmatprep.subr.mxu0 0.0
        %8253 = vmatpush1.msra.mxu0 %v7928
        %8254 = vmatprep.subr.mxu0 0.0
        %8255 = vmatpush1.msra.mxu0 %v7929
        %8256 = vmatprep.subr.mxu0 0.0
        %8257 = vmatpush1.msra.mxu0 %v7930
        %8258 = vmatprep.subr.mxu0 0.0
        %8259 = vmatpush1.msra.mxu0 %v7931
        %8260 = vmatprep.subr.mxu0 0.0
        %8261 = vmatpush1.msra.mxu0 %v7932
        %8262 = vmatprep.subr.mxu0 0.0
        %8263 = vmatpush1.msra.mxu0 %v7933
        %8264 = vmatprep.subr.mxu0 0.0
        %8265 = vmatpush1.msra.mxu0 %v7934
        %8266 = vmatprep.subr.mxu0 0.0
        %8267 = vmatpush1.msra.mxu0 %v7935
        %8268 = vmatprep.mubr.f32.mxu0 %v8189
        %8269 = vmatmul.mubr.f32.gmra.mrb[0].mxu0 %v8188
        %v8270 = vpop.f32.mrb[0].mxu0
        %v8271 = vadd.f32 0.0, %v8270
        %v8272 = vpop.f32.mrb[0].mxu0
        %8273 = vmatprep.mubr.f32.mxu0 %v8191
        %8274 = vmatmul.mubr.f32.gmra.mrb[0].mxu0 %v8190
        %v8275 = vpop.f32.mrb[0].mxu0
        %v8276 = vadd.f32 0.0, %v8275
        %v8277 = vpop.f32.mrb[0].mxu0
        %8278 = vmatprep.mubr.f32.mxu0 %v8193
        %8279 = vmatmul.mubr.f32.gmra.mrb[0].mxu0 %v8192
        %v8280 = vpop.f32.mrb[0].mxu0
        %v8281 = vadd.f32 0.0, %v8280
        %v8282 = vpop.f32.mrb[0].mxu0
        %8283 = vmatprep.mubr.f32.mxu0 %v8195
        %8284 = vmatmul.mubr.f32.gmra.mrb[0].mxu0 %v8194
        %v8285 = vpop.f32.mrb[0].mxu0
        %v8286 = vadd.f32 0.0, %v8285
        %v8287 = vpop.f32.mrb[0].mxu0
        %8288 = vmatprep.mubr.f32.mxu0 %v8197
        %8289 = vmatmul.mubr.f32.gmra.mrb[0].mxu0 %v8196
        %v8290 = vpop.f32.mrb[0].mxu0
        %v8291 = vadd.f32 0.0, %v8290
        %v8292 = vpop.f32.mrb[0].mxu0
        %8293 = vmatprep.mubr.f32.mxu0 %v8199
        %8294 = vmatmul.mubr.f32.gmra.mrb[0].mxu0 %v8198
        %v8295 = vpop.f32.mrb[0].mxu0
        %v8296 = vadd.f32 0.0, %v8295
        %v8297 = vpop.f32.mrb[0].mxu0
        %8298 = vmatprep.mubr.f32.mxu0 %v8201
        %8299 = vmatmul.mubr.f32.gmra.mrb[0].mxu0 %v8200
        %v8300 = vpop.f32.mrb[0].mxu0
        %v8301 = vadd.f32 0.0, %v8300
        %v8302 = vpop.f32.mrb[0].mxu0
        %8303 = vmatprep.mubr.f32.mxu0 %v8203
        %8304 = vmatmul.mubr.f32.gmra.mrb[0].mxu0 %v8202
        %v8305 = vpop.f32.mrb[0].mxu0
        %v8306 = vadd.f32 0.0, %v8305
        %v8307 = vpop.f32.mrb[0].mxu0
        %8308 = vdwg.mxu0
        %s8309 = scalar_lea.vmem %s6, 384
        %v8310 = vld [vmem:[%s8309] sm:$0xff]
        %v8311 = vld [vmem:[%s8309 + $0x8] sm:$0xff]
        %v8312 = vld [vmem:[%s8309 + $0x10] sm:$0xff]
        %v8313 = vld [vmem:[%s8309 + $0x18] sm:$0xff]
        %v8314 = vld [vmem:[%s8309 + $0x20] sm:$0xff]
        %v8315 = vld [vmem:[%s8309 + $0x28] sm:$0xff]
        %v8316 = vld [vmem:[%s8309 + $0x30] sm:$0xff]
        %v8317 = vld [vmem:[%s8309 + $0x38] sm:$0xff]
        %v8318 = vld [vmem:[%s8309 + $0x40] sm:$0xff]
        %v8319 = vld [vmem:[%s8309 + $0x48] sm:$0xff]
        %v8320 = vld [vmem:[%s8309 + $0x50] sm:$0xff]
        %v8321 = vld [vmem:[%s8309 + $0x58] sm:$0xff]
        %v8322 = vld [vmem:[%s8309 + $0x60] sm:$0xff]
        %v8323 = vld [vmem:[%s8309 + $0x68] sm:$0xff]
        %v8324 = vld [vmem:[%s8309 + $0x70] sm:$0xff]
        %v8325 = vld [vmem:[%s8309 + $0x78] sm:$0xff]
        %8326 = vmatprep.subr.mxu0 0.0
        %8327 = vmatpush1.msra.mxu0 %v7904
        %8328 = vmatprep.subr.mxu0 0.0
        %8329 = vmatpush1.msra.mxu0 %v7905
        %8330 = vmatprep.subr.mxu0 0.0
        %8331 = vmatpush1.msra.mxu0 %v7906
        %8332 = vmatprep.subr.mxu0 0.0
        %8333 = vmatpush1.msra.mxu0 %v7907
        %8334 = vmatprep.subr.mxu0 0.0
        %8335 = vmatpush1.msra.mxu0 %v7908
        %8336 = vmatprep.subr.mxu0 0.0
        %8337 = vmatpush1.msra.mxu0 %v7909
        %8338 = vmatprep.subr.mxu0 0.0
        %8339 = vmatpush1.msra.mxu0 %v7910
        %8340 = vmatprep.subr.mxu0 0.0
        %8341 = vmatpush1.msra.mxu0 %v7911
        %8342 = vmatprep.subr.mxu0 0.0
        %8343 = vmatpush1.msra.mxu0 %v7912
        %8344 = vmatprep.subr.mxu0 0.0
        %8345 = vmatpush1.msra.mxu0 %v7913
        %8346 = vmatprep.subr.mxu0 0.0
        %8347 = vmatpush1.msra.mxu0 %v7914
        %8348 = vmatprep.subr.mxu0 0.0
        %8349 = vmatpush1.msra.mxu0 %v7915
        %8350 = vmatprep.subr.mxu0 0.0
        %8351 = vmatpush1.msra.mxu0 %v7916
        %8352 = vmatprep.subr.mxu0 0.0
        %8353 = vmatpush1.msra.mxu0 %v7917
        %8354 = vmatprep.subr.mxu0 0.0
        %8355 = vmatpush1.msra.mxu0 %v7918
        %8356 = vmatprep.subr.mxu0 0.0
        %8357 = vmatpush1.msra.mxu0 %v7919
        %8358 = vmatprep.subr.mxu0 0.0
        %8359 = vmatpush1.msra.mxu0 %v7920
        %8360 = vmatprep.subr.mxu0 0.0
        %8361 = vmatpush1.msra.mxu0 %v7921
        %8362 = vmatprep.subr.mxu0 0.0
        %8363 = vmatpush1.msra.mxu0 %v7922
        %8364 = vmatprep.subr.mxu0 0.0
        %8365 = vmatpush1.msra.mxu0 %v7923
        %8366 = vmatprep.subr.mxu0 0.0
        %8367 = vmatpush1.msra.mxu0 %v7924
        %8368 = vmatprep.subr.mxu0 0.0
        %8369 = vmatpush1.msra.mxu0 %v7925
        %8370 = vmatprep.subr.mxu0 0.0
        %8371 = vmatpush1.msra.mxu0 %v7926
        %8372 = vmatprep.subr.mxu0 0.0
        %8373 = vmatpush1.msra.mxu0 %v7927
        %8374 = vmatprep.subr.mxu0 0.0
        %8375 = vmatpush1.msra.mxu0 %v7928
        %8376 = vmatprep.subr.mxu0 0.0
        %8377 = vmatpush1.msra.mxu0 %v7929
        %8378 = vmatprep.subr.mxu0 0.0
        %8379 = vmatpush1.msra.mxu0 %v7930
        %8380 = vmatprep.subr.mxu0 0.0
        %8381 = vmatpush1.msra.mxu0 %v7931
        %8382 = vmatprep.subr.mxu0 0.0
        %8383 = vmatpush1.msra.mxu0 %v7932
        %8384 = vmatprep.subr.mxu0 0.0
        %8385 = vmatpush1.msra.mxu0 %v7933
        %8386 = vmatprep.subr.mxu0 0.0
        %8387 = vmatpush1.msra.mxu0 %v7934
        %8388 = vmatprep.subr.mxu0 0.0
        %8389 = vmatpush1.msra.mxu0 %v7935
        %8390 = vmatprep.mubr.f32.mxu0 %v8311
        %8391 = vmatmul.mubr.f32.gmra.mrb[0].mxu0 %v8310
        %v8392 = vpop.f32.mrb[0].mxu0
        %v8393 = vadd.f32 0.0, %v8392
        %v8394 = vpop.f32.mrb[0].mxu0
        %8395 = vmatprep.mubr.f32.mxu0 %v8313
        %8396 = vmatmul.mubr.f32.gmra.mrb[0].mxu0 %v8312
        %v8397 = vpop.f32.mrb[0].mxu0
        %v8398 = vadd.f32 0.0, %v8397
        %v8399 = vpop.f32.mrb[0].mxu0
        %8400 = vmatprep.mubr.f32.mxu0 %v8315
        %8401 = vmatmul.mubr.f32.gmra.mrb[0].mxu0 %v8314
        %v8402 = vpop.f32.mrb[0].mxu0
        %v8403 = vadd.f32 0.0, %v8402
        %v8404 = vpop.f32.mrb[0].mxu0
        %8405 = vmatprep.mubr.f32.mxu0 %v8317
        %8406 = vmatmul.mubr.f32.gmra.mrb[0].mxu0 %v8316
        %v8407 = vpop.f32.mrb[0].mxu0
        %v8408 = vadd.f32 0.0, %v8407
        %v8409 = vpop.f32.mrb[0].mxu0
        %8410 = vmatprep.mubr.f32.mxu0 %v8319
        %8411 = vmatmul.mubr.f32.gmra.mrb[0].mxu0 %v8318
        %v8412 = vpop.f32.mrb[0].mxu0
        %v8413 = vadd.f32 0.0, %v8412
        %v8414 = vpop.f32.mrb[0].mxu0
        %8415 = vmatprep.mubr.f32.mxu0 %v8321
        %8416 = vmatmul.mubr.f32.gmra.mrb[0].mxu0 %v8320
        %v8417 = vpop.f32.mrb[0].mxu0
        %v8418 = vadd.f32 0.0, %v8417
        %v8419 = vpop.f32.mrb[0].mxu0
        %8420 = vmatprep.mubr.f32.mxu0 %v8323
        %8421 = vmatmul.mubr.f32.gmra.mrb[0].mxu0 %v8322
        %v8422 = vpop.f32.mrb[0].mxu0
        %v8423 = vadd.f32 0.0, %v8422
        %v8424 = vpop.f32.mrb[0].mxu0
        %8425 = vmatprep.mubr.f32.mxu0 %v8325
        %8426 = vmatmul.mubr.f32.gmra.mrb[0].mxu0 %v8324
        %v8427 = vpop.f32.mrb[0].mxu0
        %v8428 = vadd.f32 0.0, %v8427
        %v8429 = vpop.f32.mrb[0].mxu0
        %8430 = vdwg.mxu0
        %v8431 = vmax.f32 %v8271, %v8393
        %v8432 = vmax.f32 %v8276, %v8398
        %v8433 = vmax.f32 %v8281, %v8403
        %v8434 = vmax.f32 %v8286, %v8408
        %v8435 = vmax.f32 %v8291, %v8413
        %v8436 = vmax.f32 %v8296, %v8418
        %v8437 = vmax.f32 %v8301, %v8423
        %v8438 = vmax.f32 %v8306, %v8428
        %v8439 = vmax.f32 %v8179, %v8431
        %v8440 = vmax.f32 %v8180, %v8432
        %v8441 = vmax.f32 %v8181, %v8433
        %v8442 = vmax.f32 %v8182, %v8434
        %v8443 = vmax.f32 %v8183, %v8435
        %v8444 = vmax.f32 %v8184, %v8436
        %v8445 = vmax.f32 %v8185, %v8437
        %v8446 = vmax.f32 %v8186, %v8438
        %8447 = vst.msk [vmem:[#allocation3 + $0x10] sm:$0xff] %vm476, %v8439
        %8448 = vst.msk [vmem:[#allocation3 + $0x18] sm:$0xff] %vm476, %v8440
        %8449 = vst.msk [vmem:[#allocation3 + $0x20] sm:$0xff] %vm476, %v8441
        %8450 = vst.msk [vmem:[#allocation3 + $0x28] sm:$0xff] %vm476, %v8442
        %8451 = vst.msk [vmem:[#allocation3 + $0x30] sm:$0xff] %vm476, %v8443
        %8452 = vst.msk [vmem:[#allocation3 + $0x38] sm:$0xff] %vm476, %v8444
        %8453 = vst.msk [vmem:[#allocation3 + $0x40] sm:$0xff] %vm476, %v8445
        %8454 = vst.msk [vmem:[#allocation3 + $0x48] sm:$0xff] %vm476, %v8446
        %v8455 = vld [vmem:[#allocation3 + $0x7] sm:$0xff]
        %v8456 = vld [vmem:[#allocation3 + $0xf] sm:$0xff]
        %v8457 = vld [vmem:[#allocation3 + $0x17] sm:$0xff]
        %v8458 = vld [vmem:[#allocation3 + $0x1f] sm:$0xff]
        %v8459 = vld [vmem:[#allocation3 + $0x27] sm:$0xff]
        %v8460 = vld [vmem:[#allocation3 + $0x2f] sm:$0xff]
        %v8461 = vld [vmem:[#allocation3 + $0x37] sm:$0xff]
        %v8462 = vld [vmem:[#allocation3 + $0x3f] sm:$0xff]
        %8463 = vst.msk [vmem:[#allocation5] sm:$0xff] %vm476, %v8455
        %8464 = vst.msk [vmem:[#allocation5 + $0x28] sm:$0xff] %vm476, %v8456
        %8465 = vst.msk [vmem:[#allocation5 + $0x50] sm:$0xff] %vm476, %v8457
        %8466 = vst.msk [vmem:[#allocation5 + $0x78] sm:$0xff] %vm476, %v8458
        %8467 = vst.msk [vmem:[#allocation5 + $0xa0] sm:$0xff] %vm476, %v8459
        %8468 = vst.msk [vmem:[#allocation5 + $0xc8] sm:$0xff] %vm476, %v8460
        %8469 = vst.msk [vmem:[#allocation5 + $0xf0] sm:$0xff] %vm476, %v8461
        %8470 = vst.msk [vmem:[#allocation5 + $0x118] sm:$0xff] %vm476, %v8462
        %v8471 = vld [vmem:[#allocation3 + $0x8] sm:$0xff]
        %v8472 = vld [vmem:[#allocation3 + $0x10] sm:$0xff]
        %v8473 = vld [vmem:[#allocation3 + $0x18] sm:$0xff]
        %v8474 = vld [vmem:[#allocation3 + $0x20] sm:$0xff]
        %v8475 = vld [vmem:[#allocation3 + $0x28] sm:$0xff]
        %v8476 = vld [vmem:[#allocation3 + $0x30] sm:$0xff]
        %v8477 = vld [vmem:[#allocation3 + $0x38] sm:$0xff]
        %v8478 = vld [vmem:[#allocation3 + $0x40] sm:$0xff]
        %8487 = vrot.lane.b32.xlu0 %v8471, 64
        %v8488 = vpop.permute.xlu0 %8487
        %8489 = vrot.lane.b32.xlu0 %v8472, 64
        %v8490 = vpop.permute.xlu0 %8489
        %8491 = vrot.lane.b32.xlu0 %v8473, 64
        %v8492 = vpop.permute.xlu0 %8491
        %8493 = vrot.lane.b32.xlu0 %v8474, 64
        %v8494 = vpop.permute.xlu0 %8493
        %8495 = vrot.lane.b32.xlu0 %v8475, 64
        %v8496 = vpop.permute.xlu0 %8495
        %8497 = vrot.lane.b32.xlu0 %v8476, 64
        %v8498 = vpop.permute.xlu0 %8497
        %8499 = vrot.lane.b32.xlu0 %v8477, 64
        %v8500 = vpop.permute.xlu0 %8499
        %8501 = vrot.lane.b32.xlu0 %v8478, 64
        %v8502 = vpop.permute.xlu0 %8501
        %vm8511 = vcmask 1048064
        %8512 = vst.msk [vmem:[#allocation5] sm:$0xff] %vm8511, %v8488
        %8513 = vst.msk [vmem:[#allocation5 + $0x28] sm:$0xff] %vm8511, %v8490
        %8514 = vst.msk [vmem:[#allocation5 + $0x50] sm:$0xff] %vm8511, %v8492
        %8515 = vst.msk [vmem:[#allocation5 + $0x78] sm:$0xff] %vm8511, %v8494
        %8516 = vst.msk [vmem:[#allocation5 + $0xa0] sm:$0xff] %vm8511, %v8496
        %8517 = vst.msk [vmem:[#allocation5 + $0xc8] sm:$0xff] %vm8511, %v8498
        %8518 = vst.msk [vmem:[#allocation5 + $0xf0] sm:$0xff] %vm8511, %v8500
        %8519 = vst.msk [vmem:[#allocation5 + $0x118] sm:$0xff] %vm8511, %v8502
        %v8520 = vld [vmem:[#allocation3 + $0x9] sm:$0xff]
        %v8521 = vld [vmem:[#allocation3 + $0x11] sm:$0xff]
        %v8522 = vld [vmem:[#allocation3 + $0x19] sm:$0xff]
        %v8523 = vld [vmem:[#allocation3 + $0x21] sm:$0xff]
        %v8524 = vld [vmem:[#allocation3 + $0x29] sm:$0xff]
        %v8525 = vld [vmem:[#allocation3 + $0x31] sm:$0xff]
        %v8526 = vld [vmem:[#allocation3 + $0x39] sm:$0xff]
        %v8527 = vld [vmem:[#allocation3 + $0x41] sm:$0xff]
        %8528 = vst.msk [vmem:[#allocation5 + $0x8] sm:$0xff] %vm476, %v8520
        %8529 = vst.msk [vmem:[#allocation5 + $0x30] sm:$0xff] %vm476, %v8521
        %8530 = vst.msk [vmem:[#allocation5 + $0x58] sm:$0xff] %vm476, %v8522
        %8531 = vst.msk [vmem:[#allocation5 + $0x80] sm:$0xff] %vm476, %v8523
        %8532 = vst.msk [vmem:[#allocation5 + $0xa8] sm:$0xff] %vm476, %v8524
        %8533 = vst.msk [vmem:[#allocation5 + $0xd0] sm:$0xff] %vm476, %v8525
        %8534 = vst.msk [vmem:[#allocation5 + $0xf8] sm:$0xff] %vm476, %v8526
        %8535 = vst.msk [vmem:[#allocation5 + $0x120] sm:$0xff] %vm476, %v8527
        %v8536 = vld [vmem:[#allocation3 + $0xf] sm:$0xff]
        %v8537 = vld [vmem:[#allocation3 + $0x17] sm:$0xff]
        %v8538 = vld [vmem:[#allocation3 + $0x1f] sm:$0xff]
        %v8539 = vld [vmem:[#allocation3 + $0x27] sm:$0xff]
        %v8540 = vld [vmem:[#allocation3 + $0x2f] sm:$0xff]
        %v8541 = vld [vmem:[#allocation3 + $0x37] sm:$0xff]
        %v8542 = vld [vmem:[#allocation3 + $0x3f] sm:$0xff]
        %v8543 = vld [vmem:[#allocation3 + $0x47] sm:$0xff]
        %8552 = vrot.lane.b32.xlu0 %v8536, 64
        %v8553 = vpop.permute.xlu0 %8552
        %8554 = vrot.lane.b32.xlu0 %v8537, 64
        %v8555 = vpop.permute.xlu0 %8554
        %8556 = vrot.lane.b32.xlu0 %v8538, 64
        %v8557 = vpop.permute.xlu0 %8556
        %8558 = vrot.lane.b32.xlu0 %v8539, 64
        %v8559 = vpop.permute.xlu0 %8558
        %8560 = vrot.lane.b32.xlu0 %v8540, 64
        %v8561 = vpop.permute.xlu0 %8560
        %8562 = vrot.lane.b32.xlu0 %v8541, 64
        %v8563 = vpop.permute.xlu0 %8562
        %8564 = vrot.lane.b32.xlu0 %v8542, 64
        %v8565 = vpop.permute.xlu0 %8564
        %8566 = vrot.lane.b32.xlu0 %v8543, 64
        %v8567 = vpop.permute.xlu0 %8566
        %8576 = vst.msk [vmem:[#allocation5 + $0x8] sm:$0xff] %vm8511, %v8553
        %8577 = vst.msk [vmem:[#allocation5 + $0x30] sm:$0xff] %vm8511, %v8555
        %8578 = vst.msk [vmem:[#allocation5 + $0x58] sm:$0xff] %vm8511, %v8557
        %8579 = vst.msk [vmem:[#allocation5 + $0x80] sm:$0xff] %vm8511, %v8559
        %8580 = vst.msk [vmem:[#allocation5 + $0xa8] sm:$0xff] %vm8511, %v8561
        %8581 = vst.msk [vmem:[#allocation5 + $0xd0] sm:$0xff] %vm8511, %v8563
        %8582 = vst.msk [vmem:[#allocation5 + $0xf8] sm:$0xff] %vm8511, %v8565
        %8583 = vst.msk [vmem:[#allocation5 + $0x120] sm:$0xff] %vm8511, %v8567
        %v8584 = vld [vmem:[#allocation3 + $0x10] sm:$0xff]
        %v8585 = vld [vmem:[#allocation3 + $0x18] sm:$0xff]
        %v8586 = vld [vmem:[#allocation3 + $0x20] sm:$0xff]
        %v8587 = vld [vmem:[#allocation3 + $0x28] sm:$0xff]
        %v8588 = vld [vmem:[#allocation3 + $0x30] sm:$0xff]
        %v8589 = vld [vmem:[#allocation3 + $0x38] sm:$0xff]
        %v8590 = vld [vmem:[#allocation3 + $0x40] sm:$0xff]
        %v8591 = vld [vmem:[#allocation3 + $0x48] sm:$0xff]
        %8592 = vst.msk [vmem:[#allocation5 + $0x10] sm:$0xff] %vm476, %v8584
        %8593 = vst.msk [vmem:[#allocation5 + $0x38] sm:$0xff] %vm476, %v8585
        %8594 = vst.msk [vmem:[#allocation5 + $0x60] sm:$0xff] %vm476, %v8586
        %8595 = vst.msk [vmem:[#allocation5 + $0x88] sm:$0xff] %vm476, %v8587
        %8596 = vst.msk [vmem:[#allocation5 + $0xb0] sm:$0xff] %vm476, %v8588
        %8597 = vst.msk [vmem:[#allocation5 + $0xd8] sm:$0xff] %vm476, %v8589
        %8598 = vst.msk [vmem:[#allocation5 + $0x100] sm:$0xff] %vm476, %v8590
        %8599 = vst.msk [vmem:[#allocation5 + $0x128] sm:$0xff] %vm476, %v8591
        %v8600 = vld [vmem:[#allocation3 + $0x11] sm:$0xff]
        %v8601 = vld [vmem:[#allocation3 + $0x19] sm:$0xff]
        %v8602 = vld [vmem:[#allocation3 + $0x21] sm:$0xff]
        %v8603 = vld [vmem:[#allocation3 + $0x29] sm:$0xff]
        %v8604 = vld [vmem:[#allocation3 + $0x31] sm:$0xff]
        %v8605 = vld [vmem:[#allocation3 + $0x39] sm:$0xff]
        %v8606 = vld [vmem:[#allocation3 + $0x41] sm:$0xff]
        %v8607 = vld [vmem:[#allocation3 + $0x49] sm:$0xff]
        %8616 = vrot.lane.b32.xlu0 %v8600, 64
        %v8617 = vpop.permute.xlu0 %8616
        %8618 = vrot.lane.b32.xlu0 %v8601, 64
        %v8619 = vpop.permute.xlu0 %8618
        %8620 = vrot.lane.b32.xlu0 %v8602, 64
        %v8621 = vpop.permute.xlu0 %8620
        %8622 = vrot.lane.b32.xlu0 %v8603, 64
        %v8623 = vpop.permute.xlu0 %8622
        %8624 = vrot.lane.b32.xlu0 %v8604, 64
        %v8625 = vpop.permute.xlu0 %8624
        %8626 = vrot.lane.b32.xlu0 %v8605, 64
        %v8627 = vpop.permute.xlu0 %8626
        %8628 = vrot.lane.b32.xlu0 %v8606, 64
        %v8629 = vpop.permute.xlu0 %8628
        %8630 = vrot.lane.b32.xlu0 %v8607, 64
        %v8631 = vpop.permute.xlu0 %8630
        %8640 = vst.msk [vmem:[#allocation5 + $0x10] sm:$0xff] %vm8511, %v8617
        %8641 = vst.msk [vmem:[#allocation5 + $0x38] sm:$0xff] %vm8511, %v8619
        %8642 = vst.msk [vmem:[#allocation5 + $0x60] sm:$0xff] %vm8511, %v8621
        %8643 = vst.msk [vmem:[#allocation5 + $0x88] sm:$0xff] %vm8511, %v8623
        %8644 = vst.msk [vmem:[#allocation5 + $0xb0] sm:$0xff] %vm8511, %v8625
        %8645 = vst.msk [vmem:[#allocation5 + $0xd8] sm:$0xff] %vm8511, %v8627
        %8646 = vst.msk [vmem:[#allocation5 + $0x100] sm:$0xff] %vm8511, %v8629
        %8647 = vst.msk [vmem:[#allocation5 + $0x128] sm:$0xff] %vm8511, %v8631
        %v8648 = vld [vmem:[#allocation3 + $0x17] sm:$0xff]
        %v8649 = vld [vmem:[#allocation3 + $0x1f] sm:$0xff]
        %v8650 = vld [vmem:[#allocation3 + $0x27] sm:$0xff]
        %v8651 = vld [vmem:[#allocation3 + $0x2f] sm:$0xff]
        %v8652 = vld [vmem:[#allocation3 + $0x37] sm:$0xff]
        %v8653 = vld [vmem:[#allocation3 + $0x3f] sm:$0xff]
        %v8654 = vld [vmem:[#allocation3 + $0x47] sm:$0xff]
        %v8655 = vld [vmem:[#allocation3 + $0x4f] sm:$0xff]
        %8656 = vst.msk [vmem:[#allocation5 + $0x18] sm:$0xff] %vm476, %v8648
        %8657 = vst.msk [vmem:[#allocation5 + $0x40] sm:$0xff] %vm476, %v8649
        %8658 = vst.msk [vmem:[#allocation5 + $0x68] sm:$0xff] %vm476, %v8650
        %8659 = vst.msk [vmem:[#allocation5 + $0x90] sm:$0xff] %vm476, %v8651
        %8660 = vst.msk [vmem:[#allocation5 + $0xb8] sm:$0xff] %vm476, %v8652
        %8661 = vst.msk [vmem:[#allocation5 + $0xe0] sm:$0xff] %vm476, %v8653
        %8662 = vst.msk [vmem:[#allocation5 + $0x108] sm:$0xff] %vm476, %v8654
        %8663 = vst.msk [vmem:[#allocation5 + $0x130] sm:$0xff] %vm476, %v8655
        %v8664 = vld [vmem:[#allocation3 + $0x18] sm:$0xff]
        %v8665 = vld [vmem:[#allocation3 + $0x20] sm:$0xff]
        %v8666 = vld [vmem:[#allocation3 + $0x28] sm:$0xff]
        %v8667 = vld [vmem:[#allocation3 + $0x30] sm:$0xff]
        %v8668 = vld [vmem:[#allocation3 + $0x38] sm:$0xff]
        %v8669 = vld [vmem:[#allocation3 + $0x40] sm:$0xff]
        %v8670 = vld [vmem:[#allocation3 + $0x48] sm:$0xff]
        %v8671 = vld [vmem:[#allocation3 + $0x50] sm:$0xff]
        %8680 = vrot.lane.b32.xlu0 %v8664, 64
        %v8681 = vpop.permute.xlu0 %8680
        %8682 = vrot.lane.b32.xlu0 %v8665, 64
        %v8683 = vpop.permute.xlu0 %8682
        %8684 = vrot.lane.b32.xlu0 %v8666, 64
        %v8685 = vpop.permute.xlu0 %8684
        %8686 = vrot.lane.b32.xlu0 %v8667, 64
        %v8687 = vpop.permute.xlu0 %8686
        %8688 = vrot.lane.b32.xlu0 %v8668, 64
        %v8689 = vpop.permute.xlu0 %8688
        %8690 = vrot.lane.b32.xlu0 %v8669, 64
        %v8691 = vpop.permute.xlu0 %8690
        %8692 = vrot.lane.b32.xlu0 %v8670, 64
        %v8693 = vpop.permute.xlu0 %8692
        %8694 = vrot.lane.b32.xlu0 %v8671, 64
        %v8695 = vpop.permute.xlu0 %8694
        %8704 = vst.msk [vmem:[#allocation5 + $0x18] sm:$0xff] %vm8511, %v8681
        %8705 = vst.msk [vmem:[#allocation5 + $0x40] sm:$0xff] %vm8511, %v8683
        %8706 = vst.msk [vmem:[#allocation5 + $0x68] sm:$0xff] %vm8511, %v8685
        %8707 = vst.msk [vmem:[#allocation5 + $0x90] sm:$0xff] %vm8511, %v8687
        %8708 = vst.msk [vmem:[#allocation5 + $0xb8] sm:$0xff] %vm8511, %v8689
        %8709 = vst.msk [vmem:[#allocation5 + $0xe0] sm:$0xff] %vm8511, %v8691
        %8710 = vst.msk [vmem:[#allocation5 + $0x108] sm:$0xff] %vm8511, %v8693
        %8711 = vst.msk [vmem:[#allocation5 + $0x130] sm:$0xff] %vm8511, %v8695
        %v8712 = vld [vmem:[#allocation3 + $0x19] sm:$0xff]
        %v8713 = vld [vmem:[#allocation3 + $0x21] sm:$0xff]
        %v8714 = vld [vmem:[#allocation3 + $0x29] sm:$0xff]
        %v8715 = vld [vmem:[#allocation3 + $0x31] sm:$0xff]
        %v8716 = vld [vmem:[#allocation3 + $0x39] sm:$0xff]
        %v8717 = vld [vmem:[#allocation3 + $0x41] sm:$0xff]
        %v8718 = vld [vmem:[#allocation3 + $0x49] sm:$0xff]
        %v8719 = vld [vmem:[#allocation3 + $0x51] sm:$0xff]
        %8720 = vst.msk [vmem:[#allocation5 + $0x20] sm:$0xff] %vm476, %v8712
        %8721 = vst.msk [vmem:[#allocation5 + $0x48] sm:$0xff] %vm476, %v8713
        %8722 = vst.msk [vmem:[#allocation5 + $0x70] sm:$0xff] %vm476, %v8714
        %8723 = vst.msk [vmem:[#allocation5 + $0x98] sm:$0xff] %vm476, %v8715
        %8724 = vst.msk [vmem:[#allocation5 + $0xc0] sm:$0xff] %vm476, %v8716
        %8725 = vst.msk [vmem:[#allocation5 + $0xe8] sm:$0xff] %vm476, %v8717
        %8726 = vst.msk [vmem:[#allocation5 + $0x110] sm:$0xff] %vm476, %v8718
        %8727 = vst.msk [vmem:[#allocation5 + $0x138] sm:$0xff] %vm476, %v8719
        %v8728 = vld [vmem:[#allocation5] sm:$0xff]
        %v8729 = vld [vmem:[#allocation5 + $0x8] sm:$0xff]
        %v8730 = vld [vmem:[#allocation5 + $0x10] sm:$0xff]
        %v8731 = vld [vmem:[#allocation5 + $0x18] sm:$0xff]
        %v8732 = vld [vmem:[#allocation5 + $0x20] sm:$0xff]
        %v8733 = vld [vmem:[#allocation5 + $0x28] sm:$0xff]
        %v8734 = vld [vmem:[#allocation5 + $0x30] sm:$0xff]
        %v8735 = vld [vmem:[#allocation5 + $0x38] sm:$0xff]
        %v8736 = vld [vmem:[#allocation5 + $0x40] sm:$0xff]
        %v8737 = vld [vmem:[#allocation5 + $0x48] sm:$0xff]
        %v8738 = vld [vmem:[#allocation5 + $0x50] sm:$0xff]
        %v8739 = vld [vmem:[#allocation5 + $0x58] sm:$0xff]
        %v8740 = vld [vmem:[#allocation5 + $0x60] sm:$0xff]
        %v8741 = vld [vmem:[#allocation5 + $0x68] sm:$0xff]
        %v8742 = vld [vmem:[#allocation5 + $0x70] sm:$0xff]
        %v8743 = vld [vmem:[#allocation5 + $0x78] sm:$0xff]
        %v8744 = vld [vmem:[#allocation5 + $0x80] sm:$0xff]
        %v8745 = vld [vmem:[#allocation5 + $0x88] sm:$0xff]
        %v8746 = vld [vmem:[#allocation5 + $0x90] sm:$0xff]
        %v8747 = vld [vmem:[#allocation5 + $0x98] sm:$0xff]
        %v8748 = vld [vmem:[#allocation5 + $0xa0] sm:$0xff]
        %v8749 = vld [vmem:[#allocation5 + $0xa8] sm:$0xff]
        %v8750 = vld [vmem:[#allocation5 + $0xb0] sm:$0xff]
        %v8751 = vld [vmem:[#allocation5 + $0xb8] sm:$0xff]
        %v8752 = vld [vmem:[#allocation5 + $0xc0] sm:$0xff]
        %v8753 = vld [vmem:[#allocation5 + $0xc8] sm:$0xff]
        %v8754 = vld [vmem:[#allocation5 + $0xd0] sm:$0xff]
        %v8755 = vld [vmem:[#allocation5 + $0xd8] sm:$0xff]
        %v8756 = vld [vmem:[#allocation5 + $0xe0] sm:$0xff]
        %v8757 = vld [vmem:[#allocation5 + $0xe8] sm:$0xff]
        %v8758 = vld [vmem:[#allocation5 + $0xf0] sm:$0xff]
        %v8759 = vld [vmem:[#allocation5 + $0xf8] sm:$0xff]
        %v8760 = vld [vmem:[#allocation5 + $0x100] sm:$0xff]
        %v8761 = vld [vmem:[#allocation5 + $0x108] sm:$0xff]
        %v8762 = vld [vmem:[#allocation5 + $0x110] sm:$0xff]
        %v8763 = vld [vmem:[#allocation5 + $0x118] sm:$0xff]
        %v8764 = vld [vmem:[#allocation5 + $0x120] sm:$0xff]
        %v8765 = vld [vmem:[#allocation5 + $0x128] sm:$0xff]
        %v8766 = vld [vmem:[#allocation5 + $0x130] sm:$0xff]
        %v8767 = vld [vmem:[#allocation5 + $0x138] sm:$0xff]
        %v8768 = vld [vmem:[%s7] sm:$0xff]
        %v8769 = vld [vmem:[%s7 + $0x8] sm:$0xff]
        %v8770 = vld [vmem:[%s7 + $0x10] sm:$0xff]
        %v8771 = vld [vmem:[%s7 + $0x18] sm:$0xff]
        %v8772 = vld [vmem:[%s7 + $0x20] sm:$0xff]
        %v8773 = vld [vmem:[%s7 + $0x28] sm:$0xff]
        %v8774 = vld [vmem:[%s7 + $0x30] sm:$0xff]
        %v8775 = vld [vmem:[%s7 + $0x38] sm:$0xff]
        %v8776 = vld [vmem:[%s7 + $0x40] sm:$0xff]
        %v8777 = vld [vmem:[%s7 + $0x48] sm:$0xff]
        %v8778 = vld [vmem:[%s7 + $0x50] sm:$0xff]
        %v8779 = vld [vmem:[%s7 + $0x58] sm:$0xff]
        %v8780 = vld [vmem:[%s7 + $0x60] sm:$0xff]
        %v8781 = vld [vmem:[%s7 + $0x68] sm:$0xff]
        %v8782 = vld [vmem:[%s7 + $0x70] sm:$0xff]
        %v8783 = vld [vmem:[%s7 + $0x78] sm:$0xff]
        %v8784 = vld [vmem:[%s7 + $0x80] sm:$0xff]
        %v8785 = vld [vmem:[%s7 + $0x88] sm:$0xff]
        %v8786 = vld [vmem:[%s7 + $0x90] sm:$0xff]
        %v8787 = vld [vmem:[%s7 + $0x98] sm:$0xff]
        %v8788 = vld [vmem:[%s7 + $0xa0] sm:$0xff]
        %v8789 = vld [vmem:[%s7 + $0xa8] sm:$0xff]
        %v8790 = vld [vmem:[%s7 + $0xb0] sm:$0xff]
        %v8791 = vld [vmem:[%s7 + $0xb8] sm:$0xff]
        %v8792 = vld [vmem:[%s7 + $0xc0] sm:$0xff]
        %v8793 = vld [vmem:[%s7 + $0xc8] sm:$0xff]
        %v8794 = vld [vmem:[%s7 + $0xd0] sm:$0xff]
        %v8795 = vld [vmem:[%s7 + $0xd8] sm:$0xff]
        %v8796 = vld [vmem:[%s7 + $0xe0] sm:$0xff]
        %v8797 = vld [vmem:[%s7 + $0xe8] sm:$0xff]
        %v8798 = vld [vmem:[%s7 + $0xf0] sm:$0xff]
        %v8799 = vld [vmem:[%s7 + $0xf8] sm:$0xff]
        %v8800 = vld [vmem:[%s7 + $0x100] sm:$0xff]
        %v8801 = vld [vmem:[%s7 + $0x108] sm:$0xff]
        %v8802 = vld [vmem:[%s7 + $0x110] sm:$0xff]
        %v8803 = vld [vmem:[%s7 + $0x118] sm:$0xff]
        %v8804 = vld [vmem:[%s7 + $0x120] sm:$0xff]
        %v8805 = vld [vmem:[%s7 + $0x128] sm:$0xff]
        %v8806 = vld [vmem:[%s7 + $0x130] sm:$0xff]
        %v8807 = vld [vmem:[%s7 + $0x138] sm:$0xff]
        %v8808 = vld [vmem:[%s7 + $0x140] sm:$0xff]
        %v8809 = vld [vmem:[%s7 + $0x148] sm:$0xff]
        %v8810 = vld [vmem:[%s7 + $0x150] sm:$0xff]
        %v8811 = vld [vmem:[%s7 + $0x158] sm:$0xff]
        %v8812 = vld [vmem:[%s7 + $0x160] sm:$0xff]
        %v8813 = vld [vmem:[%s7 + $0x168] sm:$0xff]
        %v8814 = vld [vmem:[%s7 + $0x170] sm:$0xff]
        %v8815 = vld [vmem:[%s7 + $0x178] sm:$0xff]
        %v8816 = vld [vmem:[%s7 + $0x180] sm:$0xff]
        %v8817 = vld [vmem:[%s7 + $0x188] sm:$0xff]
        %v8818 = vld [vmem:[%s7 + $0x190] sm:$0xff]
        %v8819 = vld [vmem:[%s7 + $0x198] sm:$0xff]
        %v8820 = vld [vmem:[%s7 + $0x1a0] sm:$0xff]
        %v8821 = vld [vmem:[%s7 + $0x1a8] sm:$0xff]
        %v8822 = vld [vmem:[%s7 + $0x1b0] sm:$0xff]
        %v8823 = vld [vmem:[%s7 + $0x1b8] sm:$0xff]
        %v8824 = vld [vmem:[%s7 + $0x1c0] sm:$0xff]
        %v8825 = vld [vmem:[%s7 + $0x1c8] sm:$0xff]
        %v8826 = vld [vmem:[%s7 + $0x1d0] sm:$0xff]
        %v8827 = vld [vmem:[%s7 + $0x1d8] sm:$0xff]
        %v8828 = vld [vmem:[%s7 + $0x1e0] sm:$0xff]
        %v8829 = vld [vmem:[%s7 + $0x1e8] sm:$0xff]
        %v8830 = vld [vmem:[%s7 + $0x1f0] sm:$0xff]
        %v8831 = vld [vmem:[%s7 + $0x1f8] sm:$0xff]
        %v8832 = vld [vmem:[%s7 + $0x200] sm:$0xff]
        %v8833 = vld [vmem:[%s7 + $0x208] sm:$0xff]
        %v8834 = vld [vmem:[%s7 + $0x210] sm:$0xff]
        %v8835 = vld [vmem:[%s7 + $0x218] sm:$0xff]
        %v8836 = vld [vmem:[%s7 + $0x220] sm:$0xff]
        %v8837 = vld [vmem:[%s7 + $0x228] sm:$0xff]
        %v8838 = vld [vmem:[%s7 + $0x230] sm:$0xff]
        %v8839 = vld [vmem:[%s7 + $0x238] sm:$0xff]
        %v8840 = vld [vmem:[%s8] sm:$0x1]
        %v8842 = vlaneseq
        %v8843 = vshrl.u32 %v8842, 7
        %v8844 = vsub.s32 0, %v8843
        %v8845 = vrot.slane %v8840, %v8844
        %v8848 = vsel %vm476, %v8732, 0
        %v8851 = vsel %vm476, %v8737, 0
        %v8854 = vsel %vm476, %v8742, 0
        %v8857 = vsel %vm476, %v8747, 0
        %v8860 = vsel %vm476, %v8752, 0
        %v8863 = vsel %vm476, %v8757, 0
        %v8866 = vsel %vm476, %v8762, 0
        %v8869 = vsel %vm476, %v8767, 0
        %8871 = vmatprep.subr.mxu0 0.0
        %8872 = vmatpush1.msra.mxu0 %v8768
        %8873 = vmatprep.subr.mxu0 0.0
        %8874 = vmatpush1.msra.mxu0 %v8769
        %8875 = vmatprep.subr.mxu0 0.0
        %8876 = vmatpush1.msra.mxu0 %v8770
        %8877 = vmatprep.subr.mxu0 0.0
        %8878 = vmatpush1.msra.mxu0 %v8771
        %8879 = vmatprep.subr.mxu0 0.0
        %8880 = vmatpush1.msra.mxu0 %v8772
        %8881 = vmatprep.subr.mxu0 0.0
        %8882 = vmatpush1.msra.mxu0 %v8773
        %8883 = vmatprep.subr.mxu0 0.0
        %8884 = vmatpush1.msra.mxu0 %v8774
        %8885 = vmatprep.subr.mxu0 0.0
        %8886 = vmatpush1.msra.mxu0 %v8775
        %8887 = vmatprep.subr.mxu0 0.0
        %8888 = vmatpush1.msra.mxu0 %v8776
        %8889 = vmatprep.subr.mxu0 0.0
        %8890 = vmatpush1.msra.mxu0 %v8777
        %8891 = vmatprep.subr.mxu0 0.0
        %8892 = vmatpush1.msra.mxu0 %v8778
        %8893 = vmatprep.subr.mxu0 0.0
        %8894 = vmatpush1.msra.mxu0 %v8779
        %8895 = vmatprep.subr.mxu0 0.0
        %8896 = vmatpush1.msra.mxu0 %v8780
        %8897 = vmatprep.subr.mxu0 0.0
        %8898 = vmatpush1.msra.mxu0 %v8781
        %8899 = vmatprep.subr.mxu0 0.0
        %8900 = vmatpush1.msra.mxu0 %v8782
        %8901 = vmatprep.subr.mxu0 0.0
        %8902 = vmatpush1.msra.mxu0 %v8783
        %8903 = vmatprep.subr.mxu0 0.0
        %8904 = vmatpush1.msra.mxu0 %v8784
        %8905 = vmatprep.subr.mxu0 0.0
        %8906 = vmatpush1.msra.mxu0 %v8785
        %8907 = vmatprep.subr.mxu0 0.0
        %8908 = vmatpush1.msra.mxu0 %v8786
        %8909 = vmatprep.subr.mxu0 0.0
        %8910 = vmatpush1.msra.mxu0 %v8787
        %8911 = vmatprep.subr.mxu0 0.0
        %8912 = vmatpush1.msra.mxu0 %v8788
        %8913 = vmatprep.subr.mxu0 0.0
        %8914 = vmatpush1.msra.mxu0 %v8789
        %8915 = vmatprep.subr.mxu0 0.0
        %8916 = vmatpush1.msra.mxu0 %v8790
        %8917 = vmatprep.subr.mxu0 0.0
        %8918 = vmatpush1.msra.mxu0 %v8791
        %8919 = vmatprep.subr.mxu0 0.0
        %8920 = vmatpush1.msra.mxu0 %v8792
        %8921 = vmatprep.subr.mxu0 0.0
        %8922 = vmatpush1.msra.mxu0 %v8793
        %8923 = vmatprep.subr.mxu0 0.0
        %8924 = vmatpush1.msra.mxu0 %v8794
        %8925 = vmatprep.subr.mxu0 0.0
        %8926 = vmatpush1.msra.mxu0 %v8795
        %8927 = vmatprep.subr.mxu0 0.0
        %8928 = vmatpush1.msra.mxu0 %v8796
        %8929 = vmatprep.subr.mxu0 0.0
        %8930 = vmatpush1.msra.mxu0 %v8797
        %8931 = vmatprep.subr.mxu0 0.0
        %8932 = vmatpush1.msra.mxu0 %v8798
        %8933 = vmatprep.subr.mxu0 0.0
        %8934 = vmatpush1.msra.mxu0 %v8799
        %8935 = vmatprep.mubr.f32.mxu0 %v8729
        %8936 = vmatmul.mubr.f32.gmra.mrb[0].mxu0 %v8728
        %v8937 = vpop.f32.mrb[0].mxu0
        %v8938 = vadd.f32 %v8845, %v8937
        %v8939 = vpop.f32.mrb[0].mxu0
        %8940 = vmatprep.mubr.f32.mxu0 %v8734
        %8941 = vmatmul.mubr.f32.gmra.mrb[0].mxu0 %v8733
        %v8942 = vpop.f32.mrb[0].mxu0
        %v8943 = vadd.f32 %v8845, %v8942
        %v8944 = vpop.f32.mrb[0].mxu0
        %8945 = vmatprep.mubr.f32.mxu0 %v8739
        %8946 = vmatmul.mubr.f32.gmra.mrb[0].mxu0 %v8738
        %v8947 = vpop.f32.mrb[0].mxu0
        %v8948 = vadd.f32 %v8845, %v8947
        %v8949 = vpop.f32.mrb[0].mxu0
        %8950 = vmatprep.mubr.f32.mxu0 %v8744
        %8951 = vmatmul.mubr.f32.gmra.mrb[0].mxu0 %v8743
        %v8952 = vpop.f32.mrb[0].mxu0
        %v8953 = vadd.f32 %v8845, %v8952
        %v8954 = vpop.f32.mrb[0].mxu0
        %8955 = vmatprep.mubr.f32.mxu0 %v8749
        %8956 = vmatmul.mubr.f32.gmra.mrb[0].mxu0 %v8748
        %v8957 = vpop.f32.mrb[0].mxu0
        %v8958 = vadd.f32 %v8845, %v8957
        %v8959 = vpop.f32.mrb[0].mxu0
        %8960 = vmatprep.mubr.f32.mxu0 %v8754
        %8961 = vmatmul.mubr.f32.gmra.mrb[0].mxu0 %v8753
        %v8962 = vpop.f32.mrb[0].mxu0
        %v8963 = vadd.f32 %v8845, %v8962
        %v8964 = vpop.f32.mrb[0].mxu0
        %8965 = vmatprep.mubr.f32.mxu0 %v8759
        %8966 = vmatmul.mubr.f32.gmra.mrb[0].mxu0 %v8758
        %v8967 = vpop.f32.mrb[0].mxu0
        %v8968 = vadd.f32 %v8845, %v8967
        %v8969 = vpop.f32.mrb[0].mxu0
        %8970 = vmatprep.mubr.f32.mxu0 %v8764
        %8971 = vmatmul.mubr.f32.gmra.mrb[0].mxu0 %v8763
        %v8972 = vpop.f32.mrb[0].mxu0
        %v8973 = vadd.f32 %v8845, %v8972
        %v8974 = vpop.f32.mrb[0].mxu0
        %8975 = vdwg.mxu0
        %8976 = vmatprep.subr.mxu0 0.0
        %8977 = vmatpush1.msra.mxu0 %v8800
        %8978 = vmatprep.subr.mxu0 0.0
        %8979 = vmatpush1.msra.mxu0 %v8801
        %8980 = vmatprep.subr.mxu0 0.0
        %8981 = vmatpush1.msra.mxu0 %v8802
        %8982 = vmatprep.subr.mxu0 0.0
        %8983 = vmatpush1.msra.mxu0 %v8803
        %8984 = vmatprep.subr.mxu0 0.0
        %8985 = vmatpush1.msra.mxu0 %v8804
        %8986 = vmatprep.subr.mxu0 0.0
        %8987 = vmatpush1.msra.mxu0 %v8805
        %8988 = vmatprep.subr.mxu0 0.0
        %8989 = vmatpush1.msra.mxu0 %v8806
        %8990 = vmatprep.subr.mxu0 0.0
        %8991 = vmatpush1.msra.mxu0 %v8807
        %8992 = vmatprep.subr.mxu0 0.0
        %8993 = vmatpush1.msra.mxu0 %v8808
        %8994 = vmatprep.subr.mxu0 0.0
        %8995 = vmatpush1.msra.mxu0 %v8809
        %8996 = vmatprep.subr.mxu0 0.0
        %8997 = vmatpush1.msra.mxu0 %v8810
        %8998 = vmatprep.subr.mxu0 0.0
        %8999 = vmatpush1.msra.mxu0 %v8811
        %9000 = vmatprep.subr.mxu0 0.0
        %9001 = vmatpush1.msra.mxu0 %v8812
        %9002 = vmatprep.subr.mxu0 0.0
        %9003 = vmatpush1.msra.mxu0 %v8813
        %9004 = vmatprep.subr.mxu0 0.0
        %9005 = vmatpush1.msra.mxu0 %v8814
        %9006 = vmatprep.subr.mxu0 0.0
        %9007 = vmatpush1.msra.mxu0 %v8815
        %9008 = vmatprep.subr.mxu0 0.0
        %9009 = vmatpush1.msra.mxu0 %v8816
        %9010 = vmatprep.subr.mxu0 0.0
        %9011 = vmatpush1.msra.mxu0 %v8817
        %9012 = vmatprep.subr.mxu0 0.0
        %9013 = vmatpush1.msra.mxu0 %v8818
        %9014 = vmatprep.subr.mxu0 0.0
        %9015 = vmatpush1.msra.mxu0 %v8819
        %9016 = vmatprep.subr.mxu0 0.0
        %9017 = vmatpush1.msra.mxu0 %v8820
        %9018 = vmatprep.subr.mxu0 0.0
        %9019 = vmatpush1.msra.mxu0 %v8821
        %9020 = vmatprep.subr.mxu0 0.0
        %9021 = vmatpush1.msra.mxu0 %v8822
        %9022 = vmatprep.subr.mxu0 0.0
        %9023 = vmatpush1.msra.mxu0 %v8823
        %9024 = vmatprep.subr.mxu0 0.0
        %9025 = vmatpush1.msra.mxu0 %v8824
        %9026 = vmatprep.subr.mxu0 0.0
        %9027 = vmatpush1.msra.mxu0 %v8825
        %9028 = vmatprep.subr.mxu0 0.0
        %9029 = vmatpush1.msra.mxu0 %v8826
        %9030 = vmatprep.subr.mxu0 0.0
        %9031 = vmatpush1.msra.mxu0 %v8827
        %9032 = vmatprep.subr.mxu0 0.0
        %9033 = vmatpush1.msra.mxu0 %v8828
        %9034 = vmatprep.subr.mxu0 0.0
        %9035 = vmatpush1.msra.mxu0 %v8829
        %9036 = vmatprep.subr.mxu0 0.0
        %9037 = vmatpush1.msra.mxu0 %v8830
        %9038 = vmatprep.subr.mxu0 0.0
        %9039 = vmatpush1.msra.mxu0 %v8831
        %9040 = vmatprep.mubr.f32.mxu0 %v8731
        %9041 = vmatmul.mubr.f32.gmra.mrb[0].mxu0 %v8730
        %v9042 = vpop.f32.mrb[0].mxu0
        %v9043 = vadd.f32 %v8938, %v9042
        %v9044 = vpop.f32.mrb[0].mxu0
        %9045 = vmatprep.mubr.f32.mxu0 %v8736
        %9046 = vmatmul.mubr.f32.gmra.mrb[0].mxu0 %v8735
        %v9047 = vpop.f32.mrb[0].mxu0
        %v9048 = vadd.f32 %v8943, %v9047
        %v9049 = vpop.f32.mrb[0].mxu0
        %9050 = vmatprep.mubr.f32.mxu0 %v8741
        %9051 = vmatmul.mubr.f32.gmra.mrb[0].mxu0 %v8740
        %v9052 = vpop.f32.mrb[0].mxu0
        %v9053 = vadd.f32 %v8948, %v9052
        %v9054 = vpop.f32.mrb[0].mxu0
        %9055 = vmatprep.mubr.f32.mxu0 %v8746
        %9056 = vmatmul.mubr.f32.gmra.mrb[0].mxu0 %v8745
        %v9057 = vpop.f32.mrb[0].mxu0
        %v9058 = vadd.f32 %v8953, %v9057
        %v9059 = vpop.f32.mrb[0].mxu0
        %9060 = vmatprep.mubr.f32.mxu0 %v8751
        %9061 = vmatmul.mubr.f32.gmra.mrb[0].mxu0 %v8750
        %v9062 = vpop.f32.mrb[0].mxu0
        %v9063 = vadd.f32 %v8958, %v9062
        %v9064 = vpop.f32.mrb[0].mxu0
        %9065 = vmatprep.mubr.f32.mxu0 %v8756
        %9066 = vmatmul.mubr.f32.gmra.mrb[0].mxu0 %v8755
        %v9067 = vpop.f32.mrb[0].mxu0
        %v9068 = vadd.f32 %v8963, %v9067
        %v9069 = vpop.f32.mrb[0].mxu0
        %9070 = vmatprep.mubr.f32.mxu0 %v8761
        %9071 = vmatmul.mubr.f32.gmra.mrb[0].mxu0 %v8760
        %v9072 = vpop.f32.mrb[0].mxu0
        %v9073 = vadd.f32 %v8968, %v9072
        %v9074 = vpop.f32.mrb[0].mxu0
        %9075 = vmatprep.mubr.f32.mxu0 %v8766
        %9076 = vmatmul.mubr.f32.gmra.mrb[0].mxu0 %v8765
        %v9077 = vpop.f32.mrb[0].mxu0
        %v9078 = vadd.f32 %v8973, %v9077
        %v9079 = vpop.f32.mrb[0].mxu0
        %9080 = vdwg.mxu0
        %9081 = vmatprep.subr.mxu0 0.0
        %9082 = vmatpush1.msra.mxu0 %v8832
        %9083 = vmatprep.subr.mxu0 0.0
        %9084 = vmatpush1.msra.mxu0 %v8833
        %9085 = vmatprep.subr.mxu0 0.0
        %9086 = vmatpush1.msra.mxu0 %v8834
        %9087 = vmatprep.subr.mxu0 0.0
        %9088 = vmatpush1.msra.mxu0 %v8835
        %9089 = vmatprep.subr.mxu0 0.0
        %9090 = vmatpush1.msra.mxu0 %v8836
        %9091 = vmatprep.subr.mxu0 0.0
        %9092 = vmatpush1.msra.mxu0 %v8837
        %9093 = vmatprep.subr.mxu0 0.0
        %9094 = vmatpush1.msra.mxu0 %v8838
        %9095 = vmatprep.subr.mxu0 0.0
        %9096 = vmatpush1.msra.mxu0 %v8839
        %9097 = vmatprep.subr.mxu0 0.0
        %9098 = vmatpush1.msra.mxu0 0.0
        %9099 = vmatprep.subr.mxu0 0.0
        %9100 = vmatpush1.msra.mxu0 0.0
        %9101 = vmatprep.subr.mxu0 0.0
        %9102 = vmatpush1.msra.mxu0 0.0
        %9103 = vmatprep.subr.mxu0 0.0
        %9104 = vmatpush1.msra.mxu0 0.0
        %9105 = vmatprep.subr.mxu0 0.0
        %9106 = vmatpush1.msra.mxu0 0.0
        %9107 = vmatprep.subr.mxu0 0.0
        %9108 = vmatpush1.msra.mxu0 0.0
        %9109 = vmatprep.subr.mxu0 0.0
        %9110 = vmatpush1.msra.mxu0 0.0
        %9111 = vmatprep.subr.mxu0 0.0
        %9112 = vmatpush1.msra.mxu0 0.0
        %9113 = vmatprep.subr.mxu0 0.0
        %9114 = vmatpush1.msra.mxu0 0.0
        %9115 = vmatprep.subr.mxu0 0.0
        %9116 = vmatpush1.msra.mxu0 0.0
        %9117 = vmatprep.subr.mxu0 0.0
        %9118 = vmatpush1.msra.mxu0 0.0
        %9119 = vmatprep.subr.mxu0 0.0
        %9120 = vmatpush1.msra.mxu0 0.0
        %9121 = vmatprep.subr.mxu0 0.0
        %9122 = vmatpush1.msra.mxu0 0.0
        %9123 = vmatprep.subr.mxu0 0.0
        %9124 = vmatpush1.msra.mxu0 0.0
        %9125 = vmatprep.subr.mxu0 0.0
        %9126 = vmatpush1.msra.mxu0 0.0
        %9127 = vmatprep.subr.mxu0 0.0
        %9128 = vmatpush1.msra.mxu0 0.0
        %9129 = vmatprep.subr.mxu0 0.0
        %9130 = vmatpush1.msra.mxu0 0.0
        %9131 = vmatprep.subr.mxu0 0.0
        %9132 = vmatpush1.msra.mxu0 0.0
        %9133 = vmatprep.subr.mxu0 0.0
        %9134 = vmatpush1.msra.mxu0 0.0
        %9135 = vmatprep.subr.mxu0 0.0
        %9136 = vmatpush1.msra.mxu0 0.0
        %9137 = vmatprep.subr.mxu0 0.0
        %9138 = vmatpush1.msra.mxu0 0.0
        %9139 = vmatprep.subr.mxu0 0.0
        %9140 = vmatpush1.msra.mxu0 0.0
        %9141 = vmatprep.subr.mxu0 0.0
        %9142 = vmatpush1.msra.mxu0 0.0
        %9143 = vmatprep.subr.mxu0 0.0
        %9144 = vmatpush1.msra.mxu0 0.0
        %9145 = vmatprep.mubr.f32.mxu0 0.0
        %9146 = vmatmul.mubr.f32.gmra.mrb[0].mxu0 %v8848
        %v9147 = vpop.f32.mrb[0].mxu0
        %v9148 = vadd.f32 %v9043, %v9147
        %v9149 = vpop.f32.mrb[0].mxu0
        %9150 = vmatprep.mubr.f32.mxu0 0.0
        %9151 = vmatmul.mubr.f32.gmra.mrb[0].mxu0 %v8851
        %v9152 = vpop.f32.mrb[0].mxu0
        %v9153 = vadd.f32 %v9048, %v9152
        %v9154 = vpop.f32.mrb[0].mxu0
        %9155 = vmatprep.mubr.f32.mxu0 0.0
        %9156 = vmatmul.mubr.f32.gmra.mrb[0].mxu0 %v8854
        %v9157 = vpop.f32.mrb[0].mxu0
        %v9158 = vadd.f32 %v9053, %v9157
        %v9159 = vpop.f32.mrb[0].mxu0
        %9160 = vmatprep.mubr.f32.mxu0 0.0
        %9161 = vmatmul.mubr.f32.gmra.mrb[0].mxu0 %v8857
        %v9162 = vpop.f32.mrb[0].mxu0
        %v9163 = vadd.f32 %v9058, %v9162
        %v9164 = vpop.f32.mrb[0].mxu0
        %9165 = vmatprep.mubr.f32.mxu0 0.0
        %9166 = vmatmul.mubr.f32.gmra.mrb[0].mxu0 %v8860
        %v9167 = vpop.f32.mrb[0].mxu0
        %v9168 = vadd.f32 %v9063, %v9167
        %v9169 = vpop.f32.mrb[0].mxu0
        %9170 = vmatprep.mubr.f32.mxu0 0.0
        %9171 = vmatmul.mubr.f32.gmra.mrb[0].mxu0 %v8863
        %v9172 = vpop.f32.mrb[0].mxu0
        %v9173 = vadd.f32 %v9068, %v9172
        %v9174 = vpop.f32.mrb[0].mxu0
        %9175 = vmatprep.mubr.f32.mxu0 0.0
        %9176 = vmatmul.mubr.f32.gmra.mrb[0].mxu0 %v8866
        %v9177 = vpop.f32.mrb[0].mxu0
        %v9178 = vadd.f32 %v9073, %v9177
        %v9179 = vpop.f32.mrb[0].mxu0
        %9180 = vmatprep.mubr.f32.mxu0 0.0
        %9181 = vmatmul.mubr.f32.gmra.mrb[0].mxu0 %v8869
        %v9182 = vpop.f32.mrb[0].mxu0
        %v9183 = vadd.f32 %v9078, %v9182
        %v9184 = vpop.f32.mrb[0].mxu0
        %9185 = vdwg.mxu0
        %v9186 = vmax.f32 %v9148, 0.0
        %v9187 = vmax.f32 %v9153, 0.0
        %v9188 = vmax.f32 %v9158, 0.0
        %v9189 = vmax.f32 %v9163, 0.0
        %v9190 = vmax.f32 %v9168, 0.0
        %v9191 = vmax.f32 %v9173, 0.0
        %v9192 = vmax.f32 %v9178, 0.0
        %v9193 = vmax.f32 %v9183, 0.0
        %v9194 = vld [vmem:[%s9] sm:$0xff]
        %v9195 = vld [vmem:[%s9 + $0x8] sm:$0x1]
        %v9197 = vsel %vm476, %v9194, 0
        %v9200 = vsel %vm476, %v9195, 0
        %9202 = vmatprep.subr.mxu0 0.0
        %9203 = vmatpush1.msra.mxu0 %v9186
        %9204 = vmatprep.subr.mxu0 0.0
        %9205 = vmatpush1.msra.mxu0 %v9187
        %9206 = vmatprep.subr.mxu0 0.0
        %9207 = vmatpush1.msra.mxu0 %v9188
        %9208 = vmatprep.subr.mxu0 0.0
        %9209 = vmatpush1.msra.mxu0 %v9189
        %9210 = vmatprep.subr.mxu0 0.0
        %9211 = vmatpush1.msra.mxu0 %v9190
        %9212 = vmatprep.subr.mxu0 0.0
        %9213 = vmatpush1.msra.mxu0 %v9191
        %9214 = vmatprep.subr.mxu0 0.0
        %9215 = vmatpush1.msra.mxu0 %v9192
        %9216 = vmatprep.subr.mxu0 0.0
        %9217 = vmatpush1.msra.mxu0 %v9193
        %9218 = vmatprep.subr.mxu0 0.0
        %9219 = vmatpush1.msra.mxu0 0.0
        %9220 = vmatprep.subr.mxu0 0.0
        %9221 = vmatpush1.msra.mxu0 0.0
        %9222 = vmatprep.subr.mxu0 0.0
        %9223 = vmatpush1.msra.mxu0 0.0
        %9224 = vmatprep.subr.mxu0 0.0
        %9225 = vmatpush1.msra.mxu0 0.0
        %9226 = vmatprep.subr.mxu0 0.0
        %9227 = vmatpush1.msra.mxu0 0.0
        %9228 = vmatprep.subr.mxu0 0.0
        %9229 = vmatpush1.msra.mxu0 0.0
        %9230 = vmatprep.subr.mxu0 0.0
        %9231 = vmatpush1.msra.mxu0 0.0
        %9232 = vmatprep.subr.mxu0 0.0
        %9233 = vmatpush1.msra.mxu0 0.0
        %9234 = vmatprep.subr.mxu0 0.0
        %9235 = vmatpush1.msra.mxu0 0.0
        %9236 = vmatprep.subr.mxu0 0.0
        %9237 = vmatpush1.msra.mxu0 0.0
        %9238 = vmatprep.subr.mxu0 0.0
        %9239 = vmatpush1.msra.mxu0 0.0
        %9240 = vmatprep.subr.mxu0 0.0
        %9241 = vmatpush1.msra.mxu0 0.0
        %9242 = vmatprep.subr.mxu0 0.0
        %9243 = vmatpush1.msra.mxu0 0.0
        %9244 = vmatprep.subr.mxu0 0.0
        %9245 = vmatpush1.msra.mxu0 0.0
        %9246 = vmatprep.subr.mxu0 0.0
        %9247 = vmatpush1.msra.mxu0 0.0
        %9248 = vmatprep.subr.mxu0 0.0
        %9249 = vmatpush1.msra.mxu0 0.0
        %9250 = vmatprep.subr.mxu0 0.0
        %9251 = vmatpush1.msra.mxu0 0.0
        %9252 = vmatprep.subr.mxu0 0.0
        %9253 = vmatpush1.msra.mxu0 0.0
        %9254 = vmatprep.subr.mxu0 0.0
        %9255 = vmatpush1.msra.mxu0 0.0
        %9256 = vmatprep.subr.mxu0 0.0
        %9257 = vmatpush1.msra.mxu0 0.0
        %9258 = vmatprep.subr.mxu0 0.0
        %9259 = vmatpush1.msra.mxu0 0.0
        %9260 = vmatprep.subr.mxu0 0.0
        %9261 = vmatpush1.msra.mxu0 0.0
        %9262 = vmatprep.subr.mxu0 0.0
        %9263 = vmatpush1.msra.mxu0 0.0
        %9264 = vmatprep.subr.mxu0 0.0
        %9265 = vmatpush1.msra.mxu0 0.0
        %9266 = vmatprep.mubr.f32.mxu0 0.0
        %9267 = vmatmul.mubr.f32.gmra.mrb[0].mxu0 %v9197
        %v9268 = vpop.f32.mrb[0].mxu0
        %v9269 = vadd.f32 0.0, %v9268
        %v9270 = vpop.f32.mrb[0].mxu0
        %9271 = vmatprep.mubr.f32.mxu0 0.0
        %9272 = vmatmul.mubr.f32.gmra.mrb[0].mxu0 %v9200
        %v9273 = vpop.f32.mrb[0].mxu0
        %v9274 = vadd.f32 0.0, %v9273
        %v9275 = vpop.f32.mrb[0].mxu0
        %9276 = vdwg.mxu0
        %s9277 = scalar_lea.vmem %s9, 16
        %v9278 = vld [vmem:[%s9277] sm:$0xff]
        %v9279 = vld [vmem:[%s9277 + $0x8] sm:$0x1]
        %v9281 = vsel %vm476, %v9278, 0
        %v9284 = vsel %vm476, %v9279, 0
        %9286 = vmatprep.subr.mxu0 0.0
        %9287 = vmatpush1.msra.mxu0 %v9186
        %9288 = vmatprep.subr.mxu0 0.0
        %9289 = vmatpush1.msra.mxu0 %v9187
        %9290 = vmatprep.subr.mxu0 0.0
        %9291 = vmatpush1.msra.mxu0 %v9188
        %9292 = vmatprep.subr.mxu0 0.0
        %9293 = vmatpush1.msra.mxu0 %v9189
        %9294 = vmatprep.subr.mxu0 0.0
        %9295 = vmatpush1.msra.mxu0 %v9190
        %9296 = vmatprep.subr.mxu0 0.0
        %9297 = vmatpush1.msra.mxu0 %v9191
        %9298 = vmatprep.subr.mxu0 0.0
        %9299 = vmatpush1.msra.mxu0 %v9192
        %9300 = vmatprep.subr.mxu0 0.0
        %9301 = vmatpush1.msra.mxu0 %v9193
        %9302 = vmatprep.subr.mxu0 0.0
        %9303 = vmatpush1.msra.mxu0 0.0
        %9304 = vmatprep.subr.mxu0 0.0
        %9305 = vmatpush1.msra.mxu0 0.0
        %9306 = vmatprep.subr.mxu0 0.0
        %9307 = vmatpush1.msra.mxu0 0.0
        %9308 = vmatprep.subr.mxu0 0.0
        %9309 = vmatpush1.msra.mxu0 0.0
        %9310 = vmatprep.subr.mxu0 0.0
        %9311 = vmatpush1.msra.mxu0 0.0
        %9312 = vmatprep.subr.mxu0 0.0
        %9313 = vmatpush1.msra.mxu0 0.0
        %9314 = vmatprep.subr.mxu0 0.0
        %9315 = vmatpush1.msra.mxu0 0.0
        %9316 = vmatprep.subr.mxu0 0.0
        %9317 = vmatpush1.msra.mxu0 0.0
        %9318 = vmatprep.subr.mxu0 0.0
        %9319 = vmatpush1.msra.mxu0 0.0
        %9320 = vmatprep.subr.mxu0 0.0
        %9321 = vmatpush1.msra.mxu0 0.0
        %9322 = vmatprep.subr.mxu0 0.0
        %9323 = vmatpush1.msra.mxu0 0.0
        %9324 = vmatprep.subr.mxu0 0.0
        %9325 = vmatpush1.msra.mxu0 0.0
        %9326 = vmatprep.subr.mxu0 0.0
        %9327 = vmatpush1.msra.mxu0 0.0
        %9328 = vmatprep.subr.mxu0 0.0
        %9329 = vmatpush1.msra.mxu0 0.0
        %9330 = vmatprep.subr.mxu0 0.0
        %9331 = vmatpush1.msra.mxu0 0.0
        %9332 = vmatprep.subr.mxu0 0.0
        %9333 = vmatpush1.msra.mxu0 0.0
        %9334 = vmatprep.subr.mxu0 0.0
        %9335 = vmatpush1.msra.mxu0 0.0
        %9336 = vmatprep.subr.mxu0 0.0
        %9337 = vmatpush1.msra.mxu0 0.0
        %9338 = vmatprep.subr.mxu0 0.0
        %9339 = vmatpush1.msra.mxu0 0.0
        %9340 = vmatprep.subr.mxu0 0.0
        %9341 = vmatpush1.msra.mxu0 0.0
        %9342 = vmatprep.subr.mxu0 0.0
        %9343 = vmatpush1.msra.mxu0 0.0
        %9344 = vmatprep.subr.mxu0 0.0
        %9345 = vmatpush1.msra.mxu0 0.0
        %9346 = vmatprep.subr.mxu0 0.0
        %9347 = vmatpush1.msra.mxu0 0.0
        %9348 = vmatprep.subr.mxu0 0.0
        %9349 = vmatpush1.msra.mxu0 0.0
        %9350 = vmatprep.mubr.f32.mxu0 0.0
        %9351 = vmatmul.mubr.f32.gmra.mrb[0].mxu0 %v9281
        %v9352 = vpop.f32.mrb[0].mxu0
        %v9353 = vadd.f32 0.0, %v9352
        %v9354 = vpop.f32.mrb[0].mxu0
        %9355 = vmatprep.mubr.f32.mxu0 0.0
        %9356 = vmatmul.mubr.f32.gmra.mrb[0].mxu0 %v9284
        %v9357 = vpop.f32.mrb[0].mxu0
        %v9358 = vadd.f32 0.0, %v9357
        %v9359 = vpop.f32.mrb[0].mxu0
        %9360 = vdwg.mxu0
        %v9361 = vmax.f32 %v9269, %v9353
        %v9362 = vmax.f32 %v9274, %v9358
        %s9363 = scalar_lea.vmem %s9, 32
        %v9364 = vld [vmem:[%s9363] sm:$0xff]
        %v9365 = vld [vmem:[%s9363 + $0x8] sm:$0x1]
        %v9367 = vsel %vm476, %v9364, 0
        %v9370 = vsel %vm476, %v9365, 0
        %9372 = vmatprep.subr.mxu0 0.0
        %9373 = vmatpush1.msra.mxu0 %v9186
        %9374 = vmatprep.subr.mxu0 0.0
        %9375 = vmatpush1.msra.mxu0 %v9187
        %9376 = vmatprep.subr.mxu0 0.0
        %9377 = vmatpush1.msra.mxu0 %v9188
        %9378 = vmatprep.subr.mxu0 0.0
        %9379 = vmatpush1.msra.mxu0 %v9189
        %9380 = vmatprep.subr.mxu0 0.0
        %9381 = vmatpush1.msra.mxu0 %v9190
        %9382 = vmatprep.subr.mxu0 0.0
        %9383 = vmatpush1.msra.mxu0 %v9191
        %9384 = vmatprep.subr.mxu0 0.0
        %9385 = vmatpush1.msra.mxu0 %v9192
        %9386 = vmatprep.subr.mxu0 0.0
        %9387 = vmatpush1.msra.mxu0 %v9193
        %9388 = vmatprep.subr.mxu0 0.0
        %9389 = vmatpush1.msra.mxu0 0.0
        %9390 = vmatprep.subr.mxu0 0.0
        %9391 = vmatpush1.msra.mxu0 0.0
        %9392 = vmatprep.subr.mxu0 0.0
        %9393 = vmatpush1.msra.mxu0 0.0
        %9394 = vmatprep.subr.mxu0 0.0
        %9395 = vmatpush1.msra.mxu0 0.0
        %9396 = vmatprep.subr.mxu0 0.0
        %9397 = vmatpush1.msra.mxu0 0.0
        %9398 = vmatprep.subr.mxu0 0.0
        %9399 = vmatpush1.msra.mxu0 0.0
        %9400 = vmatprep.subr.mxu0 0.0
        %9401 = vmatpush1.msra.mxu0 0.0
        %9402 = vmatprep.subr.mxu0 0.0
        %9403 = vmatpush1.msra.mxu0 0.0
        %9404 = vmatprep.subr.mxu0 0.0
        %9405 = vmatpush1.msra.mxu0 0.0
        %9406 = vmatprep.subr.mxu0 0.0
        %9407 = vmatpush1.msra.mxu0 0.0
        %9408 = vmatprep.subr.mxu0 0.0
        %9409 = vmatpush1.msra.mxu0 0.0
        %9410 = vmatprep.subr.mxu0 0.0
        %9411 = vmatpush1.msra.mxu0 0.0
        %9412 = vmatprep.subr.mxu0 0.0
        %9413 = vmatpush1.msra.mxu0 0.0
        %9414 = vmatprep.subr.mxu0 0.0
        %9415 = vmatpush1.msra.mxu0 0.0
        %9416 = vmatprep.subr.mxu0 0.0
        %9417 = vmatpush1.msra.mxu0 0.0
        %9418 = vmatprep.subr.mxu0 0.0
        %9419 = vmatpush1.msra.mxu0 0.0
        %9420 = vmatprep.subr.mxu0 0.0
        %9421 = vmatpush1.msra.mxu0 0.0
        %9422 = vmatprep.subr.mxu0 0.0
        %9423 = vmatpush1.msra.mxu0 0.0
        %9424 = vmatprep.subr.mxu0 0.0
        %9425 = vmatpush1.msra.mxu0 0.0
        %9426 = vmatprep.subr.mxu0 0.0
        %9427 = vmatpush1.msra.mxu0 0.0
        %9428 = vmatprep.subr.mxu0 0.0
        %9429 = vmatpush1.msra.mxu0 0.0
        %9430 = vmatprep.subr.mxu0 0.0
        %9431 = vmatpush1.msra.mxu0 0.0
        %9432 = vmatprep.subr.mxu0 0.0
        %9433 = vmatpush1.msra.mxu0 0.0
        %9434 = vmatprep.subr.mxu0 0.0
        %9435 = vmatpush1.msra.mxu0 0.0
        %9436 = vmatprep.mubr.f32.mxu0 0.0
        %9437 = vmatmul.mubr.f32.gmra.mrb[0].mxu0 %v9367
        %v9438 = vpop.f32.mrb[0].mxu0
        %v9439 = vadd.f32 0.0, %v9438
        %v9440 = vpop.f32.mrb[0].mxu0
        %9441 = vmatprep.mubr.f32.mxu0 0.0
        %9442 = vmatmul.mubr.f32.gmra.mrb[0].mxu0 %v9370
        %v9443 = vpop.f32.mrb[0].mxu0
        %v9444 = vadd.f32 0.0, %v9443
        %v9445 = vpop.f32.mrb[0].mxu0
        %9446 = vdwg.mxu0
        %s9447 = scalar_lea.vmem %s9, 48
        %v9448 = vld [vmem:[%s9447] sm:$0xff]
        %v9449 = vld [vmem:[%s9447 + $0x8] sm:$0x1]
        %v9451 = vsel %vm476, %v9448, 0
        %v9454 = vsel %vm476, %v9449, 0
        %9456 = vmatprep.subr.mxu0 0.0
        %9457 = vmatpush1.msra.mxu0 %v9186
        %9458 = vmatprep.subr.mxu0 0.0
        %9459 = vmatpush1.msra.mxu0 %v9187
        %9460 = vmatprep.subr.mxu0 0.0
        %9461 = vmatpush1.msra.mxu0 %v9188
        %9462 = vmatprep.subr.mxu0 0.0
        %9463 = vmatpush1.msra.mxu0 %v9189
        %9464 = vmatprep.subr.mxu0 0.0
        %9465 = vmatpush1.msra.mxu0 %v9190
        %9466 = vmatprep.subr.mxu0 0.0
        %9467 = vmatpush1.msra.mxu0 %v9191
        %9468 = vmatprep.subr.mxu0 0.0
        %9469 = vmatpush1.msra.mxu0 %v9192
        %9470 = vmatprep.subr.mxu0 0.0
        %9471 = vmatpush1.msra.mxu0 %v9193
        %9472 = vmatprep.subr.mxu0 0.0
        %9473 = vmatpush1.msra.mxu0 0.0
        %9474 = vmatprep.subr.mxu0 0.0
        %9475 = vmatpush1.msra.mxu0 0.0
        %9476 = vmatprep.subr.mxu0 0.0
        %9477 = vmatpush1.msra.mxu0 0.0
        %9478 = vmatprep.subr.mxu0 0.0
        %9479 = vmatpush1.msra.mxu0 0.0
        %9480 = vmatprep.subr.mxu0 0.0
        %9481 = vmatpush1.msra.mxu0 0.0
        %9482 = vmatprep.subr.mxu0 0.0
        %9483 = vmatpush1.msra.mxu0 0.0
        %9484 = vmatprep.subr.mxu0 0.0
        %9485 = vmatpush1.msra.mxu0 0.0
        %9486 = vmatprep.subr.mxu0 0.0
        %9487 = vmatpush1.msra.mxu0 0.0
        %9488 = vmatprep.subr.mxu0 0.0
        %9489 = vmatpush1.msra.mxu0 0.0
        %9490 = vmatprep.subr.mxu0 0.0
        %9491 = vmatpush1.msra.mxu0 0.0
        %9492 = vmatprep.subr.mxu0 0.0
        %9493 = vmatpush1.msra.mxu0 0.0
        %9494 = vmatprep.subr.mxu0 0.0
        %9495 = vmatpush1.msra.mxu0 0.0
        %9496 = vmatprep.subr.mxu0 0.0
        %9497 = vmatpush1.msra.mxu0 0.0
        %9498 = vmatprep.subr.mxu0 0.0
        %9499 = vmatpush1.msra.mxu0 0.0
        %9500 = vmatprep.subr.mxu0 0.0
        %9501 = vmatpush1.msra.mxu0 0.0
        %9502 = vmatprep.subr.mxu0 0.0
        %9503 = vmatpush1.msra.mxu0 0.0
        %9504 = vmatprep.subr.mxu0 0.0
        %9505 = vmatpush1.msra.mxu0 0.0
        %9506 = vmatprep.subr.mxu0 0.0
        %9507 = vmatpush1.msra.mxu0 0.0
        %9508 = vmatprep.subr.mxu0 0.0
        %9509 = vmatpush1.msra.mxu0 0.0
        %9510 = vmatprep.subr.mxu0 0.0
        %9511 = vmatpush1.msra.mxu0 0.0
        %9512 = vmatprep.subr.mxu0 0.0
        %9513 = vmatpush1.msra.mxu0 0.0
        %9514 = vmatprep.subr.mxu0 0.0
        %9515 = vmatpush1.msra.mxu0 0.0
        %9516 = vmatprep.subr.mxu0 0.0
        %9517 = vmatpush1.msra.mxu0 0.0
        %9518 = vmatprep.subr.mxu0 0.0
        %9519 = vmatpush1.msra.mxu0 0.0
        %9520 = vmatprep.mubr.f32.mxu0 0.0
        %9521 = vmatmul.mubr.f32.gmra.mrb[0].mxu0 %v9451
        %v9522 = vpop.f32.mrb[0].mxu0
        %v9523 = vadd.f32 0.0, %v9522
        %v9524 = vpop.f32.mrb[0].mxu0
        %9525 = vmatprep.mubr.f32.mxu0 0.0
        %9526 = vmatmul.mubr.f32.gmra.mrb[0].mxu0 %v9454
        %v9527 = vpop.f32.mrb[0].mxu0
        %v9528 = vadd.f32 0.0, %v9527
        %v9529 = vpop.f32.mrb[0].mxu0
        %9530 = vdwg.mxu0
        %v9531 = vmax.f32 %v9439, %v9523
        %v9532 = vmax.f32 %v9444, %v9528
        %v9533 = vmax.f32 %v9361, %v9531
        %v9534 = vmax.f32 %v9362, %v9532
        %v9535 = vld [vmem:[%s11] sm:$0x1]
        %v9536 = vld [vmem:[%s10] sm:$0xff]
        %v9537 = vld [vmem:[%s10 + $0x8] sm:$0xff]
        %v9538 = vld [vmem:[%s10 + $0x10] sm:$0xff]
        %v9539 = vld [vmem:[%s10 + $0x18] sm:$0xff]
        %v9540 = vld [vmem:[%s10 + $0x20] sm:$0xff]
        %v9541 = vld [vmem:[%s10 + $0x28] sm:$0xff]
        %v9542 = vld [vmem:[%s10 + $0x30] sm:$0xff]
        %v9543 = vld [vmem:[%s10 + $0x38] sm:$0xff]
        %v9545 = vsel %vm476, %v9533, 0
        %9547 = vmatprep.subr.mxu0 0.0
        %9548 = vmatpush1.msra.mxu0 %v9536
        %9549 = vmatprep.subr.mxu0 0.0
        %9550 = vmatpush1.msra.mxu0 %v9537
        %9551 = vmatprep.subr.mxu0 0.0
        %9552 = vmatpush1.msra.mxu0 %v9538
        %9553 = vmatprep.subr.mxu0 0.0
        %9554 = vmatpush1.msra.mxu0 %v9539
        %9555 = vmatprep.subr.mxu0 0.0
        %9556 = vmatpush1.msra.mxu0 %v9540
        %9557 = vmatprep.subr.mxu0 0.0
        %9558 = vmatpush1.msra.mxu0 %v9541
        %9559 = vmatprep.subr.mxu0 0.0
        %9560 = vmatpush1.msra.mxu0 %v9542
        %9561 = vmatprep.subr.mxu0 0.0
        %9562 = vmatpush1.msra.mxu0 %v9543
        %9563 = vmatprep.subr.mxu0 0.0
        %9564 = vmatpush1.msra.mxu0 0.0
        %9565 = vmatprep.subr.mxu0 0.0
        %9566 = vmatpush1.msra.mxu0 0.0
        %9567 = vmatprep.subr.mxu0 0.0
        %9568 = vmatpush1.msra.mxu0 0.0
        %9569 = vmatprep.subr.mxu0 0.0
        %9570 = vmatpush1.msra.mxu0 0.0
        %9571 = vmatprep.subr.mxu0 0.0
        %9572 = vmatpush1.msra.mxu0 0.0
        %9573 = vmatprep.subr.mxu0 0.0
        %9574 = vmatpush1.msra.mxu0 0.0
        %9575 = vmatprep.subr.mxu0 0.0
        %9576 = vmatpush1.msra.mxu0 0.0
        %9577 = vmatprep.subr.mxu0 0.0
        %9578 = vmatpush1.msra.mxu0 0.0
        %9579 = vmatprep.subr.mxu0 0.0
        %9580 = vmatpush1.msra.mxu0 0.0
        %9581 = vmatprep.subr.mxu0 0.0
        %9582 = vmatpush1.msra.mxu0 0.0
        %9583 = vmatprep.subr.mxu0 0.0
        %9584 = vmatpush1.msra.mxu0 0.0
        %9585 = vmatprep.subr.mxu0 0.0
        %9586 = vmatpush1.msra.mxu0 0.0
        %9587 = vmatprep.subr.mxu0 0.0
        %9588 = vmatpush1.msra.mxu0 0.0
        %9589 = vmatprep.subr.mxu0 0.0
        %9590 = vmatpush1.msra.mxu0 0.0
        %9591 = vmatprep.subr.mxu0 0.0
        %9592 = vmatpush1.msra.mxu0 0.0
        %9593 = vmatprep.subr.mxu0 0.0
        %9594 = vmatpush1.msra.mxu0 0.0
        %9595 = vmatprep.subr.mxu0 0.0
        %9596 = vmatpush1.msra.mxu0 0.0
        %9597 = vmatprep.subr.mxu0 0.0
        %9598 = vmatpush1.msra.mxu0 0.0
        %9599 = vmatprep.subr.mxu0 0.0
        %9600 = vmatpush1.msra.mxu0 0.0
        %9601 = vmatprep.subr.mxu0 0.0
        %9602 = vmatpush1.msra.mxu0 0.0
        %9603 = vmatprep.subr.mxu0 0.0
        %9604 = vmatpush1.msra.mxu0 0.0
        %9605 = vmatprep.subr.mxu0 0.0
        %9606 = vmatpush1.msra.mxu0 0.0
        %9607 = vmatprep.subr.mxu0 0.0
        %9608 = vmatpush1.msra.mxu0 0.0
        %9609 = vmatprep.subr.mxu0 0.0
        %9610 = vmatpush1.msra.mxu0 0.0
        %9611 = vmatprep.mubr.f32.mxu0 0.0
        %9612 = vmatmul.mubr.f32.gmra.mrb[0].mxu0 %v9545
        %v9613 = vpop.f32.mrb[0].mxu0
        %v9614 = vadd.f32 0.0, %v9613
        %v9615 = vpop.f32.mrb[0].mxu0
        %9616 = vdwg.mxu0
        %v9617 = vadd.f32 %v9535, %v9614
        %v9618 = vld [vmem:[%s10 + $0x40] sm:$0xff]
        %v9619 = vld [vmem:[%s10 + $0x48] sm:$0xff]
        %v9620 = vld [vmem:[%s10 + $0x50] sm:$0xff]
        %v9621 = vld [vmem:[%s10 + $0x58] sm:$0xff]
        %v9622 = vld [vmem:[%s10 + $0x60] sm:$0xff]
        %v9623 = vld [vmem:[%s10 + $0x68] sm:$0xff]
        %v9624 = vld [vmem:[%s10 + $0x70] sm:$0xff]
        %v9625 = vld [vmem:[%s10 + $0x78] sm:$0xff]
        %v9626 = vrot.slane %v9533, 1
        %v9627 = vsel %vm476, %v9626, 0
        %9629 = vmatprep.subr.mxu0 0.0
        %9630 = vmatpush1.msra.mxu0 %v9618
        %9631 = vmatprep.subr.mxu0 0.0
        %9632 = vmatpush1.msra.mxu0 %v9619
        %9633 = vmatprep.subr.mxu0 0.0
        %9634 = vmatpush1.msra.mxu0 %v9620
        %9635 = vmatprep.subr.mxu0 0.0
        %9636 = vmatpush1.msra.mxu0 %v9621
        %9637 = vmatprep.subr.mxu0 0.0
        %9638 = vmatpush1.msra.mxu0 %v9622
        %9639 = vmatprep.subr.mxu0 0.0
        %9640 = vmatpush1.msra.mxu0 %v9623
        %9641 = vmatprep.subr.mxu0 0.0
        %9642 = vmatpush1.msra.mxu0 %v9624
        %9643 = vmatprep.subr.mxu0 0.0
        %9644 = vmatpush1.msra.mxu0 %v9625
        %9645 = vmatprep.subr.mxu0 0.0
        %9646 = vmatpush1.msra.mxu0 0.0
        %9647 = vmatprep.subr.mxu0 0.0
        %9648 = vmatpush1.msra.mxu0 0.0
        %9649 = vmatprep.subr.mxu0 0.0
        %9650 = vmatpush1.msra.mxu0 0.0
        %9651 = vmatprep.subr.mxu0 0.0
        %9652 = vmatpush1.msra.mxu0 0.0
        %9653 = vmatprep.subr.mxu0 0.0
        %9654 = vmatpush1.msra.mxu0 0.0
        %9655 = vmatprep.subr.mxu0 0.0
        %9656 = vmatpush1.msra.mxu0 0.0
        %9657 = vmatprep.subr.mxu0 0.0
        %9658 = vmatpush1.msra.mxu0 0.0
        %9659 = vmatprep.subr.mxu0 0.0
        %9660 = vmatpush1.msra.mxu0 0.0
        %9661 = vmatprep.subr.mxu0 0.0
        %9662 = vmatpush1.msra.mxu0 0.0
        %9663 = vmatprep.subr.mxu0 0.0
        %9664 = vmatpush1.msra.mxu0 0.0
        %9665 = vmatprep.subr.mxu0 0.0
        %9666 = vmatpush1.msra.mxu0 0.0
        %9667 = vmatprep.subr.mxu0 0.0
        %9668 = vmatpush1.msra.mxu0 0.0
        %9669 = vmatprep.subr.mxu0 0.0
        %9670 = vmatpush1.msra.mxu0 0.0
        %9671 = vmatprep.subr.mxu0 0.0
        %9672 = vmatpush1.msra.mxu0 0.0
        %9673 = vmatprep.subr.mxu0 0.0
        %9674 = vmatpush1.msra.mxu0 0.0
        %9675 = vmatprep.subr.mxu0 0.0
        %9676 = vmatpush1.msra.mxu0 0.0
        %9677 = vmatprep.subr.mxu0 0.0
        %9678 = vmatpush1.msra.mxu0 0.0
        %9679 = vmatprep.subr.mxu0 0.0
        %9680 = vmatpush1.msra.mxu0 0.0
        %9681 = vmatprep.subr.mxu0 0.0
        %9682 = vmatpush1.msra.mxu0 0.0
        %9683 = vmatprep.subr.mxu0 0.0
        %9684 = vmatpush1.msra.mxu0 0.0
        %9685 = vmatprep.subr.mxu0 0.0
        %9686 = vmatpush1.msra.mxu0 0.0
        %9687 = vmatprep.subr.mxu0 0.0
        %9688 = vmatpush1.msra.mxu0 0.0
        %9689 = vmatprep.subr.mxu0 0.0
        %9690 = vmatpush1.msra.mxu0 0.0
        %9691 = vmatprep.subr.mxu0 0.0
        %9692 = vmatpush1.msra.mxu0 0.0
        %9693 = vmatprep.mubr.f32.mxu0 0.0
        %9694 = vmatmul.mubr.f32.gmra.mrb[0].mxu0 %v9627
        %v9695 = vpop.f32.mrb[0].mxu0
        %v9696 = vadd.f32 0.0, %v9695
        %v9697 = vpop.f32.mrb[0].mxu0
        %9698 = vdwg.mxu0
        %v9699 = vadd.f32 %v9617, %v9696
        %v9700 = vld [vmem:[%s10 + $0x80] sm:$0xff]
        %v9701 = vld [vmem:[%s10 + $0x88] sm:$0xff]
        %v9702 = vld [vmem:[%s10 + $0x90] sm:$0xff]
        %v9703 = vld [vmem:[%s10 + $0x98] sm:$0xff]
        %v9704 = vld [vmem:[%s10 + $0xa0] sm:$0xff]
        %v9705 = vld [vmem:[%s10 + $0xa8] sm:$0xff]
        %v9706 = vld [vmem:[%s10 + $0xb0] sm:$0xff]
        %v9707 = vld [vmem:[%s10 + $0xb8] sm:$0xff]
        %v9708 = vrot.slane %v9533, 2
        %v9709 = vsel %vm476, %v9708, 0
        %9711 = vmatprep.subr.mxu0 0.0
        %9712 = vmatpush1.msra.mxu0 %v9700
        %9713 = vmatprep.subr.mxu0 0.0
        %9714 = vmatpush1.msra.mxu0 %v9701
        %9715 = vmatprep.subr.mxu0 0.0
        %9716 = vmatpush1.msra.mxu0 %v9702
        %9717 = vmatprep.subr.mxu0 0.0
        %9718 = vmatpush1.msra.mxu0 %v9703
        %9719 = vmatprep.subr.mxu0 0.0
        %9720 = vmatpush1.msra.mxu0 %v9704
        %9721 = vmatprep.subr.mxu0 0.0
        %9722 = vmatpush1.msra.mxu0 %v9705
        %9723 = vmatprep.subr.mxu0 0.0
        %9724 = vmatpush1.msra.mxu0 %v9706
        %9725 = vmatprep.subr.mxu0 0.0
        %9726 = vmatpush1.msra.mxu0 %v9707
        %9727 = vmatprep.subr.mxu0 0.0
        %9728 = vmatpush1.msra.mxu0 0.0
        %9729 = vmatprep.subr.mxu0 0.0
        %9730 = vmatpush1.msra.mxu0 0.0
        %9731 = vmatprep.subr.mxu0 0.0
        %9732 = vmatpush1.msra.mxu0 0.0
        %9733 = vmatprep.subr.mxu0 0.0
        %9734 = vmatpush1.msra.mxu0 0.0
        %9735 = vmatprep.subr.mxu0 0.0
        %9736 = vmatpush1.msra.mxu0 0.0
        %9737 = vmatprep.subr.mxu0 0.0
        %9738 = vmatpush1.msra.mxu0 0.0
        %9739 = vmatprep.subr.mxu0 0.0
        %9740 = vmatpush1.msra.mxu0 0.0
        %9741 = vmatprep.subr.mxu0 0.0
        %9742 = vmatpush1.msra.mxu0 0.0
        %9743 = vmatprep.subr.mxu0 0.0
        %9744 = vmatpush1.msra.mxu0 0.0
        %9745 = vmatprep.subr.mxu0 0.0
        %9746 = vmatpush1.msra.mxu0 0.0
        %9747 = vmatprep.subr.mxu0 0.0
        %9748 = vmatpush1.msra.mxu0 0.0
        %9749 = vmatprep.subr.mxu0 0.0
        %9750 = vmatpush1.msra.mxu0 0.0
        %9751 = vmatprep.subr.mxu0 0.0
        %9752 = vmatpush1.msra.mxu0 0.0
        %9753 = vmatprep.subr.mxu0 0.0
        %9754 = vmatpush1.msra.mxu0 0.0
        %9755 = vmatprep.subr.mxu0 0.0
        %9756 = vmatpush1.msra.mxu0 0.0
        %9757 = vmatprep.subr.mxu0 0.0
        %9758 = vmatpush1.msra.mxu0 0.0
        %9759 = vmatprep.subr.mxu0 0.0
        %9760 = vmatpush1.msra.mxu0 0.0
        %9761 = vmatprep.subr.mxu0 0.0
        %9762 = vmatpush1.msra.mxu0 0.0
        %9763 = vmatprep.subr.mxu0 0.0
        %9764 = vmatpush1.msra.mxu0 0.0
        %9765 = vmatprep.subr.mxu0 0.0
        %9766 = vmatpush1.msra.mxu0 0.0
        %9767 = vmatprep.subr.mxu0 0.0
        %9768 = vmatpush1.msra.mxu0 0.0
        %9769 = vmatprep.subr.mxu0 0.0
        %9770 = vmatpush1.msra.mxu0 0.0
        %9771 = vmatprep.subr.mxu0 0.0
        %9772 = vmatpush1.msra.mxu0 0.0
        %9773 = vmatprep.subr.mxu0 0.0
        %9774 = vmatpush1.msra.mxu0 0.0
        %9775 = vmatprep.mubr.f32.mxu0 0.0
        %9776 = vmatmul.mubr.f32.gmra.mrb[0].mxu0 %v9709
        %v9777 = vpop.f32.mrb[0].mxu0
        %v9778 = vadd.f32 0.0, %v9777
        %v9779 = vpop.f32.mrb[0].mxu0
        %9780 = vdwg.mxu0
        %v9781 = vadd.f32 %v9699, %v9778
        %v9782 = vld [vmem:[%s10 + $0xc0] sm:$0xff]
        %v9783 = vld [vmem:[%s10 + $0xc8] sm:$0xff]
        %v9784 = vld [vmem:[%s10 + $0xd0] sm:$0xff]
        %v9785 = vld [vmem:[%s10 + $0xd8] sm:$0xff]
        %v9786 = vld [vmem:[%s10 + $0xe0] sm:$0xff]
        %v9787 = vld [vmem:[%s10 + $0xe8] sm:$0xff]
        %v9788 = vld [vmem:[%s10 + $0xf0] sm:$0xff]
        %v9789 = vld [vmem:[%s10 + $0xf8] sm:$0xff]
        %v9790 = vrot.slane %v9533, 3
        %v9791 = vsel %vm476, %v9790, 0
        %9793 = vmatprep.subr.mxu0 0.0
        %9794 = vmatpush1.msra.mxu0 %v9782
        %9795 = vmatprep.subr.mxu0 0.0
        %9796 = vmatpush1.msra.mxu0 %v9783
        %9797 = vmatprep.subr.mxu0 0.0
        %9798 = vmatpush1.msra.mxu0 %v9784
        %9799 = vmatprep.subr.mxu0 0.0
        %9800 = vmatpush1.msra.mxu0 %v9785
        %9801 = vmatprep.subr.mxu0 0.0
        %9802 = vmatpush1.msra.mxu0 %v9786
        %9803 = vmatprep.subr.mxu0 0.0
        %9804 = vmatpush1.msra.mxu0 %v9787
        %9805 = vmatprep.subr.mxu0 0.0
        %9806 = vmatpush1.msra.mxu0 %v9788
        %9807 = vmatprep.subr.mxu0 0.0
        %9808 = vmatpush1.msra.mxu0 %v9789
        %9809 = vmatprep.subr.mxu0 0.0
        %9810 = vmatpush1.msra.mxu0 0.0
        %9811 = vmatprep.subr.mxu0 0.0
        %9812 = vmatpush1.msra.mxu0 0.0
        %9813 = vmatprep.subr.mxu0 0.0
        %9814 = vmatpush1.msra.mxu0 0.0
        %9815 = vmatprep.subr.mxu0 0.0
        %9816 = vmatpush1.msra.mxu0 0.0
        %9817 = vmatprep.subr.mxu0 0.0
        %9818 = vmatpush1.msra.mxu0 0.0
        %9819 = vmatprep.subr.mxu0 0.0
        %9820 = vmatpush1.msra.mxu0 0.0
        %9821 = vmatprep.subr.mxu0 0.0
        %9822 = vmatpush1.msra.mxu0 0.0
        %9823 = vmatprep.subr.mxu0 0.0
        %9824 = vmatpush1.msra.mxu0 0.0
        %9825 = vmatprep.subr.mxu0 0.0
        %9826 = vmatpush1.msra.mxu0 0.0
        %9827 = vmatprep.subr.mxu0 0.0
        %9828 = vmatpush1.msra.mxu0 0.0
        %9829 = vmatprep.subr.mxu0 0.0
        %9830 = vmatpush1.msra.mxu0 0.0
        %9831 = vmatprep.subr.mxu0 0.0
        %9832 = vmatpush1.msra.mxu0 0.0
        %9833 = vmatprep.subr.mxu0 0.0
        %9834 = vmatpush1.msra.mxu0 0.0
        %9835 = vmatprep.subr.mxu0 0.0
        %9836 = vmatpush1.msra.mxu0 0.0
        %9837 = vmatprep.subr.mxu0 0.0
        %9838 = vmatpush1.msra.mxu0 0.0
        %9839 = vmatprep.subr.mxu0 0.0
        %9840 = vmatpush1.msra.mxu0 0.0
        %9841 = vmatprep.subr.mxu0 0.0
        %9842 = vmatpush1.msra.mxu0 0.0
        %9843 = vmatprep.subr.mxu0 0.0
        %9844 = vmatpush1.msra.mxu0 0.0
        %9845 = vmatprep.subr.mxu0 0.0
        %9846 = vmatpush1.msra.mxu0 0.0
        %9847 = vmatprep.subr.mxu0 0.0
        %9848 = vmatpush1.msra.mxu0 0.0
        %9849 = vmatprep.subr.mxu0 0.0
        %9850 = vmatpush1.msra.mxu0 0.0
        %9851 = vmatprep.subr.mxu0 0.0
        %9852 = vmatpush1.msra.mxu0 0.0
        %9853 = vmatprep.subr.mxu0 0.0
        %9854 = vmatpush1.msra.mxu0 0.0
        %9855 = vmatprep.subr.mxu0 0.0
        %9856 = vmatpush1.msra.mxu0 0.0
        %9857 = vmatprep.mubr.f32.mxu0 0.0
        %9858 = vmatmul.mubr.f32.gmra.mrb[0].mxu0 %v9791
        %v9859 = vpop.f32.mrb[0].mxu0
        %v9860 = vadd.f32 0.0, %v9859
        %v9861 = vpop.f32.mrb[0].mxu0
        %9862 = vdwg.mxu0
        %v9863 = vadd.f32 %v9781, %v9860
        %v9864 = vld [vmem:[%s10 + $0x100] sm:$0xff]
        %v9865 = vld [vmem:[%s10 + $0x108] sm:$0xff]
        %v9866 = vld [vmem:[%s10 + $0x110] sm:$0xff]
        %v9867 = vld [vmem:[%s10 + $0x118] sm:$0xff]
        %v9868 = vld [vmem:[%s10 + $0x120] sm:$0xff]
        %v9869 = vld [vmem:[%s10 + $0x128] sm:$0xff]
        %v9870 = vld [vmem:[%s10 + $0x130] sm:$0xff]
        %v9871 = vld [vmem:[%s10 + $0x138] sm:$0xff]
        %v9872 = vrot.slane %v9533, 4
        %v9873 = vsel %vm476, %v9872, 0
        %9875 = vmatprep.subr.mxu0 0.0
        %9876 = vmatpush1.msra.mxu0 %v9864
        %9877 = vmatprep.subr.mxu0 0.0
        %9878 = vmatpush1.msra.mxu0 %v9865
        %9879 = vmatprep.subr.mxu0 0.0
        %9880 = vmatpush1.msra.mxu0 %v9866
        %9881 = vmatprep.subr.mxu0 0.0
        %9882 = vmatpush1.msra.mxu0 %v9867
        %9883 = vmatprep.subr.mxu0 0.0
        %9884 = vmatpush1.msra.mxu0 %v9868
        %9885 = vmatprep.subr.mxu0 0.0
        %9886 = vmatpush1.msra.mxu0 %v9869
        %9887 = vmatprep.subr.mxu0 0.0
        %9888 = vmatpush1.msra.mxu0 %v9870
        %9889 = vmatprep.subr.mxu0 0.0
        %9890 = vmatpush1.msra.mxu0 %v9871
        %9891 = vmatprep.subr.mxu0 0.0
        %9892 = vmatpush1.msra.mxu0 0.0
        %9893 = vmatprep.subr.mxu0 0.0
        %9894 = vmatpush1.msra.mxu0 0.0
        %9895 = vmatprep.subr.mxu0 0.0
        %9896 = vmatpush1.msra.mxu0 0.0
        %9897 = vmatprep.subr.mxu0 0.0
        %9898 = vmatpush1.msra.mxu0 0.0
        %9899 = vmatprep.subr.mxu0 0.0
        %9900 = vmatpush1.msra.mxu0 0.0
        %9901 = vmatprep.subr.mxu0 0.0
        %9902 = vmatpush1.msra.mxu0 0.0
        %9903 = vmatprep.subr.mxu0 0.0
        %9904 = vmatpush1.msra.mxu0 0.0
        %9905 = vmatprep.subr.mxu0 0.0
        %9906 = vmatpush1.msra.mxu0 0.0
        %9907 = vmatprep.subr.mxu0 0.0
        %9908 = vmatpush1.msra.mxu0 0.0
        %9909 = vmatprep.subr.mxu0 0.0
        %9910 = vmatpush1.msra.mxu0 0.0
        %9911 = vmatprep.subr.mxu0 0.0
        %9912 = vmatpush1.msra.mxu0 0.0
        %9913 = vmatprep.subr.mxu0 0.0
        %9914 = vmatpush1.msra.mxu0 0.0
        %9915 = vmatprep.subr.mxu0 0.0
        %9916 = vmatpush1.msra.mxu0 0.0
        %9917 = vmatprep.subr.mxu0 0.0
        %9918 = vmatpush1.msra.mxu0 0.0
        %9919 = vmatprep.subr.mxu0 0.0
        %9920 = vmatpush1.msra.mxu0 0.0
        %9921 = vmatprep.subr.mxu0 0.0
        %9922 = vmatpush1.msra.mxu0 0.0
        %9923 = vmatprep.subr.mxu0 0.0
        %9924 = vmatpush1.msra.mxu0 0.0
        %9925 = vmatprep.subr.mxu0 0.0
        %9926 = vmatpush1.msra.mxu0 0.0
        %9927 = vmatprep.subr.mxu0 0.0
        %9928 = vmatpush1.msra.mxu0 0.0
        %9929 = vmatprep.subr.mxu0 0.0
        %9930 = vmatpush1.msra.mxu0 0.0
        %9931 = vmatprep.subr.mxu0 0.0
        %9932 = vmatpush1.msra.mxu0 0.0
        %9933 = vmatprep.subr.mxu0 0.0
        %9934 = vmatpush1.msra.mxu0 0.0
        %9935 = vmatprep.subr.mxu0 0.0
        %9936 = vmatpush1.msra.mxu0 0.0
        %9937 = vmatprep.subr.mxu0 0.0
        %9938 = vmatpush1.msra.mxu0 0.0
        %9939 = vmatprep.mubr.f32.mxu0 0.0
        %9940 = vmatmul.mubr.f32.gmra.mrb[0].mxu0 %v9873
        %v9941 = vpop.f32.mrb[0].mxu0
        %v9942 = vadd.f32 0.0, %v9941
        %v9943 = vpop.f32.mrb[0].mxu0
        %9944 = vdwg.mxu0
        %v9945 = vadd.f32 %v9863, %v9942
        %v9946 = vld [vmem:[%s10 + $0x140] sm:$0xff]
        %v9947 = vld [vmem:[%s10 + $0x148] sm:$0xff]
        %v9948 = vld [vmem:[%s10 + $0x150] sm:$0xff]
        %v9949 = vld [vmem:[%s10 + $0x158] sm:$0xff]
        %v9950 = vld [vmem:[%s10 + $0x160] sm:$0xff]
        %v9951 = vld [vmem:[%s10 + $0x168] sm:$0xff]
        %v9952 = vld [vmem:[%s10 + $0x170] sm:$0xff]
        %v9953 = vld [vmem:[%s10 + $0x178] sm:$0xff]
        %v9954 = vrot.slane %v9533, 5
        %v9955 = vsel %vm476, %v9954, 0
        %9957 = vmatprep.subr.mxu0 0.0
        %9958 = vmatpush1.msra.mxu0 %v9946
        %9959 = vmatprep.subr.mxu0 0.0
        %9960 = vmatpush1.msra.mxu0 %v9947
        %9961 = vmatprep.subr.mxu0 0.0
        %9962 = vmatpush1.msra.mxu0 %v9948
        %9963 = vmatprep.subr.mxu0 0.0
        %9964 = vmatpush1.msra.mxu0 %v9949
        %9965 = vmatprep.subr.mxu0 0.0
        %9966 = vmatpush1.msra.mxu0 %v9950
        %9967 = vmatprep.subr.mxu0 0.0
        %9968 = vmatpush1.msra.mxu0 %v9951
        %9969 = vmatprep.subr.mxu0 0.0
        %9970 = vmatpush1.msra.mxu0 %v9952
        %9971 = vmatprep.subr.mxu0 0.0
        %9972 = vmatpush1.msra.mxu0 %v9953
        %9973 = vmatprep.subr.mxu0 0.0
        %9974 = vmatpush1.msra.mxu0 0.0
        %9975 = vmatprep.subr.mxu0 0.0
        %9976 = vmatpush1.msra.mxu0 0.0
        %9977 = vmatprep.subr.mxu0 0.0
        %9978 = vmatpush1.msra.mxu0 0.0
        %9979 = vmatprep.subr.mxu0 0.0
        %9980 = vmatpush1.msra.mxu0 0.0
        %9981 = vmatprep.subr.mxu0 0.0
        %9982 = vmatpush1.msra.mxu0 0.0
        %9983 = vmatprep.subr.mxu0 0.0
        %9984 = vmatpush1.msra.mxu0 0.0
        %9985 = vmatprep.subr.mxu0 0.0
        %9986 = vmatpush1.msra.mxu0 0.0
        %9987 = vmatprep.subr.mxu0 0.0
        %9988 = vmatpush1.msra.mxu0 0.0
        %9989 = vmatprep.subr.mxu0 0.0
        %9990 = vmatpush1.msra.mxu0 0.0
        %9991 = vmatprep.subr.mxu0 0.0
        %9992 = vmatpush1.msra.mxu0 0.0
        %9993 = vmatprep.subr.mxu0 0.0
        %9994 = vmatpush1.msra.mxu0 0.0
        %9995 = vmatprep.subr.mxu0 0.0
        %9996 = vmatpush1.msra.mxu0 0.0
        %9997 = vmatprep.subr.mxu0 0.0
        %9998 = vmatpush1.msra.mxu0 0.0
        %9999 = vmatprep.subr.mxu0 0.0
        %10000 = vmatpush1.msra.mxu0 0.0
        %10001 = vmatprep.subr.mxu0 0.0
        %10002 = vmatpush1.msra.mxu0 0.0
        %10003 = vmatprep.subr.mxu0 0.0
        %10004 = vmatpush1.msra.mxu0 0.0
        %10005 = vmatprep.subr.mxu0 0.0
        %10006 = vmatpush1.msra.mxu0 0.0
        %10007 = vmatprep.subr.mxu0 0.0
        %10008 = vmatpush1.msra.mxu0 0.0
        %10009 = vmatprep.subr.mxu0 0.0
        %10010 = vmatpush1.msra.mxu0 0.0
        %10011 = vmatprep.subr.mxu0 0.0
        %10012 = vmatpush1.msra.mxu0 0.0
        %10013 = vmatprep.subr.mxu0 0.0
        %10014 = vmatpush1.msra.mxu0 0.0
        %10015 = vmatprep.subr.mxu0 0.0
        %10016 = vmatpush1.msra.mxu0 0.0
        %10017 = vmatprep.subr.mxu0 0.0
        %10018 = vmatpush1.msra.mxu0 0.0
        %10019 = vmatprep.subr.mxu0 0.0
        %10020 = vmatpush1.msra.mxu0 0.0
        %10021 = vmatprep.mubr.f32.mxu0 0.0
        %10022 = vmatmul.mubr.f32.gmra.mrb[0].mxu0 %v9955
        %v10023 = vpop.f32.mrb[0].mxu0
        %v10024 = vadd.f32 0.0, %v10023
        %v10025 = vpop.f32.mrb[0].mxu0
        %10026 = vdwg.mxu0
        %v10027 = vadd.f32 %v9945, %v10024
        %v10028 = vld [vmem:[%s10 + $0x180] sm:$0xff]
        %v10029 = vld [vmem:[%s10 + $0x188] sm:$0xff]
        %v10030 = vld [vmem:[%s10 + $0x190] sm:$0xff]
        %v10031 = vld [vmem:[%s10 + $0x198] sm:$0xff]
        %v10032 = vld [vmem:[%s10 + $0x1a0] sm:$0xff]
        %v10033 = vld [vmem:[%s10 + $0x1a8] sm:$0xff]
        %v10034 = vld [vmem:[%s10 + $0x1b0] sm:$0xff]
        %v10035 = vld [vmem:[%s10 + $0x1b8] sm:$0xff]
        %v10036 = vrot.slane %v9533, 6
        %v10037 = vsel %vm476, %v10036, 0
        %10039 = vmatprep.subr.mxu0 0.0
        %10040 = vmatpush1.msra.mxu0 %v10028
        %10041 = vmatprep.subr.mxu0 0.0
        %10042 = vmatpush1.msra.mxu0 %v10029
        %10043 = vmatprep.subr.mxu0 0.0
        %10044 = vmatpush1.msra.mxu0 %v10030
        %10045 = vmatprep.subr.mxu0 0.0
        %10046 = vmatpush1.msra.mxu0 %v10031
        %10047 = vmatprep.subr.mxu0 0.0
        %10048 = vmatpush1.msra.mxu0 %v10032
        %10049 = vmatprep.subr.mxu0 0.0
        %10050 = vmatpush1.msra.mxu0 %v10033
        %10051 = vmatprep.subr.mxu0 0.0
        %10052 = vmatpush1.msra.mxu0 %v10034
        %10053 = vmatprep.subr.mxu0 0.0
        %10054 = vmatpush1.msra.mxu0 %v10035
        %10055 = vmatprep.subr.mxu0 0.0
        %10056 = vmatpush1.msra.mxu0 0.0
        %10057 = vmatprep.subr.mxu0 0.0
        %10058 = vmatpush1.msra.mxu0 0.0
        %10059 = vmatprep.subr.mxu0 0.0
        %10060 = vmatpush1.msra.mxu0 0.0
        %10061 = vmatprep.subr.mxu0 0.0
        %10062 = vmatpush1.msra.mxu0 0.0
        %10063 = vmatprep.subr.mxu0 0.0
        %10064 = vmatpush1.msra.mxu0 0.0
        %10065 = vmatprep.subr.mxu0 0.0
        %10066 = vmatpush1.msra.mxu0 0.0
        %10067 = vmatprep.subr.mxu0 0.0
        %10068 = vmatpush1.msra.mxu0 0.0
        %10069 = vmatprep.subr.mxu0 0.0
        %10070 = vmatpush1.msra.mxu0 0.0
        %10071 = vmatprep.subr.mxu0 0.0
        %10072 = vmatpush1.msra.mxu0 0.0
        %10073 = vmatprep.subr.mxu0 0.0
        %10074 = vmatpush1.msra.mxu0 0.0
        %10075 = vmatprep.subr.mxu0 0.0
        %10076 = vmatpush1.msra.mxu0 0.0
        %10077 = vmatprep.subr.mxu0 0.0
        %10078 = vmatpush1.msra.mxu0 0.0
        %10079 = vmatprep.subr.mxu0 0.0
        %10080 = vmatpush1.msra.mxu0 0.0
        %10081 = vmatprep.subr.mxu0 0.0
        %10082 = vmatpush1.msra.mxu0 0.0
        %10083 = vmatprep.subr.mxu0 0.0
        %10084 = vmatpush1.msra.mxu0 0.0
        %10085 = vmatprep.subr.mxu0 0.0
        %10086 = vmatpush1.msra.mxu0 0.0
        %10087 = vmatprep.subr.mxu0 0.0
        %10088 = vmatpush1.msra.mxu0 0.0
        %10089 = vmatprep.subr.mxu0 0.0
        %10090 = vmatpush1.msra.mxu0 0.0
        %10091 = vmatprep.subr.mxu0 0.0
        %10092 = vmatpush1.msra.mxu0 0.0
        %10093 = vmatprep.subr.mxu0 0.0
        %10094 = vmatpush1.msra.mxu0 0.0
        %10095 = vmatprep.subr.mxu0 0.0
        %10096 = vmatpush1.msra.mxu0 0.0
        %10097 = vmatprep.subr.mxu0 0.0
        %10098 = vmatpush1.msra.mxu0 0.0
        %10099 = vmatprep.subr.mxu0 0.0
        %10100 = vmatpush1.msra.mxu0 0.0
        %10101 = vmatprep.subr.mxu0 0.0
        %10102 = vmatpush1.msra.mxu0 0.0
        %10103 = vmatprep.mubr.f32.mxu0 0.0
        %10104 = vmatmul.mubr.f32.gmra.mrb[0].mxu0 %v10037
        %v10105 = vpop.f32.mrb[0].mxu0
        %v10106 = vadd.f32 0.0, %v10105
        %v10107 = vpop.f32.mrb[0].mxu0
        %10108 = vdwg.mxu0
        %v10109 = vadd.f32 %v10027, %v10106
        %v10110 = vld [vmem:[%s10 + $0x1c0] sm:$0xff]
        %v10111 = vld [vmem:[%s10 + $0x1c8] sm:$0xff]
        %v10112 = vld [vmem:[%s10 + $0x1d0] sm:$0xff]
        %v10113 = vld [vmem:[%s10 + $0x1d8] sm:$0xff]
        %v10114 = vld [vmem:[%s10 + $0x1e0] sm:$0xff]
        %v10115 = vld [vmem:[%s10 + $0x1e8] sm:$0xff]
        %v10116 = vld [vmem:[%s10 + $0x1f0] sm:$0xff]
        %v10117 = vld [vmem:[%s10 + $0x1f8] sm:$0xff]
        %v10118 = vrot.slane %v9533, 7
        %v10119 = vsel %vm476, %v10118, 0
        %10121 = vmatprep.subr.mxu0 0.0
        %10122 = vmatpush1.msra.mxu0 %v10110
        %10123 = vmatprep.subr.mxu0 0.0
        %10124 = vmatpush1.msra.mxu0 %v10111
        %10125 = vmatprep.subr.mxu0 0.0
        %10126 = vmatpush1.msra.mxu0 %v10112
        %10127 = vmatprep.subr.mxu0 0.0
        %10128 = vmatpush1.msra.mxu0 %v10113
        %10129 = vmatprep.subr.mxu0 0.0
        %10130 = vmatpush1.msra.mxu0 %v10114
        %10131 = vmatprep.subr.mxu0 0.0
        %10132 = vmatpush1.msra.mxu0 %v10115
        %10133 = vmatprep.subr.mxu0 0.0
        %10134 = vmatpush1.msra.mxu0 %v10116
        %10135 = vmatprep.subr.mxu0 0.0
        %10136 = vmatpush1.msra.mxu0 %v10117
        %10137 = vmatprep.subr.mxu0 0.0
        %10138 = vmatpush1.msra.mxu0 0.0
        %10139 = vmatprep.subr.mxu0 0.0
        %10140 = vmatpush1.msra.mxu0 0.0
        %10141 = vmatprep.subr.mxu0 0.0
        %10142 = vmatpush1.msra.mxu0 0.0
        %10143 = vmatprep.subr.mxu0 0.0
        %10144 = vmatpush1.msra.mxu0 0.0
        %10145 = vmatprep.subr.mxu0 0.0
        %10146 = vmatpush1.msra.mxu0 0.0
        %10147 = vmatprep.subr.mxu0 0.0
        %10148 = vmatpush1.msra.mxu0 0.0
        %10149 = vmatprep.subr.mxu0 0.0
        %10150 = vmatpush1.msra.mxu0 0.0
        %10151 = vmatprep.subr.mxu0 0.0
        %10152 = vmatpush1.msra.mxu0 0.0
        %10153 = vmatprep.subr.mxu0 0.0
        %10154 = vmatpush1.msra.mxu0 0.0
        %10155 = vmatprep.subr.mxu0 0.0
        %10156 = vmatpush1.msra.mxu0 0.0
        %10157 = vmatprep.subr.mxu0 0.0
        %10158 = vmatpush1.msra.mxu0 0.0
        %10159 = vmatprep.subr.mxu0 0.0
        %10160 = vmatpush1.msra.mxu0 0.0
        %10161 = vmatprep.subr.mxu0 0.0
        %10162 = vmatpush1.msra.mxu0 0.0
        %10163 = vmatprep.subr.mxu0 0.0
        %10164 = vmatpush1.msra.mxu0 0.0
        %10165 = vmatprep.subr.mxu0 0.0
        %10166 = vmatpush1.msra.mxu0 0.0
        %10167 = vmatprep.subr.mxu0 0.0
        %10168 = vmatpush1.msra.mxu0 0.0
        %10169 = vmatprep.subr.mxu0 0.0
        %10170 = vmatpush1.msra.mxu0 0.0
        %10171 = vmatprep.subr.mxu0 0.0
        %10172 = vmatpush1.msra.mxu0 0.0
        %10173 = vmatprep.subr.mxu0 0.0
        %10174 = vmatpush1.msra.mxu0 0.0
        %10175 = vmatprep.subr.mxu0 0.0
        %10176 = vmatpush1.msra.mxu0 0.0
        %10177 = vmatprep.subr.mxu0 0.0
        %10178 = vmatpush1.msra.mxu0 0.0
        %10179 = vmatprep.subr.mxu0 0.0
        %10180 = vmatpush1.msra.mxu0 0.0
        %10181 = vmatprep.subr.mxu0 0.0
        %10182 = vmatpush1.msra.mxu0 0.0
        %10183 = vmatprep.subr.mxu0 0.0
        %10184 = vmatpush1.msra.mxu0 0.0
        %10185 = vmatprep.mubr.f32.mxu0 0.0
        %10186 = vmatmul.mubr.f32.gmra.mrb[0].mxu0 %v10119
        %v10187 = vpop.f32.mrb[0].mxu0
        %v10188 = vadd.f32 0.0, %v10187
        %v10189 = vpop.f32.mrb[0].mxu0
        %10190 = vdwg.mxu0
        %v10191 = vadd.f32 %v10109, %v10188
        %v10192 = vld [vmem:[%s10 + $0x200] sm:$0xff]
        %v10193 = vld [vmem:[%s10 + $0x208] sm:$0xff]
        %v10194 = vld [vmem:[%s10 + $0x210] sm:$0xff]
        %v10195 = vld [vmem:[%s10 + $0x218] sm:$0xff]
        %v10196 = vld [vmem:[%s10 + $0x220] sm:$0xff]
        %v10197 = vld [vmem:[%s10 + $0x228] sm:$0xff]
        %v10198 = vld [vmem:[%s10 + $0x230] sm:$0xff]
        %v10199 = vld [vmem:[%s10 + $0x238] sm:$0xff]
        %v10201 = vsel %vm476, %v9534, 0
        %10203 = vmatprep.subr.mxu0 0.0
        %10204 = vmatpush1.msra.mxu0 %v10192
        %10205 = vmatprep.subr.mxu0 0.0
        %10206 = vmatpush1.msra.mxu0 %v10193
        %10207 = vmatprep.subr.mxu0 0.0
        %10208 = vmatpush1.msra.mxu0 %v10194
        %10209 = vmatprep.subr.mxu0 0.0
        %10210 = vmatpush1.msra.mxu0 %v10195
        %10211 = vmatprep.subr.mxu0 0.0
        %10212 = vmatpush1.msra.mxu0 %v10196
        %10213 = vmatprep.subr.mxu0 0.0
        %10214 = vmatpush1.msra.mxu0 %v10197
        %10215 = vmatprep.subr.mxu0 0.0
        %10216 = vmatpush1.msra.mxu0 %v10198
        %10217 = vmatprep.subr.mxu0 0.0
        %10218 = vmatpush1.msra.mxu0 %v10199
        %10219 = vmatprep.subr.mxu0 0.0
        %10220 = vmatpush1.msra.mxu0 0.0
        %10221 = vmatprep.subr.mxu0 0.0
        %10222 = vmatpush1.msra.mxu0 0.0
        %10223 = vmatprep.subr.mxu0 0.0
        %10224 = vmatpush1.msra.mxu0 0.0
        %10225 = vmatprep.subr.mxu0 0.0
        %10226 = vmatpush1.msra.mxu0 0.0
        %10227 = vmatprep.subr.mxu0 0.0
        %10228 = vmatpush1.msra.mxu0 0.0
        %10229 = vmatprep.subr.mxu0 0.0
        %10230 = vmatpush1.msra.mxu0 0.0
        %10231 = vmatprep.subr.mxu0 0.0
        %10232 = vmatpush1.msra.mxu0 0.0
        %10233 = vmatprep.subr.mxu0 0.0
        %10234 = vmatpush1.msra.mxu0 0.0
        %10235 = vmatprep.subr.mxu0 0.0
        %10236 = vmatpush1.msra.mxu0 0.0
        %10237 = vmatprep.subr.mxu0 0.0
        %10238 = vmatpush1.msra.mxu0 0.0
        %10239 = vmatprep.subr.mxu0 0.0
        %10240 = vmatpush1.msra.mxu0 0.0
        %10241 = vmatprep.subr.mxu0 0.0
        %10242 = vmatpush1.msra.mxu0 0.0
        %10243 = vmatprep.subr.mxu0 0.0
        %10244 = vmatpush1.msra.mxu0 0.0
        %10245 = vmatprep.subr.mxu0 0.0
        %10246 = vmatpush1.msra.mxu0 0.0
        %10247 = vmatprep.subr.mxu0 0.0
        %10248 = vmatpush1.msra.mxu0 0.0
        %10249 = vmatprep.subr.mxu0 0.0
        %10250 = vmatpush1.msra.mxu0 0.0
        %10251 = vmatprep.subr.mxu0 0.0
        %10252 = vmatpush1.msra.mxu0 0.0
        %10253 = vmatprep.subr.mxu0 0.0
        %10254 = vmatpush1.msra.mxu0 0.0
        %10255 = vmatprep.subr.mxu0 0.0
        %10256 = vmatpush1.msra.mxu0 0.0
        %10257 = vmatprep.subr.mxu0 0.0
        %10258 = vmatpush1.msra.mxu0 0.0
        %10259 = vmatprep.subr.mxu0 0.0
        %10260 = vmatpush1.msra.mxu0 0.0
        %10261 = vmatprep.subr.mxu0 0.0
        %10262 = vmatpush1.msra.mxu0 0.0
        %10263 = vmatprep.subr.mxu0 0.0
        %10264 = vmatpush1.msra.mxu0 0.0
        %10265 = vmatprep.subr.mxu0 0.0
        %10266 = vmatpush1.msra.mxu0 0.0
        %10267 = vmatprep.mubr.f32.mxu0 0.0
        %10268 = vmatmul.mubr.f32.gmra.mrb[0].mxu0 %v10201
        %v10269 = vpop.f32.mrb[0].mxu0
        %v10270 = vadd.f32 0.0, %v10269
        %v10271 = vpop.f32.mrb[0].mxu0
        %10272 = vdwg.mxu0
        %v10273 = vadd.f32 %v10191, %v10270
        %v10274 = vmax.f32 %v10273, 0.0
        %v10275 = vld [vmem:[%s12] sm:$0xff]
        %v10276 = vld [vmem:[%s12 + $0x8] sm:$0xff]
        %v10277 = vld [vmem:[%s12 + $0x10] sm:$0xff]
        %v10278 = vld [vmem:[%s12 + $0x18] sm:$0xff]
        %v10279 = vld [vmem:[%s12 + $0x20] sm:$0xff]
        %v10280 = vld [vmem:[%s12 + $0x28] sm:$0xff]
        %v10281 = vld [vmem:[%s12 + $0x30] sm:$0xff]
        %v10282 = vld [vmem:[%s12 + $0x38] sm:$0xff]
        %v10283 = vld [vmem:[%s12 + $0x40] sm:$0xff]
        %v10284 = vld [vmem:[%s12 + $0x48] sm:$0xff]
        %v10285 = vld [vmem:[%s12 + $0x50] sm:$0xff]
        %v10286 = vld [vmem:[%s12 + $0x58] sm:$0xff]
        %v10287 = vld [vmem:[%s12 + $0x60] sm:$0xff]
        %v10288 = vld [vmem:[%s12 + $0x68] sm:$0xff]
        %v10289 = vld [vmem:[%s12 + $0x70] sm:$0xff]
        %v10290 = vld [vmem:[%s12 + $0x78] sm:$0xff]
        %v10291 = vld [vmem:[%s13] sm:$0x1]
        %10292 = vmatprep.subr.mxu0 0.0
        %10293 = vmatpush1.msra.mxu0 %v10275
        %10294 = vmatprep.subr.mxu0 0.0
        %10295 = vmatpush1.msra.mxu0 %v10276
        %10296 = vmatprep.subr.mxu0 0.0
        %10297 = vmatpush1.msra.mxu0 %v10277
        %10298 = vmatprep.subr.mxu0 0.0
        %10299 = vmatpush1.msra.mxu0 %v10278
        %10300 = vmatprep.subr.mxu0 0.0
        %10301 = vmatpush1.msra.mxu0 %v10279
        %10302 = vmatprep.subr.mxu0 0.0
        %10303 = vmatpush1.msra.mxu0 %v10280
        %10304 = vmatprep.subr.mxu0 0.0
        %10305 = vmatpush1.msra.mxu0 %v10281
        %10306 = vmatprep.subr.mxu0 0.0
        %10307 = vmatpush1.msra.mxu0 %v10282
        %10308 = vmatprep.subr.mxu0 0.0
        %10309 = vmatpush1.msra.mxu0 %v10283
        %10310 = vmatprep.subr.mxu0 0.0
        %10311 = vmatpush1.msra.mxu0 %v10284
        %10312 = vmatprep.subr.mxu0 0.0
        %10313 = vmatpush1.msra.mxu0 %v10285
        %10314 = vmatprep.subr.mxu0 0.0
        %10315 = vmatpush1.msra.mxu0 %v10286
        %10316 = vmatprep.subr.mxu0 0.0
        %10317 = vmatpush1.msra.mxu0 %v10287
        %10318 = vmatprep.subr.mxu0 0.0
        %10319 = vmatpush1.msra.mxu0 %v10288
        %10320 = vmatprep.subr.mxu0 0.0
        %10321 = vmatpush1.msra.mxu0 %v10289
        %10322 = vmatprep.subr.mxu0 0.0
        %10323 = vmatpush1.msra.mxu0 %v10290
        %10324 = vmatprep.subr.mxu0 0.0
        %10325 = vmatpush1.msra.mxu0 0.0
        %10326 = vmatprep.subr.mxu0 0.0
        %10327 = vmatpush1.msra.mxu0 0.0
        %10328 = vmatprep.subr.mxu0 0.0
        %10329 = vmatpush1.msra.mxu0 0.0
        %10330 = vmatprep.subr.mxu0 0.0
        %10331 = vmatpush1.msra.mxu0 0.0
        %10332 = vmatprep.subr.mxu0 0.0
        %10333 = vmatpush1.msra.mxu0 0.0
        %10334 = vmatprep.subr.mxu0 0.0
        %10335 = vmatpush1.msra.mxu0 0.0
        %10336 = vmatprep.subr.mxu0 0.0
        %10337 = vmatpush1.msra.mxu0 0.0
        %10338 = vmatprep.subr.mxu0 0.0
        %10339 = vmatpush1.msra.mxu0 0.0
        %10340 = vmatprep.subr.mxu0 0.0
        %10341 = vmatpush1.msra.mxu0 0.0
        %10342 = vmatprep.subr.mxu0 0.0
        %10343 = vmatpush1.msra.mxu0 0.0
        %10344 = vmatprep.subr.mxu0 0.0
        %10345 = vmatpush1.msra.mxu0 0.0
        %10346 = vmatprep.subr.mxu0 0.0
        %10347 = vmatpush1.msra.mxu0 0.0
        %10348 = vmatprep.subr.mxu0 0.0
        %10349 = vmatpush1.msra.mxu0 0.0
        %10350 = vmatprep.subr.mxu0 0.0
        %10351 = vmatpush1.msra.mxu0 0.0
        %10352 = vmatprep.subr.mxu0 0.0
        %10353 = vmatpush1.msra.mxu0 0.0
        %10354 = vmatprep.subr.mxu0 0.0
        %10355 = vmatpush1.msra.mxu0 0.0
        %10356 = vmatprep.mubr.f32.mxu0 0.0
        %10357 = vmatmul.mubr.f32.gmra.mrb[0].mxu0 %v10274
        %v10358 = vpop.f32.mrb[0].mxu0
        %v10359 = vadd.f32 %v10291, %v10358
        %v10360 = vpop.f32.mrb[0].mxu0
        %10361 = vdwg.mxu0
        %10362 = vst [vmem:[%s459] sm:$0x1] %v10359
        %s10363 = sand.u32 %s335, 1
        %s10364 = scalar_lea.sflag [#allocation7], %s10363
        %s10365 = sand.u32 %s335, 1
        %s10366 = scalar_lea.vmem [#allocation6], %s10365
        // Predicated region
        $region77: #{classifier_cnn2_forward.1} parent=75 // pred_check
          %p10367 = pneg %p345
        $region78: #{classifier_cnn2_forward.1} parent=75 // pred_check_branch
          %10369 = sbr.rel (%p10367) target = $region80
        $region79: #{classifier_cnn2_forward.1} parent=75 // pred_region
          %s10371 = ssub.s32 16, 16
          %10372 = vsyncadd %s10364, %s10371
          %s10373 = smul.addr %s28, 16
          %s10374 = scalar_lea.hbm %s14, %s10373
          %s10376 = sshll.u32 %s10366, 4
          %s10377 = int_to_ptr.vmem [resolvable:$true] %s10376
          %10379 = dma.vmem_to_hbm [thread:$0]  %s10377, 16, %s10374, %s10364
        $region80: #{classifier_cnn2_forward.1} parent=75 // pred_fallthru
          _
      $region76: #{classifier_cnn2_forward.1} parent=5 // pred_fallthru
        _
      %p10380 = scmp.le.s32.totalorder 2, %s23
      // Predicated region
      $region81: #{classifier_cnn2_forward.1} parent=5 // pred_check
        %p10381 = pneg %p10380
      $region82: #{classifier_cnn2_forward.1} parent=5 // pred_check_branch
        %10383 = sbr.rel (%p10381) target = $region84
      $region83: #{classifier_cnn2_forward.1} parent=5 // pred_region
        %s10384 = ssub.s32 %s23, 2
        // Predicated region
        $region85: #{classifier_cnn2_forward.1} parent=83 // pred_check
          %p10385 = pneg %p351
        $region86: #{classifier_cnn2_forward.1} parent=83 // pred_check_branch
          %10387 = sbr.rel (%p10385) target = $region88
        $region87: #{classifier_cnn2_forward.1} parent=83 // pred_region
          %s10388 = sand.u32 %s336, 1
          %s10389 = scalar_lea.sflag [#allocation7], %s10388
          %s10390 = sand.u32 %s336, 1
          %s10391 = scalar_lea.vmem [#allocation6], %s10390
          %10392 = dma.done %s10389, 16
        $region88: #{classifier_cnn2_forward.1} parent=83 // pred_fallthru
          _
      $region84: #{classifier_cnn2_forward.1} parent=5 // pred_fallthru
        _
    $region6: #{classifier_cnn2_forward.1} parent=1 // loop_footer
      %s27 = sadd.s32 1, %s23
    $region7: #{classifier_cnn2_forward.1} parent=1 // loop_footer_branch
      %22 = sbr.rel target = $region3
    $region8: #{classifier_cnn2_forward.1} parent=1 // loop_exit
      _
    %10393 = vsyncpa [#allocation7], 1
    %s10394 = scalar_lea.sflag [#allocation7], 1
    %10395 = vsyncpa %s10394, 1

</llo_original>
